<compile_context>
chip_gen: v5e
topology: v5e:2x2
jax: 0.10.0
libtpu: 0.0.40
codegen_flags: <defaults>
</compile_context>

<pallas_src>
import functools

import jax
import jax.numpy as jnp
from jax.experimental import pallas as pl
from jax.experimental.pallas import tpu as pltpu


def mlp_kernel(x_ref, w1_ref, b1_ref, w2_ref, b2_ref, o_ref, *, approx_gelu):
    # First linear on this batch tile: [TB, D] @ [D, I] on the MXU,
    # bf16 inputs / f32 accumulation, f32 bias add.
    x = x_ref[...].astype(jnp.bfloat16)
    w1 = w1_ref[...].astype(jnp.bfloat16)      # no-op when weights are already bf16
    h = jnp.dot(x, w1, preferred_element_type=jnp.float32) + b1_ref[...]

    # tanh GELU -> EUP slot (keeps the 4 VALU slots free); erf form available
    # for exact torch.nn.GELU() parity.
    h = jax.nn.gelu(h, approximate=approx_gelu)

    # Second linear: [TB, I] @ [I, D]. Casting h to bf16 halves the VMEM
    # round-trip of the [TB, I] intermediate (matters most on v5e's single
    # vector-store slot) and keeps the MXU at native bf16 rate.
    y = jnp.dot(h.astype(jnp.bfloat16), w2_ref[...].astype(jnp.bfloat16),
                preferred_element_type=jnp.float32) + b2_ref[...]

    # Dropout(0.1) in eval mode == identity.
    o_ref[...] = y.astype(o_ref.dtype)


def mlp_forward(x, w1, b1, w2, b2, *, tb=256, approx_gelu=True):
    B, D = x.shape
    I = w1.shape[1]  # intermediate dim = 4 * D

    TB = min(tb, B)
    grid = (pl.cdiv(B, TB),)  # ragged last block: Pallas masks the partial store

    itemsize = lambda a: a.size * a.dtype.itemsize
    cost = pl.CostEstimate(
        flops=4 * B * D * I,                       # two [B,D]x[D,I]-sized matmuls
        transcendentals=B * I if approx_gelu else 0,
        bytes_accessed=(itemsize(x) + itemsize(w1) + itemsize(b1)
                        + itemsize(w2) + itemsize(b2)
                        + B * D * x.dtype.itemsize),
    )

    return pl.pallas_call(
        functools.partial(mlp_kernel, approx_gelu=approx_gelu),
        out_shape=jax.ShapeDtypeStruct((B, D), x.dtype),
        grid_spec=pltpu.PrefetchScalarGridSpec(
            num_scalar_prefetch=0,
            grid=grid,
            in_specs=[
                # Activation tile marches over the batch axis (double-buffered).
                pl.BlockSpec((TB, D), lambda i: (i, 0)),
                # Weights / biases: constant block index -> DMA'd once and kept
                # VMEM-resident across all batch tiles. For much larger D/I on
                # v7x's 64 MiB VMEM: keep weights bf16, add
                # pipeline_mode=pl.Buffered(1), or tile the I axis with an
                # f32 accumulator instead.
                pl.BlockSpec((D, I), lambda i: (0, 0)),
                pl.BlockSpec((1, I), lambda i: (0, 0)),
                pl.BlockSpec((I, D), lambda i: (0, 0)),
                pl.BlockSpec((1, D), lambda i: (0, 0)),
            ],
            out_specs=pl.BlockSpec((TB, D), lambda i: (i, 0)),
        ),
        compiler_params=pltpu.CompilerParams(
            # Independent batch tiles. On v7x (2 TC/chip) switch this axis to
            # pltpu.CORE_PARALLEL and keep >= 2 grid steps per core so the
            # per-core pipeline actually overlaps DMA with the matmuls.
            dimension_semantics=(pltpu.PARALLEL,),
            # Headroom so TB up to 1024 (f32 activations) still fits on v5e's
            # 16 MiB default scoped VMEM; well under every generation's VMEM.
            vmem_limit_bytes=32 * 1024 * 1024,
        ),
        cost_estimate=cost,
    )(x, w1, b1, w2, b2)


if __name__ == "__main__":
    # Module default: dim=256, intermediate=1024. B=1024 with TB=256 gives a
    # 4-step grid (pipelined DMA overlap; >=2 steps per TC on v7x).
    B, D = 1024, 256
    I = D * 4

    key = jax.random.PRNGKey(0)
    kx, kw1, kb1, kw2, kb2 = jax.random.split(key, 5)

    x = jax.random.normal(kx, (B, D), dtype=jnp.float32)
    # Parameters stored as [in, out] (y = x @ W + b == torch's x @ weight.T + b).
    # Weights kept bf16 in HBM (halves weight DMA / resident VMEM); biases f32.
    w1 = (jax.random.normal(kw1, (D, I), dtype=jnp.float32) / jnp.sqrt(D)).astype(jnp.bfloat16)
    b1 = jax.random.normal(kb1, (1, I), dtype=jnp.float32) * 0.01
    w2 = (jax.random.normal(kw2, (I, D), dtype=jnp.float32) / jnp.sqrt(I)).astype(jnp.bfloat16)
    b2 = jax.random.normal(kb2, (1, D), dtype=jnp.float32) * 0.01

    out = jax.block_until_ready(mlp_forward(x, w1, b1, w2, b2, tb=256))
    assert out.shape == (B, D) and out.dtype == x.dtype

    # Reference in plain JAX using the same bf16-input / f32-accumulate math
    # (eval-mode dropout == identity). Both paths hit the MXU, so they agree
    # to ~f32-accumulation-order noise.
    h_ref = jnp.dot(x.astype(jnp.bfloat16), w1, preferred_element_type=jnp.float32) + b1
    h_ref = jax.nn.gelu(h_ref, approximate=True)
    ref = jnp.dot(h_ref.astype(jnp.bfloat16), w2, preferred_element_type=jnp.float32) + b2
    assert jnp.allclose(out, ref, atol=2e-3, rtol=2e-3)

    print("KERNEL_OK")
</pallas_src>

<mosaic_0001>
module attributes {stable_mosaic.version = 11 : i64} {
  func.func @mlp_kernel(%arg0: i32, %arg1: memref<256x256xf32, #tpu.memory_space<vmem>>, %arg2: memref<256x1024xbf16, #tpu.memory_space<vmem>>, %arg3: memref<1x1024xf32, #tpu.memory_space<vmem>>, %arg4: memref<1024x256xbf16, #tpu.memory_space<vmem>>, %arg5: memref<1x256xf32, #tpu.memory_space<vmem>>, %arg6: memref<256x256xf32, #tpu.memory_space<vmem>>) attributes {dimension_semantics = [#tpu.dimension_semantics<parallel>], iteration_bounds = array<i64: 4>, scalar_prefetch = 0 : i64, scratch_operands = 0 : i64, tpu.core_type = #tpu.core_type<tc>, window_params = [{transform_indices = @transform_0, window_bounds = array<i64: 256, 256>}, {pipeline_mode = #tpu.pipeline_mode<synchronous>, transform_indices = @transform_1, window_bounds = array<i64: 256, 1024>}, {pipeline_mode = #tpu.pipeline_mode<synchronous>, transform_indices = @transform_2, window_bounds = array<i64: 1, 1024>}, {pipeline_mode = #tpu.pipeline_mode<synchronous>, transform_indices = @transform_3, window_bounds = array<i64: 1024, 256>}, {pipeline_mode = #tpu.pipeline_mode<synchronous>, transform_indices = @transform_4, window_bounds = array<i64: 1, 256>}, {transform_indices = @transform_5, window_bounds = array<i64: 256, 256>}]} {
    %c0 = arith.constant 0 : index
    %c0_0 = arith.constant 0 : index
    %0 = vector.load %arg1[%c0, %c0_0] : memref<256x256xf32, #tpu.memory_space<vmem>>, vector<256x256xf32>
    %1 = arith.truncf %0 : vector<256x256xf32> to vector<256x256xbf16>
    %c0_1 = arith.constant 0 : index
    %c0_2 = arith.constant 0 : index
    %2 = vector.load %arg2[%c0_1, %c0_2] : memref<256x1024xbf16, #tpu.memory_space<vmem>>, vector<256x1024xbf16>
    %cst = arith.constant dense<0.000000e+00> : vector<256x1024xf32>
    %3 = tpu.matmul %1, %2, %cst {dimension_numbers = #tpu.dot_dimension_numbers<[1], [0], [0], [1], [0, 0, 1, 1], [], []>} : vector<256x256xbf16>, vector<256x1024xbf16>, vector<256x1024xf32> -> vector<256x1024xf32>
    %c0_3 = arith.constant 0 : index
    %c0_4 = arith.constant 0 : index
    %4 = vector.load %arg3[%c0_3, %c0_4] : memref<1x1024xf32, #tpu.memory_space<vmem>>, vector<1x1024xf32>
    %5 = vector.broadcast %4 : vector<1x1024xf32> to vector<256x1024xf32>
    %6 = arith.addf %3, %5 : vector<256x1024xf32>
    %7 = arith.mulf %6, %6 : vector<256x1024xf32>
    %8 = arith.mulf %6, %7 : vector<256x1024xf32>
    %cst_5 = arith.constant 4.471500e-02 : f32
    %9 = vector.broadcast %cst_5 : f32 to vector<256x1024xf32>
    %10 = arith.mulf %9, %8 : vector<256x1024xf32>
    %11 = arith.addf %6, %10 : vector<256x1024xf32>
    %cst_6 = arith.constant 0.797884583 : f32
    %12 = vector.broadcast %cst_6 : f32 to vector<256x1024xf32>
    %13 = arith.mulf %12, %11 : vector<256x1024xf32>
    %14 = math.tanh %13 : vector<256x1024xf32>
    %cst_7 = arith.constant 1.000000e+00 : f32
    %15 = vector.broadcast %cst_7 : f32 to vector<256x1024xf32>
    %16 = arith.addf %15, %14 : vector<256x1024xf32>
    %cst_8 = arith.constant 5.000000e-01 : f32
    %17 = vector.broadcast %cst_8 : f32 to vector<256x1024xf32>
    %18 = arith.mulf %17, %16 : vector<256x1024xf32>
    %19 = arith.mulf %6, %18 : vector<256x1024xf32>
    %20 = arith.truncf %19 : vector<256x1024xf32> to vector<256x1024xbf16>
    %c0_9 = arith.constant 0 : index
    %c0_10 = arith.constant 0 : index
    %21 = vector.load %arg4[%c0_9, %c0_10] : memref<1024x256xbf16, #tpu.memory_space<vmem>>, vector<1024x256xbf16>
    %cst_11 = arith.constant dense<0.000000e+00> : vector<256x256xf32>
    %22 = tpu.matmul %20, %21, %cst_11 {dimension_numbers = #tpu.dot_dimension_numbers<[1], [0], [0], [1], [0, 0, 1, 1], [], []>} : vector<256x1024xbf16>, vector<1024x256xbf16>, vector<256x256xf32> -> vector<256x256xf32>
    %c0_12 = arith.constant 0 : index
    %c0_13 = arith.constant 0 : index
    %23 = vector.load %arg5[%c0_12, %c0_13] : memref<1x256xf32, #tpu.memory_space<vmem>>, vector<1x256xf32>
    %24 = vector.broadcast %23 : vector<1x256xf32> to vector<256x256xf32>
    %25 = arith.addf %22, %24 : vector<256x256xf32>
    %c0_14 = arith.constant 0 : index
    %c0_15 = arith.constant 0 : index
    %26 = vector.load %arg6[%c0_14, %c0_15] : memref<256x256xf32, #tpu.memory_space<vmem>>, vector<256x256xf32>
    tpu.vector_store %arg6[%c0_14, %c0_15], %25 {strides = array<i32>} : memref<256x256xf32, #tpu.memory_space<vmem>>, vector<256x256xf32>,
    return
  }
  func.func @transform_0(%arg0: i32) -> (i32, i32) {
    %c0_i32 = arith.constant 0 : i32
    %c0_i32_0 = arith.constant 0 : i32
    return %arg0, %c0_i32 : i32, i32
  }
  func.func @transform_1(%arg0: i32) -> (i32, i32) {
    %c0_i32 = arith.constant 0 : i32
    %c0_i32_0 = arith.constant 0 : i32
    %c0_i32_1 = arith.constant 0 : i32
    return %c0_i32, %c0_i32_0 : i32, i32
  }
  func.func @transform_2(%arg0: i32) -> (i32, i32) {
    %c0_i32 = arith.constant 0 : i32
    %c0_i32_0 = arith.constant 0 : i32
    %c0_i32_1 = arith.constant 0 : i32
    return %c0_i32, %c0_i32_0 : i32, i32
  }
  func.func @transform_3(%arg0: i32) -> (i32, i32) {
    %c0_i32 = arith.constant 0 : i32
    %c0_i32_0 = arith.constant 0 : i32
    %c0_i32_1 = arith.constant 0 : i32
    return %c0_i32, %c0_i32_0 : i32, i32
  }
  func.func @transform_4(%arg0: i32) -> (i32, i32) {
    %c0_i32 = arith.constant 0 : i32
    %c0_i32_0 = arith.constant 0 : i32
    %c0_i32_1 = arith.constant 0 : i32
    return %c0_i32, %c0_i32_0 : i32, i32
  }
  func.func @transform_5(%arg0: i32) -> (i32, i32) {
    %c0_i32 = arith.constant 0 : i32
    %c0_i32_0 = arith.constant 0 : i32
    return %arg0, %c0_i32 : i32, i32
  }
}

</mosaic_0001>

<llo_original>
// kernel: tpu_custom_call.1
$region0: #{tpu_custom_call.1}
  #allocation0 [shape = 'u32[]', space=smem, size = 0x4, offset = 0x4, fixed_abs, tag = 'smem constant byte address 0x4 - core index']
  #allocation1 [shape = 'u32[72,128]{1,0:T(1,128)}', space=vmem, size = 0x9000, scoped, tag = 'internal scratch']
  %s0 = inlined_call_operand.hbm [shape: f32[1024,256], index: 0, kind: input, shape index: {}]
  %s1 = inlined_call_operand.hbm [shape: bf16[256,1024], index: 1, kind: input, shape index: {}]
  %s2 = inlined_call_operand.hbm [shape: f32[1,1024], index: 2, kind: input, shape index: {}]
  %s3 = inlined_call_operand.hbm [shape: bf16[1024,256], index: 3, kind: input, shape index: {}]
  %s4 = inlined_call_operand.vmem [shape: f32[1,256], index: 4, kind: input, shape index: {}]
  %s5 = inlined_call_operand.hbm [shape: f32[1024,256], index: 5, kind: output, shape index: {}]
  %s6 = sld [smem:[#allocation0]]
  $region69: #{tpu_custom_call.1} parent=0
    _
  %s8 = ssub.s32 1, %s6
  %s9 = scalar_select 0, %s8, %s6
  $region1: #{tpu_custom_call.1} parent=0
    #allocation2 [shape = 'u8[524288]{0}', space=vmem, size = 0x80000, scoped, tag = 'input window, operand 0']
    #allocation3 [shape = 's32[2]{0}', space=sflag, size = 0x8, scoped, tag = 'scoped memory for tpu_custom_call.1']
    #allocation4 [shape = 's32[2]{0}', space=sflag, size = 0x8, scoped, tag = 'scoped memory for tpu_custom_call.1']
    #allocation5 [shape = 'u8[524288]{0}', space=vmem, size = 0x80000, scoped, tag = 'input window, operand 1, single buffered']
    #allocation6 [shape = 's32[1]{0}', space=sflag, size = 0x4, scoped, tag = 'scoped memory for tpu_custom_call.1']
    #allocation7 [shape = 'u8[4096]{0}', space=vmem, size = 0x1000, scoped, tag = 'input window, operand 2, single buffered']
    #allocation8 [shape = 'u8[524288]{0}', space=vmem, size = 0x80000, scoped, tag = 'input window, operand 3, single buffered']
    #allocation9 [shape = 's32[1]{0}', space=sflag, size = 0x4, scoped, tag = 'scoped memory for tpu_custom_call.1']
    #allocation10 [shape = 'u8[524288]{0}', space=vmem, size = 0x80000, scoped, tag = 'output window, operand 0']
    %10 = vsyncpa [#allocation3], 0
    %s11 = scalar_lea.sflag [#allocation3], 1
    %12 = vsyncpa %s11, 0
    %13 = vsyncpa [#allocation6], 0
    %14 = vsyncpa [#allocation9], 0
    %15 = vsyncpa [#allocation4], 0
    %s16 = scalar_lea.sflag [#allocation4], 1
    %17 = vsyncpa %s16, 0
    loop: start=0, step=1, limit=6
    $region2: #{tpu_custom_call.1} parent=1 // loop_pre_header
      _
    $region3: #{tpu_custom_call.1} parent=1 // loop_header
      %s19 = sphi 0, %s23
      %p20 = scmp.ge.s32.totalorder %s19, 6
      %s29 = sphi 0, %s31
      %s32 = sphi 0, %s29
      %s33 = sphi 0, %s32
      %s49 = sphi 0, %s33
      %s53 = sphi 0, %s53
      %s55 = sphi 0, %s53
      %s56 = sphi 0, %s55
      %s70 = sphi 0, %s56
      %s74 = sphi 0, %s74
      %s76 = sphi 0, %s74
      %s77 = sphi 0, %s76
      %s91 = sphi 0, %s77
      %s95 = sphi 0, %s95
      %s97 = sphi 0, %s95
      %s98 = sphi 0, %s97
      %s112 = sphi 0, %s98
      %s116 = sphi 0, %s116
      %s118 = sphi 0, %s116
      %s119 = sphi 0, %s118
      %s133 = sphi 0, %s119
      %s139 = sphi 0, %s141
      %s142 = sphi 0, %s139
      %s143 = sphi 0, %s142
      %s159 = sphi 0, %s143
    $region4: #{tpu_custom_call.1} parent=1 // loop_header_branch
      %22 = sbr.rel (%p20) target = $region8
    $region5: #{tpu_custom_call.1} parent=1 // loop_body
      %s24 = ssub.s32 %s19, 1
      %s25 = ssub.s32 %s19, 2
      %s26 = sadd.s32 %s19, 1
      %s27 = ssub.s32 %s19, %s26
      %p28 = scmp.eq.s32.totalorder %s27, 0
      %s30 = sadd.s32 %s29, 1
      %s31 = scalar_select %p28, %s29, %s30
      %p34 = pneg %p28
      %p35 = scmp.eq.s32.totalorder %s19, 3
      %p36 = por %p34, %p35
      %p37 = scmp.ne.s32.totalorder %s29, %s32
      %p38 = scmp.eq.s32.totalorder %s19, 0
      %p39 = por %p37, %p38
      %p40 = scmp.ne.s32.totalorder %s29, %s32
      %p41 = scmp.eq.s32.totalorder %s24, 3
      %p42 = por %p40, %p41
      %p43 = scmp.ne.s32.totalorder %s32, %s33
      %p44 = scmp.eq.s32.totalorder %s24, 0
      %p45 = por %p43, %p44
      %p46 = scmp.ne.s32.totalorder %s32, %s33
      %p47 = scmp.eq.s32.totalorder %s25, 3
      %p48 = por %p46, %p47
      %p50 = scmp.ne.s32.totalorder %s33, %s49
      %p51 = scmp.eq.s32.totalorder %s25, 0
      %p52 = por %p50, %p51
      %s54 = sadd.s32 %s53, 1
      %p57 = scmp.eq.s32.totalorder %s19, 3
      %p58 = scmp.ne.s32.totalorder %s53, %s55
      %p59 = scmp.eq.s32.totalorder %s19, 0
      %p60 = por %p58, %p59
      %p61 = scmp.ne.s32.totalorder %s53, %s55
      %p62 = scmp.eq.s32.totalorder %s24, 3
      %p63 = por %p61, %p62
      %p64 = scmp.ne.s32.totalorder %s55, %s56
      %p65 = scmp.eq.s32.totalorder %s24, 0
      %p66 = por %p64, %p65
      %p67 = scmp.ne.s32.totalorder %s55, %s56
      %p68 = scmp.eq.s32.totalorder %s25, 3
      %p69 = por %p67, %p68
      %p71 = scmp.ne.s32.totalorder %s56, %s70
      %p72 = scmp.eq.s32.totalorder %s25, 0
      %p73 = por %p71, %p72
      %s75 = sadd.s32 %s74, 1
      %p78 = scmp.eq.s32.totalorder %s19, 3
      %p79 = scmp.ne.s32.totalorder %s74, %s76
      %p80 = scmp.eq.s32.totalorder %s19, 0
      %p81 = por %p79, %p80
      %p82 = scmp.ne.s32.totalorder %s74, %s76
      %p83 = scmp.eq.s32.totalorder %s24, 3
      %p84 = por %p82, %p83
      %p85 = scmp.ne.s32.totalorder %s76, %s77
      %p86 = scmp.eq.s32.totalorder %s24, 0
      %p87 = por %p85, %p86
      %p88 = scmp.ne.s32.totalorder %s76, %s77
      %p89 = scmp.eq.s32.totalorder %s25, 3
      %p90 = por %p88, %p89
      %p92 = scmp.ne.s32.totalorder %s77, %s91
      %p93 = scmp.eq.s32.totalorder %s25, 0
      %p94 = por %p92, %p93
      %s96 = sadd.s32 %s95, 1
      %p99 = scmp.eq.s32.totalorder %s19, 3
      %p100 = scmp.ne.s32.totalorder %s95, %s97
      %p101 = scmp.eq.s32.totalorder %s19, 0
      %p102 = por %p100, %p101
      %p103 = scmp.ne.s32.totalorder %s95, %s97
      %p104 = scmp.eq.s32.totalorder %s24, 3
      %p105 = por %p103, %p104
      %p106 = scmp.ne.s32.totalorder %s97, %s98
      %p107 = scmp.eq.s32.totalorder %s24, 0
      %p108 = por %p106, %p107
      %p109 = scmp.ne.s32.totalorder %s97, %s98
      %p110 = scmp.eq.s32.totalorder %s25, 3
      %p111 = por %p109, %p110
      %p113 = scmp.ne.s32.totalorder %s98, %s112
      %p114 = scmp.eq.s32.totalorder %s25, 0
      %p115 = por %p113, %p114
      %s117 = sadd.s32 %s116, 1
      %p120 = scmp.eq.s32.totalorder %s19, 3
      %p121 = scmp.ne.s32.totalorder %s116, %s118
      %p122 = scmp.eq.s32.totalorder %s19, 0
      %p123 = por %p121, %p122
      %p124 = scmp.ne.s32.totalorder %s116, %s118
      %p125 = scmp.eq.s32.totalorder %s24, 3
      %p126 = por %p124, %p125
      %p127 = scmp.ne.s32.totalorder %s118, %s119
      %p128 = scmp.eq.s32.totalorder %s24, 0
      %p129 = por %p127, %p128
      %p130 = scmp.ne.s32.totalorder %s118, %s119
      %p131 = scmp.eq.s32.totalorder %s25, 3
      %p132 = por %p130, %p131
      %p134 = scmp.ne.s32.totalorder %s119, %s133
      %p135 = scmp.eq.s32.totalorder %s25, 0
      %p136 = por %p134, %p135
      %s137 = ssub.s32 %s19, %s26
      %p138 = scmp.eq.s32.totalorder %s137, 0
      %s140 = sadd.s32 %s139, 1
      %s141 = scalar_select %p138, %s139, %s140
      %p144 = pneg %p138
      %p145 = scmp.eq.s32.totalorder %s19, 3
      %p146 = por %p144, %p145
      %p147 = scmp.ne.s32.totalorder %s139, %s142
      %p148 = scmp.eq.s32.totalorder %s19, 0
      %p149 = por %p147, %p148
      %p150 = scmp.ne.s32.totalorder %s139, %s142
      %p151 = scmp.eq.s32.totalorder %s24, 3
      %p152 = por %p150, %p151
      %p153 = scmp.ne.s32.totalorder %s142, %s143
      %p154 = scmp.eq.s32.totalorder %s24, 0
      %p155 = por %p153, %p154
      %p156 = scmp.ne.s32.totalorder %s142, %s143
      %p157 = scmp.eq.s32.totalorder %s25, 3
      %p158 = por %p156, %p157
      %p160 = scmp.ne.s32.totalorder %s143, %s159
      %p161 = scmp.eq.s32.totalorder %s25, 0
      %p162 = por %p160, %p161
      %p163 = scmp.le.s32.totalorder 1, %s19
      %p164 = scmp.lt.s32.totalorder %s19, 5
      %p165 = pnand %p163, %p164
      %p166 = pneg %p165
      // Predicated region
      $region9: #{tpu_custom_call.1} parent=5 // pred_check
        _
      $region10: #{tpu_custom_call.1} parent=5 // pred_check_branch
        %168 = sbr.rel (%p165) target = $region12
      $region11: #{tpu_custom_call.1} parent=5 // pred_region
        %s169 = ssub.s32 %s19, 1
        // Predicated region
        $region13: #{tpu_custom_call.1} parent=11 // pred_check
          %p170 = pneg %p66
        $region14: #{tpu_custom_call.1} parent=11 // pred_check_branch
          %172 = sbr.rel (%p170) target = $region16
        $region15: #{tpu_custom_call.1} parent=11 // pred_region
          %174 = vsyncadd [#allocation6], 0
          %s175 = sshll.u32 %s1, 4
          %s176 = int_to_ptr.hbm [resolvable:$true] %s175
          %s177 = sshll.u32 [#allocation5], 4
          %s178 = int_to_ptr.vmem [resolvable:$true] %s177
          %183 = dma.hbm_to_vmem [thread:$0]  %s176, 16384, %s178, [#allocation6], 512, 512, 32
        $region16: #{tpu_custom_call.1} parent=11 // pred_fallthru
          _
        // Predicated region
        $region17: #{tpu_custom_call.1} parent=11 // pred_check
          %p184 = pneg %p87
        $region18: #{tpu_custom_call.1} parent=11 // pred_check_branch
          %186 = sbr.rel (%p184) target = $region20
        $region19: #{tpu_custom_call.1} parent=11 // pred_region
          %188 = vsyncadd [#allocation6], 0
          %s190 = sshll.u32 %s2, 4
          %s191 = int_to_ptr.hbm [resolvable:$true] %s190
          %s192 = sshll.u32 [#allocation7], 4
          %s193 = int_to_ptr.vmem [resolvable:$true] %s192
          %195 = dma.hbm_to_vmem [thread:$0]  %s191, 128, %s193, [#allocation6]
        $region20: #{tpu_custom_call.1} parent=11 // pred_fallthru
          _
        // Predicated region
        $region21: #{tpu_custom_call.1} parent=11 // pred_check
          %p196 = pneg %p108
        $region22: #{tpu_custom_call.1} parent=11 // pred_check_branch
          %198 = sbr.rel (%p196) target = $region24
        $region23: #{tpu_custom_call.1} parent=11 // pred_region
          %200 = vsyncadd [#allocation9], 0
          %s201 = sshll.u32 %s3, 4
          %s202 = int_to_ptr.hbm [resolvable:$true] %s201
          %s203 = sshll.u32 [#allocation8], 4
          %s204 = int_to_ptr.vmem [resolvable:$true] %s203
          %209 = dma.hbm_to_vmem [thread:$0]  %s202, 16384, %s204, [#allocation9], 128, 128, 8
        $region24: #{tpu_custom_call.1} parent=11 // pred_fallthru
          _
        // Predicated region
        $region25: #{tpu_custom_call.1} parent=11 // pred_check
          %p210 = pneg %p129
        $region26: #{tpu_custom_call.1} parent=11 // pred_check_branch
          %212 = sbr.rel (%p210) target = $region28
        $region27: #{tpu_custom_call.1} parent=11 // pred_region
          _
        $region28: #{tpu_custom_call.1} parent=11 // pred_fallthru
          _
      $region12: #{tpu_custom_call.1} parent=5 // pred_fallthru
        _
      %p213 = scmp.lt.s32.totalorder %s19, 4
      // Predicated region
      $region29: #{tpu_custom_call.1} parent=5 // pred_check
        %p214 = pneg %p213
      $region30: #{tpu_custom_call.1} parent=5 // pred_check_branch
        %216 = sbr.rel (%p214) target = $region32
      $region31: #{tpu_custom_call.1} parent=5 // pred_region
        // Predicated region
        $region33: #{tpu_custom_call.1} parent=31 // pred_check
          %p217 = pneg %p39
        $region34: #{tpu_custom_call.1} parent=31 // pred_check_branch
          %219 = sbr.rel (%p217) target = $region36
        $region35: #{tpu_custom_call.1} parent=31 // pred_region
          %s220 = sand.u32 %s29, 1
          %s221 = scalar_lea.sflag [#allocation3], %s220
          %s222 = sand.u32 %s29, 1
          %s223 = smul.addr %s222, 512
          %s224 = scalar_lea.vmem [#allocation2], %s223
          %s225 = smul.u32 32, %s19
          %227 = vsyncadd %s221, 0
          %s228 = smul.addr %s225, 2
          %s229 = smul.addr %s228, 8
          %s230 = scalar_lea.hbm %s0, %s229
          %s231 = sshll.u32 %s230, 4
          %s232 = int_to_ptr.hbm [resolvable:$true] %s231
          %s233 = sshll.u32 %s224, 4
          %s234 = int_to_ptr.vmem [resolvable:$true] %s233
          %239 = dma.hbm_to_vmem [thread:$0]  %s232, 8192, %s234, %s221, 256, 256, 16
        $region36: #{tpu_custom_call.1} parent=31 // pred_fallthru
          _
      $region32: #{tpu_custom_call.1} parent=5 // pred_fallthru
        _
      %p240 = scmp.le.s32.totalorder 1, %s19
      %p241 = scmp.lt.s32.totalorder %s19, 5
      %p242 = pnand %p240, %p241
      %p243 = pneg %p242
      // Predicated region
      $region37: #{tpu_custom_call.1} parent=5 // pred_check
        _
      $region38: #{tpu_custom_call.1} parent=5 // pred_check_branch
        %245 = sbr.rel (%p242) target = $region40
      $region39: #{tpu_custom_call.1} parent=5 // pred_region
        %s246 = ssub.s32 %s19, 1
        %s247 = sand.u32 %s32, 1
        %s248 = scalar_lea.sflag [#allocation3], %s247
        %s249 = sand.u32 %s32, 1
        %s250 = smul.addr %s249, 512
        %s251 = scalar_lea.vmem [#allocation2], %s250
        // Predicated region
        $region41: #{tpu_custom_call.1} parent=39 // pred_check
          %p252 = pneg %p45
        $region42: #{tpu_custom_call.1} parent=39 // pred_check_branch
          %254 = sbr.rel (%p252) target = $region44
        $region43: #{tpu_custom_call.1} parent=39 // pred_region
          %256 = dma.done %s248, 8192
        $region44: #{tpu_custom_call.1} parent=39 // pred_fallthru
          _
        // Predicated region
        $region45: #{tpu_custom_call.1} parent=39 // pred_check
          %p257 = pneg %p66
        $region46: #{tpu_custom_call.1} parent=39 // pred_check_branch
          %259 = sbr.rel (%p257) target = $region48
        $region47: #{tpu_custom_call.1} parent=39 // pred_region
          %261 = dma.done [#allocation6], 16384
        $region48: #{tpu_custom_call.1} parent=39 // pred_fallthru
          _
        // Predicated region
        $region49: #{tpu_custom_call.1} parent=39 // pred_check
          %p262 = pneg %p87
        $region50: #{tpu_custom_call.1} parent=39 // pred_check_branch
          %264 = sbr.rel (%p262) target = $region52
        $region51: #{tpu_custom_call.1} parent=39 // pred_region
          %266 = dma.done [#allocation6], 128
        $region52: #{tpu_custom_call.1} parent=39 // pred_fallthru
          _
        // Predicated region
        $region53: #{tpu_custom_call.1} parent=39 // pred_check
          %p267 = pneg %p108
        $region54: #{tpu_custom_call.1} parent=39 // pred_check_branch
          %269 = sbr.rel (%p267) target = $region56
        $region55: #{tpu_custom_call.1} parent=39 // pred_region
          %271 = dma.done [#allocation9], 16384
        $region56: #{tpu_custom_call.1} parent=39 // pred_fallthru
          _
        %s272 = sand.u32 %s32, 1
        %s273 = scalar_lea.sflag [#allocation3], %s272
        %s274 = sand.u32 %s32, 1
        %s275 = smul.addr %s274, 512
        %s276 = scalar_lea.vmem [#allocation2], %s275
        %p277 = pneg %p45
        %p278 = pneg %p42
        %p279 = pneg %p66
        %p280 = pneg %p63
        %p281 = pneg %p87
        %p282 = pneg %p84
        %p283 = pneg %p108
        %p284 = pneg %p105
        %p285 = pneg %p129
        %p286 = pneg %p126
        %p287 = pneg %p155
        %p288 = pneg %p152
        %s289 = sand.u32 %s142, 1
        %s290 = scalar_lea.sflag [#allocation4], %s289
        %s291 = sand.u32 %s142, 1
        %s292 = smul.addr %s291, 512
        %s293 = scalar_lea.vmem [#allocation10], %s292
        %s294 = smul.u32 32, %s24
        %s295 = smul.u32 32, %s24
        %v296 = vld [vmem:[%s251] sm:$0xff]
        %v297 = vld [vmem:[%s251 + $0x8] sm:$0xff]
        %v298 = vld [vmem:[%s251 + $0x10] sm:$0xff]
        %v299 = vld [vmem:[%s251 + $0x18] sm:$0xff]
        %v300 = vld [vmem:[%s251 + $0x20] sm:$0xff]
        %v301 = vld [vmem:[%s251 + $0x28] sm:$0xff]
        %v302 = vld [vmem:[%s251 + $0x30] sm:$0xff]
        %v303 = vld [vmem:[%s251 + $0x38] sm:$0xff]
        %v304 = vld [vmem:[%s251 + $0x40] sm:$0xff]
        %v305 = vld [vmem:[%s251 + $0x48] sm:$0xff]
        %v306 = vld [vmem:[%s251 + $0x50] sm:$0xff]
        %v307 = vld [vmem:[%s251 + $0x58] sm:$0xff]
        %v308 = vld [vmem:[%s251 + $0x60] sm:$0xff]
        %v309 = vld [vmem:[%s251 + $0x68] sm:$0xff]
        %v310 = vld [vmem:[%s251 + $0x70] sm:$0xff]
        %v311 = vld [vmem:[%s251 + $0x78] sm:$0xff]
        %v312 = vld [vmem:[%s251 + $0x80] sm:$0xff]
        %v313 = vld [vmem:[%s251 + $0x88] sm:$0xff]
        %v314 = vld [vmem:[%s251 + $0x90] sm:$0xff]
        %v315 = vld [vmem:[%s251 + $0x98] sm:$0xff]
        %v316 = vld [vmem:[%s251 + $0xa0] sm:$0xff]
        %v317 = vld [vmem:[%s251 + $0xa8] sm:$0xff]
        %v318 = vld [vmem:[%s251 + $0xb0] sm:$0xff]
        %v319 = vld [vmem:[%s251 + $0xb8] sm:$0xff]
        %v320 = vld [vmem:[%s251 + $0xc0] sm:$0xff]
        %v321 = vld [vmem:[%s251 + $0xc8] sm:$0xff]
        %v322 = vld [vmem:[%s251 + $0xd0] sm:$0xff]
        %v323 = vld [vmem:[%s251 + $0xd8] sm:$0xff]
        %v324 = vld [vmem:[%s251 + $0xe0] sm:$0xff]
        %v325 = vld [vmem:[%s251 + $0xe8] sm:$0xff]
        %v326 = vld [vmem:[%s251 + $0xf0] sm:$0xff]
        %v327 = vld [vmem:[%s251 + $0xf8] sm:$0xff]
        %v328 = vld [vmem:[%s251 + $0x100] sm:$0xff]
        %v329 = vld [vmem:[%s251 + $0x108] sm:$0xff]
        %v330 = vld [vmem:[%s251 + $0x110] sm:$0xff]
        %v331 = vld [vmem:[%s251 + $0x118] sm:$0xff]
        %v332 = vld [vmem:[%s251 + $0x120] sm:$0xff]
        %v333 = vld [vmem:[%s251 + $0x128] sm:$0xff]
        %v334 = vld [vmem:[%s251 + $0x130] sm:$0xff]
        %v335 = vld [vmem:[%s251 + $0x138] sm:$0xff]
        %v336 = vld [vmem:[%s251 + $0x140] sm:$0xff]
        %v337 = vld [vmem:[%s251 + $0x148] sm:$0xff]
        %v338 = vld [vmem:[%s251 + $0x150] sm:$0xff]
        %v339 = vld [vmem:[%s251 + $0x158] sm:$0xff]
        %v340 = vld [vmem:[%s251 + $0x160] sm:$0xff]
        %v341 = vld [vmem:[%s251 + $0x168] sm:$0xff]
        %v342 = vld [vmem:[%s251 + $0x170] sm:$0xff]
        %v343 = vld [vmem:[%s251 + $0x178] sm:$0xff]
        %v344 = vld [vmem:[%s251 + $0x180] sm:$0xff]
        %v345 = vld [vmem:[%s251 + $0x188] sm:$0xff]
        %v346 = vld [vmem:[%s251 + $0x190] sm:$0xff]
        %v347 = vld [vmem:[%s251 + $0x198] sm:$0xff]
        %v348 = vld [vmem:[%s251 + $0x1a0] sm:$0xff]
        %v349 = vld [vmem:[%s251 + $0x1a8] sm:$0xff]
        %v350 = vld [vmem:[%s251 + $0x1b0] sm:$0xff]
        %v351 = vld [vmem:[%s251 + $0x1b8] sm:$0xff]
        %v352 = vld [vmem:[%s251 + $0x1c0] sm:$0xff]
        %v353 = vld [vmem:[%s251 + $0x1c8] sm:$0xff]
        %v354 = vld [vmem:[%s251 + $0x1d0] sm:$0xff]
        %v355 = vld [vmem:[%s251 + $0x1d8] sm:$0xff]
        %v356 = vld [vmem:[%s251 + $0x1e0] sm:$0xff]
        %v357 = vld [vmem:[%s251 + $0x1e8] sm:$0xff]
        %v358 = vld [vmem:[%s251 + $0x1f0] sm:$0xff]
        %v359 = vld [vmem:[%s251 + $0x1f8] sm:$0xff]
        %v360 = vpack.c.bf16 %v298, %v296
        %v361 = vpack.c.bf16 %v299, %v297
        %v362 = vpack.c.bf16 %v302, %v300
        %v363 = vpack.c.bf16 %v303, %v301
        %v364 = vpack.c.bf16 %v306, %v304
        %v365 = vpack.c.bf16 %v307, %v305
        %v366 = vpack.c.bf16 %v310, %v308
        %v367 = vpack.c.bf16 %v311, %v309
        %v368 = vpack.c.bf16 %v314, %v312
        %v369 = vpack.c.bf16 %v315, %v313
        %v370 = vpack.c.bf16 %v318, %v316
        %v371 = vpack.c.bf16 %v319, %v317
        %v372 = vpack.c.bf16 %v322, %v320
        %v373 = vpack.c.bf16 %v323, %v321
        %v374 = vpack.c.bf16 %v326, %v324
        %v375 = vpack.c.bf16 %v327, %v325
        %v376 = vpack.c.bf16 %v330, %v328
        %v377 = vpack.c.bf16 %v331, %v329
        %v378 = vpack.c.bf16 %v334, %v332
        %v379 = vpack.c.bf16 %v335, %v333
        %v380 = vpack.c.bf16 %v338, %v336
        %v381 = vpack.c.bf16 %v339, %v337
        %v382 = vpack.c.bf16 %v342, %v340
        %v383 = vpack.c.bf16 %v343, %v341
        %v384 = vpack.c.bf16 %v346, %v344
        %v385 = vpack.c.bf16 %v347, %v345
        %v386 = vpack.c.bf16 %v350, %v348
        %v387 = vpack.c.bf16 %v351, %v349
        %v388 = vpack.c.bf16 %v354, %v352
        %v389 = vpack.c.bf16 %v355, %v353
        %v390 = vpack.c.bf16 %v358, %v356
        %v391 = vpack.c.bf16 %v359, %v357
        %v392 = vld [vmem:[#allocation5] sm:$0xff]
        %v393 = vld [vmem:[#allocation5 + $0x8] sm:$0xff]
        %v394 = vld [vmem:[#allocation5 + $0x10] sm:$0xff]
        %v395 = vld [vmem:[#allocation5 + $0x18] sm:$0xff]
        %v396 = vld [vmem:[#allocation5 + $0x20] sm:$0xff]
        %v397 = vld [vmem:[#allocation5 + $0x28] sm:$0xff]
        %v398 = vld [vmem:[#allocation5 + $0x30] sm:$0xff]
        %v399 = vld [vmem:[#allocation5 + $0x38] sm:$0xff]
        %v400 = vld [vmem:[#allocation5 + $0x40] sm:$0xff]
        %v401 = vld [vmem:[#allocation5 + $0x48] sm:$0xff]
        %v402 = vld [vmem:[#allocation5 + $0x50] sm:$0xff]
        %v403 = vld [vmem:[#allocation5 + $0x58] sm:$0xff]
        %v404 = vld [vmem:[#allocation5 + $0x60] sm:$0xff]
        %v405 = vld [vmem:[#allocation5 + $0x68] sm:$0xff]
        %v406 = vld [vmem:[#allocation5 + $0x70] sm:$0xff]
        %v407 = vld [vmem:[#allocation5 + $0x78] sm:$0xff]
        %v408 = vld [vmem:[#allocation5 + $0x80] sm:$0xff]
        %v409 = vld [vmem:[#allocation5 + $0x88] sm:$0xff]
        %v410 = vld [vmem:[#allocation5 + $0x90] sm:$0xff]
        %v411 = vld [vmem:[#allocation5 + $0x98] sm:$0xff]
        %v412 = vld [vmem:[#allocation5 + $0xa0] sm:$0xff]
        %v413 = vld [vmem:[#allocation5 + $0xa8] sm:$0xff]
        %v414 = vld [vmem:[#allocation5 + $0xb0] sm:$0xff]
        %v415 = vld [vmem:[#allocation5 + $0xb8] sm:$0xff]
        %v416 = vld [vmem:[#allocation5 + $0xc0] sm:$0xff]
        %v417 = vld [vmem:[#allocation5 + $0xc8] sm:$0xff]
        %v418 = vld [vmem:[#allocation5 + $0xd0] sm:$0xff]
        %v419 = vld [vmem:[#allocation5 + $0xd8] sm:$0xff]
        %v420 = vld [vmem:[#allocation5 + $0xe0] sm:$0xff]
        %v421 = vld [vmem:[#allocation5 + $0xe8] sm:$0xff]
        %v422 = vld [vmem:[#allocation5 + $0xf0] sm:$0xff]
        %v423 = vld [vmem:[#allocation5 + $0xf8] sm:$0xff]
        %v424 = vld [vmem:[#allocation5 + $0x100] sm:$0xff]
        %v425 = vld [vmem:[#allocation5 + $0x108] sm:$0xff]
        %v426 = vld [vmem:[#allocation5 + $0x110] sm:$0xff]
        %v427 = vld [vmem:[#allocation5 + $0x118] sm:$0xff]
        %v428 = vld [vmem:[#allocation5 + $0x120] sm:$0xff]
        %v429 = vld [vmem:[#allocation5 + $0x128] sm:$0xff]
        %v430 = vld [vmem:[#allocation5 + $0x130] sm:$0xff]
        %v431 = vld [vmem:[#allocation5 + $0x138] sm:$0xff]
        %v432 = vld [vmem:[#allocation5 + $0x140] sm:$0xff]
        %v433 = vld [vmem:[#allocation5 + $0x148] sm:$0xff]
        %v434 = vld [vmem:[#allocation5 + $0x150] sm:$0xff]
        %v435 = vld [vmem:[#allocation5 + $0x158] sm:$0xff]
        %v436 = vld [vmem:[#allocation5 + $0x160] sm:$0xff]
        %v437 = vld [vmem:[#allocation5 + $0x168] sm:$0xff]
        %v438 = vld [vmem:[#allocation5 + $0x170] sm:$0xff]
        %v439 = vld [vmem:[#allocation5 + $0x178] sm:$0xff]
        %v440 = vld [vmem:[#allocation5 + $0x180] sm:$0xff]
        %v441 = vld [vmem:[#allocation5 + $0x188] sm:$0xff]
        %v442 = vld [vmem:[#allocation5 + $0x190] sm:$0xff]
        %v443 = vld [vmem:[#allocation5 + $0x198] sm:$0xff]
        %v444 = vld [vmem:[#allocation5 + $0x1a0] sm:$0xff]
        %v445 = vld [vmem:[#allocation5 + $0x1a8] sm:$0xff]
        %v446 = vld [vmem:[#allocation5 + $0x1b0] sm:$0xff]
        %v447 = vld [vmem:[#allocation5 + $0x1b8] sm:$0xff]
        %v448 = vld [vmem:[#allocation5 + $0x1c0] sm:$0xff]
        %v449 = vld [vmem:[#allocation5 + $0x1c8] sm:$0xff]
        %v450 = vld [vmem:[#allocation5 + $0x1d0] sm:$0xff]
        %v451 = vld [vmem:[#allocation5 + $0x1d8] sm:$0xff]
        %v452 = vld [vmem:[#allocation5 + $0x1e0] sm:$0xff]
        %v453 = vld [vmem:[#allocation5 + $0x1e8] sm:$0xff]
        %v454 = vld [vmem:[#allocation5 + $0x1f0] sm:$0xff]
        %v455 = vld [vmem:[#allocation5 + $0x1f8] sm:$0xff]
        %v456 = vld [vmem:[#allocation5 + $0x200] sm:$0xff]
        %v457 = vld [vmem:[#allocation5 + $0x208] sm:$0xff]
        %v458 = vld [vmem:[#allocation5 + $0x210] sm:$0xff]
        %v459 = vld [vmem:[#allocation5 + $0x218] sm:$0xff]
        %v460 = vld [vmem:[#allocation5 + $0x220] sm:$0xff]
        %v461 = vld [vmem:[#allocation5 + $0x228] sm:$0xff]
        %v462 = vld [vmem:[#allocation5 + $0x230] sm:$0xff]
        %v463 = vld [vmem:[#allocation5 + $0x238] sm:$0xff]
        %v464 = vld [vmem:[#allocation5 + $0x240] sm:$0xff]
        %v465 = vld [vmem:[#allocation5 + $0x248] sm:$0xff]
        %v466 = vld [vmem:[#allocation5 + $0x250] sm:$0xff]
        %v467 = vld [vmem:[#allocation5 + $0x258] sm:$0xff]
        %v468 = vld [vmem:[#allocation5 + $0x260] sm:$0xff]
        %v469 = vld [vmem:[#allocation5 + $0x268] sm:$0xff]
        %v470 = vld [vmem:[#allocation5 + $0x270] sm:$0xff]
        %v471 = vld [vmem:[#allocation5 + $0x278] sm:$0xff]
        %v472 = vld [vmem:[#allocation5 + $0x280] sm:$0xff]
        %v473 = vld [vmem:[#allocation5 + $0x288] sm:$0xff]
        %v474 = vld [vmem:[#allocation5 + $0x290] sm:$0xff]
        %v475 = vld [vmem:[#allocation5 + $0x298] sm:$0xff]
        %v476 = vld [vmem:[#allocation5 + $0x2a0] sm:$0xff]
        %v477 = vld [vmem:[#allocation5 + $0x2a8] sm:$0xff]
        %v478 = vld [vmem:[#allocation5 + $0x2b0] sm:$0xff]
        %v479 = vld [vmem:[#allocation5 + $0x2b8] sm:$0xff]
        %v480 = vld [vmem:[#allocation5 + $0x2c0] sm:$0xff]
        %v481 = vld [vmem:[#allocation5 + $0x2c8] sm:$0xff]
        %v482 = vld [vmem:[#allocation5 + $0x2d0] sm:$0xff]
        %v483 = vld [vmem:[#allocation5 + $0x2d8] sm:$0xff]
        %v484 = vld [vmem:[#allocation5 + $0x2e0] sm:$0xff]
        %v485 = vld [vmem:[#allocation5 + $0x2e8] sm:$0xff]
        %v486 = vld [vmem:[#allocation5 + $0x2f0] sm:$0xff]
        %v487 = vld [vmem:[#allocation5 + $0x2f8] sm:$0xff]
        %v488 = vld [vmem:[#allocation5 + $0x300] sm:$0xff]
        %v489 = vld [vmem:[#allocation5 + $0x308] sm:$0xff]
        %v490 = vld [vmem:[#allocation5 + $0x310] sm:$0xff]
        %v491 = vld [vmem:[#allocation5 + $0x318] sm:$0xff]
        %v492 = vld [vmem:[#allocation5 + $0x320] sm:$0xff]
        %v493 = vld [vmem:[#allocation5 + $0x328] sm:$0xff]
        %v494 = vld [vmem:[#allocation5 + $0x330] sm:$0xff]
        %v495 = vld [vmem:[#allocation5 + $0x338] sm:$0xff]
        %v496 = vld [vmem:[#allocation5 + $0x340] sm:$0xff]
        %v497 = vld [vmem:[#allocation5 + $0x348] sm:$0xff]
        %v498 = vld [vmem:[#allocation5 + $0x350] sm:$0xff]
        %v499 = vld [vmem:[#allocation5 + $0x358] sm:$0xff]
        %v500 = vld [vmem:[#allocation5 + $0x360] sm:$0xff]
        %v501 = vld [vmem:[#allocation5 + $0x368] sm:$0xff]
        %v502 = vld [vmem:[#allocation5 + $0x370] sm:$0xff]
        %v503 = vld [vmem:[#allocation5 + $0x378] sm:$0xff]
        %v504 = vld [vmem:[#allocation5 + $0x380] sm:$0xff]
        %v505 = vld [vmem:[#allocation5 + $0x388] sm:$0xff]
        %v506 = vld [vmem:[#allocation5 + $0x390] sm:$0xff]
        %v507 = vld [vmem:[#allocation5 + $0x398] sm:$0xff]
        %v508 = vld [vmem:[#allocation5 + $0x3a0] sm:$0xff]
        %v509 = vld [vmem:[#allocation5 + $0x3a8] sm:$0xff]
        %v510 = vld [vmem:[#allocation5 + $0x3b0] sm:$0xff]
        %v511 = vld [vmem:[#allocation5 + $0x3b8] sm:$0xff]
        %v512 = vld [vmem:[#allocation5 + $0x3c0] sm:$0xff]
        %v513 = vld [vmem:[#allocation5 + $0x3c8] sm:$0xff]
        %v514 = vld [vmem:[#allocation5 + $0x3d0] sm:$0xff]
        %v515 = vld [vmem:[#allocation5 + $0x3d8] sm:$0xff]
        %v516 = vld [vmem:[#allocation5 + $0x3e0] sm:$0xff]
        %v517 = vld [vmem:[#allocation5 + $0x3e8] sm:$0xff]
        %v518 = vld [vmem:[#allocation5 + $0x3f0] sm:$0xff]
        %v519 = vld [vmem:[#allocation5 + $0x3f8] sm:$0xff]
        %v520 = vld [vmem:[#allocation7] sm:$0xff]
        %v522 = vperm.slane %v520, 0
        %v523 = vperm.slane %v520, 1
        %v524 = vperm.slane %v520, 2
        %v525 = vperm.slane %v520, 3
        %v526 = vperm.slane %v520, 4
        %v527 = vperm.slane %v520, 5
        %v528 = vperm.slane %v520, 6
        %v529 = vperm.slane %v520, 7
        %v666 = vunpack.c.l.b16 %v392
        %v667 = vunpack.c.h.b16 %v392
        %v668 = vunpack.c.l.b16 %v393
        %v669 = vunpack.c.h.b16 %v393
        %v670 = vunpack.c.l.b16 %v394
        %v671 = vunpack.c.h.b16 %v394
        %v672 = vunpack.c.l.b16 %v395
        %v673 = vunpack.c.h.b16 %v395
        %v674 = vunpack.c.l.b16 %v396
        %v675 = vunpack.c.h.b16 %v396
        %v676 = vunpack.c.l.b16 %v397
        %v677 = vunpack.c.h.b16 %v397
        %v678 = vunpack.c.l.b16 %v398
        %v679 = vunpack.c.h.b16 %v398
        %v680 = vunpack.c.l.b16 %v399
        %v681 = vunpack.c.h.b16 %v399
        %v682 = vunpack.c.l.b16 %v400
        %v683 = vunpack.c.h.b16 %v400
        %v684 = vunpack.c.l.b16 %v401
        %v685 = vunpack.c.h.b16 %v401
        %v686 = vunpack.c.l.b16 %v402
        %v687 = vunpack.c.h.b16 %v402
        %v688 = vunpack.c.l.b16 %v403
        %v689 = vunpack.c.h.b16 %v403
        %v690 = vunpack.c.l.b16 %v404
        %v691 = vunpack.c.h.b16 %v404
        %v692 = vunpack.c.l.b16 %v405
        %v693 = vunpack.c.h.b16 %v405
        %v694 = vunpack.c.l.b16 %v406
        %v695 = vunpack.c.h.b16 %v406
        %v696 = vunpack.c.l.b16 %v407
        %v697 = vunpack.c.h.b16 %v407
        %v698 = vunpack.c.l.b16 %v408
        %v699 = vunpack.c.h.b16 %v408
        %v700 = vunpack.c.l.b16 %v409
        %v701 = vunpack.c.h.b16 %v409
        %v702 = vunpack.c.l.b16 %v410
        %v703 = vunpack.c.h.b16 %v410
        %v704 = vunpack.c.l.b16 %v411
        %v705 = vunpack.c.h.b16 %v411
        %v706 = vunpack.c.l.b16 %v412
        %v707 = vunpack.c.h.b16 %v412
        %v708 = vunpack.c.l.b16 %v413
        %v709 = vunpack.c.h.b16 %v413
        %v710 = vunpack.c.l.b16 %v414
        %v711 = vunpack.c.h.b16 %v414
        %v712 = vunpack.c.l.b16 %v415
        %v713 = vunpack.c.h.b16 %v415
        %v714 = vunpack.c.l.b16 %v416
        %v715 = vunpack.c.h.b16 %v416
        %v716 = vunpack.c.l.b16 %v417
        %v717 = vunpack.c.h.b16 %v417
        %v718 = vunpack.c.l.b16 %v418
        %v719 = vunpack.c.h.b16 %v418
        %v720 = vunpack.c.l.b16 %v419
        %v721 = vunpack.c.h.b16 %v419
        %v722 = vunpack.c.l.b16 %v420
        %v723 = vunpack.c.h.b16 %v420
        %v724 = vunpack.c.l.b16 %v421
        %v725 = vunpack.c.h.b16 %v421
        %v726 = vunpack.c.l.b16 %v422
        %v727 = vunpack.c.h.b16 %v422
        %v728 = vunpack.c.l.b16 %v423
        %v729 = vunpack.c.h.b16 %v423
        %v730 = vunpack.c.l.b16 %v424
        %v731 = vunpack.c.h.b16 %v424
        %v732 = vunpack.c.l.b16 %v425
        %v733 = vunpack.c.h.b16 %v425
        %v734 = vunpack.c.l.b16 %v426
        %v735 = vunpack.c.h.b16 %v426
        %v736 = vunpack.c.l.b16 %v427
        %v737 = vunpack.c.h.b16 %v427
        %v738 = vunpack.c.l.b16 %v428
        %v739 = vunpack.c.h.b16 %v428
        %v740 = vunpack.c.l.b16 %v429
        %v741 = vunpack.c.h.b16 %v429
        %v742 = vunpack.c.l.b16 %v430
        %v743 = vunpack.c.h.b16 %v430
        %v744 = vunpack.c.l.b16 %v431
        %v745 = vunpack.c.h.b16 %v431
        %v746 = vunpack.c.l.b16 %v432
        %v747 = vunpack.c.h.b16 %v432
        %v748 = vunpack.c.l.b16 %v433
        %v749 = vunpack.c.h.b16 %v433
        %v750 = vunpack.c.l.b16 %v434
        %v751 = vunpack.c.h.b16 %v434
        %v752 = vunpack.c.l.b16 %v435
        %v753 = vunpack.c.h.b16 %v435
        %v754 = vunpack.c.l.b16 %v436
        %v755 = vunpack.c.h.b16 %v436
        %v756 = vunpack.c.l.b16 %v437
        %v757 = vunpack.c.h.b16 %v437
        %v758 = vunpack.c.l.b16 %v438
        %v759 = vunpack.c.h.b16 %v438
        %v760 = vunpack.c.l.b16 %v439
        %v761 = vunpack.c.h.b16 %v439
        %v762 = vunpack.c.l.b16 %v440
        %v763 = vunpack.c.h.b16 %v440
        %v764 = vunpack.c.l.b16 %v441
        %v765 = vunpack.c.h.b16 %v441
        %v766 = vunpack.c.l.b16 %v442
        %v767 = vunpack.c.h.b16 %v442
        %v768 = vunpack.c.l.b16 %v443
        %v769 = vunpack.c.h.b16 %v443
        %v770 = vunpack.c.l.b16 %v444
        %v771 = vunpack.c.h.b16 %v444
        %v772 = vunpack.c.l.b16 %v445
        %v773 = vunpack.c.h.b16 %v445
        %v774 = vunpack.c.l.b16 %v446
        %v775 = vunpack.c.h.b16 %v446
        %v776 = vunpack.c.l.b16 %v447
        %v777 = vunpack.c.h.b16 %v447
        %v778 = vunpack.c.l.b16 %v448
        %v779 = vunpack.c.h.b16 %v448
        %v780 = vunpack.c.l.b16 %v449
        %v781 = vunpack.c.h.b16 %v449
        %v782 = vunpack.c.l.b16 %v450
        %v783 = vunpack.c.h.b16 %v450
        %v784 = vunpack.c.l.b16 %v451
        %v785 = vunpack.c.h.b16 %v451
        %v786 = vunpack.c.l.b16 %v452
        %v787 = vunpack.c.h.b16 %v452
        %v788 = vunpack.c.l.b16 %v453
        %v789 = vunpack.c.h.b16 %v453
        %v790 = vunpack.c.l.b16 %v454
        %v791 = vunpack.c.h.b16 %v454
        %v792 = vunpack.c.l.b16 %v455
        %v793 = vunpack.c.h.b16 %v455
        %v794 = vunpack.c.l.b16 %v456
        %v795 = vunpack.c.h.b16 %v456
        %v796 = vunpack.c.l.b16 %v457
        %v797 = vunpack.c.h.b16 %v457
        %v798 = vunpack.c.l.b16 %v458
        %v799 = vunpack.c.h.b16 %v458
        %v800 = vunpack.c.l.b16 %v459
        %v801 = vunpack.c.h.b16 %v459
        %v802 = vunpack.c.l.b16 %v460
        %v803 = vunpack.c.h.b16 %v460
        %v804 = vunpack.c.l.b16 %v461
        %v805 = vunpack.c.h.b16 %v461
        %v806 = vunpack.c.l.b16 %v462
        %v807 = vunpack.c.h.b16 %v462
        %v808 = vunpack.c.l.b16 %v463
        %v809 = vunpack.c.h.b16 %v463
        %v810 = vunpack.c.l.b16 %v464
        %v811 = vunpack.c.h.b16 %v464
        %v812 = vunpack.c.l.b16 %v465
        %v813 = vunpack.c.h.b16 %v465
        %v814 = vunpack.c.l.b16 %v466
        %v815 = vunpack.c.h.b16 %v466
        %v816 = vunpack.c.l.b16 %v467
        %v817 = vunpack.c.h.b16 %v467
        %v818 = vunpack.c.l.b16 %v468
        %v819 = vunpack.c.h.b16 %v468
        %v820 = vunpack.c.l.b16 %v469
        %v821 = vunpack.c.h.b16 %v469
        %v822 = vunpack.c.l.b16 %v470
        %v823 = vunpack.c.h.b16 %v470
        %v824 = vunpack.c.l.b16 %v471
        %v825 = vunpack.c.h.b16 %v471
        %v826 = vunpack.c.l.b16 %v472
        %v827 = vunpack.c.h.b16 %v472
        %v828 = vunpack.c.l.b16 %v473
        %v829 = vunpack.c.h.b16 %v473
        %v830 = vunpack.c.l.b16 %v474
        %v831 = vunpack.c.h.b16 %v474
        %v832 = vunpack.c.l.b16 %v475
        %v833 = vunpack.c.h.b16 %v475
        %v834 = vunpack.c.l.b16 %v476
        %v835 = vunpack.c.h.b16 %v476
        %v836 = vunpack.c.l.b16 %v477
        %v837 = vunpack.c.h.b16 %v477
        %v838 = vunpack.c.l.b16 %v478
        %v839 = vunpack.c.h.b16 %v478
        %v840 = vunpack.c.l.b16 %v479
        %v841 = vunpack.c.h.b16 %v479
        %v842 = vunpack.c.l.b16 %v480
        %v843 = vunpack.c.h.b16 %v480
        %v844 = vunpack.c.l.b16 %v481
        %v845 = vunpack.c.h.b16 %v481
        %v846 = vunpack.c.l.b16 %v482
        %v847 = vunpack.c.h.b16 %v482
        %v848 = vunpack.c.l.b16 %v483
        %v849 = vunpack.c.h.b16 %v483
        %v850 = vunpack.c.l.b16 %v484
        %v851 = vunpack.c.h.b16 %v484
        %v852 = vunpack.c.l.b16 %v485
        %v853 = vunpack.c.h.b16 %v485
        %v854 = vunpack.c.l.b16 %v486
        %v855 = vunpack.c.h.b16 %v486
        %v856 = vunpack.c.l.b16 %v487
        %v857 = vunpack.c.h.b16 %v487
        %v858 = vunpack.c.l.b16 %v488
        %v859 = vunpack.c.h.b16 %v488
        %v860 = vunpack.c.l.b16 %v489
        %v861 = vunpack.c.h.b16 %v489
        %v862 = vunpack.c.l.b16 %v490
        %v863 = vunpack.c.h.b16 %v490
        %v864 = vunpack.c.l.b16 %v491
        %v865 = vunpack.c.h.b16 %v491
        %v866 = vunpack.c.l.b16 %v492
        %v867 = vunpack.c.h.b16 %v492
        %v868 = vunpack.c.l.b16 %v493
        %v869 = vunpack.c.h.b16 %v493
        %v870 = vunpack.c.l.b16 %v494
        %v871 = vunpack.c.h.b16 %v494
        %v872 = vunpack.c.l.b16 %v495
        %v873 = vunpack.c.h.b16 %v495
        %v874 = vunpack.c.l.b16 %v496
        %v875 = vunpack.c.h.b16 %v496
        %v876 = vunpack.c.l.b16 %v497
        %v877 = vunpack.c.h.b16 %v497
        %v878 = vunpack.c.l.b16 %v498
        %v879 = vunpack.c.h.b16 %v498
        %v880 = vunpack.c.l.b16 %v499
        %v881 = vunpack.c.h.b16 %v499
        %v882 = vunpack.c.l.b16 %v500
        %v883 = vunpack.c.h.b16 %v500
        %v884 = vunpack.c.l.b16 %v501
        %v885 = vunpack.c.h.b16 %v501
        %v886 = vunpack.c.l.b16 %v502
        %v887 = vunpack.c.h.b16 %v502
        %v888 = vunpack.c.l.b16 %v503
        %v889 = vunpack.c.h.b16 %v503
        %v890 = vunpack.c.l.b16 %v504
        %v891 = vunpack.c.h.b16 %v504
        %v892 = vunpack.c.l.b16 %v505
        %v893 = vunpack.c.h.b16 %v505
        %v894 = vunpack.c.l.b16 %v506
        %v895 = vunpack.c.h.b16 %v506
        %v896 = vunpack.c.l.b16 %v507
        %v897 = vunpack.c.h.b16 %v507
        %v898 = vunpack.c.l.b16 %v508
        %v899 = vunpack.c.h.b16 %v508
        %v900 = vunpack.c.l.b16 %v509
        %v901 = vunpack.c.h.b16 %v509
        %v902 = vunpack.c.l.b16 %v510
        %v903 = vunpack.c.h.b16 %v510
        %v904 = vunpack.c.l.b16 %v511
        %v905 = vunpack.c.h.b16 %v511
        %v906 = vunpack.c.l.b16 %v512
        %v907 = vunpack.c.h.b16 %v512
        %v908 = vunpack.c.l.b16 %v513
        %v909 = vunpack.c.h.b16 %v513
        %v910 = vunpack.c.l.b16 %v514
        %v911 = vunpack.c.h.b16 %v514
        %v912 = vunpack.c.l.b16 %v515
        %v913 = vunpack.c.h.b16 %v515
        %v914 = vunpack.c.l.b16 %v516
        %v915 = vunpack.c.h.b16 %v516
        %v916 = vunpack.c.l.b16 %v517
        %v917 = vunpack.c.h.b16 %v517
        %v918 = vunpack.c.l.b16 %v518
        %v919 = vunpack.c.h.b16 %v518
        %v920 = vunpack.c.l.b16 %v519
        %v921 = vunpack.c.h.b16 %v519
        %v922 = vpack.c.b16 %v674, %v666
        %v923 = vpack.c.b16 %v675, %v667
        %v924 = vpack.c.b16 %v676, %v668
        %v925 = vpack.c.b16 %v677, %v669
        %v926 = vpack.c.b16 %v678, %v670
        %v927 = vpack.c.b16 %v679, %v671
        %v928 = vpack.c.b16 %v680, %v672
        %v929 = vpack.c.b16 %v681, %v673
        %v930 = vpack.c.b16 %v690, %v682
        %v931 = vpack.c.b16 %v691, %v683
        %v932 = vpack.c.b16 %v692, %v684
        %v933 = vpack.c.b16 %v693, %v685
        %v934 = vpack.c.b16 %v694, %v686
        %v935 = vpack.c.b16 %v695, %v687
        %v936 = vpack.c.b16 %v696, %v688
        %v937 = vpack.c.b16 %v697, %v689
        %v938 = vpack.c.b16 %v706, %v698
        %v939 = vpack.c.b16 %v707, %v699
        %v940 = vpack.c.b16 %v708, %v700
        %v941 = vpack.c.b16 %v709, %v701
        %v942 = vpack.c.b16 %v710, %v702
        %v943 = vpack.c.b16 %v711, %v703
        %v944 = vpack.c.b16 %v712, %v704
        %v945 = vpack.c.b16 %v713, %v705
        %v946 = vpack.c.b16 %v722, %v714
        %v947 = vpack.c.b16 %v723, %v715
        %v948 = vpack.c.b16 %v724, %v716
        %v949 = vpack.c.b16 %v725, %v717
        %v950 = vpack.c.b16 %v726, %v718
        %v951 = vpack.c.b16 %v727, %v719
        %v952 = vpack.c.b16 %v728, %v720
        %v953 = vpack.c.b16 %v729, %v721
        %v954 = vpack.c.b16 %v738, %v730
        %v955 = vpack.c.b16 %v739, %v731
        %v956 = vpack.c.b16 %v740, %v732
        %v957 = vpack.c.b16 %v741, %v733
        %v958 = vpack.c.b16 %v742, %v734
        %v959 = vpack.c.b16 %v743, %v735
        %v960 = vpack.c.b16 %v744, %v736
        %v961 = vpack.c.b16 %v745, %v737
        %v962 = vpack.c.b16 %v754, %v746
        %v963 = vpack.c.b16 %v755, %v747
        %v964 = vpack.c.b16 %v756, %v748
        %v965 = vpack.c.b16 %v757, %v749
        %v966 = vpack.c.b16 %v758, %v750
        %v967 = vpack.c.b16 %v759, %v751
        %v968 = vpack.c.b16 %v760, %v752
        %v969 = vpack.c.b16 %v761, %v753
        %v970 = vpack.c.b16 %v770, %v762
        %v971 = vpack.c.b16 %v771, %v763
        %v972 = vpack.c.b16 %v772, %v764
        %v973 = vpack.c.b16 %v773, %v765
        %v974 = vpack.c.b16 %v774, %v766
        %v975 = vpack.c.b16 %v775, %v767
        %v976 = vpack.c.b16 %v776, %v768
        %v977 = vpack.c.b16 %v777, %v769
        %v978 = vpack.c.b16 %v786, %v778
        %v979 = vpack.c.b16 %v787, %v779
        %v980 = vpack.c.b16 %v788, %v780
        %v981 = vpack.c.b16 %v789, %v781
        %v982 = vpack.c.b16 %v790, %v782
        %v983 = vpack.c.b16 %v791, %v783
        %v984 = vpack.c.b16 %v792, %v784
        %v985 = vpack.c.b16 %v793, %v785
        %v986 = vpack.c.b16 %v802, %v794
        %v987 = vpack.c.b16 %v803, %v795
        %v988 = vpack.c.b16 %v804, %v796
        %v989 = vpack.c.b16 %v805, %v797
        %v990 = vpack.c.b16 %v806, %v798
        %v991 = vpack.c.b16 %v807, %v799
        %v992 = vpack.c.b16 %v808, %v800
        %v993 = vpack.c.b16 %v809, %v801
        %v994 = vpack.c.b16 %v818, %v810
        %v995 = vpack.c.b16 %v819, %v811
        %v996 = vpack.c.b16 %v820, %v812
        %v997 = vpack.c.b16 %v821, %v813
        %v998 = vpack.c.b16 %v822, %v814
        %v999 = vpack.c.b16 %v823, %v815
        %v1000 = vpack.c.b16 %v824, %v816
        %v1001 = vpack.c.b16 %v825, %v817
        %v1002 = vpack.c.b16 %v834, %v826
        %v1003 = vpack.c.b16 %v835, %v827
        %v1004 = vpack.c.b16 %v836, %v828
        %v1005 = vpack.c.b16 %v837, %v829
        %v1006 = vpack.c.b16 %v838, %v830
        %v1007 = vpack.c.b16 %v839, %v831
        %v1008 = vpack.c.b16 %v840, %v832
        %v1009 = vpack.c.b16 %v841, %v833
        %v1010 = vpack.c.b16 %v850, %v842
        %v1011 = vpack.c.b16 %v851, %v843
        %v1012 = vpack.c.b16 %v852, %v844
        %v1013 = vpack.c.b16 %v853, %v845
        %v1014 = vpack.c.b16 %v854, %v846
        %v1015 = vpack.c.b16 %v855, %v847
        %v1016 = vpack.c.b16 %v856, %v848
        %v1017 = vpack.c.b16 %v857, %v849
        %v1018 = vpack.c.b16 %v866, %v858
        %v1019 = vpack.c.b16 %v867, %v859
        %v1020 = vpack.c.b16 %v868, %v860
        %v1021 = vpack.c.b16 %v869, %v861
        %v1022 = vpack.c.b16 %v870, %v862
        %v1023 = vpack.c.b16 %v871, %v863
        %v1024 = vpack.c.b16 %v872, %v864
        %v1025 = vpack.c.b16 %v873, %v865
        %v1026 = vpack.c.b16 %v882, %v874
        %v1027 = vpack.c.b16 %v883, %v875
        %v1028 = vpack.c.b16 %v884, %v876
        %v1029 = vpack.c.b16 %v885, %v877
        %v1030 = vpack.c.b16 %v886, %v878
        %v1031 = vpack.c.b16 %v887, %v879
        %v1032 = vpack.c.b16 %v888, %v880
        %v1033 = vpack.c.b16 %v889, %v881
        %v1034 = vpack.c.b16 %v898, %v890
        %v1035 = vpack.c.b16 %v899, %v891
        %v1036 = vpack.c.b16 %v900, %v892
        %v1037 = vpack.c.b16 %v901, %v893
        %v1038 = vpack.c.b16 %v902, %v894
        %v1039 = vpack.c.b16 %v903, %v895
        %v1040 = vpack.c.b16 %v904, %v896
        %v1041 = vpack.c.b16 %v905, %v897
        %v1042 = vpack.c.b16 %v914, %v906
        %v1043 = vpack.c.b16 %v915, %v907
        %v1044 = vpack.c.b16 %v916, %v908
        %v1045 = vpack.c.b16 %v917, %v909
        %v1046 = vpack.c.b16 %v918, %v910
        %v1047 = vpack.c.b16 %v919, %v911
        %v1048 = vpack.c.b16 %v920, %v912
        %v1049 = vpack.c.b16 %v921, %v913
        %1178 = vmatpush.bf16.msra.mxu0 %v978
        %1179 = vmatpush.bf16.msra.mxu0 %v970
        %1180 = vmatpush.bf16.msra.mxu0 %v962
        %1181 = vmatpush.bf16.msra.mxu0 %v954
        %1182 = vmatpush.bf16.msra.mxu0 %v946
        %1183 = vmatpush.bf16.msra.mxu0 %v938
        %1184 = vmatpush.bf16.msra.mxu0 %v930
        %1185 = vmatpush.bf16.msra.mxu0 %v922
        %1186 = vmatmul.bf16.gmra.mxu0 %v360
        %v1187 = vpop.f32.mrf.mxu0
        %v1188 = vadd.f32 %v522, %v1187
        %v1189 = vpop.f32.mrf.mxu0
        %v1190 = vadd.f32 %v522, %v1189
        %1191 = vmatmul.bf16.gmra.mxu0 %v362
        %v1192 = vpop.f32.mrf.mxu0
        %v1193 = vadd.f32 %v522, %v1192
        %v1194 = vpop.f32.mrf.mxu0
        %v1195 = vadd.f32 %v522, %v1194
        %1196 = vmatmul.bf16.gmra.mxu0 %v364
        %v1197 = vpop.f32.mrf.mxu0
        %v1198 = vadd.f32 %v522, %v1197
        %v1199 = vpop.f32.mrf.mxu0
        %v1200 = vadd.f32 %v522, %v1199
        %1201 = vmatmul.bf16.gmra.mxu0 %v366
        %v1202 = vpop.f32.mrf.mxu0
        %v1203 = vadd.f32 %v522, %v1202
        %v1204 = vpop.f32.mrf.mxu0
        %v1205 = vadd.f32 %v522, %v1204
        %1206 = vmatmul.bf16.gmra.mxu0 %v368
        %v1207 = vpop.f32.mrf.mxu0
        %v1208 = vadd.f32 %v522, %v1207
        %v1209 = vpop.f32.mrf.mxu0
        %v1210 = vadd.f32 %v522, %v1209
        %1211 = vmatmul.bf16.gmra.mxu0 %v370
        %v1212 = vpop.f32.mrf.mxu0
        %v1213 = vadd.f32 %v522, %v1212
        %v1214 = vpop.f32.mrf.mxu0
        %v1215 = vadd.f32 %v522, %v1214
        %1216 = vmatmul.bf16.gmra.mxu0 %v372
        %v1217 = vpop.f32.mrf.mxu0
        %v1218 = vadd.f32 %v522, %v1217
        %v1219 = vpop.f32.mrf.mxu0
        %v1220 = vadd.f32 %v522, %v1219
        %1221 = vmatmul.bf16.gmra.mxu0 %v374
        %v1222 = vpop.f32.mrf.mxu0
        %v1223 = vadd.f32 %v522, %v1222
        %v1224 = vpop.f32.mrf.mxu0
        %v1225 = vadd.f32 %v522, %v1224
        %1226 = vmatmul.bf16.gmra.mxu0 %v376
        %v1227 = vpop.f32.mrf.mxu0
        %v1228 = vadd.f32 %v522, %v1227
        %v1229 = vpop.f32.mrf.mxu0
        %v1230 = vadd.f32 %v522, %v1229
        %1231 = vmatmul.bf16.gmra.mxu0 %v378
        %v1232 = vpop.f32.mrf.mxu0
        %v1233 = vadd.f32 %v522, %v1232
        %v1234 = vpop.f32.mrf.mxu0
        %v1235 = vadd.f32 %v522, %v1234
        %1236 = vmatmul.bf16.gmra.mxu0 %v380
        %v1237 = vpop.f32.mrf.mxu0
        %v1238 = vadd.f32 %v522, %v1237
        %v1239 = vpop.f32.mrf.mxu0
        %v1240 = vadd.f32 %v522, %v1239
        %1241 = vmatmul.bf16.gmra.mxu0 %v382
        %v1242 = vpop.f32.mrf.mxu0
        %v1243 = vadd.f32 %v522, %v1242
        %v1244 = vpop.f32.mrf.mxu0
        %v1245 = vadd.f32 %v522, %v1244
        %1246 = vmatmul.bf16.gmra.mxu0 %v384
        %v1247 = vpop.f32.mrf.mxu0
        %v1248 = vadd.f32 %v522, %v1247
        %v1249 = vpop.f32.mrf.mxu0
        %v1250 = vadd.f32 %v522, %v1249
        %1251 = vmatmul.bf16.gmra.mxu0 %v386
        %v1252 = vpop.f32.mrf.mxu0
        %v1253 = vadd.f32 %v522, %v1252
        %v1254 = vpop.f32.mrf.mxu0
        %v1255 = vadd.f32 %v522, %v1254
        %1256 = vmatmul.bf16.gmra.mxu0 %v388
        %v1257 = vpop.f32.mrf.mxu0
        %v1258 = vadd.f32 %v522, %v1257
        %v1259 = vpop.f32.mrf.mxu0
        %v1260 = vadd.f32 %v522, %v1259
        %1261 = vmatmul.bf16.gmra.mxu0 %v390
        %v1262 = vpop.f32.mrf.mxu0
        %v1263 = vadd.f32 %v522, %v1262
        %v1264 = vpop.f32.mrf.mxu0
        %v1265 = vadd.f32 %v522, %v1264
        %1266 = vdwg.mxu0
        %1267 = vmatpush.bf16.msra.mxu0 %v1042
        %1268 = vmatpush.bf16.msra.mxu0 %v1034
        %1269 = vmatpush.bf16.msra.mxu0 %v1026
        %1270 = vmatpush.bf16.msra.mxu0 %v1018
        %1271 = vmatpush.bf16.msra.mxu0 %v1010
        %1272 = vmatpush.bf16.msra.mxu0 %v1002
        %1273 = vmatpush.bf16.msra.mxu0 %v994
        %1274 = vmatpush.bf16.msra.mxu0 %v986
        %1275 = vmatmul.bf16.gmra.mxu0 %v361
        %v1276 = vpop.f32.mrf.mxu0
        %v1277 = vadd.f32 %v1188, %v1276
        %v1278 = vpop.f32.mrf.mxu0
        %v1279 = vadd.f32 %v1190, %v1278
        %1280 = vmatmul.bf16.gmra.mxu0 %v363
        %v1281 = vpop.f32.mrf.mxu0
        %v1282 = vadd.f32 %v1193, %v1281
        %v1283 = vpop.f32.mrf.mxu0
        %v1284 = vadd.f32 %v1195, %v1283
        %1285 = vmatmul.bf16.gmra.mxu0 %v365
        %v1286 = vpop.f32.mrf.mxu0
        %v1287 = vadd.f32 %v1198, %v1286
        %v1288 = vpop.f32.mrf.mxu0
        %v1289 = vadd.f32 %v1200, %v1288
        %1290 = vmatmul.bf16.gmra.mxu0 %v367
        %v1291 = vpop.f32.mrf.mxu0
        %v1292 = vadd.f32 %v1203, %v1291
        %v1293 = vpop.f32.mrf.mxu0
        %v1294 = vadd.f32 %v1205, %v1293
        %1295 = vmatmul.bf16.gmra.mxu0 %v369
        %v1296 = vpop.f32.mrf.mxu0
        %v1297 = vadd.f32 %v1208, %v1296
        %v1298 = vpop.f32.mrf.mxu0
        %v1299 = vadd.f32 %v1210, %v1298
        %1300 = vmatmul.bf16.gmra.mxu0 %v371
        %v1301 = vpop.f32.mrf.mxu0
        %v1302 = vadd.f32 %v1213, %v1301
        %v1303 = vpop.f32.mrf.mxu0
        %v1304 = vadd.f32 %v1215, %v1303
        %1305 = vmatmul.bf16.gmra.mxu0 %v373
        %v1306 = vpop.f32.mrf.mxu0
        %v1307 = vadd.f32 %v1218, %v1306
        %v1308 = vpop.f32.mrf.mxu0
        %v1309 = vadd.f32 %v1220, %v1308
        %1310 = vmatmul.bf16.gmra.mxu0 %v375
        %v1311 = vpop.f32.mrf.mxu0
        %v1312 = vadd.f32 %v1223, %v1311
        %v1313 = vpop.f32.mrf.mxu0
        %v1314 = vadd.f32 %v1225, %v1313
        %1315 = vmatmul.bf16.gmra.mxu0 %v377
        %v1316 = vpop.f32.mrf.mxu0
        %v1317 = vadd.f32 %v1228, %v1316
        %v1318 = vpop.f32.mrf.mxu0
        %v1319 = vadd.f32 %v1230, %v1318
        %1320 = vmatmul.bf16.gmra.mxu0 %v379
        %v1321 = vpop.f32.mrf.mxu0
        %v1322 = vadd.f32 %v1233, %v1321
        %v1323 = vpop.f32.mrf.mxu0
        %v1324 = vadd.f32 %v1235, %v1323
        %1325 = vmatmul.bf16.gmra.mxu0 %v381
        %v1326 = vpop.f32.mrf.mxu0
        %v1327 = vadd.f32 %v1238, %v1326
        %v1328 = vpop.f32.mrf.mxu0
        %v1329 = vadd.f32 %v1240, %v1328
        %1330 = vmatmul.bf16.gmra.mxu0 %v383
        %v1331 = vpop.f32.mrf.mxu0
        %v1332 = vadd.f32 %v1243, %v1331
        %v1333 = vpop.f32.mrf.mxu0
        %v1334 = vadd.f32 %v1245, %v1333
        %1335 = vmatmul.bf16.gmra.mxu0 %v385
        %v1336 = vpop.f32.mrf.mxu0
        %v1337 = vadd.f32 %v1248, %v1336
        %v1338 = vpop.f32.mrf.mxu0
        %v1339 = vadd.f32 %v1250, %v1338
        %1340 = vmatmul.bf16.gmra.mxu0 %v387
        %v1341 = vpop.f32.mrf.mxu0
        %v1342 = vadd.f32 %v1253, %v1341
        %v1343 = vpop.f32.mrf.mxu0
        %v1344 = vadd.f32 %v1255, %v1343
        %1345 = vmatmul.bf16.gmra.mxu0 %v389
        %v1346 = vpop.f32.mrf.mxu0
        %v1347 = vadd.f32 %v1258, %v1346
        %v1348 = vpop.f32.mrf.mxu0
        %v1349 = vadd.f32 %v1260, %v1348
        %1350 = vmatmul.bf16.gmra.mxu0 %v391
        %v1351 = vpop.f32.mrf.mxu0
        %v1352 = vadd.f32 %v1263, %v1351
        %v1353 = vpop.f32.mrf.mxu0
        %v1354 = vadd.f32 %v1265, %v1353
        %1355 = vdwg.mxu0
        %1356 = vmatpush.bf16.msra.mxu0 %v979
        %1357 = vmatpush.bf16.msra.mxu0 %v971
        %1358 = vmatpush.bf16.msra.mxu0 %v963
        %1359 = vmatpush.bf16.msra.mxu0 %v955
        %1360 = vmatpush.bf16.msra.mxu0 %v947
        %1361 = vmatpush.bf16.msra.mxu0 %v939
        %1362 = vmatpush.bf16.msra.mxu0 %v931
        %1363 = vmatpush.bf16.msra.mxu0 %v923
        %1364 = vmatmul.bf16.gmra.mxu0 %v360
        %v1365 = vpop.f32.mrf.mxu0
        %v1366 = vadd.f32 %v523, %v1365
        %v1367 = vpop.f32.mrf.mxu0
        %v1368 = vadd.f32 %v523, %v1367
        %1369 = vmatmul.bf16.gmra.mxu0 %v362
        %v1370 = vpop.f32.mrf.mxu0
        %v1371 = vadd.f32 %v523, %v1370
        %v1372 = vpop.f32.mrf.mxu0
        %v1373 = vadd.f32 %v523, %v1372
        %1374 = vmatmul.bf16.gmra.mxu0 %v364
        %v1375 = vpop.f32.mrf.mxu0
        %v1376 = vadd.f32 %v523, %v1375
        %v1377 = vpop.f32.mrf.mxu0
        %v1378 = vadd.f32 %v523, %v1377
        %1379 = vmatmul.bf16.gmra.mxu0 %v366
        %v1380 = vpop.f32.mrf.mxu0
        %v1381 = vadd.f32 %v523, %v1380
        %v1382 = vpop.f32.mrf.mxu0
        %v1383 = vadd.f32 %v523, %v1382
        %1384 = vmatmul.bf16.gmra.mxu0 %v368
        %v1385 = vpop.f32.mrf.mxu0
        %v1386 = vadd.f32 %v523, %v1385
        %v1387 = vpop.f32.mrf.mxu0
        %v1388 = vadd.f32 %v523, %v1387
        %1389 = vmatmul.bf16.gmra.mxu0 %v370
        %v1390 = vpop.f32.mrf.mxu0
        %v1391 = vadd.f32 %v523, %v1390
        %v1392 = vpop.f32.mrf.mxu0
        %v1393 = vadd.f32 %v523, %v1392
        %1394 = vmatmul.bf16.gmra.mxu0 %v372
        %v1395 = vpop.f32.mrf.mxu0
        %v1396 = vadd.f32 %v523, %v1395
        %v1397 = vpop.f32.mrf.mxu0
        %v1398 = vadd.f32 %v523, %v1397
        %1399 = vmatmul.bf16.gmra.mxu0 %v374
        %v1400 = vpop.f32.mrf.mxu0
        %v1401 = vadd.f32 %v523, %v1400
        %v1402 = vpop.f32.mrf.mxu0
        %v1403 = vadd.f32 %v523, %v1402
        %1404 = vmatmul.bf16.gmra.mxu0 %v376
        %v1405 = vpop.f32.mrf.mxu0
        %v1406 = vadd.f32 %v523, %v1405
        %v1407 = vpop.f32.mrf.mxu0
        %v1408 = vadd.f32 %v523, %v1407
        %1409 = vmatmul.bf16.gmra.mxu0 %v378
        %v1410 = vpop.f32.mrf.mxu0
        %v1411 = vadd.f32 %v523, %v1410
        %v1412 = vpop.f32.mrf.mxu0
        %v1413 = vadd.f32 %v523, %v1412
        %1414 = vmatmul.bf16.gmra.mxu0 %v380
        %v1415 = vpop.f32.mrf.mxu0
        %v1416 = vadd.f32 %v523, %v1415
        %v1417 = vpop.f32.mrf.mxu0
        %v1418 = vadd.f32 %v523, %v1417
        %1419 = vmatmul.bf16.gmra.mxu0 %v382
        %v1420 = vpop.f32.mrf.mxu0
        %v1421 = vadd.f32 %v523, %v1420
        %v1422 = vpop.f32.mrf.mxu0
        %v1423 = vadd.f32 %v523, %v1422
        %1424 = vmatmul.bf16.gmra.mxu0 %v384
        %v1425 = vpop.f32.mrf.mxu0
        %v1426 = vadd.f32 %v523, %v1425
        %v1427 = vpop.f32.mrf.mxu0
        %v1428 = vadd.f32 %v523, %v1427
        %1429 = vmatmul.bf16.gmra.mxu0 %v386
        %v1430 = vpop.f32.mrf.mxu0
        %v1431 = vadd.f32 %v523, %v1430
        %v1432 = vpop.f32.mrf.mxu0
        %v1433 = vadd.f32 %v523, %v1432
        %1434 = vmatmul.bf16.gmra.mxu0 %v388
        %v1435 = vpop.f32.mrf.mxu0
        %v1436 = vadd.f32 %v523, %v1435
        %v1437 = vpop.f32.mrf.mxu0
        %v1438 = vadd.f32 %v523, %v1437
        %1439 = vmatmul.bf16.gmra.mxu0 %v390
        %v1440 = vpop.f32.mrf.mxu0
        %v1441 = vadd.f32 %v523, %v1440
        %v1442 = vpop.f32.mrf.mxu0
        %v1443 = vadd.f32 %v523, %v1442
        %1444 = vdwg.mxu0
        %1445 = vmatpush.bf16.msra.mxu0 %v1043
        %1446 = vmatpush.bf16.msra.mxu0 %v1035
        %1447 = vmatpush.bf16.msra.mxu0 %v1027
        %1448 = vmatpush.bf16.msra.mxu0 %v1019
        %1449 = vmatpush.bf16.msra.mxu0 %v1011
        %1450 = vmatpush.bf16.msra.mxu0 %v1003
        %1451 = vmatpush.bf16.msra.mxu0 %v995
        %1452 = vmatpush.bf16.msra.mxu0 %v987
        %1453 = vmatmul.bf16.gmra.mxu0 %v361
        %v1454 = vpop.f32.mrf.mxu0
        %v1455 = vadd.f32 %v1366, %v1454
        %v1456 = vpop.f32.mrf.mxu0
        %v1457 = vadd.f32 %v1368, %v1456
        %1458 = vmatmul.bf16.gmra.mxu0 %v363
        %v1459 = vpop.f32.mrf.mxu0
        %v1460 = vadd.f32 %v1371, %v1459
        %v1461 = vpop.f32.mrf.mxu0
        %v1462 = vadd.f32 %v1373, %v1461
        %1463 = vmatmul.bf16.gmra.mxu0 %v365
        %v1464 = vpop.f32.mrf.mxu0
        %v1465 = vadd.f32 %v1376, %v1464
        %v1466 = vpop.f32.mrf.mxu0
        %v1467 = vadd.f32 %v1378, %v1466
        %1468 = vmatmul.bf16.gmra.mxu0 %v367
        %v1469 = vpop.f32.mrf.mxu0
        %v1470 = vadd.f32 %v1381, %v1469
        %v1471 = vpop.f32.mrf.mxu0
        %v1472 = vadd.f32 %v1383, %v1471
        %1473 = vmatmul.bf16.gmra.mxu0 %v369
        %v1474 = vpop.f32.mrf.mxu0
        %v1475 = vadd.f32 %v1386, %v1474
        %v1476 = vpop.f32.mrf.mxu0
        %v1477 = vadd.f32 %v1388, %v1476
        %1478 = vmatmul.bf16.gmra.mxu0 %v371
        %v1479 = vpop.f32.mrf.mxu0
        %v1480 = vadd.f32 %v1391, %v1479
        %v1481 = vpop.f32.mrf.mxu0
        %v1482 = vadd.f32 %v1393, %v1481
        %1483 = vmatmul.bf16.gmra.mxu0 %v373
        %v1484 = vpop.f32.mrf.mxu0
        %v1485 = vadd.f32 %v1396, %v1484
        %v1486 = vpop.f32.mrf.mxu0
        %v1487 = vadd.f32 %v1398, %v1486
        %1488 = vmatmul.bf16.gmra.mxu0 %v375
        %v1489 = vpop.f32.mrf.mxu0
        %v1490 = vadd.f32 %v1401, %v1489
        %v1491 = vpop.f32.mrf.mxu0
        %v1492 = vadd.f32 %v1403, %v1491
        %1493 = vmatmul.bf16.gmra.mxu0 %v377
        %v1494 = vpop.f32.mrf.mxu0
        %v1495 = vadd.f32 %v1406, %v1494
        %v1496 = vpop.f32.mrf.mxu0
        %v1497 = vadd.f32 %v1408, %v1496
        %1498 = vmatmul.bf16.gmra.mxu0 %v379
        %v1499 = vpop.f32.mrf.mxu0
        %v1500 = vadd.f32 %v1411, %v1499
        %v1501 = vpop.f32.mrf.mxu0
        %v1502 = vadd.f32 %v1413, %v1501
        %1503 = vmatmul.bf16.gmra.mxu0 %v381
        %v1504 = vpop.f32.mrf.mxu0
        %v1505 = vadd.f32 %v1416, %v1504
        %v1506 = vpop.f32.mrf.mxu0
        %v1507 = vadd.f32 %v1418, %v1506
        %1508 = vmatmul.bf16.gmra.mxu0 %v383
        %v1509 = vpop.f32.mrf.mxu0
        %v1510 = vadd.f32 %v1421, %v1509
        %v1511 = vpop.f32.mrf.mxu0
        %v1512 = vadd.f32 %v1423, %v1511
        %1513 = vmatmul.bf16.gmra.mxu0 %v385
        %v1514 = vpop.f32.mrf.mxu0
        %v1515 = vadd.f32 %v1426, %v1514
        %v1516 = vpop.f32.mrf.mxu0
        %v1517 = vadd.f32 %v1428, %v1516
        %1518 = vmatmul.bf16.gmra.mxu0 %v387
        %v1519 = vpop.f32.mrf.mxu0
        %v1520 = vadd.f32 %v1431, %v1519
        %v1521 = vpop.f32.mrf.mxu0
        %v1522 = vadd.f32 %v1433, %v1521
        %1523 = vmatmul.bf16.gmra.mxu0 %v389
        %v1524 = vpop.f32.mrf.mxu0
        %v1525 = vadd.f32 %v1436, %v1524
        %v1526 = vpop.f32.mrf.mxu0
        %v1527 = vadd.f32 %v1438, %v1526
        %1528 = vmatmul.bf16.gmra.mxu0 %v391
        %v1529 = vpop.f32.mrf.mxu0
        %v1530 = vadd.f32 %v1441, %v1529
        %v1531 = vpop.f32.mrf.mxu0
        %v1532 = vadd.f32 %v1443, %v1531
        %1533 = vdwg.mxu0
        %1534 = vmatpush.bf16.msra.mxu0 %v980
        %1535 = vmatpush.bf16.msra.mxu0 %v972
        %1536 = vmatpush.bf16.msra.mxu0 %v964
        %1537 = vmatpush.bf16.msra.mxu0 %v956
        %1538 = vmatpush.bf16.msra.mxu0 %v948
        %1539 = vmatpush.bf16.msra.mxu0 %v940
        %1540 = vmatpush.bf16.msra.mxu0 %v932
        %1541 = vmatpush.bf16.msra.mxu0 %v924
        %1542 = vmatmul.bf16.gmra.mxu0 %v360
        %v1543 = vpop.f32.mrf.mxu0
        %v1544 = vadd.f32 %v524, %v1543
        %v1545 = vpop.f32.mrf.mxu0
        %v1546 = vadd.f32 %v524, %v1545
        %1547 = vmatmul.bf16.gmra.mxu0 %v362
        %v1548 = vpop.f32.mrf.mxu0
        %v1549 = vadd.f32 %v524, %v1548
        %v1550 = vpop.f32.mrf.mxu0
        %v1551 = vadd.f32 %v524, %v1550
        %1552 = vmatmul.bf16.gmra.mxu0 %v364
        %v1553 = vpop.f32.mrf.mxu0
        %v1554 = vadd.f32 %v524, %v1553
        %v1555 = vpop.f32.mrf.mxu0
        %v1556 = vadd.f32 %v524, %v1555
        %1557 = vmatmul.bf16.gmra.mxu0 %v366
        %v1558 = vpop.f32.mrf.mxu0
        %v1559 = vadd.f32 %v524, %v1558
        %v1560 = vpop.f32.mrf.mxu0
        %v1561 = vadd.f32 %v524, %v1560
        %1562 = vmatmul.bf16.gmra.mxu0 %v368
        %v1563 = vpop.f32.mrf.mxu0
        %v1564 = vadd.f32 %v524, %v1563
        %v1565 = vpop.f32.mrf.mxu0
        %v1566 = vadd.f32 %v524, %v1565
        %1567 = vmatmul.bf16.gmra.mxu0 %v370
        %v1568 = vpop.f32.mrf.mxu0
        %v1569 = vadd.f32 %v524, %v1568
        %v1570 = vpop.f32.mrf.mxu0
        %v1571 = vadd.f32 %v524, %v1570
        %1572 = vmatmul.bf16.gmra.mxu0 %v372
        %v1573 = vpop.f32.mrf.mxu0
        %v1574 = vadd.f32 %v524, %v1573
        %v1575 = vpop.f32.mrf.mxu0
        %v1576 = vadd.f32 %v524, %v1575
        %1577 = vmatmul.bf16.gmra.mxu0 %v374
        %v1578 = vpop.f32.mrf.mxu0
        %v1579 = vadd.f32 %v524, %v1578
        %v1580 = vpop.f32.mrf.mxu0
        %v1581 = vadd.f32 %v524, %v1580
        %1582 = vmatmul.bf16.gmra.mxu0 %v376
        %v1583 = vpop.f32.mrf.mxu0
        %v1584 = vadd.f32 %v524, %v1583
        %v1585 = vpop.f32.mrf.mxu0
        %v1586 = vadd.f32 %v524, %v1585
        %1587 = vmatmul.bf16.gmra.mxu0 %v378
        %v1588 = vpop.f32.mrf.mxu0
        %v1589 = vadd.f32 %v524, %v1588
        %v1590 = vpop.f32.mrf.mxu0
        %v1591 = vadd.f32 %v524, %v1590
        %1592 = vmatmul.bf16.gmra.mxu0 %v380
        %v1593 = vpop.f32.mrf.mxu0
        %v1594 = vadd.f32 %v524, %v1593
        %v1595 = vpop.f32.mrf.mxu0
        %v1596 = vadd.f32 %v524, %v1595
        %1597 = vmatmul.bf16.gmra.mxu0 %v382
        %v1598 = vpop.f32.mrf.mxu0
        %v1599 = vadd.f32 %v524, %v1598
        %v1600 = vpop.f32.mrf.mxu0
        %v1601 = vadd.f32 %v524, %v1600
        %1602 = vmatmul.bf16.gmra.mxu0 %v384
        %v1603 = vpop.f32.mrf.mxu0
        %v1604 = vadd.f32 %v524, %v1603
        %v1605 = vpop.f32.mrf.mxu0
        %v1606 = vadd.f32 %v524, %v1605
        %1607 = vmatmul.bf16.gmra.mxu0 %v386
        %v1608 = vpop.f32.mrf.mxu0
        %v1609 = vadd.f32 %v524, %v1608
        %v1610 = vpop.f32.mrf.mxu0
        %v1611 = vadd.f32 %v524, %v1610
        %1612 = vmatmul.bf16.gmra.mxu0 %v388
        %v1613 = vpop.f32.mrf.mxu0
        %v1614 = vadd.f32 %v524, %v1613
        %v1615 = vpop.f32.mrf.mxu0
        %v1616 = vadd.f32 %v524, %v1615
        %1617 = vmatmul.bf16.gmra.mxu0 %v390
        %v1618 = vpop.f32.mrf.mxu0
        %v1619 = vadd.f32 %v524, %v1618
        %v1620 = vpop.f32.mrf.mxu0
        %v1621 = vadd.f32 %v524, %v1620
        %1622 = vdwg.mxu0
        %1623 = vmatpush.bf16.msra.mxu0 %v1044
        %1624 = vmatpush.bf16.msra.mxu0 %v1036
        %1625 = vmatpush.bf16.msra.mxu0 %v1028
        %1626 = vmatpush.bf16.msra.mxu0 %v1020
        %1627 = vmatpush.bf16.msra.mxu0 %v1012
        %1628 = vmatpush.bf16.msra.mxu0 %v1004
        %1629 = vmatpush.bf16.msra.mxu0 %v996
        %1630 = vmatpush.bf16.msra.mxu0 %v988
        %1631 = vmatmul.bf16.gmra.mxu0 %v361
        %v1632 = vpop.f32.mrf.mxu0
        %v1633 = vadd.f32 %v1544, %v1632
        %v1634 = vpop.f32.mrf.mxu0
        %v1635 = vadd.f32 %v1546, %v1634
        %1636 = vmatmul.bf16.gmra.mxu0 %v363
        %v1637 = vpop.f32.mrf.mxu0
        %v1638 = vadd.f32 %v1549, %v1637
        %v1639 = vpop.f32.mrf.mxu0
        %v1640 = vadd.f32 %v1551, %v1639
        %1641 = vmatmul.bf16.gmra.mxu0 %v365
        %v1642 = vpop.f32.mrf.mxu0
        %v1643 = vadd.f32 %v1554, %v1642
        %v1644 = vpop.f32.mrf.mxu0
        %v1645 = vadd.f32 %v1556, %v1644
        %1646 = vmatmul.bf16.gmra.mxu0 %v367
        %v1647 = vpop.f32.mrf.mxu0
        %v1648 = vadd.f32 %v1559, %v1647
        %v1649 = vpop.f32.mrf.mxu0
        %v1650 = vadd.f32 %v1561, %v1649
        %1651 = vmatmul.bf16.gmra.mxu0 %v369
        %v1652 = vpop.f32.mrf.mxu0
        %v1653 = vadd.f32 %v1564, %v1652
        %v1654 = vpop.f32.mrf.mxu0
        %v1655 = vadd.f32 %v1566, %v1654
        %1656 = vmatmul.bf16.gmra.mxu0 %v371
        %v1657 = vpop.f32.mrf.mxu0
        %v1658 = vadd.f32 %v1569, %v1657
        %v1659 = vpop.f32.mrf.mxu0
        %v1660 = vadd.f32 %v1571, %v1659
        %1661 = vmatmul.bf16.gmra.mxu0 %v373
        %v1662 = vpop.f32.mrf.mxu0
        %v1663 = vadd.f32 %v1574, %v1662
        %v1664 = vpop.f32.mrf.mxu0
        %v1665 = vadd.f32 %v1576, %v1664
        %1666 = vmatmul.bf16.gmra.mxu0 %v375
        %v1667 = vpop.f32.mrf.mxu0
        %v1668 = vadd.f32 %v1579, %v1667
        %v1669 = vpop.f32.mrf.mxu0
        %v1670 = vadd.f32 %v1581, %v1669
        %1671 = vmatmul.bf16.gmra.mxu0 %v377
        %v1672 = vpop.f32.mrf.mxu0
        %v1673 = vadd.f32 %v1584, %v1672
        %v1674 = vpop.f32.mrf.mxu0
        %v1675 = vadd.f32 %v1586, %v1674
        %1676 = vmatmul.bf16.gmra.mxu0 %v379
        %v1677 = vpop.f32.mrf.mxu0
        %v1678 = vadd.f32 %v1589, %v1677
        %v1679 = vpop.f32.mrf.mxu0
        %v1680 = vadd.f32 %v1591, %v1679
        %1681 = vmatmul.bf16.gmra.mxu0 %v381
        %v1682 = vpop.f32.mrf.mxu0
        %v1683 = vadd.f32 %v1594, %v1682
        %v1684 = vpop.f32.mrf.mxu0
        %v1685 = vadd.f32 %v1596, %v1684
        %1686 = vmatmul.bf16.gmra.mxu0 %v383
        %v1687 = vpop.f32.mrf.mxu0
        %v1688 = vadd.f32 %v1599, %v1687
        %v1689 = vpop.f32.mrf.mxu0
        %v1690 = vadd.f32 %v1601, %v1689
        %1691 = vmatmul.bf16.gmra.mxu0 %v385
        %v1692 = vpop.f32.mrf.mxu0
        %v1693 = vadd.f32 %v1604, %v1692
        %v1694 = vpop.f32.mrf.mxu0
        %v1695 = vadd.f32 %v1606, %v1694
        %1696 = vmatmul.bf16.gmra.mxu0 %v387
        %v1697 = vpop.f32.mrf.mxu0
        %v1698 = vadd.f32 %v1609, %v1697
        %v1699 = vpop.f32.mrf.mxu0
        %v1700 = vadd.f32 %v1611, %v1699
        %1701 = vmatmul.bf16.gmra.mxu0 %v389
        %v1702 = vpop.f32.mrf.mxu0
        %v1703 = vadd.f32 %v1614, %v1702
        %v1704 = vpop.f32.mrf.mxu0
        %v1705 = vadd.f32 %v1616, %v1704
        %1706 = vmatmul.bf16.gmra.mxu0 %v391
        %v1707 = vpop.f32.mrf.mxu0
        %v1708 = vadd.f32 %v1619, %v1707
        %v1709 = vpop.f32.mrf.mxu0
        %v1710 = vadd.f32 %v1621, %v1709
        %1711 = vdwg.mxu0
        %1712 = vmatpush.bf16.msra.mxu0 %v981
        %1713 = vmatpush.bf16.msra.mxu0 %v973
        %1714 = vmatpush.bf16.msra.mxu0 %v965
        %1715 = vmatpush.bf16.msra.mxu0 %v957
        %1716 = vmatpush.bf16.msra.mxu0 %v949
        %1717 = vmatpush.bf16.msra.mxu0 %v941
        %1718 = vmatpush.bf16.msra.mxu0 %v933
        %1719 = vmatpush.bf16.msra.mxu0 %v925
        %1720 = vmatmul.bf16.gmra.mxu0 %v360
        %v1721 = vpop.f32.mrf.mxu0
        %v1722 = vadd.f32 %v525, %v1721
        %v1723 = vpop.f32.mrf.mxu0
        %v1724 = vadd.f32 %v525, %v1723
        %1725 = vmatmul.bf16.gmra.mxu0 %v362
        %v1726 = vpop.f32.mrf.mxu0
        %v1727 = vadd.f32 %v525, %v1726
        %v1728 = vpop.f32.mrf.mxu0
        %v1729 = vadd.f32 %v525, %v1728
        %1730 = vmatmul.bf16.gmra.mxu0 %v364
        %v1731 = vpop.f32.mrf.mxu0
        %v1732 = vadd.f32 %v525, %v1731
        %v1733 = vpop.f32.mrf.mxu0
        %v1734 = vadd.f32 %v525, %v1733
        %1735 = vmatmul.bf16.gmra.mxu0 %v366
        %v1736 = vpop.f32.mrf.mxu0
        %v1737 = vadd.f32 %v525, %v1736
        %v1738 = vpop.f32.mrf.mxu0
        %v1739 = vadd.f32 %v525, %v1738
        %1740 = vmatmul.bf16.gmra.mxu0 %v368
        %v1741 = vpop.f32.mrf.mxu0
        %v1742 = vadd.f32 %v525, %v1741
        %v1743 = vpop.f32.mrf.mxu0
        %v1744 = vadd.f32 %v525, %v1743
        %1745 = vmatmul.bf16.gmra.mxu0 %v370
        %v1746 = vpop.f32.mrf.mxu0
        %v1747 = vadd.f32 %v525, %v1746
        %v1748 = vpop.f32.mrf.mxu0
        %v1749 = vadd.f32 %v525, %v1748
        %1750 = vmatmul.bf16.gmra.mxu0 %v372
        %v1751 = vpop.f32.mrf.mxu0
        %v1752 = vadd.f32 %v525, %v1751
        %v1753 = vpop.f32.mrf.mxu0
        %v1754 = vadd.f32 %v525, %v1753
        %1755 = vmatmul.bf16.gmra.mxu0 %v374
        %v1756 = vpop.f32.mrf.mxu0
        %v1757 = vadd.f32 %v525, %v1756
        %v1758 = vpop.f32.mrf.mxu0
        %v1759 = vadd.f32 %v525, %v1758
        %1760 = vmatmul.bf16.gmra.mxu0 %v376
        %v1761 = vpop.f32.mrf.mxu0
        %v1762 = vadd.f32 %v525, %v1761
        %v1763 = vpop.f32.mrf.mxu0
        %v1764 = vadd.f32 %v525, %v1763
        %1765 = vmatmul.bf16.gmra.mxu0 %v378
        %v1766 = vpop.f32.mrf.mxu0
        %v1767 = vadd.f32 %v525, %v1766
        %v1768 = vpop.f32.mrf.mxu0
        %v1769 = vadd.f32 %v525, %v1768
        %1770 = vmatmul.bf16.gmra.mxu0 %v380
        %v1771 = vpop.f32.mrf.mxu0
        %v1772 = vadd.f32 %v525, %v1771
        %v1773 = vpop.f32.mrf.mxu0
        %v1774 = vadd.f32 %v525, %v1773
        %1775 = vmatmul.bf16.gmra.mxu0 %v382
        %v1776 = vpop.f32.mrf.mxu0
        %v1777 = vadd.f32 %v525, %v1776
        %v1778 = vpop.f32.mrf.mxu0
        %v1779 = vadd.f32 %v525, %v1778
        %1780 = vmatmul.bf16.gmra.mxu0 %v384
        %v1781 = vpop.f32.mrf.mxu0
        %v1782 = vadd.f32 %v525, %v1781
        %v1783 = vpop.f32.mrf.mxu0
        %v1784 = vadd.f32 %v525, %v1783
        %1785 = vmatmul.bf16.gmra.mxu0 %v386
        %v1786 = vpop.f32.mrf.mxu0
        %v1787 = vadd.f32 %v525, %v1786
        %v1788 = vpop.f32.mrf.mxu0
        %v1789 = vadd.f32 %v525, %v1788
        %1790 = vmatmul.bf16.gmra.mxu0 %v388
        %v1791 = vpop.f32.mrf.mxu0
        %v1792 = vadd.f32 %v525, %v1791
        %v1793 = vpop.f32.mrf.mxu0
        %v1794 = vadd.f32 %v525, %v1793
        %1795 = vmatmul.bf16.gmra.mxu0 %v390
        %v1796 = vpop.f32.mrf.mxu0
        %v1797 = vadd.f32 %v525, %v1796
        %v1798 = vpop.f32.mrf.mxu0
        %v1799 = vadd.f32 %v525, %v1798
        %1800 = vdwg.mxu0
        %1801 = vmatpush.bf16.msra.mxu0 %v1045
        %1802 = vmatpush.bf16.msra.mxu0 %v1037
        %1803 = vmatpush.bf16.msra.mxu0 %v1029
        %1804 = vmatpush.bf16.msra.mxu0 %v1021
        %1805 = vmatpush.bf16.msra.mxu0 %v1013
        %1806 = vmatpush.bf16.msra.mxu0 %v1005
        %1807 = vmatpush.bf16.msra.mxu0 %v997
        %1808 = vmatpush.bf16.msra.mxu0 %v989
        %1809 = vmatmul.bf16.gmra.mxu0 %v361
        %v1810 = vpop.f32.mrf.mxu0
        %v1811 = vadd.f32 %v1722, %v1810
        %v1812 = vpop.f32.mrf.mxu0
        %v1813 = vadd.f32 %v1724, %v1812
        %1814 = vmatmul.bf16.gmra.mxu0 %v363
        %v1815 = vpop.f32.mrf.mxu0
        %v1816 = vadd.f32 %v1727, %v1815
        %v1817 = vpop.f32.mrf.mxu0
        %v1818 = vadd.f32 %v1729, %v1817
        %1819 = vmatmul.bf16.gmra.mxu0 %v365
        %v1820 = vpop.f32.mrf.mxu0
        %v1821 = vadd.f32 %v1732, %v1820
        %v1822 = vpop.f32.mrf.mxu0
        %v1823 = vadd.f32 %v1734, %v1822
        %1824 = vmatmul.bf16.gmra.mxu0 %v367
        %v1825 = vpop.f32.mrf.mxu0
        %v1826 = vadd.f32 %v1737, %v1825
        %v1827 = vpop.f32.mrf.mxu0
        %v1828 = vadd.f32 %v1739, %v1827
        %1829 = vmatmul.bf16.gmra.mxu0 %v369
        %v1830 = vpop.f32.mrf.mxu0
        %v1831 = vadd.f32 %v1742, %v1830
        %v1832 = vpop.f32.mrf.mxu0
        %v1833 = vadd.f32 %v1744, %v1832
        %1834 = vmatmul.bf16.gmra.mxu0 %v371
        %v1835 = vpop.f32.mrf.mxu0
        %v1836 = vadd.f32 %v1747, %v1835
        %v1837 = vpop.f32.mrf.mxu0
        %v1838 = vadd.f32 %v1749, %v1837
        %1839 = vmatmul.bf16.gmra.mxu0 %v373
        %v1840 = vpop.f32.mrf.mxu0
        %v1841 = vadd.f32 %v1752, %v1840
        %v1842 = vpop.f32.mrf.mxu0
        %v1843 = vadd.f32 %v1754, %v1842
        %1844 = vmatmul.bf16.gmra.mxu0 %v375
        %v1845 = vpop.f32.mrf.mxu0
        %v1846 = vadd.f32 %v1757, %v1845
        %v1847 = vpop.f32.mrf.mxu0
        %v1848 = vadd.f32 %v1759, %v1847
        %1849 = vmatmul.bf16.gmra.mxu0 %v377
        %v1850 = vpop.f32.mrf.mxu0
        %v1851 = vadd.f32 %v1762, %v1850
        %v1852 = vpop.f32.mrf.mxu0
        %v1853 = vadd.f32 %v1764, %v1852
        %1854 = vmatmul.bf16.gmra.mxu0 %v379
        %v1855 = vpop.f32.mrf.mxu0
        %v1856 = vadd.f32 %v1767, %v1855
        %v1857 = vpop.f32.mrf.mxu0
        %v1858 = vadd.f32 %v1769, %v1857
        %1859 = vmatmul.bf16.gmra.mxu0 %v381
        %v1860 = vpop.f32.mrf.mxu0
        %v1861 = vadd.f32 %v1772, %v1860
        %v1862 = vpop.f32.mrf.mxu0
        %v1863 = vadd.f32 %v1774, %v1862
        %1864 = vmatmul.bf16.gmra.mxu0 %v383
        %v1865 = vpop.f32.mrf.mxu0
        %v1866 = vadd.f32 %v1777, %v1865
        %v1867 = vpop.f32.mrf.mxu0
        %v1868 = vadd.f32 %v1779, %v1867
        %1869 = vmatmul.bf16.gmra.mxu0 %v385
        %v1870 = vpop.f32.mrf.mxu0
        %v1871 = vadd.f32 %v1782, %v1870
        %v1872 = vpop.f32.mrf.mxu0
        %v1873 = vadd.f32 %v1784, %v1872
        %1874 = vmatmul.bf16.gmra.mxu0 %v387
        %v1875 = vpop.f32.mrf.mxu0
        %v1876 = vadd.f32 %v1787, %v1875
        %v1877 = vpop.f32.mrf.mxu0
        %v1878 = vadd.f32 %v1789, %v1877
        %1879 = vmatmul.bf16.gmra.mxu0 %v389
        %v1880 = vpop.f32.mrf.mxu0
        %v1881 = vadd.f32 %v1792, %v1880
        %v1882 = vpop.f32.mrf.mxu0
        %v1883 = vadd.f32 %v1794, %v1882
        %1884 = vmatmul.bf16.gmra.mxu0 %v391
        %v1885 = vpop.f32.mrf.mxu0
        %v1886 = vadd.f32 %v1797, %v1885
        %v1887 = vpop.f32.mrf.mxu0
        %v1888 = vadd.f32 %v1799, %v1887
        %1889 = vdwg.mxu0
        %1890 = vmatpush.bf16.msra.mxu0 %v982
        %1891 = vmatpush.bf16.msra.mxu0 %v974
        %1892 = vmatpush.bf16.msra.mxu0 %v966
        %1893 = vmatpush.bf16.msra.mxu0 %v958
        %1894 = vmatpush.bf16.msra.mxu0 %v950
        %1895 = vmatpush.bf16.msra.mxu0 %v942
        %1896 = vmatpush.bf16.msra.mxu0 %v934
        %1897 = vmatpush.bf16.msra.mxu0 %v926
        %1898 = vmatmul.bf16.gmra.mxu0 %v360
        %v1899 = vpop.f32.mrf.mxu0
        %v1900 = vadd.f32 %v526, %v1899
        %v1901 = vpop.f32.mrf.mxu0
        %v1902 = vadd.f32 %v526, %v1901
        %1903 = vmatmul.bf16.gmra.mxu0 %v362
        %v1904 = vpop.f32.mrf.mxu0
        %v1905 = vadd.f32 %v526, %v1904
        %v1906 = vpop.f32.mrf.mxu0
        %v1907 = vadd.f32 %v526, %v1906
        %1908 = vmatmul.bf16.gmra.mxu0 %v364
        %v1909 = vpop.f32.mrf.mxu0
        %v1910 = vadd.f32 %v526, %v1909
        %v1911 = vpop.f32.mrf.mxu0
        %v1912 = vadd.f32 %v526, %v1911
        %1913 = vmatmul.bf16.gmra.mxu0 %v366
        %v1914 = vpop.f32.mrf.mxu0
        %v1915 = vadd.f32 %v526, %v1914
        %v1916 = vpop.f32.mrf.mxu0
        %v1917 = vadd.f32 %v526, %v1916
        %1918 = vmatmul.bf16.gmra.mxu0 %v368
        %v1919 = vpop.f32.mrf.mxu0
        %v1920 = vadd.f32 %v526, %v1919
        %v1921 = vpop.f32.mrf.mxu0
        %v1922 = vadd.f32 %v526, %v1921
        %1923 = vmatmul.bf16.gmra.mxu0 %v370
        %v1924 = vpop.f32.mrf.mxu0
        %v1925 = vadd.f32 %v526, %v1924
        %v1926 = vpop.f32.mrf.mxu0
        %v1927 = vadd.f32 %v526, %v1926
        %1928 = vmatmul.bf16.gmra.mxu0 %v372
        %v1929 = vpop.f32.mrf.mxu0
        %v1930 = vadd.f32 %v526, %v1929
        %v1931 = vpop.f32.mrf.mxu0
        %v1932 = vadd.f32 %v526, %v1931
        %1933 = vmatmul.bf16.gmra.mxu0 %v374
        %v1934 = vpop.f32.mrf.mxu0
        %v1935 = vadd.f32 %v526, %v1934
        %v1936 = vpop.f32.mrf.mxu0
        %v1937 = vadd.f32 %v526, %v1936
        %1938 = vmatmul.bf16.gmra.mxu0 %v376
        %v1939 = vpop.f32.mrf.mxu0
        %v1940 = vadd.f32 %v526, %v1939
        %v1941 = vpop.f32.mrf.mxu0
        %v1942 = vadd.f32 %v526, %v1941
        %1943 = vmatmul.bf16.gmra.mxu0 %v378
        %v1944 = vpop.f32.mrf.mxu0
        %v1945 = vadd.f32 %v526, %v1944
        %v1946 = vpop.f32.mrf.mxu0
        %v1947 = vadd.f32 %v526, %v1946
        %1948 = vmatmul.bf16.gmra.mxu0 %v380
        %v1949 = vpop.f32.mrf.mxu0
        %v1950 = vadd.f32 %v526, %v1949
        %v1951 = vpop.f32.mrf.mxu0
        %v1952 = vadd.f32 %v526, %v1951
        %1953 = vmatmul.bf16.gmra.mxu0 %v382
        %v1954 = vpop.f32.mrf.mxu0
        %v1955 = vadd.f32 %v526, %v1954
        %v1956 = vpop.f32.mrf.mxu0
        %v1957 = vadd.f32 %v526, %v1956
        %1958 = vmatmul.bf16.gmra.mxu0 %v384
        %v1959 = vpop.f32.mrf.mxu0
        %v1960 = vadd.f32 %v526, %v1959
        %v1961 = vpop.f32.mrf.mxu0
        %v1962 = vadd.f32 %v526, %v1961
        %1963 = vmatmul.bf16.gmra.mxu0 %v386
        %v1964 = vpop.f32.mrf.mxu0
        %v1965 = vadd.f32 %v526, %v1964
        %v1966 = vpop.f32.mrf.mxu0
        %v1967 = vadd.f32 %v526, %v1966
        %1968 = vmatmul.bf16.gmra.mxu0 %v388
        %v1969 = vpop.f32.mrf.mxu0
        %v1970 = vadd.f32 %v526, %v1969
        %v1971 = vpop.f32.mrf.mxu0
        %v1972 = vadd.f32 %v526, %v1971
        %1973 = vmatmul.bf16.gmra.mxu0 %v390
        %v1974 = vpop.f32.mrf.mxu0
        %v1975 = vadd.f32 %v526, %v1974
        %v1976 = vpop.f32.mrf.mxu0
        %v1977 = vadd.f32 %v526, %v1976
        %1978 = vdwg.mxu0
        %1979 = vmatpush.bf16.msra.mxu0 %v1046
        %1980 = vmatpush.bf16.msra.mxu0 %v1038
        %1981 = vmatpush.bf16.msra.mxu0 %v1030
        %1982 = vmatpush.bf16.msra.mxu0 %v1022
        %1983 = vmatpush.bf16.msra.mxu0 %v1014
        %1984 = vmatpush.bf16.msra.mxu0 %v1006
        %1985 = vmatpush.bf16.msra.mxu0 %v998
        %1986 = vmatpush.bf16.msra.mxu0 %v990
        %1987 = vmatmul.bf16.gmra.mxu0 %v361
        %v1988 = vpop.f32.mrf.mxu0
        %v1989 = vadd.f32 %v1900, %v1988
        %v1990 = vpop.f32.mrf.mxu0
        %v1991 = vadd.f32 %v1902, %v1990
        %1992 = vmatmul.bf16.gmra.mxu0 %v363
        %v1993 = vpop.f32.mrf.mxu0
        %v1994 = vadd.f32 %v1905, %v1993
        %v1995 = vpop.f32.mrf.mxu0
        %v1996 = vadd.f32 %v1907, %v1995
        %1997 = vmatmul.bf16.gmra.mxu0 %v365
        %v1998 = vpop.f32.mrf.mxu0
        %v1999 = vadd.f32 %v1910, %v1998
        %v2000 = vpop.f32.mrf.mxu0
        %v2001 = vadd.f32 %v1912, %v2000
        %2002 = vmatmul.bf16.gmra.mxu0 %v367
        %v2003 = vpop.f32.mrf.mxu0
        %v2004 = vadd.f32 %v1915, %v2003
        %v2005 = vpop.f32.mrf.mxu0
        %v2006 = vadd.f32 %v1917, %v2005
        %2007 = vmatmul.bf16.gmra.mxu0 %v369
        %v2008 = vpop.f32.mrf.mxu0
        %v2009 = vadd.f32 %v1920, %v2008
        %v2010 = vpop.f32.mrf.mxu0
        %v2011 = vadd.f32 %v1922, %v2010
        %2012 = vmatmul.bf16.gmra.mxu0 %v371
        %v2013 = vpop.f32.mrf.mxu0
        %v2014 = vadd.f32 %v1925, %v2013
        %v2015 = vpop.f32.mrf.mxu0
        %v2016 = vadd.f32 %v1927, %v2015
        %2017 = vmatmul.bf16.gmra.mxu0 %v373
        %v2018 = vpop.f32.mrf.mxu0
        %v2019 = vadd.f32 %v1930, %v2018
        %v2020 = vpop.f32.mrf.mxu0
        %v2021 = vadd.f32 %v1932, %v2020
        %2022 = vmatmul.bf16.gmra.mxu0 %v375
        %v2023 = vpop.f32.mrf.mxu0
        %v2024 = vadd.f32 %v1935, %v2023
        %v2025 = vpop.f32.mrf.mxu0
        %v2026 = vadd.f32 %v1937, %v2025
        %2027 = vmatmul.bf16.gmra.mxu0 %v377
        %v2028 = vpop.f32.mrf.mxu0
        %v2029 = vadd.f32 %v1940, %v2028
        %v2030 = vpop.f32.mrf.mxu0
        %v2031 = vadd.f32 %v1942, %v2030
        %2032 = vmatmul.bf16.gmra.mxu0 %v379
        %v2033 = vpop.f32.mrf.mxu0
        %v2034 = vadd.f32 %v1945, %v2033
        %v2035 = vpop.f32.mrf.mxu0
        %v2036 = vadd.f32 %v1947, %v2035
        %2037 = vmatmul.bf16.gmra.mxu0 %v381
        %v2038 = vpop.f32.mrf.mxu0
        %v2039 = vadd.f32 %v1950, %v2038
        %v2040 = vpop.f32.mrf.mxu0
        %v2041 = vadd.f32 %v1952, %v2040
        %2042 = vmatmul.bf16.gmra.mxu0 %v383
        %v2043 = vpop.f32.mrf.mxu0
        %v2044 = vadd.f32 %v1955, %v2043
        %v2045 = vpop.f32.mrf.mxu0
        %v2046 = vadd.f32 %v1957, %v2045
        %2047 = vmatmul.bf16.gmra.mxu0 %v385
        %v2048 = vpop.f32.mrf.mxu0
        %v2049 = vadd.f32 %v1960, %v2048
        %v2050 = vpop.f32.mrf.mxu0
        %v2051 = vadd.f32 %v1962, %v2050
        %2052 = vmatmul.bf16.gmra.mxu0 %v387
        %v2053 = vpop.f32.mrf.mxu0
        %v2054 = vadd.f32 %v1965, %v2053
        %v2055 = vpop.f32.mrf.mxu0
        %v2056 = vadd.f32 %v1967, %v2055
        %2057 = vmatmul.bf16.gmra.mxu0 %v389
        %v2058 = vpop.f32.mrf.mxu0
        %v2059 = vadd.f32 %v1970, %v2058
        %v2060 = vpop.f32.mrf.mxu0
        %v2061 = vadd.f32 %v1972, %v2060
        %2062 = vmatmul.bf16.gmra.mxu0 %v391
        %v2063 = vpop.f32.mrf.mxu0
        %v2064 = vadd.f32 %v1975, %v2063
        %v2065 = vpop.f32.mrf.mxu0
        %v2066 = vadd.f32 %v1977, %v2065
        %2067 = vdwg.mxu0
        %2068 = vmatpush.bf16.msra.mxu0 %v983
        %2069 = vmatpush.bf16.msra.mxu0 %v975
        %2070 = vmatpush.bf16.msra.mxu0 %v967
        %2071 = vmatpush.bf16.msra.mxu0 %v959
        %2072 = vmatpush.bf16.msra.mxu0 %v951
        %2073 = vmatpush.bf16.msra.mxu0 %v943
        %2074 = vmatpush.bf16.msra.mxu0 %v935
        %2075 = vmatpush.bf16.msra.mxu0 %v927
        %2076 = vmatmul.bf16.gmra.mxu0 %v360
        %v2077 = vpop.f32.mrf.mxu0
        %v2078 = vadd.f32 %v527, %v2077
        %v2079 = vpop.f32.mrf.mxu0
        %v2080 = vadd.f32 %v527, %v2079
        %2081 = vmatmul.bf16.gmra.mxu0 %v362
        %v2082 = vpop.f32.mrf.mxu0
        %v2083 = vadd.f32 %v527, %v2082
        %v2084 = vpop.f32.mrf.mxu0
        %v2085 = vadd.f32 %v527, %v2084
        %2086 = vmatmul.bf16.gmra.mxu0 %v364
        %v2087 = vpop.f32.mrf.mxu0
        %v2088 = vadd.f32 %v527, %v2087
        %v2089 = vpop.f32.mrf.mxu0
        %v2090 = vadd.f32 %v527, %v2089
        %2091 = vmatmul.bf16.gmra.mxu0 %v366
        %v2092 = vpop.f32.mrf.mxu0
        %v2093 = vadd.f32 %v527, %v2092
        %v2094 = vpop.f32.mrf.mxu0
        %v2095 = vadd.f32 %v527, %v2094
        %2096 = vmatmul.bf16.gmra.mxu0 %v368
        %v2097 = vpop.f32.mrf.mxu0
        %v2098 = vadd.f32 %v527, %v2097
        %v2099 = vpop.f32.mrf.mxu0
        %v2100 = vadd.f32 %v527, %v2099
        %2101 = vmatmul.bf16.gmra.mxu0 %v370
        %v2102 = vpop.f32.mrf.mxu0
        %v2103 = vadd.f32 %v527, %v2102
        %v2104 = vpop.f32.mrf.mxu0
        %v2105 = vadd.f32 %v527, %v2104
        %2106 = vmatmul.bf16.gmra.mxu0 %v372
        %v2107 = vpop.f32.mrf.mxu0
        %v2108 = vadd.f32 %v527, %v2107
        %v2109 = vpop.f32.mrf.mxu0
        %v2110 = vadd.f32 %v527, %v2109
        %2111 = vmatmul.bf16.gmra.mxu0 %v374
        %v2112 = vpop.f32.mrf.mxu0
        %v2113 = vadd.f32 %v527, %v2112
        %v2114 = vpop.f32.mrf.mxu0
        %v2115 = vadd.f32 %v527, %v2114
        %2116 = vmatmul.bf16.gmra.mxu0 %v376
        %v2117 = vpop.f32.mrf.mxu0
        %v2118 = vadd.f32 %v527, %v2117
        %v2119 = vpop.f32.mrf.mxu0
        %v2120 = vadd.f32 %v527, %v2119
        %2121 = vmatmul.bf16.gmra.mxu0 %v378
        %v2122 = vpop.f32.mrf.mxu0
        %v2123 = vadd.f32 %v527, %v2122
        %v2124 = vpop.f32.mrf.mxu0
        %v2125 = vadd.f32 %v527, %v2124
        %2126 = vmatmul.bf16.gmra.mxu0 %v380
        %v2127 = vpop.f32.mrf.mxu0
        %v2128 = vadd.f32 %v527, %v2127
        %v2129 = vpop.f32.mrf.mxu0
        %v2130 = vadd.f32 %v527, %v2129
        %2131 = vmatmul.bf16.gmra.mxu0 %v382
        %v2132 = vpop.f32.mrf.mxu0
        %v2133 = vadd.f32 %v527, %v2132
        %v2134 = vpop.f32.mrf.mxu0
        %v2135 = vadd.f32 %v527, %v2134
        %2136 = vmatmul.bf16.gmra.mxu0 %v384
        %v2137 = vpop.f32.mrf.mxu0
        %v2138 = vadd.f32 %v527, %v2137
        %v2139 = vpop.f32.mrf.mxu0
        %v2140 = vadd.f32 %v527, %v2139
        %2141 = vmatmul.bf16.gmra.mxu0 %v386
        %v2142 = vpop.f32.mrf.mxu0
        %v2143 = vadd.f32 %v527, %v2142
        %v2144 = vpop.f32.mrf.mxu0
        %v2145 = vadd.f32 %v527, %v2144
        %2146 = vmatmul.bf16.gmra.mxu0 %v388
        %v2147 = vpop.f32.mrf.mxu0
        %v2148 = vadd.f32 %v527, %v2147
        %v2149 = vpop.f32.mrf.mxu0
        %v2150 = vadd.f32 %v527, %v2149
        %2151 = vmatmul.bf16.gmra.mxu0 %v390
        %v2152 = vpop.f32.mrf.mxu0
        %v2153 = vadd.f32 %v527, %v2152
        %v2154 = vpop.f32.mrf.mxu0
        %v2155 = vadd.f32 %v527, %v2154
        %2156 = vdwg.mxu0
        %2157 = vmatpush.bf16.msra.mxu0 %v1047
        %2158 = vmatpush.bf16.msra.mxu0 %v1039
        %2159 = vmatpush.bf16.msra.mxu0 %v1031
        %2160 = vmatpush.bf16.msra.mxu0 %v1023
        %2161 = vmatpush.bf16.msra.mxu0 %v1015
        %2162 = vmatpush.bf16.msra.mxu0 %v1007
        %2163 = vmatpush.bf16.msra.mxu0 %v999
        %2164 = vmatpush.bf16.msra.mxu0 %v991
        %2165 = vmatmul.bf16.gmra.mxu0 %v361
        %v2166 = vpop.f32.mrf.mxu0
        %v2167 = vadd.f32 %v2078, %v2166
        %v2168 = vpop.f32.mrf.mxu0
        %v2169 = vadd.f32 %v2080, %v2168
        %2170 = vmatmul.bf16.gmra.mxu0 %v363
        %v2171 = vpop.f32.mrf.mxu0
        %v2172 = vadd.f32 %v2083, %v2171
        %v2173 = vpop.f32.mrf.mxu0
        %v2174 = vadd.f32 %v2085, %v2173
        %2175 = vmatmul.bf16.gmra.mxu0 %v365
        %v2176 = vpop.f32.mrf.mxu0
        %v2177 = vadd.f32 %v2088, %v2176
        %v2178 = vpop.f32.mrf.mxu0
        %v2179 = vadd.f32 %v2090, %v2178
        %2180 = vmatmul.bf16.gmra.mxu0 %v367
        %v2181 = vpop.f32.mrf.mxu0
        %v2182 = vadd.f32 %v2093, %v2181
        %v2183 = vpop.f32.mrf.mxu0
        %v2184 = vadd.f32 %v2095, %v2183
        %2185 = vmatmul.bf16.gmra.mxu0 %v369
        %v2186 = vpop.f32.mrf.mxu0
        %v2187 = vadd.f32 %v2098, %v2186
        %v2188 = vpop.f32.mrf.mxu0
        %v2189 = vadd.f32 %v2100, %v2188
        %2190 = vmatmul.bf16.gmra.mxu0 %v371
        %v2191 = vpop.f32.mrf.mxu0
        %v2192 = vadd.f32 %v2103, %v2191
        %v2193 = vpop.f32.mrf.mxu0
        %v2194 = vadd.f32 %v2105, %v2193
        %2195 = vmatmul.bf16.gmra.mxu0 %v373
        %v2196 = vpop.f32.mrf.mxu0
        %v2197 = vadd.f32 %v2108, %v2196
        %v2198 = vpop.f32.mrf.mxu0
        %v2199 = vadd.f32 %v2110, %v2198
        %2200 = vmatmul.bf16.gmra.mxu0 %v375
        %v2201 = vpop.f32.mrf.mxu0
        %v2202 = vadd.f32 %v2113, %v2201
        %v2203 = vpop.f32.mrf.mxu0
        %v2204 = vadd.f32 %v2115, %v2203
        %2205 = vmatmul.bf16.gmra.mxu0 %v377
        %v2206 = vpop.f32.mrf.mxu0
        %v2207 = vadd.f32 %v2118, %v2206
        %v2208 = vpop.f32.mrf.mxu0
        %v2209 = vadd.f32 %v2120, %v2208
        %2210 = vmatmul.bf16.gmra.mxu0 %v379
        %v2211 = vpop.f32.mrf.mxu0
        %v2212 = vadd.f32 %v2123, %v2211
        %v2213 = vpop.f32.mrf.mxu0
        %v2214 = vadd.f32 %v2125, %v2213
        %2215 = vmatmul.bf16.gmra.mxu0 %v381
        %v2216 = vpop.f32.mrf.mxu0
        %v2217 = vadd.f32 %v2128, %v2216
        %v2218 = vpop.f32.mrf.mxu0
        %v2219 = vadd.f32 %v2130, %v2218
        %2220 = vmatmul.bf16.gmra.mxu0 %v383
        %v2221 = vpop.f32.mrf.mxu0
        %v2222 = vadd.f32 %v2133, %v2221
        %v2223 = vpop.f32.mrf.mxu0
        %v2224 = vadd.f32 %v2135, %v2223
        %2225 = vmatmul.bf16.gmra.mxu0 %v385
        %v2226 = vpop.f32.mrf.mxu0
        %v2227 = vadd.f32 %v2138, %v2226
        %v2228 = vpop.f32.mrf.mxu0
        %v2229 = vadd.f32 %v2140, %v2228
        %2230 = vmatmul.bf16.gmra.mxu0 %v387
        %v2231 = vpop.f32.mrf.mxu0
        %v2232 = vadd.f32 %v2143, %v2231
        %v2233 = vpop.f32.mrf.mxu0
        %v2234 = vadd.f32 %v2145, %v2233
        %2235 = vmatmul.bf16.gmra.mxu0 %v389
        %v2236 = vpop.f32.mrf.mxu0
        %v2237 = vadd.f32 %v2148, %v2236
        %v2238 = vpop.f32.mrf.mxu0
        %v2239 = vadd.f32 %v2150, %v2238
        %2240 = vmatmul.bf16.gmra.mxu0 %v391
        %v2241 = vpop.f32.mrf.mxu0
        %v2242 = vadd.f32 %v2153, %v2241
        %v2243 = vpop.f32.mrf.mxu0
        %v2244 = vadd.f32 %v2155, %v2243
        %2245 = vdwg.mxu0
        %2246 = vmatpush.bf16.msra.mxu0 %v984
        %2247 = vmatpush.bf16.msra.mxu0 %v976
        %2248 = vmatpush.bf16.msra.mxu0 %v968
        %2249 = vmatpush.bf16.msra.mxu0 %v960
        %2250 = vmatpush.bf16.msra.mxu0 %v952
        %2251 = vmatpush.bf16.msra.mxu0 %v944
        %2252 = vmatpush.bf16.msra.mxu0 %v936
        %2253 = vmatpush.bf16.msra.mxu0 %v928
        %2254 = vmatmul.bf16.gmra.mxu0 %v360
        %v2255 = vpop.f32.mrf.mxu0
        %v2256 = vadd.f32 %v528, %v2255
        %v2257 = vpop.f32.mrf.mxu0
        %v2258 = vadd.f32 %v528, %v2257
        %2259 = vmatmul.bf16.gmra.mxu0 %v362
        %v2260 = vpop.f32.mrf.mxu0
        %v2261 = vadd.f32 %v528, %v2260
        %v2262 = vpop.f32.mrf.mxu0
        %v2263 = vadd.f32 %v528, %v2262
        %2264 = vmatmul.bf16.gmra.mxu0 %v364
        %v2265 = vpop.f32.mrf.mxu0
        %v2266 = vadd.f32 %v528, %v2265
        %v2267 = vpop.f32.mrf.mxu0
        %v2268 = vadd.f32 %v528, %v2267
        %2269 = vmatmul.bf16.gmra.mxu0 %v366
        %v2270 = vpop.f32.mrf.mxu0
        %v2271 = vadd.f32 %v528, %v2270
        %v2272 = vpop.f32.mrf.mxu0
        %v2273 = vadd.f32 %v528, %v2272
        %2274 = vmatmul.bf16.gmra.mxu0 %v368
        %v2275 = vpop.f32.mrf.mxu0
        %v2276 = vadd.f32 %v528, %v2275
        %v2277 = vpop.f32.mrf.mxu0
        %v2278 = vadd.f32 %v528, %v2277
        %2279 = vmatmul.bf16.gmra.mxu0 %v370
        %v2280 = vpop.f32.mrf.mxu0
        %v2281 = vadd.f32 %v528, %v2280
        %v2282 = vpop.f32.mrf.mxu0
        %v2283 = vadd.f32 %v528, %v2282
        %2284 = vmatmul.bf16.gmra.mxu0 %v372
        %v2285 = vpop.f32.mrf.mxu0
        %v2286 = vadd.f32 %v528, %v2285
        %v2287 = vpop.f32.mrf.mxu0
        %v2288 = vadd.f32 %v528, %v2287
        %2289 = vmatmul.bf16.gmra.mxu0 %v374
        %v2290 = vpop.f32.mrf.mxu0
        %v2291 = vadd.f32 %v528, %v2290
        %v2292 = vpop.f32.mrf.mxu0
        %v2293 = vadd.f32 %v528, %v2292
        %2294 = vmatmul.bf16.gmra.mxu0 %v376
        %v2295 = vpop.f32.mrf.mxu0
        %v2296 = vadd.f32 %v528, %v2295
        %v2297 = vpop.f32.mrf.mxu0
        %v2298 = vadd.f32 %v528, %v2297
        %2299 = vmatmul.bf16.gmra.mxu0 %v378
        %v2300 = vpop.f32.mrf.mxu0
        %v2301 = vadd.f32 %v528, %v2300
        %v2302 = vpop.f32.mrf.mxu0
        %v2303 = vadd.f32 %v528, %v2302
        %2304 = vmatmul.bf16.gmra.mxu0 %v380
        %v2305 = vpop.f32.mrf.mxu0
        %v2306 = vadd.f32 %v528, %v2305
        %v2307 = vpop.f32.mrf.mxu0
        %v2308 = vadd.f32 %v528, %v2307
        %2309 = vmatmul.bf16.gmra.mxu0 %v382
        %v2310 = vpop.f32.mrf.mxu0
        %v2311 = vadd.f32 %v528, %v2310
        %v2312 = vpop.f32.mrf.mxu0
        %v2313 = vadd.f32 %v528, %v2312
        %2314 = vmatmul.bf16.gmra.mxu0 %v384
        %v2315 = vpop.f32.mrf.mxu0
        %v2316 = vadd.f32 %v528, %v2315
        %v2317 = vpop.f32.mrf.mxu0
        %v2318 = vadd.f32 %v528, %v2317
        %2319 = vmatmul.bf16.gmra.mxu0 %v386
        %v2320 = vpop.f32.mrf.mxu0
        %v2321 = vadd.f32 %v528, %v2320
        %v2322 = vpop.f32.mrf.mxu0
        %v2323 = vadd.f32 %v528, %v2322
        %2324 = vmatmul.bf16.gmra.mxu0 %v388
        %v2325 = vpop.f32.mrf.mxu0
        %v2326 = vadd.f32 %v528, %v2325
        %v2327 = vpop.f32.mrf.mxu0
        %v2328 = vadd.f32 %v528, %v2327
        %2329 = vmatmul.bf16.gmra.mxu0 %v390
        %v2330 = vpop.f32.mrf.mxu0
        %v2331 = vadd.f32 %v528, %v2330
        %v2332 = vpop.f32.mrf.mxu0
        %v2333 = vadd.f32 %v528, %v2332
        %2334 = vdwg.mxu0
        %2335 = vmatpush.bf16.msra.mxu0 %v1048
        %2336 = vmatpush.bf16.msra.mxu0 %v1040
        %2337 = vmatpush.bf16.msra.mxu0 %v1032
        %2338 = vmatpush.bf16.msra.mxu0 %v1024
        %2339 = vmatpush.bf16.msra.mxu0 %v1016
        %2340 = vmatpush.bf16.msra.mxu0 %v1008
        %2341 = vmatpush.bf16.msra.mxu0 %v1000
        %2342 = vmatpush.bf16.msra.mxu0 %v992
        %2343 = vmatmul.bf16.gmra.mxu0 %v361
        %v2344 = vpop.f32.mrf.mxu0
        %v2345 = vadd.f32 %v2256, %v2344
        %v2346 = vpop.f32.mrf.mxu0
        %v2347 = vadd.f32 %v2258, %v2346
        %2348 = vmatmul.bf16.gmra.mxu0 %v363
        %v2349 = vpop.f32.mrf.mxu0
        %v2350 = vadd.f32 %v2261, %v2349
        %v2351 = vpop.f32.mrf.mxu0
        %v2352 = vadd.f32 %v2263, %v2351
        %2353 = vmatmul.bf16.gmra.mxu0 %v365
        %v2354 = vpop.f32.mrf.mxu0
        %v2355 = vadd.f32 %v2266, %v2354
        %v2356 = vpop.f32.mrf.mxu0
        %v2357 = vadd.f32 %v2268, %v2356
        %2358 = vmatmul.bf16.gmra.mxu0 %v367
        %v2359 = vpop.f32.mrf.mxu0
        %v2360 = vadd.f32 %v2271, %v2359
        %v2361 = vpop.f32.mrf.mxu0
        %v2362 = vadd.f32 %v2273, %v2361
        %2363 = vmatmul.bf16.gmra.mxu0 %v369
        %v2364 = vpop.f32.mrf.mxu0
        %v2365 = vadd.f32 %v2276, %v2364
        %v2366 = vpop.f32.mrf.mxu0
        %v2367 = vadd.f32 %v2278, %v2366
        %2368 = vmatmul.bf16.gmra.mxu0 %v371
        %v2369 = vpop.f32.mrf.mxu0
        %v2370 = vadd.f32 %v2281, %v2369
        %v2371 = vpop.f32.mrf.mxu0
        %v2372 = vadd.f32 %v2283, %v2371
        %2373 = vmatmul.bf16.gmra.mxu0 %v373
        %v2374 = vpop.f32.mrf.mxu0
        %v2375 = vadd.f32 %v2286, %v2374
        %v2376 = vpop.f32.mrf.mxu0
        %v2377 = vadd.f32 %v2288, %v2376
        %2378 = vmatmul.bf16.gmra.mxu0 %v375
        %v2379 = vpop.f32.mrf.mxu0
        %v2380 = vadd.f32 %v2291, %v2379
        %v2381 = vpop.f32.mrf.mxu0
        %v2382 = vadd.f32 %v2293, %v2381
        %2383 = vmatmul.bf16.gmra.mxu0 %v377
        %v2384 = vpop.f32.mrf.mxu0
        %v2385 = vadd.f32 %v2296, %v2384
        %v2386 = vpop.f32.mrf.mxu0
        %v2387 = vadd.f32 %v2298, %v2386
        %2388 = vmatmul.bf16.gmra.mxu0 %v379
        %v2389 = vpop.f32.mrf.mxu0
        %v2390 = vadd.f32 %v2301, %v2389
        %v2391 = vpop.f32.mrf.mxu0
        %v2392 = vadd.f32 %v2303, %v2391
        %2393 = vmatmul.bf16.gmra.mxu0 %v381
        %v2394 = vpop.f32.mrf.mxu0
        %v2395 = vadd.f32 %v2306, %v2394
        %v2396 = vpop.f32.mrf.mxu0
        %v2397 = vadd.f32 %v2308, %v2396
        %2398 = vmatmul.bf16.gmra.mxu0 %v383
        %v2399 = vpop.f32.mrf.mxu0
        %v2400 = vadd.f32 %v2311, %v2399
        %v2401 = vpop.f32.mrf.mxu0
        %v2402 = vadd.f32 %v2313, %v2401
        %2403 = vmatmul.bf16.gmra.mxu0 %v385
        %v2404 = vpop.f32.mrf.mxu0
        %v2405 = vadd.f32 %v2316, %v2404
        %v2406 = vpop.f32.mrf.mxu0
        %v2407 = vadd.f32 %v2318, %v2406
        %2408 = vmatmul.bf16.gmra.mxu0 %v387
        %v2409 = vpop.f32.mrf.mxu0
        %v2410 = vadd.f32 %v2321, %v2409
        %v2411 = vpop.f32.mrf.mxu0
        %v2412 = vadd.f32 %v2323, %v2411
        %2413 = vmatmul.bf16.gmra.mxu0 %v389
        %v2414 = vpop.f32.mrf.mxu0
        %v2415 = vadd.f32 %v2326, %v2414
        %v2416 = vpop.f32.mrf.mxu0
        %v2417 = vadd.f32 %v2328, %v2416
        %2418 = vmatmul.bf16.gmra.mxu0 %v391
        %v2419 = vpop.f32.mrf.mxu0
        %v2420 = vadd.f32 %v2331, %v2419
        %v2421 = vpop.f32.mrf.mxu0
        %v2422 = vadd.f32 %v2333, %v2421
        %2423 = vdwg.mxu0
        %2424 = vmatpush.bf16.msra.mxu0 %v985
        %2425 = vmatpush.bf16.msra.mxu0 %v977
        %2426 = vmatpush.bf16.msra.mxu0 %v969
        %2427 = vmatpush.bf16.msra.mxu0 %v961
        %2428 = vmatpush.bf16.msra.mxu0 %v953
        %2429 = vmatpush.bf16.msra.mxu0 %v945
        %2430 = vmatpush.bf16.msra.mxu0 %v937
        %2431 = vmatpush.bf16.msra.mxu0 %v929
        %2432 = vmatmul.bf16.gmra.mxu0 %v360
        %v2433 = vpop.f32.mrf.mxu0
        %v2434 = vadd.f32 %v529, %v2433
        %v2435 = vpop.f32.mrf.mxu0
        %v2436 = vadd.f32 %v529, %v2435
        %2437 = vmatmul.bf16.gmra.mxu0 %v362
        %v2438 = vpop.f32.mrf.mxu0
        %v2439 = vadd.f32 %v529, %v2438
        %v2440 = vpop.f32.mrf.mxu0
        %v2441 = vadd.f32 %v529, %v2440
        %2442 = vmatmul.bf16.gmra.mxu0 %v364
        %v2443 = vpop.f32.mrf.mxu0
        %v2444 = vadd.f32 %v529, %v2443
        %v2445 = vpop.f32.mrf.mxu0
        %v2446 = vadd.f32 %v529, %v2445
        %2447 = vmatmul.bf16.gmra.mxu0 %v366
        %v2448 = vpop.f32.mrf.mxu0
        %v2449 = vadd.f32 %v529, %v2448
        %v2450 = vpop.f32.mrf.mxu0
        %v2451 = vadd.f32 %v529, %v2450
        %2452 = vmatmul.bf16.gmra.mxu0 %v368
        %v2453 = vpop.f32.mrf.mxu0
        %v2454 = vadd.f32 %v529, %v2453
        %v2455 = vpop.f32.mrf.mxu0
        %v2456 = vadd.f32 %v529, %v2455
        %2457 = vmatmul.bf16.gmra.mxu0 %v370
        %v2458 = vpop.f32.mrf.mxu0
        %v2459 = vadd.f32 %v529, %v2458
        %v2460 = vpop.f32.mrf.mxu0
        %v2461 = vadd.f32 %v529, %v2460
        %2462 = vmatmul.bf16.gmra.mxu0 %v372
        %v2463 = vpop.f32.mrf.mxu0
        %v2464 = vadd.f32 %v529, %v2463
        %v2465 = vpop.f32.mrf.mxu0
        %v2466 = vadd.f32 %v529, %v2465
        %2467 = vmatmul.bf16.gmra.mxu0 %v374
        %v2468 = vpop.f32.mrf.mxu0
        %v2469 = vadd.f32 %v529, %v2468
        %v2470 = vpop.f32.mrf.mxu0
        %v2471 = vadd.f32 %v529, %v2470
        %2472 = vmatmul.bf16.gmra.mxu0 %v376
        %v2473 = vpop.f32.mrf.mxu0
        %v2474 = vadd.f32 %v529, %v2473
        %v2475 = vpop.f32.mrf.mxu0
        %v2476 = vadd.f32 %v529, %v2475
        %2477 = vmatmul.bf16.gmra.mxu0 %v378
        %v2478 = vpop.f32.mrf.mxu0
        %v2479 = vadd.f32 %v529, %v2478
        %v2480 = vpop.f32.mrf.mxu0
        %v2481 = vadd.f32 %v529, %v2480
        %2482 = vmatmul.bf16.gmra.mxu0 %v380
        %v2483 = vpop.f32.mrf.mxu0
        %v2484 = vadd.f32 %v529, %v2483
        %v2485 = vpop.f32.mrf.mxu0
        %v2486 = vadd.f32 %v529, %v2485
        %2487 = vmatmul.bf16.gmra.mxu0 %v382
        %v2488 = vpop.f32.mrf.mxu0
        %v2489 = vadd.f32 %v529, %v2488
        %v2490 = vpop.f32.mrf.mxu0
        %v2491 = vadd.f32 %v529, %v2490
        %2492 = vmatmul.bf16.gmra.mxu0 %v384
        %v2493 = vpop.f32.mrf.mxu0
        %v2494 = vadd.f32 %v529, %v2493
        %v2495 = vpop.f32.mrf.mxu0
        %v2496 = vadd.f32 %v529, %v2495
        %2497 = vmatmul.bf16.gmra.mxu0 %v386
        %v2498 = vpop.f32.mrf.mxu0
        %v2499 = vadd.f32 %v529, %v2498
        %v2500 = vpop.f32.mrf.mxu0
        %v2501 = vadd.f32 %v529, %v2500
        %2502 = vmatmul.bf16.gmra.mxu0 %v388
        %v2503 = vpop.f32.mrf.mxu0
        %v2504 = vadd.f32 %v529, %v2503
        %v2505 = vpop.f32.mrf.mxu0
        %v2506 = vadd.f32 %v529, %v2505
        %2507 = vmatmul.bf16.gmra.mxu0 %v390
        %v2508 = vpop.f32.mrf.mxu0
        %v2509 = vadd.f32 %v529, %v2508
        %v2510 = vpop.f32.mrf.mxu0
        %v2511 = vadd.f32 %v529, %v2510
        %2512 = vdwg.mxu0
        %2513 = vmatpush.bf16.msra.mxu0 %v1049
        %2514 = vmatpush.bf16.msra.mxu0 %v1041
        %2515 = vmatpush.bf16.msra.mxu0 %v1033
        %2516 = vmatpush.bf16.msra.mxu0 %v1025
        %2517 = vmatpush.bf16.msra.mxu0 %v1017
        %2518 = vmatpush.bf16.msra.mxu0 %v1009
        %2519 = vmatpush.bf16.msra.mxu0 %v1001
        %2520 = vmatpush.bf16.msra.mxu0 %v993
        %2521 = vmatmul.bf16.gmra.mxu0 %v361
        %v2522 = vpop.f32.mrf.mxu0
        %v2523 = vadd.f32 %v2434, %v2522
        %v2524 = vpop.f32.mrf.mxu0
        %v2525 = vadd.f32 %v2436, %v2524
        %2526 = vmatmul.bf16.gmra.mxu0 %v363
        %v2527 = vpop.f32.mrf.mxu0
        %v2528 = vadd.f32 %v2439, %v2527
        %v2529 = vpop.f32.mrf.mxu0
        %v2530 = vadd.f32 %v2441, %v2529
        %2531 = vmatmul.bf16.gmra.mxu0 %v365
        %v2532 = vpop.f32.mrf.mxu0
        %v2533 = vadd.f32 %v2444, %v2532
        %v2534 = vpop.f32.mrf.mxu0
        %v2535 = vadd.f32 %v2446, %v2534
        %2536 = vmatmul.bf16.gmra.mxu0 %v367
        %v2537 = vpop.f32.mrf.mxu0
        %v2538 = vadd.f32 %v2449, %v2537
        %v2539 = vpop.f32.mrf.mxu0
        %v2540 = vadd.f32 %v2451, %v2539
        %2541 = vmatmul.bf16.gmra.mxu0 %v369
        %v2542 = vpop.f32.mrf.mxu0
        %v2543 = vadd.f32 %v2454, %v2542
        %v2544 = vpop.f32.mrf.mxu0
        %v2545 = vadd.f32 %v2456, %v2544
        %2546 = vmatmul.bf16.gmra.mxu0 %v371
        %v2547 = vpop.f32.mrf.mxu0
        %v2548 = vadd.f32 %v2459, %v2547
        %v2549 = vpop.f32.mrf.mxu0
        %v2550 = vadd.f32 %v2461, %v2549
        %2551 = vmatmul.bf16.gmra.mxu0 %v373
        %v2552 = vpop.f32.mrf.mxu0
        %v2553 = vadd.f32 %v2464, %v2552
        %v2554 = vpop.f32.mrf.mxu0
        %v2555 = vadd.f32 %v2466, %v2554
        %2556 = vmatmul.bf16.gmra.mxu0 %v375
        %v2557 = vpop.f32.mrf.mxu0
        %v2558 = vadd.f32 %v2469, %v2557
        %v2559 = vpop.f32.mrf.mxu0
        %v2560 = vadd.f32 %v2471, %v2559
        %2561 = vmatmul.bf16.gmra.mxu0 %v377
        %v2562 = vpop.f32.mrf.mxu0
        %v2563 = vadd.f32 %v2474, %v2562
        %v2564 = vpop.f32.mrf.mxu0
        %v2565 = vadd.f32 %v2476, %v2564
        %2566 = vmatmul.bf16.gmra.mxu0 %v379
        %v2567 = vpop.f32.mrf.mxu0
        %v2568 = vadd.f32 %v2479, %v2567
        %v2569 = vpop.f32.mrf.mxu0
        %v2570 = vadd.f32 %v2481, %v2569
        %2571 = vmatmul.bf16.gmra.mxu0 %v381
        %v2572 = vpop.f32.mrf.mxu0
        %v2573 = vadd.f32 %v2484, %v2572
        %v2574 = vpop.f32.mrf.mxu0
        %v2575 = vadd.f32 %v2486, %v2574
        %2576 = vmatmul.bf16.gmra.mxu0 %v383
        %v2577 = vpop.f32.mrf.mxu0
        %v2578 = vadd.f32 %v2489, %v2577
        %v2579 = vpop.f32.mrf.mxu0
        %v2580 = vadd.f32 %v2491, %v2579
        %2581 = vmatmul.bf16.gmra.mxu0 %v385
        %v2582 = vpop.f32.mrf.mxu0
        %v2583 = vadd.f32 %v2494, %v2582
        %v2584 = vpop.f32.mrf.mxu0
        %v2585 = vadd.f32 %v2496, %v2584
        %2586 = vmatmul.bf16.gmra.mxu0 %v387
        %v2587 = vpop.f32.mrf.mxu0
        %v2588 = vadd.f32 %v2499, %v2587
        %v2589 = vpop.f32.mrf.mxu0
        %v2590 = vadd.f32 %v2501, %v2589
        %2591 = vmatmul.bf16.gmra.mxu0 %v389
        %v2592 = vpop.f32.mrf.mxu0
        %v2593 = vadd.f32 %v2504, %v2592
        %v2594 = vpop.f32.mrf.mxu0
        %v2595 = vadd.f32 %v2506, %v2594
        %2596 = vmatmul.bf16.gmra.mxu0 %v391
        %v2597 = vpop.f32.mrf.mxu0
        %v2598 = vadd.f32 %v2509, %v2597
        %v2599 = vpop.f32.mrf.mxu0
        %v2600 = vadd.f32 %v2511, %v2599
        %2601 = vdwg.mxu0
        %v2602 = vmul.f32 %v1277, %v1277
        %v2603 = vmul.f32 %v1455, %v1455
        %v2604 = vmul.f32 %v1633, %v1633
        %v2605 = vmul.f32 %v1811, %v1811
        %v2606 = vmul.f32 %v1989, %v1989
        %v2607 = vmul.f32 %v2167, %v2167
        %v2608 = vmul.f32 %v2345, %v2345
        %v2609 = vmul.f32 %v2523, %v2523
        %v2610 = vmul.f32 %v1279, %v1279
        %v2611 = vmul.f32 %v1457, %v1457
        %v2612 = vmul.f32 %v1635, %v1635
        %v2613 = vmul.f32 %v1813, %v1813
        %v2614 = vmul.f32 %v1991, %v1991
        %v2615 = vmul.f32 %v2169, %v2169
        %v2616 = vmul.f32 %v2347, %v2347
        %v2617 = vmul.f32 %v2525, %v2525
        %v2618 = vmul.f32 %v1282, %v1282
        %v2619 = vmul.f32 %v1460, %v1460
        %v2620 = vmul.f32 %v1638, %v1638
        %v2621 = vmul.f32 %v1816, %v1816
        %v2622 = vmul.f32 %v1994, %v1994
        %v2623 = vmul.f32 %v2172, %v2172
        %v2624 = vmul.f32 %v2350, %v2350
        %v2625 = vmul.f32 %v2528, %v2528
        %v2626 = vmul.f32 %v1284, %v1284
        %v2627 = vmul.f32 %v1462, %v1462
        %v2628 = vmul.f32 %v1640, %v1640
        %v2629 = vmul.f32 %v1818, %v1818
        %v2630 = vmul.f32 %v1996, %v1996
        %v2631 = vmul.f32 %v2174, %v2174
        %v2632 = vmul.f32 %v2352, %v2352
        %v2633 = vmul.f32 %v2530, %v2530
        %v2634 = vmul.f32 %v1287, %v1287
        %v2635 = vmul.f32 %v1465, %v1465
        %v2636 = vmul.f32 %v1643, %v1643
        %v2637 = vmul.f32 %v1821, %v1821
        %v2638 = vmul.f32 %v1999, %v1999
        %v2639 = vmul.f32 %v2177, %v2177
        %v2640 = vmul.f32 %v2355, %v2355
        %v2641 = vmul.f32 %v2533, %v2533
        %v2642 = vmul.f32 %v1289, %v1289
        %v2643 = vmul.f32 %v1467, %v1467
        %v2644 = vmul.f32 %v1645, %v1645
        %v2645 = vmul.f32 %v1823, %v1823
        %v2646 = vmul.f32 %v2001, %v2001
        %v2647 = vmul.f32 %v2179, %v2179
        %v2648 = vmul.f32 %v2357, %v2357
        %v2649 = vmul.f32 %v2535, %v2535
        %v2650 = vmul.f32 %v1292, %v1292
        %v2651 = vmul.f32 %v1470, %v1470
        %v2652 = vmul.f32 %v1648, %v1648
        %v2653 = vmul.f32 %v1826, %v1826
        %v2654 = vmul.f32 %v2004, %v2004
        %v2655 = vmul.f32 %v2182, %v2182
        %v2656 = vmul.f32 %v2360, %v2360
        %v2657 = vmul.f32 %v2538, %v2538
        %v2658 = vmul.f32 %v1294, %v1294
        %v2659 = vmul.f32 %v1472, %v1472
        %v2660 = vmul.f32 %v1650, %v1650
        %v2661 = vmul.f32 %v1828, %v1828
        %v2662 = vmul.f32 %v2006, %v2006
        %v2663 = vmul.f32 %v2184, %v2184
        %v2664 = vmul.f32 %v2362, %v2362
        %v2665 = vmul.f32 %v2540, %v2540
        %v2666 = vmul.f32 %v1297, %v1297
        %v2667 = vmul.f32 %v1475, %v1475
        %v2668 = vmul.f32 %v1653, %v1653
        %v2669 = vmul.f32 %v1831, %v1831
        %v2670 = vmul.f32 %v2009, %v2009
        %v2671 = vmul.f32 %v2187, %v2187
        %v2672 = vmul.f32 %v2365, %v2365
        %v2673 = vmul.f32 %v2543, %v2543
        %v2674 = vmul.f32 %v1299, %v1299
        %v2675 = vmul.f32 %v1477, %v1477
        %v2676 = vmul.f32 %v1655, %v1655
        %v2677 = vmul.f32 %v1833, %v1833
        %v2678 = vmul.f32 %v2011, %v2011
        %v2679 = vmul.f32 %v2189, %v2189
        %v2680 = vmul.f32 %v2367, %v2367
        %v2681 = vmul.f32 %v2545, %v2545
        %v2682 = vmul.f32 %v1302, %v1302
        %v2683 = vmul.f32 %v1480, %v1480
        %v2684 = vmul.f32 %v1658, %v1658
        %v2685 = vmul.f32 %v1836, %v1836
        %v2686 = vmul.f32 %v2014, %v2014
        %v2687 = vmul.f32 %v2192, %v2192
        %v2688 = vmul.f32 %v2370, %v2370
        %v2689 = vmul.f32 %v2548, %v2548
        %v2690 = vmul.f32 %v1304, %v1304
        %v2691 = vmul.f32 %v1482, %v1482
        %v2692 = vmul.f32 %v1660, %v1660
        %v2693 = vmul.f32 %v1838, %v1838
        %v2694 = vmul.f32 %v2016, %v2016
        %v2695 = vmul.f32 %v2194, %v2194
        %v2696 = vmul.f32 %v2372, %v2372
        %v2697 = vmul.f32 %v2550, %v2550
        %v2698 = vmul.f32 %v1307, %v1307
        %v2699 = vmul.f32 %v1485, %v1485
        %v2700 = vmul.f32 %v1663, %v1663
        %v2701 = vmul.f32 %v1841, %v1841
        %v2702 = vmul.f32 %v2019, %v2019
        %v2703 = vmul.f32 %v2197, %v2197
        %v2704 = vmul.f32 %v2375, %v2375
        %v2705 = vmul.f32 %v2553, %v2553
        %v2706 = vmul.f32 %v1309, %v1309
        %v2707 = vmul.f32 %v1487, %v1487
        %v2708 = vmul.f32 %v1665, %v1665
        %v2709 = vmul.f32 %v1843, %v1843
        %v2710 = vmul.f32 %v2021, %v2021
        %v2711 = vmul.f32 %v2199, %v2199
        %v2712 = vmul.f32 %v2377, %v2377
        %v2713 = vmul.f32 %v2555, %v2555
        %v2714 = vmul.f32 %v1312, %v1312
        %v2715 = vmul.f32 %v1490, %v1490
        %v2716 = vmul.f32 %v1668, %v1668
        %v2717 = vmul.f32 %v1846, %v1846
        %v2718 = vmul.f32 %v2024, %v2024
        %v2719 = vmul.f32 %v2202, %v2202
        %v2720 = vmul.f32 %v2380, %v2380
        %v2721 = vmul.f32 %v2558, %v2558
        %v2722 = vmul.f32 %v1314, %v1314
        %v2723 = vmul.f32 %v1492, %v1492
        %v2724 = vmul.f32 %v1670, %v1670
        %v2725 = vmul.f32 %v1848, %v1848
        %v2726 = vmul.f32 %v2026, %v2026
        %v2727 = vmul.f32 %v2204, %v2204
        %v2728 = vmul.f32 %v2382, %v2382
        %v2729 = vmul.f32 %v2560, %v2560
        %v2730 = vmul.f32 %v1317, %v1317
        %v2731 = vmul.f32 %v1495, %v1495
        %v2732 = vmul.f32 %v1673, %v1673
        %v2733 = vmul.f32 %v1851, %v1851
        %v2734 = vmul.f32 %v2029, %v2029
        %v2735 = vmul.f32 %v2207, %v2207
        %v2736 = vmul.f32 %v2385, %v2385
        %v2737 = vmul.f32 %v2563, %v2563
        %v2738 = vmul.f32 %v1319, %v1319
        %v2739 = vmul.f32 %v1497, %v1497
        %v2740 = vmul.f32 %v1675, %v1675
        %v2741 = vmul.f32 %v1853, %v1853
        %v2742 = vmul.f32 %v2031, %v2031
        %v2743 = vmul.f32 %v2209, %v2209
        %v2744 = vmul.f32 %v2387, %v2387
        %v2745 = vmul.f32 %v2565, %v2565
        %v2746 = vmul.f32 %v1322, %v1322
        %v2747 = vmul.f32 %v1500, %v1500
        %v2748 = vmul.f32 %v1678, %v1678
        %v2749 = vmul.f32 %v1856, %v1856
        %v2750 = vmul.f32 %v2034, %v2034
        %v2751 = vmul.f32 %v2212, %v2212
        %v2752 = vmul.f32 %v2390, %v2390
        %v2753 = vmul.f32 %v2568, %v2568
        %v2754 = vmul.f32 %v1324, %v1324
        %v2755 = vmul.f32 %v1502, %v1502
        %v2756 = vmul.f32 %v1680, %v1680
        %v2757 = vmul.f32 %v1858, %v1858
        %v2758 = vmul.f32 %v2036, %v2036
        %v2759 = vmul.f32 %v2214, %v2214
        %v2760 = vmul.f32 %v2392, %v2392
        %v2761 = vmul.f32 %v2570, %v2570
        %v2762 = vmul.f32 %v1327, %v1327
        %v2763 = vmul.f32 %v1505, %v1505
        %v2764 = vmul.f32 %v1683, %v1683
        %v2765 = vmul.f32 %v1861, %v1861
        %v2766 = vmul.f32 %v2039, %v2039
        %v2767 = vmul.f32 %v2217, %v2217
        %v2768 = vmul.f32 %v2395, %v2395
        %v2769 = vmul.f32 %v2573, %v2573
        %v2770 = vmul.f32 %v1329, %v1329
        %v2771 = vmul.f32 %v1507, %v1507
        %v2772 = vmul.f32 %v1685, %v1685
        %v2773 = vmul.f32 %v1863, %v1863
        %v2774 = vmul.f32 %v2041, %v2041
        %v2775 = vmul.f32 %v2219, %v2219
        %v2776 = vmul.f32 %v2397, %v2397
        %v2777 = vmul.f32 %v2575, %v2575
        %v2778 = vmul.f32 %v1332, %v1332
        %v2779 = vmul.f32 %v1510, %v1510
        %v2780 = vmul.f32 %v1688, %v1688
        %v2781 = vmul.f32 %v1866, %v1866
        %v2782 = vmul.f32 %v2044, %v2044
        %v2783 = vmul.f32 %v2222, %v2222
        %v2784 = vmul.f32 %v2400, %v2400
        %v2785 = vmul.f32 %v2578, %v2578
        %v2786 = vmul.f32 %v1334, %v1334
        %v2787 = vmul.f32 %v1512, %v1512
        %v2788 = vmul.f32 %v1690, %v1690
        %v2789 = vmul.f32 %v1868, %v1868
        %v2790 = vmul.f32 %v2046, %v2046
        %v2791 = vmul.f32 %v2224, %v2224
        %v2792 = vmul.f32 %v2402, %v2402
        %v2793 = vmul.f32 %v2580, %v2580
        %v2794 = vmul.f32 %v1337, %v1337
        %v2795 = vmul.f32 %v1515, %v1515
        %v2796 = vmul.f32 %v1693, %v1693
        %v2797 = vmul.f32 %v1871, %v1871
        %v2798 = vmul.f32 %v2049, %v2049
        %v2799 = vmul.f32 %v2227, %v2227
        %v2800 = vmul.f32 %v2405, %v2405
        %v2801 = vmul.f32 %v2583, %v2583
        %v2802 = vmul.f32 %v1339, %v1339
        %v2803 = vmul.f32 %v1517, %v1517
        %v2804 = vmul.f32 %v1695, %v1695
        %v2805 = vmul.f32 %v1873, %v1873
        %v2806 = vmul.f32 %v2051, %v2051
        %v2807 = vmul.f32 %v2229, %v2229
        %v2808 = vmul.f32 %v2407, %v2407
        %v2809 = vmul.f32 %v2585, %v2585
        %v2810 = vmul.f32 %v1342, %v1342
        %v2811 = vmul.f32 %v1520, %v1520
        %v2812 = vmul.f32 %v1698, %v1698
        %v2813 = vmul.f32 %v1876, %v1876
        %v2814 = vmul.f32 %v2054, %v2054
        %v2815 = vmul.f32 %v2232, %v2232
        %v2816 = vmul.f32 %v2410, %v2410
        %v2817 = vmul.f32 %v2588, %v2588
        %v2818 = vmul.f32 %v1344, %v1344
        %v2819 = vmul.f32 %v1522, %v1522
        %v2820 = vmul.f32 %v1700, %v1700
        %v2821 = vmul.f32 %v1878, %v1878
        %v2822 = vmul.f32 %v2056, %v2056
        %v2823 = vmul.f32 %v2234, %v2234
        %v2824 = vmul.f32 %v2412, %v2412
        %v2825 = vmul.f32 %v2590, %v2590
        %v2826 = vmul.f32 %v1347, %v1347
        %v2827 = vmul.f32 %v1525, %v1525
        %v2828 = vmul.f32 %v1703, %v1703
        %v2829 = vmul.f32 %v1881, %v1881
        %v2830 = vmul.f32 %v2059, %v2059
        %v2831 = vmul.f32 %v2237, %v2237
        %v2832 = vmul.f32 %v2415, %v2415
        %v2833 = vmul.f32 %v2593, %v2593
        %v2834 = vmul.f32 %v1349, %v1349
        %v2835 = vmul.f32 %v1527, %v1527
        %v2836 = vmul.f32 %v1705, %v1705
        %v2837 = vmul.f32 %v1883, %v1883
        %v2838 = vmul.f32 %v2061, %v2061
        %v2839 = vmul.f32 %v2239, %v2239
        %v2840 = vmul.f32 %v2417, %v2417
        %v2841 = vmul.f32 %v2595, %v2595
        %v2842 = vmul.f32 %v1352, %v1352
        %v2843 = vmul.f32 %v1530, %v1530
        %v2844 = vmul.f32 %v1708, %v1708
        %v2845 = vmul.f32 %v1886, %v1886
        %v2846 = vmul.f32 %v2064, %v2064
        %v2847 = vmul.f32 %v2242, %v2242
        %v2848 = vmul.f32 %v2420, %v2420
        %v2849 = vmul.f32 %v2598, %v2598
        %v2850 = vmul.f32 %v1354, %v1354
        %v2851 = vmul.f32 %v1532, %v1532
        %v2852 = vmul.f32 %v1710, %v1710
        %v2853 = vmul.f32 %v1888, %v1888
        %v2854 = vmul.f32 %v2066, %v2066
        %v2855 = vmul.f32 %v2244, %v2244
        %v2856 = vmul.f32 %v2422, %v2422
        %v2857 = vmul.f32 %v2600, %v2600
        %v2858 = vmul.f32 %v1277, %v2602
        %v2859 = vmul.f32 %v1455, %v2603
        %v2860 = vmul.f32 %v1633, %v2604
        %v2861 = vmul.f32 %v1811, %v2605
        %v2862 = vmul.f32 %v1989, %v2606
        %v2863 = vmul.f32 %v2167, %v2607
        %v2864 = vmul.f32 %v2345, %v2608
        %v2865 = vmul.f32 %v2523, %v2609
        %v2866 = vmul.f32 %v1279, %v2610
        %v2867 = vmul.f32 %v1457, %v2611
        %v2868 = vmul.f32 %v1635, %v2612
        %v2869 = vmul.f32 %v1813, %v2613
        %v2870 = vmul.f32 %v1991, %v2614
        %v2871 = vmul.f32 %v2169, %v2615
        %v2872 = vmul.f32 %v2347, %v2616
        %v2873 = vmul.f32 %v2525, %v2617
        %v2874 = vmul.f32 %v1282, %v2618
        %v2875 = vmul.f32 %v1460, %v2619
        %v2876 = vmul.f32 %v1638, %v2620
        %v2877 = vmul.f32 %v1816, %v2621
        %v2878 = vmul.f32 %v1994, %v2622
        %v2879 = vmul.f32 %v2172, %v2623
        %v2880 = vmul.f32 %v2350, %v2624
        %v2881 = vmul.f32 %v2528, %v2625
        %v2882 = vmul.f32 %v1284, %v2626
        %v2883 = vmul.f32 %v1462, %v2627
        %v2884 = vmul.f32 %v1640, %v2628
        %v2885 = vmul.f32 %v1818, %v2629
        %v2886 = vmul.f32 %v1996, %v2630
        %v2887 = vmul.f32 %v2174, %v2631
        %v2888 = vmul.f32 %v2352, %v2632
        %v2889 = vmul.f32 %v2530, %v2633
        %v2890 = vmul.f32 %v1287, %v2634
        %v2891 = vmul.f32 %v1465, %v2635
        %v2892 = vmul.f32 %v1643, %v2636
        %v2893 = vmul.f32 %v1821, %v2637
        %v2894 = vmul.f32 %v1999, %v2638
        %v2895 = vmul.f32 %v2177, %v2639
        %v2896 = vmul.f32 %v2355, %v2640
        %v2897 = vmul.f32 %v2533, %v2641
        %v2898 = vmul.f32 %v1289, %v2642
        %v2899 = vmul.f32 %v1467, %v2643
        %v2900 = vmul.f32 %v1645, %v2644
        %v2901 = vmul.f32 %v1823, %v2645
        %v2902 = vmul.f32 %v2001, %v2646
        %v2903 = vmul.f32 %v2179, %v2647
        %v2904 = vmul.f32 %v2357, %v2648
        %v2905 = vmul.f32 %v2535, %v2649
        %v2906 = vmul.f32 %v1292, %v2650
        %v2907 = vmul.f32 %v1470, %v2651
        %v2908 = vmul.f32 %v1648, %v2652
        %v2909 = vmul.f32 %v1826, %v2653
        %v2910 = vmul.f32 %v2004, %v2654
        %v2911 = vmul.f32 %v2182, %v2655
        %v2912 = vmul.f32 %v2360, %v2656
        %v2913 = vmul.f32 %v2538, %v2657
        %v2914 = vmul.f32 %v1294, %v2658
        %v2915 = vmul.f32 %v1472, %v2659
        %v2916 = vmul.f32 %v1650, %v2660
        %v2917 = vmul.f32 %v1828, %v2661
        %v2918 = vmul.f32 %v2006, %v2662
        %v2919 = vmul.f32 %v2184, %v2663
        %v2920 = vmul.f32 %v2362, %v2664
        %v2921 = vmul.f32 %v2540, %v2665
        %v2922 = vmul.f32 %v1297, %v2666
        %v2923 = vmul.f32 %v1475, %v2667
        %v2924 = vmul.f32 %v1653, %v2668
        %v2925 = vmul.f32 %v1831, %v2669
        %v2926 = vmul.f32 %v2009, %v2670
        %v2927 = vmul.f32 %v2187, %v2671
        %v2928 = vmul.f32 %v2365, %v2672
        %v2929 = vmul.f32 %v2543, %v2673
        %v2930 = vmul.f32 %v1299, %v2674
        %v2931 = vmul.f32 %v1477, %v2675
        %v2932 = vmul.f32 %v1655, %v2676
        %v2933 = vmul.f32 %v1833, %v2677
        %v2934 = vmul.f32 %v2011, %v2678
        %v2935 = vmul.f32 %v2189, %v2679
        %v2936 = vmul.f32 %v2367, %v2680
        %v2937 = vmul.f32 %v2545, %v2681
        %v2938 = vmul.f32 %v1302, %v2682
        %v2939 = vmul.f32 %v1480, %v2683
        %v2940 = vmul.f32 %v1658, %v2684
        %v2941 = vmul.f32 %v1836, %v2685
        %v2942 = vmul.f32 %v2014, %v2686
        %v2943 = vmul.f32 %v2192, %v2687
        %v2944 = vmul.f32 %v2370, %v2688
        %v2945 = vmul.f32 %v2548, %v2689
        %v2946 = vmul.f32 %v1304, %v2690
        %v2947 = vmul.f32 %v1482, %v2691
        %v2948 = vmul.f32 %v1660, %v2692
        %v2949 = vmul.f32 %v1838, %v2693
        %v2950 = vmul.f32 %v2016, %v2694
        %v2951 = vmul.f32 %v2194, %v2695
        %v2952 = vmul.f32 %v2372, %v2696
        %v2953 = vmul.f32 %v2550, %v2697
        %v2954 = vmul.f32 %v1307, %v2698
        %v2955 = vmul.f32 %v1485, %v2699
        %v2956 = vmul.f32 %v1663, %v2700
        %v2957 = vmul.f32 %v1841, %v2701
        %v2958 = vmul.f32 %v2019, %v2702
        %v2959 = vmul.f32 %v2197, %v2703
        %v2960 = vmul.f32 %v2375, %v2704
        %v2961 = vmul.f32 %v2553, %v2705
        %v2962 = vmul.f32 %v1309, %v2706
        %v2963 = vmul.f32 %v1487, %v2707
        %v2964 = vmul.f32 %v1665, %v2708
        %v2965 = vmul.f32 %v1843, %v2709
        %v2966 = vmul.f32 %v2021, %v2710
        %v2967 = vmul.f32 %v2199, %v2711
        %v2968 = vmul.f32 %v2377, %v2712
        %v2969 = vmul.f32 %v2555, %v2713
        %v2970 = vmul.f32 %v1312, %v2714
        %v2971 = vmul.f32 %v1490, %v2715
        %v2972 = vmul.f32 %v1668, %v2716
        %v2973 = vmul.f32 %v1846, %v2717
        %v2974 = vmul.f32 %v2024, %v2718
        %v2975 = vmul.f32 %v2202, %v2719
        %v2976 = vmul.f32 %v2380, %v2720
        %v2977 = vmul.f32 %v2558, %v2721
        %v2978 = vmul.f32 %v1314, %v2722
        %v2979 = vmul.f32 %v1492, %v2723
        %v2980 = vmul.f32 %v1670, %v2724
        %v2981 = vmul.f32 %v1848, %v2725
        %v2982 = vmul.f32 %v2026, %v2726
        %v2983 = vmul.f32 %v2204, %v2727
        %v2984 = vmul.f32 %v2382, %v2728
        %v2985 = vmul.f32 %v2560, %v2729
        %v2986 = vmul.f32 %v1317, %v2730
        %v2987 = vmul.f32 %v1495, %v2731
        %v2988 = vmul.f32 %v1673, %v2732
        %v2989 = vmul.f32 %v1851, %v2733
        %v2990 = vmul.f32 %v2029, %v2734
        %v2991 = vmul.f32 %v2207, %v2735
        %v2992 = vmul.f32 %v2385, %v2736
        %v2993 = vmul.f32 %v2563, %v2737
        %v2994 = vmul.f32 %v1319, %v2738
        %v2995 = vmul.f32 %v1497, %v2739
        %v2996 = vmul.f32 %v1675, %v2740
        %v2997 = vmul.f32 %v1853, %v2741
        %v2998 = vmul.f32 %v2031, %v2742
        %v2999 = vmul.f32 %v2209, %v2743
        %v3000 = vmul.f32 %v2387, %v2744
        %v3001 = vmul.f32 %v2565, %v2745
        %v3002 = vmul.f32 %v1322, %v2746
        %v3003 = vmul.f32 %v1500, %v2747
        %v3004 = vmul.f32 %v1678, %v2748
        %v3005 = vmul.f32 %v1856, %v2749
        %v3006 = vmul.f32 %v2034, %v2750
        %v3007 = vmul.f32 %v2212, %v2751
        %v3008 = vmul.f32 %v2390, %v2752
        %v3009 = vmul.f32 %v2568, %v2753
        %v3010 = vmul.f32 %v1324, %v2754
        %v3011 = vmul.f32 %v1502, %v2755
        %v3012 = vmul.f32 %v1680, %v2756
        %v3013 = vmul.f32 %v1858, %v2757
        %v3014 = vmul.f32 %v2036, %v2758
        %v3015 = vmul.f32 %v2214, %v2759
        %v3016 = vmul.f32 %v2392, %v2760
        %v3017 = vmul.f32 %v2570, %v2761
        %v3018 = vmul.f32 %v1327, %v2762
        %v3019 = vmul.f32 %v1505, %v2763
        %v3020 = vmul.f32 %v1683, %v2764
        %v3021 = vmul.f32 %v1861, %v2765
        %v3022 = vmul.f32 %v2039, %v2766
        %v3023 = vmul.f32 %v2217, %v2767
        %v3024 = vmul.f32 %v2395, %v2768
        %v3025 = vmul.f32 %v2573, %v2769
        %v3026 = vmul.f32 %v1329, %v2770
        %v3027 = vmul.f32 %v1507, %v2771
        %v3028 = vmul.f32 %v1685, %v2772
        %v3029 = vmul.f32 %v1863, %v2773
        %v3030 = vmul.f32 %v2041, %v2774
        %v3031 = vmul.f32 %v2219, %v2775
        %v3032 = vmul.f32 %v2397, %v2776
        %v3033 = vmul.f32 %v2575, %v2777
        %v3034 = vmul.f32 %v1332, %v2778
        %v3035 = vmul.f32 %v1510, %v2779
        %v3036 = vmul.f32 %v1688, %v2780
        %v3037 = vmul.f32 %v1866, %v2781
        %v3038 = vmul.f32 %v2044, %v2782
        %v3039 = vmul.f32 %v2222, %v2783
        %v3040 = vmul.f32 %v2400, %v2784
        %v3041 = vmul.f32 %v2578, %v2785
        %v3042 = vmul.f32 %v1334, %v2786
        %v3043 = vmul.f32 %v1512, %v2787
        %v3044 = vmul.f32 %v1690, %v2788
        %v3045 = vmul.f32 %v1868, %v2789
        %v3046 = vmul.f32 %v2046, %v2790
        %v3047 = vmul.f32 %v2224, %v2791
        %v3048 = vmul.f32 %v2402, %v2792
        %v3049 = vmul.f32 %v2580, %v2793
        %v3050 = vmul.f32 %v1337, %v2794
        %v3051 = vmul.f32 %v1515, %v2795
        %v3052 = vmul.f32 %v1693, %v2796
        %v3053 = vmul.f32 %v1871, %v2797
        %v3054 = vmul.f32 %v2049, %v2798
        %v3055 = vmul.f32 %v2227, %v2799
        %v3056 = vmul.f32 %v2405, %v2800
        %v3057 = vmul.f32 %v2583, %v2801
        %v3058 = vmul.f32 %v1339, %v2802
        %v3059 = vmul.f32 %v1517, %v2803
        %v3060 = vmul.f32 %v1695, %v2804
        %v3061 = vmul.f32 %v1873, %v2805
        %v3062 = vmul.f32 %v2051, %v2806
        %v3063 = vmul.f32 %v2229, %v2807
        %v3064 = vmul.f32 %v2407, %v2808
        %v3065 = vmul.f32 %v2585, %v2809
        %v3066 = vmul.f32 %v1342, %v2810
        %v3067 = vmul.f32 %v1520, %v2811
        %v3068 = vmul.f32 %v1698, %v2812
        %v3069 = vmul.f32 %v1876, %v2813
        %v3070 = vmul.f32 %v2054, %v2814
        %v3071 = vmul.f32 %v2232, %v2815
        %v3072 = vmul.f32 %v2410, %v2816
        %v3073 = vmul.f32 %v2588, %v2817
        %v3074 = vmul.f32 %v1344, %v2818
        %v3075 = vmul.f32 %v1522, %v2819
        %v3076 = vmul.f32 %v1700, %v2820
        %v3077 = vmul.f32 %v1878, %v2821
        %v3078 = vmul.f32 %v2056, %v2822
        %v3079 = vmul.f32 %v2234, %v2823
        %v3080 = vmul.f32 %v2412, %v2824
        %v3081 = vmul.f32 %v2590, %v2825
        %v3082 = vmul.f32 %v1347, %v2826
        %v3083 = vmul.f32 %v1525, %v2827
        %v3084 = vmul.f32 %v1703, %v2828
        %v3085 = vmul.f32 %v1881, %v2829
        %v3086 = vmul.f32 %v2059, %v2830
        %v3087 = vmul.f32 %v2237, %v2831
        %v3088 = vmul.f32 %v2415, %v2832
        %v3089 = vmul.f32 %v2593, %v2833
        %v3090 = vmul.f32 %v1349, %v2834
        %v3091 = vmul.f32 %v1527, %v2835
        %v3092 = vmul.f32 %v1705, %v2836
        %v3093 = vmul.f32 %v1883, %v2837
        %v3094 = vmul.f32 %v2061, %v2838
        %v3095 = vmul.f32 %v2239, %v2839
        %v3096 = vmul.f32 %v2417, %v2840
        %v3097 = vmul.f32 %v2595, %v2841
        %v3098 = vmul.f32 %v1352, %v2842
        %v3099 = vmul.f32 %v1530, %v2843
        %v3100 = vmul.f32 %v1708, %v2844
        %v3101 = vmul.f32 %v1886, %v2845
        %v3102 = vmul.f32 %v2064, %v2846
        %v3103 = vmul.f32 %v2242, %v2847
        %v3104 = vmul.f32 %v2420, %v2848
        %v3105 = vmul.f32 %v2598, %v2849
        %v3106 = vmul.f32 %v1354, %v2850
        %v3107 = vmul.f32 %v1532, %v2851
        %v3108 = vmul.f32 %v1710, %v2852
        %v3109 = vmul.f32 %v1888, %v2853
        %v3110 = vmul.f32 %v2066, %v2854
        %v3111 = vmul.f32 %v2244, %v2855
        %v3112 = vmul.f32 %v2422, %v2856
        %v3113 = vmul.f32 %v2600, %v2857
        %v3114 = vmul.f32 %v2858, 0.044715
        %v3115 = vmul.f32 %v2859, 0.044715
        %v3116 = vmul.f32 %v2860, 0.044715
        %v3117 = vmul.f32 %v2861, 0.044715
        %v3118 = vmul.f32 %v2862, 0.044715
        %v3119 = vmul.f32 %v2863, 0.044715
        %v3120 = vmul.f32 %v2864, 0.044715
        %v3121 = vmul.f32 %v2865, 0.044715
        %v3122 = vmul.f32 %v2866, 0.044715
        %v3123 = vmul.f32 %v2867, 0.044715
        %v3124 = vmul.f32 %v2868, 0.044715
        %v3125 = vmul.f32 %v2869, 0.044715
        %v3126 = vmul.f32 %v2870, 0.044715
        %v3127 = vmul.f32 %v2871, 0.044715
        %v3128 = vmul.f32 %v2872, 0.044715
        %v3129 = vmul.f32 %v2873, 0.044715
        %v3130 = vmul.f32 %v2874, 0.044715
        %v3131 = vmul.f32 %v2875, 0.044715
        %v3132 = vmul.f32 %v2876, 0.044715
        %v3133 = vmul.f32 %v2877, 0.044715
        %v3134 = vmul.f32 %v2878, 0.044715
        %v3135 = vmul.f32 %v2879, 0.044715
        %v3136 = vmul.f32 %v2880, 0.044715
        %v3137 = vmul.f32 %v2881, 0.044715
        %v3138 = vmul.f32 %v2882, 0.044715
        %v3139 = vmul.f32 %v2883, 0.044715
        %v3140 = vmul.f32 %v2884, 0.044715
        %v3141 = vmul.f32 %v2885, 0.044715
        %v3142 = vmul.f32 %v2886, 0.044715
        %v3143 = vmul.f32 %v2887, 0.044715
        %v3144 = vmul.f32 %v2888, 0.044715
        %v3145 = vmul.f32 %v2889, 0.044715
        %v3146 = vmul.f32 %v2890, 0.044715
        %v3147 = vmul.f32 %v2891, 0.044715
        %v3148 = vmul.f32 %v2892, 0.044715
        %v3149 = vmul.f32 %v2893, 0.044715
        %v3150 = vmul.f32 %v2894, 0.044715
        %v3151 = vmul.f32 %v2895, 0.044715
        %v3152 = vmul.f32 %v2896, 0.044715
        %v3153 = vmul.f32 %v2897, 0.044715
        %v3154 = vmul.f32 %v2898, 0.044715
        %v3155 = vmul.f32 %v2899, 0.044715
        %v3156 = vmul.f32 %v2900, 0.044715
        %v3157 = vmul.f32 %v2901, 0.044715
        %v3158 = vmul.f32 %v2902, 0.044715
        %v3159 = vmul.f32 %v2903, 0.044715
        %v3160 = vmul.f32 %v2904, 0.044715
        %v3161 = vmul.f32 %v2905, 0.044715
        %v3162 = vmul.f32 %v2906, 0.044715
        %v3163 = vmul.f32 %v2907, 0.044715
        %v3164 = vmul.f32 %v2908, 0.044715
        %v3165 = vmul.f32 %v2909, 0.044715
        %v3166 = vmul.f32 %v2910, 0.044715
        %v3167 = vmul.f32 %v2911, 0.044715
        %v3168 = vmul.f32 %v2912, 0.044715
        %v3169 = vmul.f32 %v2913, 0.044715
        %v3170 = vmul.f32 %v2914, 0.044715
        %v3171 = vmul.f32 %v2915, 0.044715
        %v3172 = vmul.f32 %v2916, 0.044715
        %v3173 = vmul.f32 %v2917, 0.044715
        %v3174 = vmul.f32 %v2918, 0.044715
        %v3175 = vmul.f32 %v2919, 0.044715
        %v3176 = vmul.f32 %v2920, 0.044715
        %v3177 = vmul.f32 %v2921, 0.044715
        %v3178 = vmul.f32 %v2922, 0.044715
        %v3179 = vmul.f32 %v2923, 0.044715
        %v3180 = vmul.f32 %v2924, 0.044715
        %v3181 = vmul.f32 %v2925, 0.044715
        %v3182 = vmul.f32 %v2926, 0.044715
        %v3183 = vmul.f32 %v2927, 0.044715
        %v3184 = vmul.f32 %v2928, 0.044715
        %v3185 = vmul.f32 %v2929, 0.044715
        %v3186 = vmul.f32 %v2930, 0.044715
        %v3187 = vmul.f32 %v2931, 0.044715
        %v3188 = vmul.f32 %v2932, 0.044715
        %v3189 = vmul.f32 %v2933, 0.044715
        %v3190 = vmul.f32 %v2934, 0.044715
        %v3191 = vmul.f32 %v2935, 0.044715
        %v3192 = vmul.f32 %v2936, 0.044715
        %v3193 = vmul.f32 %v2937, 0.044715
        %v3194 = vmul.f32 %v2938, 0.044715
        %v3195 = vmul.f32 %v2939, 0.044715
        %v3196 = vmul.f32 %v2940, 0.044715
        %v3197 = vmul.f32 %v2941, 0.044715
        %v3198 = vmul.f32 %v2942, 0.044715
        %v3199 = vmul.f32 %v2943, 0.044715
        %v3200 = vmul.f32 %v2944, 0.044715
        %v3201 = vmul.f32 %v2945, 0.044715
        %v3202 = vmul.f32 %v2946, 0.044715
        %v3203 = vmul.f32 %v2947, 0.044715
        %v3204 = vmul.f32 %v2948, 0.044715
        %v3205 = vmul.f32 %v2949, 0.044715
        %v3206 = vmul.f32 %v2950, 0.044715
        %v3207 = vmul.f32 %v2951, 0.044715
        %v3208 = vmul.f32 %v2952, 0.044715
        %v3209 = vmul.f32 %v2953, 0.044715
        %v3210 = vmul.f32 %v2954, 0.044715
        %v3211 = vmul.f32 %v2955, 0.044715
        %v3212 = vmul.f32 %v2956, 0.044715
        %v3213 = vmul.f32 %v2957, 0.044715
        %v3214 = vmul.f32 %v2958, 0.044715
        %v3215 = vmul.f32 %v2959, 0.044715
        %v3216 = vmul.f32 %v2960, 0.044715
        %v3217 = vmul.f32 %v2961, 0.044715
        %v3218 = vmul.f32 %v2962, 0.044715
        %v3219 = vmul.f32 %v2963, 0.044715
        %v3220 = vmul.f32 %v2964, 0.044715
        %v3221 = vmul.f32 %v2965, 0.044715
        %v3222 = vmul.f32 %v2966, 0.044715
        %v3223 = vmul.f32 %v2967, 0.044715
        %v3224 = vmul.f32 %v2968, 0.044715
        %v3225 = vmul.f32 %v2969, 0.044715
        %v3226 = vmul.f32 %v2970, 0.044715
        %v3227 = vmul.f32 %v2971, 0.044715
        %v3228 = vmul.f32 %v2972, 0.044715
        %v3229 = vmul.f32 %v2973, 0.044715
        %v3230 = vmul.f32 %v2974, 0.044715
        %v3231 = vmul.f32 %v2975, 0.044715
        %v3232 = vmul.f32 %v2976, 0.044715
        %v3233 = vmul.f32 %v2977, 0.044715
        %v3234 = vmul.f32 %v2978, 0.044715
        %v3235 = vmul.f32 %v2979, 0.044715
        %v3236 = vmul.f32 %v2980, 0.044715
        %v3237 = vmul.f32 %v2981, 0.044715
        %v3238 = vmul.f32 %v2982, 0.044715
        %v3239 = vmul.f32 %v2983, 0.044715
        %v3240 = vmul.f32 %v2984, 0.044715
        %v3241 = vmul.f32 %v2985, 0.044715
        %v3242 = vmul.f32 %v2986, 0.044715
        %v3243 = vmul.f32 %v2987, 0.044715
        %v3244 = vmul.f32 %v2988, 0.044715
        %v3245 = vmul.f32 %v2989, 0.044715
        %v3246 = vmul.f32 %v2990, 0.044715
        %v3247 = vmul.f32 %v2991, 0.044715
        %v3248 = vmul.f32 %v2992, 0.044715
        %v3249 = vmul.f32 %v2993, 0.044715
        %v3250 = vmul.f32 %v2994, 0.044715
        %v3251 = vmul.f32 %v2995, 0.044715
        %v3252 = vmul.f32 %v2996, 0.044715
        %v3253 = vmul.f32 %v2997, 0.044715
        %v3254 = vmul.f32 %v2998, 0.044715
        %v3255 = vmul.f32 %v2999, 0.044715
        %v3256 = vmul.f32 %v3000, 0.044715
        %v3257 = vmul.f32 %v3001, 0.044715
        %v3258 = vmul.f32 %v3002, 0.044715
        %v3259 = vmul.f32 %v3003, 0.044715
        %v3260 = vmul.f32 %v3004, 0.044715
        %v3261 = vmul.f32 %v3005, 0.044715
        %v3262 = vmul.f32 %v3006, 0.044715
        %v3263 = vmul.f32 %v3007, 0.044715
        %v3264 = vmul.f32 %v3008, 0.044715
        %v3265 = vmul.f32 %v3009, 0.044715
        %v3266 = vmul.f32 %v3010, 0.044715
        %v3267 = vmul.f32 %v3011, 0.044715
        %v3268 = vmul.f32 %v3012, 0.044715
        %v3269 = vmul.f32 %v3013, 0.044715
        %v3270 = vmul.f32 %v3014, 0.044715
        %v3271 = vmul.f32 %v3015, 0.044715
        %v3272 = vmul.f32 %v3016, 0.044715
        %v3273 = vmul.f32 %v3017, 0.044715
        %v3274 = vmul.f32 %v3018, 0.044715
        %v3275 = vmul.f32 %v3019, 0.044715
        %v3276 = vmul.f32 %v3020, 0.044715
        %v3277 = vmul.f32 %v3021, 0.044715
        %v3278 = vmul.f32 %v3022, 0.044715
        %v3279 = vmul.f32 %v3023, 0.044715
        %v3280 = vmul.f32 %v3024, 0.044715
        %v3281 = vmul.f32 %v3025, 0.044715
        %v3282 = vmul.f32 %v3026, 0.044715
        %v3283 = vmul.f32 %v3027, 0.044715
        %v3284 = vmul.f32 %v3028, 0.044715
        %v3285 = vmul.f32 %v3029, 0.044715
        %v3286 = vmul.f32 %v3030, 0.044715
        %v3287 = vmul.f32 %v3031, 0.044715
        %v3288 = vmul.f32 %v3032, 0.044715
        %v3289 = vmul.f32 %v3033, 0.044715
        %v3290 = vmul.f32 %v3034, 0.044715
        %v3291 = vmul.f32 %v3035, 0.044715
        %v3292 = vmul.f32 %v3036, 0.044715
        %v3293 = vmul.f32 %v3037, 0.044715
        %v3294 = vmul.f32 %v3038, 0.044715
        %v3295 = vmul.f32 %v3039, 0.044715
        %v3296 = vmul.f32 %v3040, 0.044715
        %v3297 = vmul.f32 %v3041, 0.044715
        %v3298 = vmul.f32 %v3042, 0.044715
        %v3299 = vmul.f32 %v3043, 0.044715
        %v3300 = vmul.f32 %v3044, 0.044715
        %v3301 = vmul.f32 %v3045, 0.044715
        %v3302 = vmul.f32 %v3046, 0.044715
        %v3303 = vmul.f32 %v3047, 0.044715
        %v3304 = vmul.f32 %v3048, 0.044715
        %v3305 = vmul.f32 %v3049, 0.044715
        %v3306 = vmul.f32 %v3050, 0.044715
        %v3307 = vmul.f32 %v3051, 0.044715
        %v3308 = vmul.f32 %v3052, 0.044715
        %v3309 = vmul.f32 %v3053, 0.044715
        %v3310 = vmul.f32 %v3054, 0.044715
        %v3311 = vmul.f32 %v3055, 0.044715
        %v3312 = vmul.f32 %v3056, 0.044715
        %v3313 = vmul.f32 %v3057, 0.044715
        %v3314 = vmul.f32 %v3058, 0.044715
        %v3315 = vmul.f32 %v3059, 0.044715
        %v3316 = vmul.f32 %v3060, 0.044715
        %v3317 = vmul.f32 %v3061, 0.044715
        %v3318 = vmul.f32 %v3062, 0.044715
        %v3319 = vmul.f32 %v3063, 0.044715
        %v3320 = vmul.f32 %v3064, 0.044715
        %v3321 = vmul.f32 %v3065, 0.044715
        %v3322 = vmul.f32 %v3066, 0.044715
        %v3323 = vmul.f32 %v3067, 0.044715
        %v3324 = vmul.f32 %v3068, 0.044715
        %v3325 = vmul.f32 %v3069, 0.044715
        %v3326 = vmul.f32 %v3070, 0.044715
        %v3327 = vmul.f32 %v3071, 0.044715
        %v3328 = vmul.f32 %v3072, 0.044715
        %v3329 = vmul.f32 %v3073, 0.044715
        %v3330 = vmul.f32 %v3074, 0.044715
        %v3331 = vmul.f32 %v3075, 0.044715
        %v3332 = vmul.f32 %v3076, 0.044715
        %v3333 = vmul.f32 %v3077, 0.044715
        %v3334 = vmul.f32 %v3078, 0.044715
        %v3335 = vmul.f32 %v3079, 0.044715
        %v3336 = vmul.f32 %v3080, 0.044715
        %v3337 = vmul.f32 %v3081, 0.044715
        %v3338 = vmul.f32 %v3082, 0.044715
        %v3339 = vmul.f32 %v3083, 0.044715
        %v3340 = vmul.f32 %v3084, 0.044715
        %v3341 = vmul.f32 %v3085, 0.044715
        %v3342 = vmul.f32 %v3086, 0.044715
        %v3343 = vmul.f32 %v3087, 0.044715
        %v3344 = vmul.f32 %v3088, 0.044715
        %v3345 = vmul.f32 %v3089, 0.044715
        %v3346 = vmul.f32 %v3090, 0.044715
        %v3347 = vmul.f32 %v3091, 0.044715
        %v3348 = vmul.f32 %v3092, 0.044715
        %v3349 = vmul.f32 %v3093, 0.044715
        %v3350 = vmul.f32 %v3094, 0.044715
        %v3351 = vmul.f32 %v3095, 0.044715
        %v3352 = vmul.f32 %v3096, 0.044715
        %v3353 = vmul.f32 %v3097, 0.044715
        %v3354 = vmul.f32 %v3098, 0.044715
        %v3355 = vmul.f32 %v3099, 0.044715
        %v3356 = vmul.f32 %v3100, 0.044715
        %v3357 = vmul.f32 %v3101, 0.044715
        %v3358 = vmul.f32 %v3102, 0.044715
        %v3359 = vmul.f32 %v3103, 0.044715
        %v3360 = vmul.f32 %v3104, 0.044715
        %v3361 = vmul.f32 %v3105, 0.044715
        %v3362 = vmul.f32 %v3106, 0.044715
        %v3363 = vmul.f32 %v3107, 0.044715
        %v3364 = vmul.f32 %v3108, 0.044715
        %v3365 = vmul.f32 %v3109, 0.044715
        %v3366 = vmul.f32 %v3110, 0.044715
        %v3367 = vmul.f32 %v3111, 0.044715
        %v3368 = vmul.f32 %v3112, 0.044715
        %v3369 = vmul.f32 %v3113, 0.044715
        %v3370 = vadd.f32 %v1277, %v3114
        %v3371 = vadd.f32 %v1455, %v3115
        %v3372 = vadd.f32 %v1633, %v3116
        %v3373 = vadd.f32 %v1811, %v3117
        %v3374 = vadd.f32 %v1989, %v3118
        %v3375 = vadd.f32 %v2167, %v3119
        %v3376 = vadd.f32 %v2345, %v3120
        %v3377 = vadd.f32 %v2523, %v3121
        %v3378 = vadd.f32 %v1279, %v3122
        %v3379 = vadd.f32 %v1457, %v3123
        %v3380 = vadd.f32 %v1635, %v3124
        %v3381 = vadd.f32 %v1813, %v3125
        %v3382 = vadd.f32 %v1991, %v3126
        %v3383 = vadd.f32 %v2169, %v3127
        %v3384 = vadd.f32 %v2347, %v3128
        %v3385 = vadd.f32 %v2525, %v3129
        %v3386 = vadd.f32 %v1282, %v3130
        %v3387 = vadd.f32 %v1460, %v3131
        %v3388 = vadd.f32 %v1638, %v3132
        %v3389 = vadd.f32 %v1816, %v3133
        %v3390 = vadd.f32 %v1994, %v3134
        %v3391 = vadd.f32 %v2172, %v3135
        %v3392 = vadd.f32 %v2350, %v3136
        %v3393 = vadd.f32 %v2528, %v3137
        %v3394 = vadd.f32 %v1284, %v3138
        %v3395 = vadd.f32 %v1462, %v3139
        %v3396 = vadd.f32 %v1640, %v3140
        %v3397 = vadd.f32 %v1818, %v3141
        %v3398 = vadd.f32 %v1996, %v3142
        %v3399 = vadd.f32 %v2174, %v3143
        %v3400 = vadd.f32 %v2352, %v3144
        %v3401 = vadd.f32 %v2530, %v3145
        %v3402 = vadd.f32 %v1287, %v3146
        %v3403 = vadd.f32 %v1465, %v3147
        %v3404 = vadd.f32 %v1643, %v3148
        %v3405 = vadd.f32 %v1821, %v3149
        %v3406 = vadd.f32 %v1999, %v3150
        %v3407 = vadd.f32 %v2177, %v3151
        %v3408 = vadd.f32 %v2355, %v3152
        %v3409 = vadd.f32 %v2533, %v3153
        %v3410 = vadd.f32 %v1289, %v3154
        %v3411 = vadd.f32 %v1467, %v3155
        %v3412 = vadd.f32 %v1645, %v3156
        %v3413 = vadd.f32 %v1823, %v3157
        %v3414 = vadd.f32 %v2001, %v3158
        %v3415 = vadd.f32 %v2179, %v3159
        %v3416 = vadd.f32 %v2357, %v3160
        %v3417 = vadd.f32 %v2535, %v3161
        %v3418 = vadd.f32 %v1292, %v3162
        %v3419 = vadd.f32 %v1470, %v3163
        %v3420 = vadd.f32 %v1648, %v3164
        %v3421 = vadd.f32 %v1826, %v3165
        %v3422 = vadd.f32 %v2004, %v3166
        %v3423 = vadd.f32 %v2182, %v3167
        %v3424 = vadd.f32 %v2360, %v3168
        %v3425 = vadd.f32 %v2538, %v3169
        %v3426 = vadd.f32 %v1294, %v3170
        %v3427 = vadd.f32 %v1472, %v3171
        %v3428 = vadd.f32 %v1650, %v3172
        %v3429 = vadd.f32 %v1828, %v3173
        %v3430 = vadd.f32 %v2006, %v3174
        %v3431 = vadd.f32 %v2184, %v3175
        %v3432 = vadd.f32 %v2362, %v3176
        %v3433 = vadd.f32 %v2540, %v3177
        %v3434 = vadd.f32 %v1297, %v3178
        %v3435 = vadd.f32 %v1475, %v3179
        %v3436 = vadd.f32 %v1653, %v3180
        %v3437 = vadd.f32 %v1831, %v3181
        %v3438 = vadd.f32 %v2009, %v3182
        %v3439 = vadd.f32 %v2187, %v3183
        %v3440 = vadd.f32 %v2365, %v3184
        %v3441 = vadd.f32 %v2543, %v3185
        %v3442 = vadd.f32 %v1299, %v3186
        %v3443 = vadd.f32 %v1477, %v3187
        %v3444 = vadd.f32 %v1655, %v3188
        %v3445 = vadd.f32 %v1833, %v3189
        %v3446 = vadd.f32 %v2011, %v3190
        %v3447 = vadd.f32 %v2189, %v3191
        %v3448 = vadd.f32 %v2367, %v3192
        %v3449 = vadd.f32 %v2545, %v3193
        %v3450 = vadd.f32 %v1302, %v3194
        %v3451 = vadd.f32 %v1480, %v3195
        %v3452 = vadd.f32 %v1658, %v3196
        %v3453 = vadd.f32 %v1836, %v3197
        %v3454 = vadd.f32 %v2014, %v3198
        %v3455 = vadd.f32 %v2192, %v3199
        %v3456 = vadd.f32 %v2370, %v3200
        %v3457 = vadd.f32 %v2548, %v3201
        %v3458 = vadd.f32 %v1304, %v3202
        %v3459 = vadd.f32 %v1482, %v3203
        %v3460 = vadd.f32 %v1660, %v3204
        %v3461 = vadd.f32 %v1838, %v3205
        %v3462 = vadd.f32 %v2016, %v3206
        %v3463 = vadd.f32 %v2194, %v3207
        %v3464 = vadd.f32 %v2372, %v3208
        %v3465 = vadd.f32 %v2550, %v3209
        %v3466 = vadd.f32 %v1307, %v3210
        %v3467 = vadd.f32 %v1485, %v3211
        %v3468 = vadd.f32 %v1663, %v3212
        %v3469 = vadd.f32 %v1841, %v3213
        %v3470 = vadd.f32 %v2019, %v3214
        %v3471 = vadd.f32 %v2197, %v3215
        %v3472 = vadd.f32 %v2375, %v3216
        %v3473 = vadd.f32 %v2553, %v3217
        %v3474 = vadd.f32 %v1309, %v3218
        %v3475 = vadd.f32 %v1487, %v3219
        %v3476 = vadd.f32 %v1665, %v3220
        %v3477 = vadd.f32 %v1843, %v3221
        %v3478 = vadd.f32 %v2021, %v3222
        %v3479 = vadd.f32 %v2199, %v3223
        %v3480 = vadd.f32 %v2377, %v3224
        %v3481 = vadd.f32 %v2555, %v3225
        %v3482 = vadd.f32 %v1312, %v3226
        %v3483 = vadd.f32 %v1490, %v3227
        %v3484 = vadd.f32 %v1668, %v3228
        %v3485 = vadd.f32 %v1846, %v3229
        %v3486 = vadd.f32 %v2024, %v3230
        %v3487 = vadd.f32 %v2202, %v3231
        %v3488 = vadd.f32 %v2380, %v3232
        %v3489 = vadd.f32 %v2558, %v3233
        %v3490 = vadd.f32 %v1314, %v3234
        %v3491 = vadd.f32 %v1492, %v3235
        %v3492 = vadd.f32 %v1670, %v3236
        %v3493 = vadd.f32 %v1848, %v3237
        %v3494 = vadd.f32 %v2026, %v3238
        %v3495 = vadd.f32 %v2204, %v3239
        %v3496 = vadd.f32 %v2382, %v3240
        %v3497 = vadd.f32 %v2560, %v3241
        %v3498 = vadd.f32 %v1317, %v3242
        %v3499 = vadd.f32 %v1495, %v3243
        %v3500 = vadd.f32 %v1673, %v3244
        %v3501 = vadd.f32 %v1851, %v3245
        %v3502 = vadd.f32 %v2029, %v3246
        %v3503 = vadd.f32 %v2207, %v3247
        %v3504 = vadd.f32 %v2385, %v3248
        %v3505 = vadd.f32 %v2563, %v3249
        %v3506 = vadd.f32 %v1319, %v3250
        %v3507 = vadd.f32 %v1497, %v3251
        %v3508 = vadd.f32 %v1675, %v3252
        %v3509 = vadd.f32 %v1853, %v3253
        %v3510 = vadd.f32 %v2031, %v3254
        %v3511 = vadd.f32 %v2209, %v3255
        %v3512 = vadd.f32 %v2387, %v3256
        %v3513 = vadd.f32 %v2565, %v3257
        %v3514 = vadd.f32 %v1322, %v3258
        %v3515 = vadd.f32 %v1500, %v3259
        %v3516 = vadd.f32 %v1678, %v3260
        %v3517 = vadd.f32 %v1856, %v3261
        %v3518 = vadd.f32 %v2034, %v3262
        %v3519 = vadd.f32 %v2212, %v3263
        %v3520 = vadd.f32 %v2390, %v3264
        %v3521 = vadd.f32 %v2568, %v3265
        %v3522 = vadd.f32 %v1324, %v3266
        %v3523 = vadd.f32 %v1502, %v3267
        %v3524 = vadd.f32 %v1680, %v3268
        %v3525 = vadd.f32 %v1858, %v3269
        %v3526 = vadd.f32 %v2036, %v3270
        %v3527 = vadd.f32 %v2214, %v3271
        %v3528 = vadd.f32 %v2392, %v3272
        %v3529 = vadd.f32 %v2570, %v3273
        %v3530 = vadd.f32 %v1327, %v3274
        %v3531 = vadd.f32 %v1505, %v3275
        %v3532 = vadd.f32 %v1683, %v3276
        %v3533 = vadd.f32 %v1861, %v3277
        %v3534 = vadd.f32 %v2039, %v3278
        %v3535 = vadd.f32 %v2217, %v3279
        %v3536 = vadd.f32 %v2395, %v3280
        %v3537 = vadd.f32 %v2573, %v3281
        %v3538 = vadd.f32 %v1329, %v3282
        %v3539 = vadd.f32 %v1507, %v3283
        %v3540 = vadd.f32 %v1685, %v3284
        %v3541 = vadd.f32 %v1863, %v3285
        %v3542 = vadd.f32 %v2041, %v3286
        %v3543 = vadd.f32 %v2219, %v3287
        %v3544 = vadd.f32 %v2397, %v3288
        %v3545 = vadd.f32 %v2575, %v3289
        %v3546 = vadd.f32 %v1332, %v3290
        %v3547 = vadd.f32 %v1510, %v3291
        %v3548 = vadd.f32 %v1688, %v3292
        %v3549 = vadd.f32 %v1866, %v3293
        %v3550 = vadd.f32 %v2044, %v3294
        %v3551 = vadd.f32 %v2222, %v3295
        %v3552 = vadd.f32 %v2400, %v3296
        %v3553 = vadd.f32 %v2578, %v3297
        %v3554 = vadd.f32 %v1334, %v3298
        %v3555 = vadd.f32 %v1512, %v3299
        %v3556 = vadd.f32 %v1690, %v3300
        %v3557 = vadd.f32 %v1868, %v3301
        %v3558 = vadd.f32 %v2046, %v3302
        %v3559 = vadd.f32 %v2224, %v3303
        %v3560 = vadd.f32 %v2402, %v3304
        %v3561 = vadd.f32 %v2580, %v3305
        %v3562 = vadd.f32 %v1337, %v3306
        %v3563 = vadd.f32 %v1515, %v3307
        %v3564 = vadd.f32 %v1693, %v3308
        %v3565 = vadd.f32 %v1871, %v3309
        %v3566 = vadd.f32 %v2049, %v3310
        %v3567 = vadd.f32 %v2227, %v3311
        %v3568 = vadd.f32 %v2405, %v3312
        %v3569 = vadd.f32 %v2583, %v3313
        %v3570 = vadd.f32 %v1339, %v3314
        %v3571 = vadd.f32 %v1517, %v3315
        %v3572 = vadd.f32 %v1695, %v3316
        %v3573 = vadd.f32 %v1873, %v3317
        %v3574 = vadd.f32 %v2051, %v3318
        %v3575 = vadd.f32 %v2229, %v3319
        %v3576 = vadd.f32 %v2407, %v3320
        %v3577 = vadd.f32 %v2585, %v3321
        %v3578 = vadd.f32 %v1342, %v3322
        %v3579 = vadd.f32 %v1520, %v3323
        %v3580 = vadd.f32 %v1698, %v3324
        %v3581 = vadd.f32 %v1876, %v3325
        %v3582 = vadd.f32 %v2054, %v3326
        %v3583 = vadd.f32 %v2232, %v3327
        %v3584 = vadd.f32 %v2410, %v3328
        %v3585 = vadd.f32 %v2588, %v3329
        %v3586 = vadd.f32 %v1344, %v3330
        %v3587 = vadd.f32 %v1522, %v3331
        %v3588 = vadd.f32 %v1700, %v3332
        %v3589 = vadd.f32 %v1878, %v3333
        %v3590 = vadd.f32 %v2056, %v3334
        %v3591 = vadd.f32 %v2234, %v3335
        %v3592 = vadd.f32 %v2412, %v3336
        %v3593 = vadd.f32 %v2590, %v3337
        %v3594 = vadd.f32 %v1347, %v3338
        %v3595 = vadd.f32 %v1525, %v3339
        %v3596 = vadd.f32 %v1703, %v3340
        %v3597 = vadd.f32 %v1881, %v3341
        %v3598 = vadd.f32 %v2059, %v3342
        %v3599 = vadd.f32 %v2237, %v3343
        %v3600 = vadd.f32 %v2415, %v3344
        %v3601 = vadd.f32 %v2593, %v3345
        %v3602 = vadd.f32 %v1349, %v3346
        %v3603 = vadd.f32 %v1527, %v3347
        %v3604 = vadd.f32 %v1705, %v3348
        %v3605 = vadd.f32 %v1883, %v3349
        %v3606 = vadd.f32 %v2061, %v3350
        %v3607 = vadd.f32 %v2239, %v3351
        %v3608 = vadd.f32 %v2417, %v3352
        %v3609 = vadd.f32 %v2595, %v3353
        %v3610 = vadd.f32 %v1352, %v3354
        %v3611 = vadd.f32 %v1530, %v3355
        %v3612 = vadd.f32 %v1708, %v3356
        %v3613 = vadd.f32 %v1886, %v3357
        %v3614 = vadd.f32 %v2064, %v3358
        %v3615 = vadd.f32 %v2242, %v3359
        %v3616 = vadd.f32 %v2420, %v3360
        %v3617 = vadd.f32 %v2598, %v3361
        %v3618 = vadd.f32 %v1354, %v3362
        %v3619 = vadd.f32 %v1532, %v3363
        %v3620 = vadd.f32 %v1710, %v3364
        %v3621 = vadd.f32 %v1888, %v3365
        %v3622 = vadd.f32 %v2066, %v3366
        %v3623 = vadd.f32 %v2244, %v3367
        %v3624 = vadd.f32 %v2422, %v3368
        %v3625 = vadd.f32 %v2600, %v3369
        %v3626 = vmul.f32 %v3370, 0.7978846
        %v3627 = vmul.f32 %v3371, 0.7978846
        %v3628 = vmul.f32 %v3372, 0.7978846
        %v3629 = vmul.f32 %v3373, 0.7978846
        %v3630 = vmul.f32 %v3374, 0.7978846
        %v3631 = vmul.f32 %v3375, 0.7978846
        %v3632 = vmul.f32 %v3376, 0.7978846
        %v3633 = vmul.f32 %v3377, 0.7978846
        %v3634 = vmul.f32 %v3378, 0.7978846
        %v3635 = vmul.f32 %v3379, 0.7978846
        %v3636 = vmul.f32 %v3380, 0.7978846
        %v3637 = vmul.f32 %v3381, 0.7978846
        %v3638 = vmul.f32 %v3382, 0.7978846
        %v3639 = vmul.f32 %v3383, 0.7978846
        %v3640 = vmul.f32 %v3384, 0.7978846
        %v3641 = vmul.f32 %v3385, 0.7978846
        %v3642 = vmul.f32 %v3386, 0.7978846
        %v3643 = vmul.f32 %v3387, 0.7978846
        %v3644 = vmul.f32 %v3388, 0.7978846
        %v3645 = vmul.f32 %v3389, 0.7978846
        %v3646 = vmul.f32 %v3390, 0.7978846
        %v3647 = vmul.f32 %v3391, 0.7978846
        %v3648 = vmul.f32 %v3392, 0.7978846
        %v3649 = vmul.f32 %v3393, 0.7978846
        %v3650 = vmul.f32 %v3394, 0.7978846
        %v3651 = vmul.f32 %v3395, 0.7978846
        %v3652 = vmul.f32 %v3396, 0.7978846
        %v3653 = vmul.f32 %v3397, 0.7978846
        %v3654 = vmul.f32 %v3398, 0.7978846
        %v3655 = vmul.f32 %v3399, 0.7978846
        %v3656 = vmul.f32 %v3400, 0.7978846
        %v3657 = vmul.f32 %v3401, 0.7978846
        %v3658 = vmul.f32 %v3402, 0.7978846
        %v3659 = vmul.f32 %v3403, 0.7978846
        %v3660 = vmul.f32 %v3404, 0.7978846
        %v3661 = vmul.f32 %v3405, 0.7978846
        %v3662 = vmul.f32 %v3406, 0.7978846
        %v3663 = vmul.f32 %v3407, 0.7978846
        %v3664 = vmul.f32 %v3408, 0.7978846
        %v3665 = vmul.f32 %v3409, 0.7978846
        %v3666 = vmul.f32 %v3410, 0.7978846
        %v3667 = vmul.f32 %v3411, 0.7978846
        %v3668 = vmul.f32 %v3412, 0.7978846
        %v3669 = vmul.f32 %v3413, 0.7978846
        %v3670 = vmul.f32 %v3414, 0.7978846
        %v3671 = vmul.f32 %v3415, 0.7978846
        %v3672 = vmul.f32 %v3416, 0.7978846
        %v3673 = vmul.f32 %v3417, 0.7978846
        %v3674 = vmul.f32 %v3418, 0.7978846
        %v3675 = vmul.f32 %v3419, 0.7978846
        %v3676 = vmul.f32 %v3420, 0.7978846
        %v3677 = vmul.f32 %v3421, 0.7978846
        %v3678 = vmul.f32 %v3422, 0.7978846
        %v3679 = vmul.f32 %v3423, 0.7978846
        %v3680 = vmul.f32 %v3424, 0.7978846
        %v3681 = vmul.f32 %v3425, 0.7978846
        %v3682 = vmul.f32 %v3426, 0.7978846
        %v3683 = vmul.f32 %v3427, 0.7978846
        %v3684 = vmul.f32 %v3428, 0.7978846
        %v3685 = vmul.f32 %v3429, 0.7978846
        %v3686 = vmul.f32 %v3430, 0.7978846
        %v3687 = vmul.f32 %v3431, 0.7978846
        %v3688 = vmul.f32 %v3432, 0.7978846
        %v3689 = vmul.f32 %v3433, 0.7978846
        %v3690 = vmul.f32 %v3434, 0.7978846
        %v3691 = vmul.f32 %v3435, 0.7978846
        %v3692 = vmul.f32 %v3436, 0.7978846
        %v3693 = vmul.f32 %v3437, 0.7978846
        %v3694 = vmul.f32 %v3438, 0.7978846
        %v3695 = vmul.f32 %v3439, 0.7978846
        %v3696 = vmul.f32 %v3440, 0.7978846
        %v3697 = vmul.f32 %v3441, 0.7978846
        %v3698 = vmul.f32 %v3442, 0.7978846
        %v3699 = vmul.f32 %v3443, 0.7978846
        %v3700 = vmul.f32 %v3444, 0.7978846
        %v3701 = vmul.f32 %v3445, 0.7978846
        %v3702 = vmul.f32 %v3446, 0.7978846
        %v3703 = vmul.f32 %v3447, 0.7978846
        %v3704 = vmul.f32 %v3448, 0.7978846
        %v3705 = vmul.f32 %v3449, 0.7978846
        %v3706 = vmul.f32 %v3450, 0.7978846
        %v3707 = vmul.f32 %v3451, 0.7978846
        %v3708 = vmul.f32 %v3452, 0.7978846
        %v3709 = vmul.f32 %v3453, 0.7978846
        %v3710 = vmul.f32 %v3454, 0.7978846
        %v3711 = vmul.f32 %v3455, 0.7978846
        %v3712 = vmul.f32 %v3456, 0.7978846
        %v3713 = vmul.f32 %v3457, 0.7978846
        %v3714 = vmul.f32 %v3458, 0.7978846
        %v3715 = vmul.f32 %v3459, 0.7978846
        %v3716 = vmul.f32 %v3460, 0.7978846
        %v3717 = vmul.f32 %v3461, 0.7978846
        %v3718 = vmul.f32 %v3462, 0.7978846
        %v3719 = vmul.f32 %v3463, 0.7978846
        %v3720 = vmul.f32 %v3464, 0.7978846
        %v3721 = vmul.f32 %v3465, 0.7978846
        %v3722 = vmul.f32 %v3466, 0.7978846
        %v3723 = vmul.f32 %v3467, 0.7978846
        %v3724 = vmul.f32 %v3468, 0.7978846
        %v3725 = vmul.f32 %v3469, 0.7978846
        %v3726 = vmul.f32 %v3470, 0.7978846
        %v3727 = vmul.f32 %v3471, 0.7978846
        %v3728 = vmul.f32 %v3472, 0.7978846
        %v3729 = vmul.f32 %v3473, 0.7978846
        %v3730 = vmul.f32 %v3474, 0.7978846
        %v3731 = vmul.f32 %v3475, 0.7978846
        %v3732 = vmul.f32 %v3476, 0.7978846
        %v3733 = vmul.f32 %v3477, 0.7978846
        %v3734 = vmul.f32 %v3478, 0.7978846
        %v3735 = vmul.f32 %v3479, 0.7978846
        %v3736 = vmul.f32 %v3480, 0.7978846
        %v3737 = vmul.f32 %v3481, 0.7978846
        %v3738 = vmul.f32 %v3482, 0.7978846
        %v3739 = vmul.f32 %v3483, 0.7978846
        %v3740 = vmul.f32 %v3484, 0.7978846
        %v3741 = vmul.f32 %v3485, 0.7978846
        %v3742 = vmul.f32 %v3486, 0.7978846
        %v3743 = vmul.f32 %v3487, 0.7978846
        %v3744 = vmul.f32 %v3488, 0.7978846
        %v3745 = vmul.f32 %v3489, 0.7978846
        %v3746 = vmul.f32 %v3490, 0.7978846
        %v3747 = vmul.f32 %v3491, 0.7978846
        %v3748 = vmul.f32 %v3492, 0.7978846
        %v3749 = vmul.f32 %v3493, 0.7978846
        %v3750 = vmul.f32 %v3494, 0.7978846
        %v3751 = vmul.f32 %v3495, 0.7978846
        %v3752 = vmul.f32 %v3496, 0.7978846
        %v3753 = vmul.f32 %v3497, 0.7978846
        %v3754 = vmul.f32 %v3498, 0.7978846
        %v3755 = vmul.f32 %v3499, 0.7978846
        %v3756 = vmul.f32 %v3500, 0.7978846
        %v3757 = vmul.f32 %v3501, 0.7978846
        %v3758 = vmul.f32 %v3502, 0.7978846
        %v3759 = vmul.f32 %v3503, 0.7978846
        %v3760 = vmul.f32 %v3504, 0.7978846
        %v3761 = vmul.f32 %v3505, 0.7978846
        %v3762 = vmul.f32 %v3506, 0.7978846
        %v3763 = vmul.f32 %v3507, 0.7978846
        %v3764 = vmul.f32 %v3508, 0.7978846
        %v3765 = vmul.f32 %v3509, 0.7978846
        %v3766 = vmul.f32 %v3510, 0.7978846
        %v3767 = vmul.f32 %v3511, 0.7978846
        %v3768 = vmul.f32 %v3512, 0.7978846
        %v3769 = vmul.f32 %v3513, 0.7978846
        %v3770 = vmul.f32 %v3514, 0.7978846
        %v3771 = vmul.f32 %v3515, 0.7978846
        %v3772 = vmul.f32 %v3516, 0.7978846
        %v3773 = vmul.f32 %v3517, 0.7978846
        %v3774 = vmul.f32 %v3518, 0.7978846
        %v3775 = vmul.f32 %v3519, 0.7978846
        %v3776 = vmul.f32 %v3520, 0.7978846
        %v3777 = vmul.f32 %v3521, 0.7978846
        %v3778 = vmul.f32 %v3522, 0.7978846
        %v3779 = vmul.f32 %v3523, 0.7978846
        %v3780 = vmul.f32 %v3524, 0.7978846
        %v3781 = vmul.f32 %v3525, 0.7978846
        %v3782 = vmul.f32 %v3526, 0.7978846
        %v3783 = vmul.f32 %v3527, 0.7978846
        %v3784 = vmul.f32 %v3528, 0.7978846
        %v3785 = vmul.f32 %v3529, 0.7978846
        %v3786 = vmul.f32 %v3530, 0.7978846
        %v3787 = vmul.f32 %v3531, 0.7978846
        %v3788 = vmul.f32 %v3532, 0.7978846
        %v3789 = vmul.f32 %v3533, 0.7978846
        %v3790 = vmul.f32 %v3534, 0.7978846
        %v3791 = vmul.f32 %v3535, 0.7978846
        %v3792 = vmul.f32 %v3536, 0.7978846
        %v3793 = vmul.f32 %v3537, 0.7978846
        %v3794 = vmul.f32 %v3538, 0.7978846
        %v3795 = vmul.f32 %v3539, 0.7978846
        %v3796 = vmul.f32 %v3540, 0.7978846
        %v3797 = vmul.f32 %v3541, 0.7978846
        %v3798 = vmul.f32 %v3542, 0.7978846
        %v3799 = vmul.f32 %v3543, 0.7978846
        %v3800 = vmul.f32 %v3544, 0.7978846
        %v3801 = vmul.f32 %v3545, 0.7978846
        %v3802 = vmul.f32 %v3546, 0.7978846
        %v3803 = vmul.f32 %v3547, 0.7978846
        %v3804 = vmul.f32 %v3548, 0.7978846
        %v3805 = vmul.f32 %v3549, 0.7978846
        %v3806 = vmul.f32 %v3550, 0.7978846
        %v3807 = vmul.f32 %v3551, 0.7978846
        %v3808 = vmul.f32 %v3552, 0.7978846
        %v3809 = vmul.f32 %v3553, 0.7978846
        %v3810 = vmul.f32 %v3554, 0.7978846
        %v3811 = vmul.f32 %v3555, 0.7978846
        %v3812 = vmul.f32 %v3556, 0.7978846
        %v3813 = vmul.f32 %v3557, 0.7978846
        %v3814 = vmul.f32 %v3558, 0.7978846
        %v3815 = vmul.f32 %v3559, 0.7978846
        %v3816 = vmul.f32 %v3560, 0.7978846
        %v3817 = vmul.f32 %v3561, 0.7978846
        %v3818 = vmul.f32 %v3562, 0.7978846
        %v3819 = vmul.f32 %v3563, 0.7978846
        %v3820 = vmul.f32 %v3564, 0.7978846
        %v3821 = vmul.f32 %v3565, 0.7978846
        %v3822 = vmul.f32 %v3566, 0.7978846
        %v3823 = vmul.f32 %v3567, 0.7978846
        %v3824 = vmul.f32 %v3568, 0.7978846
        %v3825 = vmul.f32 %v3569, 0.7978846
        %v3826 = vmul.f32 %v3570, 0.7978846
        %v3827 = vmul.f32 %v3571, 0.7978846
        %v3828 = vmul.f32 %v3572, 0.7978846
        %v3829 = vmul.f32 %v3573, 0.7978846
        %v3830 = vmul.f32 %v3574, 0.7978846
        %v3831 = vmul.f32 %v3575, 0.7978846
        %v3832 = vmul.f32 %v3576, 0.7978846
        %v3833 = vmul.f32 %v3577, 0.7978846
        %v3834 = vmul.f32 %v3578, 0.7978846
        %v3835 = vmul.f32 %v3579, 0.7978846
        %v3836 = vmul.f32 %v3580, 0.7978846
        %v3837 = vmul.f32 %v3581, 0.7978846
        %v3838 = vmul.f32 %v3582, 0.7978846
        %v3839 = vmul.f32 %v3583, 0.7978846
        %v3840 = vmul.f32 %v3584, 0.7978846
        %v3841 = vmul.f32 %v3585, 0.7978846
        %v3842 = vmul.f32 %v3586, 0.7978846
        %v3843 = vmul.f32 %v3587, 0.7978846
        %v3844 = vmul.f32 %v3588, 0.7978846
        %v3845 = vmul.f32 %v3589, 0.7978846
        %v3846 = vmul.f32 %v3590, 0.7978846
        %v3847 = vmul.f32 %v3591, 0.7978846
        %v3848 = vmul.f32 %v3592, 0.7978846
        %v3849 = vmul.f32 %v3593, 0.7978846
        %v3850 = vmul.f32 %v3594, 0.7978846
        %v3851 = vmul.f32 %v3595, 0.7978846
        %v3852 = vmul.f32 %v3596, 0.7978846
        %v3853 = vmul.f32 %v3597, 0.7978846
        %v3854 = vmul.f32 %v3598, 0.7978846
        %v3855 = vmul.f32 %v3599, 0.7978846
        %v3856 = vmul.f32 %v3600, 0.7978846
        %v3857 = vmul.f32 %v3601, 0.7978846
        %v3858 = vmul.f32 %v3602, 0.7978846
        %v3859 = vmul.f32 %v3603, 0.7978846
        %v3860 = vmul.f32 %v3604, 0.7978846
        %v3861 = vmul.f32 %v3605, 0.7978846
        %v3862 = vmul.f32 %v3606, 0.7978846
        %v3863 = vmul.f32 %v3607, 0.7978846
        %v3864 = vmul.f32 %v3608, 0.7978846
        %v3865 = vmul.f32 %v3609, 0.7978846
        %v3866 = vmul.f32 %v3610, 0.7978846
        %v3867 = vmul.f32 %v3611, 0.7978846
        %v3868 = vmul.f32 %v3612, 0.7978846
        %v3869 = vmul.f32 %v3613, 0.7978846
        %v3870 = vmul.f32 %v3614, 0.7978846
        %v3871 = vmul.f32 %v3615, 0.7978846
        %v3872 = vmul.f32 %v3616, 0.7978846
        %v3873 = vmul.f32 %v3617, 0.7978846
        %v3874 = vmul.f32 %v3618, 0.7978846
        %v3875 = vmul.f32 %v3619, 0.7978846
        %v3876 = vmul.f32 %v3620, 0.7978846
        %v3877 = vmul.f32 %v3621, 0.7978846
        %v3878 = vmul.f32 %v3622, 0.7978846
        %v3879 = vmul.f32 %v3623, 0.7978846
        %v3880 = vmul.f32 %v3624, 0.7978846
        %v3881 = vmul.f32 %v3625, 0.7978846
        %v3882 = vtanh.pop %v3626
        %v3883 = vtanh.pop %v3627
        %v3884 = vtanh.pop %v3628
        %v3885 = vtanh.pop %v3629
        %v3886 = vtanh.pop %v3630
        %v3887 = vtanh.pop %v3631
        %v3888 = vtanh.pop %v3632
        %v3889 = vtanh.pop %v3633
        %v3890 = vtanh.pop %v3634
        %v3891 = vtanh.pop %v3635
        %v3892 = vtanh.pop %v3636
        %v3893 = vtanh.pop %v3637
        %v3894 = vtanh.pop %v3638
        %v3895 = vtanh.pop %v3639
        %v3896 = vtanh.pop %v3640
        %v3897 = vtanh.pop %v3641
        %v3898 = vtanh.pop %v3642
        %v3899 = vtanh.pop %v3643
        %v3900 = vtanh.pop %v3644
        %v3901 = vtanh.pop %v3645
        %v3902 = vtanh.pop %v3646
        %v3903 = vtanh.pop %v3647
        %v3904 = vtanh.pop %v3648
        %v3905 = vtanh.pop %v3649
        %v3906 = vtanh.pop %v3650
        %v3907 = vtanh.pop %v3651
        %v3908 = vtanh.pop %v3652
        %v3909 = vtanh.pop %v3653
        %v3910 = vtanh.pop %v3654
        %v3911 = vtanh.pop %v3655
        %v3912 = vtanh.pop %v3656
        %v3913 = vtanh.pop %v3657
        %v3914 = vtanh.pop %v3658
        %v3915 = vtanh.pop %v3659
        %v3916 = vtanh.pop %v3660
        %v3917 = vtanh.pop %v3661
        %v3918 = vtanh.pop %v3662
        %v3919 = vtanh.pop %v3663
        %v3920 = vtanh.pop %v3664
        %v3921 = vtanh.pop %v3665
        %v3922 = vtanh.pop %v3666
        %v3923 = vtanh.pop %v3667
        %v3924 = vtanh.pop %v3668
        %v3925 = vtanh.pop %v3669
        %v3926 = vtanh.pop %v3670
        %v3927 = vtanh.pop %v3671
        %v3928 = vtanh.pop %v3672
        %v3929 = vtanh.pop %v3673
        %v3930 = vtanh.pop %v3674
        %v3931 = vtanh.pop %v3675
        %v3932 = vtanh.pop %v3676
        %v3933 = vtanh.pop %v3677
        %v3934 = vtanh.pop %v3678
        %v3935 = vtanh.pop %v3679
        %v3936 = vtanh.pop %v3680
        %v3937 = vtanh.pop %v3681
        %v3938 = vtanh.pop %v3682
        %v3939 = vtanh.pop %v3683
        %v3940 = vtanh.pop %v3684
        %v3941 = vtanh.pop %v3685
        %v3942 = vtanh.pop %v3686
        %v3943 = vtanh.pop %v3687
        %v3944 = vtanh.pop %v3688
        %v3945 = vtanh.pop %v3689
        %v3946 = vtanh.pop %v3690
        %v3947 = vtanh.pop %v3691
        %v3948 = vtanh.pop %v3692
        %v3949 = vtanh.pop %v3693
        %v3950 = vtanh.pop %v3694
        %v3951 = vtanh.pop %v3695
        %v3952 = vtanh.pop %v3696
        %v3953 = vtanh.pop %v3697
        %v3954 = vtanh.pop %v3698
        %v3955 = vtanh.pop %v3699
        %v3956 = vtanh.pop %v3700
        %v3957 = vtanh.pop %v3701
        %v3958 = vtanh.pop %v3702
        %v3959 = vtanh.pop %v3703
        %v3960 = vtanh.pop %v3704
        %v3961 = vtanh.pop %v3705
        %v3962 = vtanh.pop %v3706
        %v3963 = vtanh.pop %v3707
        %v3964 = vtanh.pop %v3708
        %v3965 = vtanh.pop %v3709
        %v3966 = vtanh.pop %v3710
        %v3967 = vtanh.pop %v3711
        %v3968 = vtanh.pop %v3712
        %v3969 = vtanh.pop %v3713
        %v3970 = vtanh.pop %v3714
        %v3971 = vtanh.pop %v3715
        %v3972 = vtanh.pop %v3716
        %v3973 = vtanh.pop %v3717
        %v3974 = vtanh.pop %v3718
        %v3975 = vtanh.pop %v3719
        %v3976 = vtanh.pop %v3720
        %v3977 = vtanh.pop %v3721
        %v3978 = vtanh.pop %v3722
        %v3979 = vtanh.pop %v3723
        %v3980 = vtanh.pop %v3724
        %v3981 = vtanh.pop %v3725
        %v3982 = vtanh.pop %v3726
        %v3983 = vtanh.pop %v3727
        %v3984 = vtanh.pop %v3728
        %v3985 = vtanh.pop %v3729
        %v3986 = vtanh.pop %v3730
        %v3987 = vtanh.pop %v3731
        %v3988 = vtanh.pop %v3732
        %v3989 = vtanh.pop %v3733
        %v3990 = vtanh.pop %v3734
        %v3991 = vtanh.pop %v3735
        %v3992 = vtanh.pop %v3736
        %v3993 = vtanh.pop %v3737
        %v3994 = vtanh.pop %v3738
        %v3995 = vtanh.pop %v3739
        %v3996 = vtanh.pop %v3740
        %v3997 = vtanh.pop %v3741
        %v3998 = vtanh.pop %v3742
        %v3999 = vtanh.pop %v3743
        %v4000 = vtanh.pop %v3744
        %v4001 = vtanh.pop %v3745
        %v4002 = vtanh.pop %v3746
        %v4003 = vtanh.pop %v3747
        %v4004 = vtanh.pop %v3748
        %v4005 = vtanh.pop %v3749
        %v4006 = vtanh.pop %v3750
        %v4007 = vtanh.pop %v3751
        %v4008 = vtanh.pop %v3752
        %v4009 = vtanh.pop %v3753
        %v4010 = vtanh.pop %v3754
        %v4011 = vtanh.pop %v3755
        %v4012 = vtanh.pop %v3756
        %v4013 = vtanh.pop %v3757
        %v4014 = vtanh.pop %v3758
        %v4015 = vtanh.pop %v3759
        %v4016 = vtanh.pop %v3760
        %v4017 = vtanh.pop %v3761
        %v4018 = vtanh.pop %v3762
        %v4019 = vtanh.pop %v3763
        %v4020 = vtanh.pop %v3764
        %v4021 = vtanh.pop %v3765
        %v4022 = vtanh.pop %v3766
        %v4023 = vtanh.pop %v3767
        %v4024 = vtanh.pop %v3768
        %v4025 = vtanh.pop %v3769
        %v4026 = vtanh.pop %v3770
        %v4027 = vtanh.pop %v3771
        %v4028 = vtanh.pop %v3772
        %v4029 = vtanh.pop %v3773
        %v4030 = vtanh.pop %v3774
        %v4031 = vtanh.pop %v3775
        %v4032 = vtanh.pop %v3776
        %v4033 = vtanh.pop %v3777
        %v4034 = vtanh.pop %v3778
        %v4035 = vtanh.pop %v3779
        %v4036 = vtanh.pop %v3780
        %v4037 = vtanh.pop %v3781
        %v4038 = vtanh.pop %v3782
        %v4039 = vtanh.pop %v3783
        %v4040 = vtanh.pop %v3784
        %v4041 = vtanh.pop %v3785
        %v4042 = vtanh.pop %v3786
        %v4043 = vtanh.pop %v3787
        %v4044 = vtanh.pop %v3788
        %v4045 = vtanh.pop %v3789
        %v4046 = vtanh.pop %v3790
        %v4047 = vtanh.pop %v3791
        %v4048 = vtanh.pop %v3792
        %v4049 = vtanh.pop %v3793
        %v4050 = vtanh.pop %v3794
        %v4051 = vtanh.pop %v3795
        %v4052 = vtanh.pop %v3796
        %v4053 = vtanh.pop %v3797
        %v4054 = vtanh.pop %v3798
        %v4055 = vtanh.pop %v3799
        %v4056 = vtanh.pop %v3800
        %v4057 = vtanh.pop %v3801
        %v4058 = vtanh.pop %v3802
        %v4059 = vtanh.pop %v3803
        %v4060 = vtanh.pop %v3804
        %v4061 = vtanh.pop %v3805
        %v4062 = vtanh.pop %v3806
        %v4063 = vtanh.pop %v3807
        %v4064 = vtanh.pop %v3808
        %v4065 = vtanh.pop %v3809
        %v4066 = vtanh.pop %v3810
        %v4067 = vtanh.pop %v3811
        %v4068 = vtanh.pop %v3812
        %v4069 = vtanh.pop %v3813
        %v4070 = vtanh.pop %v3814
        %v4071 = vtanh.pop %v3815
        %v4072 = vtanh.pop %v3816
        %v4073 = vtanh.pop %v3817
        %v4074 = vtanh.pop %v3818
        %v4075 = vtanh.pop %v3819
        %v4076 = vtanh.pop %v3820
        %v4077 = vtanh.pop %v3821
        %v4078 = vtanh.pop %v3822
        %v4079 = vtanh.pop %v3823
        %v4080 = vtanh.pop %v3824
        %v4081 = vtanh.pop %v3825
        %v4082 = vtanh.pop %v3826
        %v4083 = vtanh.pop %v3827
        %v4084 = vtanh.pop %v3828
        %v4085 = vtanh.pop %v3829
        %v4086 = vtanh.pop %v3830
        %v4087 = vtanh.pop %v3831
        %v4088 = vtanh.pop %v3832
        %v4089 = vtanh.pop %v3833
        %v4090 = vtanh.pop %v3834
        %v4091 = vtanh.pop %v3835
        %v4092 = vtanh.pop %v3836
        %v4093 = vtanh.pop %v3837
        %v4094 = vtanh.pop %v3838
        %v4095 = vtanh.pop %v3839
        %v4096 = vtanh.pop %v3840
        %v4097 = vtanh.pop %v3841
        %v4098 = vtanh.pop %v3842
        %v4099 = vtanh.pop %v3843
        %v4100 = vtanh.pop %v3844
        %v4101 = vtanh.pop %v3845
        %v4102 = vtanh.pop %v3846
        %v4103 = vtanh.pop %v3847
        %v4104 = vtanh.pop %v3848
        %v4105 = vtanh.pop %v3849
        %v4106 = vtanh.pop %v3850
        %v4107 = vtanh.pop %v3851
        %v4108 = vtanh.pop %v3852
        %v4109 = vtanh.pop %v3853
        %v4110 = vtanh.pop %v3854
        %v4111 = vtanh.pop %v3855
        %v4112 = vtanh.pop %v3856
        %v4113 = vtanh.pop %v3857
        %v4114 = vtanh.pop %v3858
        %v4115 = vtanh.pop %v3859
        %v4116 = vtanh.pop %v3860
        %v4117 = vtanh.pop %v3861
        %v4118 = vtanh.pop %v3862
        %v4119 = vtanh.pop %v3863
        %v4120 = vtanh.pop %v3864
        %v4121 = vtanh.pop %v3865
        %v4122 = vtanh.pop %v3866
        %v4123 = vtanh.pop %v3867
        %v4124 = vtanh.pop %v3868
        %v4125 = vtanh.pop %v3869
        %v4126 = vtanh.pop %v3870
        %v4127 = vtanh.pop %v3871
        %v4128 = vtanh.pop %v3872
        %v4129 = vtanh.pop %v3873
        %v4130 = vtanh.pop %v3874
        %v4131 = vtanh.pop %v3875
        %v4132 = vtanh.pop %v3876
        %v4133 = vtanh.pop %v3877
        %v4134 = vtanh.pop %v3878
        %v4135 = vtanh.pop %v3879
        %v4136 = vtanh.pop %v3880
        %v4137 = vtanh.pop %v3881
        %v4138 = vadd.f32 %v3882, 1.0
        %v4139 = vadd.f32 %v3883, 1.0
        %v4140 = vadd.f32 %v3884, 1.0
        %v4141 = vadd.f32 %v3885, 1.0
        %v4142 = vadd.f32 %v3886, 1.0
        %v4143 = vadd.f32 %v3887, 1.0
        %v4144 = vadd.f32 %v3888, 1.0
        %v4145 = vadd.f32 %v3889, 1.0
        %v4146 = vadd.f32 %v3890, 1.0
        %v4147 = vadd.f32 %v3891, 1.0
        %v4148 = vadd.f32 %v3892, 1.0
        %v4149 = vadd.f32 %v3893, 1.0
        %v4150 = vadd.f32 %v3894, 1.0
        %v4151 = vadd.f32 %v3895, 1.0
        %v4152 = vadd.f32 %v3896, 1.0
        %v4153 = vadd.f32 %v3897, 1.0
        %v4154 = vadd.f32 %v3898, 1.0
        %v4155 = vadd.f32 %v3899, 1.0
        %v4156 = vadd.f32 %v3900, 1.0
        %v4157 = vadd.f32 %v3901, 1.0
        %v4158 = vadd.f32 %v3902, 1.0
        %v4159 = vadd.f32 %v3903, 1.0
        %v4160 = vadd.f32 %v3904, 1.0
        %v4161 = vadd.f32 %v3905, 1.0
        %v4162 = vadd.f32 %v3906, 1.0
        %v4163 = vadd.f32 %v3907, 1.0
        %v4164 = vadd.f32 %v3908, 1.0
        %v4165 = vadd.f32 %v3909, 1.0
        %v4166 = vadd.f32 %v3910, 1.0
        %v4167 = vadd.f32 %v3911, 1.0
        %v4168 = vadd.f32 %v3912, 1.0
        %v4169 = vadd.f32 %v3913, 1.0
        %v4170 = vadd.f32 %v3914, 1.0
        %v4171 = vadd.f32 %v3915, 1.0
        %v4172 = vadd.f32 %v3916, 1.0
        %v4173 = vadd.f32 %v3917, 1.0
        %v4174 = vadd.f32 %v3918, 1.0
        %v4175 = vadd.f32 %v3919, 1.0
        %v4176 = vadd.f32 %v3920, 1.0
        %v4177 = vadd.f32 %v3921, 1.0
        %v4178 = vadd.f32 %v3922, 1.0
        %v4179 = vadd.f32 %v3923, 1.0
        %v4180 = vadd.f32 %v3924, 1.0
        %v4181 = vadd.f32 %v3925, 1.0
        %v4182 = vadd.f32 %v3926, 1.0
        %v4183 = vadd.f32 %v3927, 1.0
        %v4184 = vadd.f32 %v3928, 1.0
        %v4185 = vadd.f32 %v3929, 1.0
        %v4186 = vadd.f32 %v3930, 1.0
        %v4187 = vadd.f32 %v3931, 1.0
        %v4188 = vadd.f32 %v3932, 1.0
        %v4189 = vadd.f32 %v3933, 1.0
        %v4190 = vadd.f32 %v3934, 1.0
        %v4191 = vadd.f32 %v3935, 1.0
        %v4192 = vadd.f32 %v3936, 1.0
        %v4193 = vadd.f32 %v3937, 1.0
        %v4194 = vadd.f32 %v3938, 1.0
        %v4195 = vadd.f32 %v3939, 1.0
        %v4196 = vadd.f32 %v3940, 1.0
        %v4197 = vadd.f32 %v3941, 1.0
        %v4198 = vadd.f32 %v3942, 1.0
        %v4199 = vadd.f32 %v3943, 1.0
        %v4200 = vadd.f32 %v3944, 1.0
        %v4201 = vadd.f32 %v3945, 1.0
        %v4202 = vadd.f32 %v3946, 1.0
        %v4203 = vadd.f32 %v3947, 1.0
        %v4204 = vadd.f32 %v3948, 1.0
        %v4205 = vadd.f32 %v3949, 1.0
        %v4206 = vadd.f32 %v3950, 1.0
        %v4207 = vadd.f32 %v3951, 1.0
        %v4208 = vadd.f32 %v3952, 1.0
        %v4209 = vadd.f32 %v3953, 1.0
        %v4210 = vadd.f32 %v3954, 1.0
        %v4211 = vadd.f32 %v3955, 1.0
        %v4212 = vadd.f32 %v3956, 1.0
        %v4213 = vadd.f32 %v3957, 1.0
        %v4214 = vadd.f32 %v3958, 1.0
        %v4215 = vadd.f32 %v3959, 1.0
        %v4216 = vadd.f32 %v3960, 1.0
        %v4217 = vadd.f32 %v3961, 1.0
        %v4218 = vadd.f32 %v3962, 1.0
        %v4219 = vadd.f32 %v3963, 1.0
        %v4220 = vadd.f32 %v3964, 1.0
        %v4221 = vadd.f32 %v3965, 1.0
        %v4222 = vadd.f32 %v3966, 1.0
        %v4223 = vadd.f32 %v3967, 1.0
        %v4224 = vadd.f32 %v3968, 1.0
        %v4225 = vadd.f32 %v3969, 1.0
        %v4226 = vadd.f32 %v3970, 1.0
        %v4227 = vadd.f32 %v3971, 1.0
        %v4228 = vadd.f32 %v3972, 1.0
        %v4229 = vadd.f32 %v3973, 1.0
        %v4230 = vadd.f32 %v3974, 1.0
        %v4231 = vadd.f32 %v3975, 1.0
        %v4232 = vadd.f32 %v3976, 1.0
        %v4233 = vadd.f32 %v3977, 1.0
        %v4234 = vadd.f32 %v3978, 1.0
        %v4235 = vadd.f32 %v3979, 1.0
        %v4236 = vadd.f32 %v3980, 1.0
        %v4237 = vadd.f32 %v3981, 1.0
        %v4238 = vadd.f32 %v3982, 1.0
        %v4239 = vadd.f32 %v3983, 1.0
        %v4240 = vadd.f32 %v3984, 1.0
        %v4241 = vadd.f32 %v3985, 1.0
        %v4242 = vadd.f32 %v3986, 1.0
        %v4243 = vadd.f32 %v3987, 1.0
        %v4244 = vadd.f32 %v3988, 1.0
        %v4245 = vadd.f32 %v3989, 1.0
        %v4246 = vadd.f32 %v3990, 1.0
        %v4247 = vadd.f32 %v3991, 1.0
        %v4248 = vadd.f32 %v3992, 1.0
        %v4249 = vadd.f32 %v3993, 1.0
        %v4250 = vadd.f32 %v3994, 1.0
        %v4251 = vadd.f32 %v3995, 1.0
        %v4252 = vadd.f32 %v3996, 1.0
        %v4253 = vadd.f32 %v3997, 1.0
        %v4254 = vadd.f32 %v3998, 1.0
        %v4255 = vadd.f32 %v3999, 1.0
        %v4256 = vadd.f32 %v4000, 1.0
        %v4257 = vadd.f32 %v4001, 1.0
        %v4258 = vadd.f32 %v4002, 1.0
        %v4259 = vadd.f32 %v4003, 1.0
        %v4260 = vadd.f32 %v4004, 1.0
        %v4261 = vadd.f32 %v4005, 1.0
        %v4262 = vadd.f32 %v4006, 1.0
        %v4263 = vadd.f32 %v4007, 1.0
        %v4264 = vadd.f32 %v4008, 1.0
        %v4265 = vadd.f32 %v4009, 1.0
        %v4266 = vadd.f32 %v4010, 1.0
        %v4267 = vadd.f32 %v4011, 1.0
        %v4268 = vadd.f32 %v4012, 1.0
        %v4269 = vadd.f32 %v4013, 1.0
        %v4270 = vadd.f32 %v4014, 1.0
        %v4271 = vadd.f32 %v4015, 1.0
        %v4272 = vadd.f32 %v4016, 1.0
        %v4273 = vadd.f32 %v4017, 1.0
        %v4274 = vadd.f32 %v4018, 1.0
        %v4275 = vadd.f32 %v4019, 1.0
        %v4276 = vadd.f32 %v4020, 1.0
        %v4277 = vadd.f32 %v4021, 1.0
        %v4278 = vadd.f32 %v4022, 1.0
        %v4279 = vadd.f32 %v4023, 1.0
        %v4280 = vadd.f32 %v4024, 1.0
        %v4281 = vadd.f32 %v4025, 1.0
        %v4282 = vadd.f32 %v4026, 1.0
        %v4283 = vadd.f32 %v4027, 1.0
        %v4284 = vadd.f32 %v4028, 1.0
        %v4285 = vadd.f32 %v4029, 1.0
        %v4286 = vadd.f32 %v4030, 1.0
        %v4287 = vadd.f32 %v4031, 1.0
        %v4288 = vadd.f32 %v4032, 1.0
        %v4289 = vadd.f32 %v4033, 1.0
        %v4290 = vadd.f32 %v4034, 1.0
        %v4291 = vadd.f32 %v4035, 1.0
        %v4292 = vadd.f32 %v4036, 1.0
        %v4293 = vadd.f32 %v4037, 1.0
        %v4294 = vadd.f32 %v4038, 1.0
        %v4295 = vadd.f32 %v4039, 1.0
        %v4296 = vadd.f32 %v4040, 1.0
        %v4297 = vadd.f32 %v4041, 1.0
        %v4298 = vadd.f32 %v4042, 1.0
        %v4299 = vadd.f32 %v4043, 1.0
        %v4300 = vadd.f32 %v4044, 1.0
        %v4301 = vadd.f32 %v4045, 1.0
        %v4302 = vadd.f32 %v4046, 1.0
        %v4303 = vadd.f32 %v4047, 1.0
        %v4304 = vadd.f32 %v4048, 1.0
        %v4305 = vadd.f32 %v4049, 1.0
        %v4306 = vadd.f32 %v4050, 1.0
        %v4307 = vadd.f32 %v4051, 1.0
        %v4308 = vadd.f32 %v4052, 1.0
        %v4309 = vadd.f32 %v4053, 1.0
        %v4310 = vadd.f32 %v4054, 1.0
        %v4311 = vadd.f32 %v4055, 1.0
        %v4312 = vadd.f32 %v4056, 1.0
        %v4313 = vadd.f32 %v4057, 1.0
        %v4314 = vadd.f32 %v4058, 1.0
        %v4315 = vadd.f32 %v4059, 1.0
        %v4316 = vadd.f32 %v4060, 1.0
        %v4317 = vadd.f32 %v4061, 1.0
        %v4318 = vadd.f32 %v4062, 1.0
        %v4319 = vadd.f32 %v4063, 1.0
        %v4320 = vadd.f32 %v4064, 1.0
        %v4321 = vadd.f32 %v4065, 1.0
        %v4322 = vadd.f32 %v4066, 1.0
        %v4323 = vadd.f32 %v4067, 1.0
        %v4324 = vadd.f32 %v4068, 1.0
        %v4325 = vadd.f32 %v4069, 1.0
        %v4326 = vadd.f32 %v4070, 1.0
        %v4327 = vadd.f32 %v4071, 1.0
        %v4328 = vadd.f32 %v4072, 1.0
        %v4329 = vadd.f32 %v4073, 1.0
        %v4330 = vadd.f32 %v4074, 1.0
        %v4331 = vadd.f32 %v4075, 1.0
        %v4332 = vadd.f32 %v4076, 1.0
        %v4333 = vadd.f32 %v4077, 1.0
        %v4334 = vadd.f32 %v4078, 1.0
        %v4335 = vadd.f32 %v4079, 1.0
        %v4336 = vadd.f32 %v4080, 1.0
        %v4337 = vadd.f32 %v4081, 1.0
        %v4338 = vadd.f32 %v4082, 1.0
        %v4339 = vadd.f32 %v4083, 1.0
        %v4340 = vadd.f32 %v4084, 1.0
        %v4341 = vadd.f32 %v4085, 1.0
        %v4342 = vadd.f32 %v4086, 1.0
        %v4343 = vadd.f32 %v4087, 1.0
        %v4344 = vadd.f32 %v4088, 1.0
        %v4345 = vadd.f32 %v4089, 1.0
        %v4346 = vadd.f32 %v4090, 1.0
        %v4347 = vadd.f32 %v4091, 1.0
        %v4348 = vadd.f32 %v4092, 1.0
        %v4349 = vadd.f32 %v4093, 1.0
        %v4350 = vadd.f32 %v4094, 1.0
        %v4351 = vadd.f32 %v4095, 1.0
        %v4352 = vadd.f32 %v4096, 1.0
        %v4353 = vadd.f32 %v4097, 1.0
        %v4354 = vadd.f32 %v4098, 1.0
        %v4355 = vadd.f32 %v4099, 1.0
        %v4356 = vadd.f32 %v4100, 1.0
        %v4357 = vadd.f32 %v4101, 1.0
        %v4358 = vadd.f32 %v4102, 1.0
        %v4359 = vadd.f32 %v4103, 1.0
        %v4360 = vadd.f32 %v4104, 1.0
        %v4361 = vadd.f32 %v4105, 1.0
        %v4362 = vadd.f32 %v4106, 1.0
        %v4363 = vadd.f32 %v4107, 1.0
        %v4364 = vadd.f32 %v4108, 1.0
        %v4365 = vadd.f32 %v4109, 1.0
        %v4366 = vadd.f32 %v4110, 1.0
        %v4367 = vadd.f32 %v4111, 1.0
        %v4368 = vadd.f32 %v4112, 1.0
        %v4369 = vadd.f32 %v4113, 1.0
        %v4370 = vadd.f32 %v4114, 1.0
        %v4371 = vadd.f32 %v4115, 1.0
        %v4372 = vadd.f32 %v4116, 1.0
        %v4373 = vadd.f32 %v4117, 1.0
        %v4374 = vadd.f32 %v4118, 1.0
        %v4375 = vadd.f32 %v4119, 1.0
        %v4376 = vadd.f32 %v4120, 1.0
        %v4377 = vadd.f32 %v4121, 1.0
        %v4378 = vadd.f32 %v4122, 1.0
        %v4379 = vadd.f32 %v4123, 1.0
        %v4380 = vadd.f32 %v4124, 1.0
        %v4381 = vadd.f32 %v4125, 1.0
        %v4382 = vadd.f32 %v4126, 1.0
        %v4383 = vadd.f32 %v4127, 1.0
        %v4384 = vadd.f32 %v4128, 1.0
        %v4385 = vadd.f32 %v4129, 1.0
        %v4386 = vadd.f32 %v4130, 1.0
        %v4387 = vadd.f32 %v4131, 1.0
        %v4388 = vadd.f32 %v4132, 1.0
        %v4389 = vadd.f32 %v4133, 1.0
        %v4390 = vadd.f32 %v4134, 1.0
        %v4391 = vadd.f32 %v4135, 1.0
        %v4392 = vadd.f32 %v4136, 1.0
        %v4393 = vadd.f32 %v4137, 1.0
        %v4394 = vmul.f32 %v4138, 0.5
        %v4395 = vmul.f32 %v4139, 0.5
        %v4396 = vmul.f32 %v4140, 0.5
        %v4397 = vmul.f32 %v4141, 0.5
        %v4398 = vmul.f32 %v4142, 0.5
        %v4399 = vmul.f32 %v4143, 0.5
        %v4400 = vmul.f32 %v4144, 0.5
        %v4401 = vmul.f32 %v4145, 0.5
        %v4402 = vmul.f32 %v4146, 0.5
        %v4403 = vmul.f32 %v4147, 0.5
        %v4404 = vmul.f32 %v4148, 0.5
        %v4405 = vmul.f32 %v4149, 0.5
        %v4406 = vmul.f32 %v4150, 0.5
        %v4407 = vmul.f32 %v4151, 0.5
        %v4408 = vmul.f32 %v4152, 0.5
        %v4409 = vmul.f32 %v4153, 0.5
        %v4410 = vmul.f32 %v4154, 0.5
        %v4411 = vmul.f32 %v4155, 0.5
        %v4412 = vmul.f32 %v4156, 0.5
        %v4413 = vmul.f32 %v4157, 0.5
        %v4414 = vmul.f32 %v4158, 0.5
        %v4415 = vmul.f32 %v4159, 0.5
        %v4416 = vmul.f32 %v4160, 0.5
        %v4417 = vmul.f32 %v4161, 0.5
        %v4418 = vmul.f32 %v4162, 0.5
        %v4419 = vmul.f32 %v4163, 0.5
        %v4420 = vmul.f32 %v4164, 0.5
        %v4421 = vmul.f32 %v4165, 0.5
        %v4422 = vmul.f32 %v4166, 0.5
        %v4423 = vmul.f32 %v4167, 0.5
        %v4424 = vmul.f32 %v4168, 0.5
        %v4425 = vmul.f32 %v4169, 0.5
        %v4426 = vmul.f32 %v4170, 0.5
        %v4427 = vmul.f32 %v4171, 0.5
        %v4428 = vmul.f32 %v4172, 0.5
        %v4429 = vmul.f32 %v4173, 0.5
        %v4430 = vmul.f32 %v4174, 0.5
        %v4431 = vmul.f32 %v4175, 0.5
        %v4432 = vmul.f32 %v4176, 0.5
        %v4433 = vmul.f32 %v4177, 0.5
        %v4434 = vmul.f32 %v4178, 0.5
        %v4435 = vmul.f32 %v4179, 0.5
        %v4436 = vmul.f32 %v4180, 0.5
        %v4437 = vmul.f32 %v4181, 0.5
        %v4438 = vmul.f32 %v4182, 0.5
        %v4439 = vmul.f32 %v4183, 0.5
        %v4440 = vmul.f32 %v4184, 0.5
        %v4441 = vmul.f32 %v4185, 0.5
        %v4442 = vmul.f32 %v4186, 0.5
        %v4443 = vmul.f32 %v4187, 0.5
        %v4444 = vmul.f32 %v4188, 0.5
        %v4445 = vmul.f32 %v4189, 0.5
        %v4446 = vmul.f32 %v4190, 0.5
        %v4447 = vmul.f32 %v4191, 0.5
        %v4448 = vmul.f32 %v4192, 0.5
        %v4449 = vmul.f32 %v4193, 0.5
        %v4450 = vmul.f32 %v4194, 0.5
        %v4451 = vmul.f32 %v4195, 0.5
        %v4452 = vmul.f32 %v4196, 0.5
        %v4453 = vmul.f32 %v4197, 0.5
        %v4454 = vmul.f32 %v4198, 0.5
        %v4455 = vmul.f32 %v4199, 0.5
        %v4456 = vmul.f32 %v4200, 0.5
        %v4457 = vmul.f32 %v4201, 0.5
        %v4458 = vmul.f32 %v4202, 0.5
        %v4459 = vmul.f32 %v4203, 0.5
        %v4460 = vmul.f32 %v4204, 0.5
        %v4461 = vmul.f32 %v4205, 0.5
        %v4462 = vmul.f32 %v4206, 0.5
        %v4463 = vmul.f32 %v4207, 0.5
        %v4464 = vmul.f32 %v4208, 0.5
        %v4465 = vmul.f32 %v4209, 0.5
        %v4466 = vmul.f32 %v4210, 0.5
        %v4467 = vmul.f32 %v4211, 0.5
        %v4468 = vmul.f32 %v4212, 0.5
        %v4469 = vmul.f32 %v4213, 0.5
        %v4470 = vmul.f32 %v4214, 0.5
        %v4471 = vmul.f32 %v4215, 0.5
        %v4472 = vmul.f32 %v4216, 0.5
        %v4473 = vmul.f32 %v4217, 0.5
        %v4474 = vmul.f32 %v4218, 0.5
        %v4475 = vmul.f32 %v4219, 0.5
        %v4476 = vmul.f32 %v4220, 0.5
        %v4477 = vmul.f32 %v4221, 0.5
        %v4478 = vmul.f32 %v4222, 0.5
        %v4479 = vmul.f32 %v4223, 0.5
        %v4480 = vmul.f32 %v4224, 0.5
        %v4481 = vmul.f32 %v4225, 0.5
        %v4482 = vmul.f32 %v4226, 0.5
        %v4483 = vmul.f32 %v4227, 0.5
        %v4484 = vmul.f32 %v4228, 0.5
        %v4485 = vmul.f32 %v4229, 0.5
        %v4486 = vmul.f32 %v4230, 0.5
        %v4487 = vmul.f32 %v4231, 0.5
        %v4488 = vmul.f32 %v4232, 0.5
        %v4489 = vmul.f32 %v4233, 0.5
        %v4490 = vmul.f32 %v4234, 0.5
        %v4491 = vmul.f32 %v4235, 0.5
        %v4492 = vmul.f32 %v4236, 0.5
        %v4493 = vmul.f32 %v4237, 0.5
        %v4494 = vmul.f32 %v4238, 0.5
        %v4495 = vmul.f32 %v4239, 0.5
        %v4496 = vmul.f32 %v4240, 0.5
        %v4497 = vmul.f32 %v4241, 0.5
        %v4498 = vmul.f32 %v4242, 0.5
        %v4499 = vmul.f32 %v4243, 0.5
        %v4500 = vmul.f32 %v4244, 0.5
        %v4501 = vmul.f32 %v4245, 0.5
        %v4502 = vmul.f32 %v4246, 0.5
        %v4503 = vmul.f32 %v4247, 0.5
        %v4504 = vmul.f32 %v4248, 0.5
        %v4505 = vmul.f32 %v4249, 0.5
        %v4506 = vmul.f32 %v4250, 0.5
        %v4507 = vmul.f32 %v4251, 0.5
        %v4508 = vmul.f32 %v4252, 0.5
        %v4509 = vmul.f32 %v4253, 0.5
        %v4510 = vmul.f32 %v4254, 0.5
        %v4511 = vmul.f32 %v4255, 0.5
        %v4512 = vmul.f32 %v4256, 0.5
        %v4513 = vmul.f32 %v4257, 0.5
        %v4514 = vmul.f32 %v4258, 0.5
        %v4515 = vmul.f32 %v4259, 0.5
        %v4516 = vmul.f32 %v4260, 0.5
        %v4517 = vmul.f32 %v4261, 0.5
        %v4518 = vmul.f32 %v4262, 0.5
        %v4519 = vmul.f32 %v4263, 0.5
        %v4520 = vmul.f32 %v4264, 0.5
        %v4521 = vmul.f32 %v4265, 0.5
        %v4522 = vmul.f32 %v4266, 0.5
        %v4523 = vmul.f32 %v4267, 0.5
        %v4524 = vmul.f32 %v4268, 0.5
        %v4525 = vmul.f32 %v4269, 0.5
        %v4526 = vmul.f32 %v4270, 0.5
        %v4527 = vmul.f32 %v4271, 0.5
        %v4528 = vmul.f32 %v4272, 0.5
        %v4529 = vmul.f32 %v4273, 0.5
        %v4530 = vmul.f32 %v4274, 0.5
        %v4531 = vmul.f32 %v4275, 0.5
        %v4532 = vmul.f32 %v4276, 0.5
        %v4533 = vmul.f32 %v4277, 0.5
        %v4534 = vmul.f32 %v4278, 0.5
        %v4535 = vmul.f32 %v4279, 0.5
        %v4536 = vmul.f32 %v4280, 0.5
        %v4537 = vmul.f32 %v4281, 0.5
        %v4538 = vmul.f32 %v4282, 0.5
        %v4539 = vmul.f32 %v4283, 0.5
        %v4540 = vmul.f32 %v4284, 0.5
        %v4541 = vmul.f32 %v4285, 0.5
        %v4542 = vmul.f32 %v4286, 0.5
        %v4543 = vmul.f32 %v4287, 0.5
        %v4544 = vmul.f32 %v4288, 0.5
        %v4545 = vmul.f32 %v4289, 0.5
        %v4546 = vmul.f32 %v4290, 0.5
        %v4547 = vmul.f32 %v4291, 0.5
        %v4548 = vmul.f32 %v4292, 0.5
        %v4549 = vmul.f32 %v4293, 0.5
        %v4550 = vmul.f32 %v4294, 0.5
        %v4551 = vmul.f32 %v4295, 0.5
        %v4552 = vmul.f32 %v4296, 0.5
        %v4553 = vmul.f32 %v4297, 0.5
        %v4554 = vmul.f32 %v4298, 0.5
        %v4555 = vmul.f32 %v4299, 0.5
        %v4556 = vmul.f32 %v4300, 0.5
        %v4557 = vmul.f32 %v4301, 0.5
        %v4558 = vmul.f32 %v4302, 0.5
        %v4559 = vmul.f32 %v4303, 0.5
        %v4560 = vmul.f32 %v4304, 0.5
        %v4561 = vmul.f32 %v4305, 0.5
        %v4562 = vmul.f32 %v4306, 0.5
        %v4563 = vmul.f32 %v4307, 0.5
        %v4564 = vmul.f32 %v4308, 0.5
        %v4565 = vmul.f32 %v4309, 0.5
        %v4566 = vmul.f32 %v4310, 0.5
        %v4567 = vmul.f32 %v4311, 0.5
        %v4568 = vmul.f32 %v4312, 0.5
        %v4569 = vmul.f32 %v4313, 0.5
        %v4570 = vmul.f32 %v4314, 0.5
        %v4571 = vmul.f32 %v4315, 0.5
        %v4572 = vmul.f32 %v4316, 0.5
        %v4573 = vmul.f32 %v4317, 0.5
        %v4574 = vmul.f32 %v4318, 0.5
        %v4575 = vmul.f32 %v4319, 0.5
        %v4576 = vmul.f32 %v4320, 0.5
        %v4577 = vmul.f32 %v4321, 0.5
        %v4578 = vmul.f32 %v4322, 0.5
        %v4579 = vmul.f32 %v4323, 0.5
        %v4580 = vmul.f32 %v4324, 0.5
        %v4581 = vmul.f32 %v4325, 0.5
        %v4582 = vmul.f32 %v4326, 0.5
        %v4583 = vmul.f32 %v4327, 0.5
        %v4584 = vmul.f32 %v4328, 0.5
        %v4585 = vmul.f32 %v4329, 0.5
        %v4586 = vmul.f32 %v4330, 0.5
        %v4587 = vmul.f32 %v4331, 0.5
        %v4588 = vmul.f32 %v4332, 0.5
        %v4589 = vmul.f32 %v4333, 0.5
        %v4590 = vmul.f32 %v4334, 0.5
        %v4591 = vmul.f32 %v4335, 0.5
        %v4592 = vmul.f32 %v4336, 0.5
        %v4593 = vmul.f32 %v4337, 0.5
        %v4594 = vmul.f32 %v4338, 0.5
        %v4595 = vmul.f32 %v4339, 0.5
        %v4596 = vmul.f32 %v4340, 0.5
        %v4597 = vmul.f32 %v4341, 0.5
        %v4598 = vmul.f32 %v4342, 0.5
        %v4599 = vmul.f32 %v4343, 0.5
        %v4600 = vmul.f32 %v4344, 0.5
        %v4601 = vmul.f32 %v4345, 0.5
        %v4602 = vmul.f32 %v4346, 0.5
        %v4603 = vmul.f32 %v4347, 0.5
        %v4604 = vmul.f32 %v4348, 0.5
        %v4605 = vmul.f32 %v4349, 0.5
        %v4606 = vmul.f32 %v4350, 0.5
        %v4607 = vmul.f32 %v4351, 0.5
        %v4608 = vmul.f32 %v4352, 0.5
        %v4609 = vmul.f32 %v4353, 0.5
        %v4610 = vmul.f32 %v4354, 0.5
        %v4611 = vmul.f32 %v4355, 0.5
        %v4612 = vmul.f32 %v4356, 0.5
        %v4613 = vmul.f32 %v4357, 0.5
        %v4614 = vmul.f32 %v4358, 0.5
        %v4615 = vmul.f32 %v4359, 0.5
        %v4616 = vmul.f32 %v4360, 0.5
        %v4617 = vmul.f32 %v4361, 0.5
        %v4618 = vmul.f32 %v4362, 0.5
        %v4619 = vmul.f32 %v4363, 0.5
        %v4620 = vmul.f32 %v4364, 0.5
        %v4621 = vmul.f32 %v4365, 0.5
        %v4622 = vmul.f32 %v4366, 0.5
        %v4623 = vmul.f32 %v4367, 0.5
        %v4624 = vmul.f32 %v4368, 0.5
        %v4625 = vmul.f32 %v4369, 0.5
        %v4626 = vmul.f32 %v4370, 0.5
        %v4627 = vmul.f32 %v4371, 0.5
        %v4628 = vmul.f32 %v4372, 0.5
        %v4629 = vmul.f32 %v4373, 0.5
        %v4630 = vmul.f32 %v4374, 0.5
        %v4631 = vmul.f32 %v4375, 0.5
        %v4632 = vmul.f32 %v4376, 0.5
        %v4633 = vmul.f32 %v4377, 0.5
        %v4634 = vmul.f32 %v4378, 0.5
        %v4635 = vmul.f32 %v4379, 0.5
        %v4636 = vmul.f32 %v4380, 0.5
        %v4637 = vmul.f32 %v4381, 0.5
        %v4638 = vmul.f32 %v4382, 0.5
        %v4639 = vmul.f32 %v4383, 0.5
        %v4640 = vmul.f32 %v4384, 0.5
        %v4641 = vmul.f32 %v4385, 0.5
        %v4642 = vmul.f32 %v4386, 0.5
        %v4643 = vmul.f32 %v4387, 0.5
        %v4644 = vmul.f32 %v4388, 0.5
        %v4645 = vmul.f32 %v4389, 0.5
        %v4646 = vmul.f32 %v4390, 0.5
        %v4647 = vmul.f32 %v4391, 0.5
        %v4648 = vmul.f32 %v4392, 0.5
        %v4649 = vmul.f32 %v4393, 0.5
        %v4650 = vmul.f32 %v1277, %v4394
        %v4651 = vmul.f32 %v1455, %v4395
        %v4652 = vmul.f32 %v1633, %v4396
        %v4653 = vmul.f32 %v1811, %v4397
        %v4654 = vmul.f32 %v1989, %v4398
        %v4655 = vmul.f32 %v2167, %v4399
        %v4656 = vmul.f32 %v2345, %v4400
        %v4657 = vmul.f32 %v2523, %v4401
        %v4658 = vmul.f32 %v1279, %v4402
        %v4659 = vmul.f32 %v1457, %v4403
        %v4660 = vmul.f32 %v1635, %v4404
        %v4661 = vmul.f32 %v1813, %v4405
        %v4662 = vmul.f32 %v1991, %v4406
        %v4663 = vmul.f32 %v2169, %v4407
        %v4664 = vmul.f32 %v2347, %v4408
        %v4665 = vmul.f32 %v2525, %v4409
        %v4666 = vmul.f32 %v1282, %v4410
        %v4667 = vmul.f32 %v1460, %v4411
        %v4668 = vmul.f32 %v1638, %v4412
        %v4669 = vmul.f32 %v1816, %v4413
        %v4670 = vmul.f32 %v1994, %v4414
        %v4671 = vmul.f32 %v2172, %v4415
        %v4672 = vmul.f32 %v2350, %v4416
        %v4673 = vmul.f32 %v2528, %v4417
        %v4674 = vmul.f32 %v1284, %v4418
        %v4675 = vmul.f32 %v1462, %v4419
        %v4676 = vmul.f32 %v1640, %v4420
        %v4677 = vmul.f32 %v1818, %v4421
        %v4678 = vmul.f32 %v1996, %v4422
        %v4679 = vmul.f32 %v2174, %v4423
        %v4680 = vmul.f32 %v2352, %v4424
        %v4681 = vmul.f32 %v2530, %v4425
        %v4682 = vmul.f32 %v1287, %v4426
        %v4683 = vmul.f32 %v1465, %v4427
        %v4684 = vmul.f32 %v1643, %v4428
        %v4685 = vmul.f32 %v1821, %v4429
        %v4686 = vmul.f32 %v1999, %v4430
        %v4687 = vmul.f32 %v2177, %v4431
        %v4688 = vmul.f32 %v2355, %v4432
        %v4689 = vmul.f32 %v2533, %v4433
        %v4690 = vmul.f32 %v1289, %v4434
        %v4691 = vmul.f32 %v1467, %v4435
        %v4692 = vmul.f32 %v1645, %v4436
        %v4693 = vmul.f32 %v1823, %v4437
        %v4694 = vmul.f32 %v2001, %v4438
        %v4695 = vmul.f32 %v2179, %v4439
        %v4696 = vmul.f32 %v2357, %v4440
        %v4697 = vmul.f32 %v2535, %v4441
        %v4698 = vmul.f32 %v1292, %v4442
        %v4699 = vmul.f32 %v1470, %v4443
        %v4700 = vmul.f32 %v1648, %v4444
        %v4701 = vmul.f32 %v1826, %v4445
        %v4702 = vmul.f32 %v2004, %v4446
        %v4703 = vmul.f32 %v2182, %v4447
        %v4704 = vmul.f32 %v2360, %v4448
        %v4705 = vmul.f32 %v2538, %v4449
        %v4706 = vmul.f32 %v1294, %v4450
        %v4707 = vmul.f32 %v1472, %v4451
        %v4708 = vmul.f32 %v1650, %v4452
        %v4709 = vmul.f32 %v1828, %v4453
        %v4710 = vmul.f32 %v2006, %v4454
        %v4711 = vmul.f32 %v2184, %v4455
        %v4712 = vmul.f32 %v2362, %v4456
        %v4713 = vmul.f32 %v2540, %v4457
        %v4714 = vmul.f32 %v1297, %v4458
        %v4715 = vmul.f32 %v1475, %v4459
        %v4716 = vmul.f32 %v1653, %v4460
        %v4717 = vmul.f32 %v1831, %v4461
        %v4718 = vmul.f32 %v2009, %v4462
        %v4719 = vmul.f32 %v2187, %v4463
        %v4720 = vmul.f32 %v2365, %v4464
        %v4721 = vmul.f32 %v2543, %v4465
        %v4722 = vmul.f32 %v1299, %v4466
        %v4723 = vmul.f32 %v1477, %v4467
        %v4724 = vmul.f32 %v1655, %v4468
        %v4725 = vmul.f32 %v1833, %v4469
        %v4726 = vmul.f32 %v2011, %v4470
        %v4727 = vmul.f32 %v2189, %v4471
        %v4728 = vmul.f32 %v2367, %v4472
        %v4729 = vmul.f32 %v2545, %v4473
        %v4730 = vmul.f32 %v1302, %v4474
        %v4731 = vmul.f32 %v1480, %v4475
        %v4732 = vmul.f32 %v1658, %v4476
        %v4733 = vmul.f32 %v1836, %v4477
        %v4734 = vmul.f32 %v2014, %v4478
        %v4735 = vmul.f32 %v2192, %v4479
        %v4736 = vmul.f32 %v2370, %v4480
        %v4737 = vmul.f32 %v2548, %v4481
        %v4738 = vmul.f32 %v1304, %v4482
        %v4739 = vmul.f32 %v1482, %v4483
        %v4740 = vmul.f32 %v1660, %v4484
        %v4741 = vmul.f32 %v1838, %v4485
        %v4742 = vmul.f32 %v2016, %v4486
        %v4743 = vmul.f32 %v2194, %v4487
        %v4744 = vmul.f32 %v2372, %v4488
        %v4745 = vmul.f32 %v2550, %v4489
        %v4746 = vmul.f32 %v1307, %v4490
        %v4747 = vmul.f32 %v1485, %v4491
        %v4748 = vmul.f32 %v1663, %v4492
        %v4749 = vmul.f32 %v1841, %v4493
        %v4750 = vmul.f32 %v2019, %v4494
        %v4751 = vmul.f32 %v2197, %v4495
        %v4752 = vmul.f32 %v2375, %v4496
        %v4753 = vmul.f32 %v2553, %v4497
        %v4754 = vmul.f32 %v1309, %v4498
        %v4755 = vmul.f32 %v1487, %v4499
        %v4756 = vmul.f32 %v1665, %v4500
        %v4757 = vmul.f32 %v1843, %v4501
        %v4758 = vmul.f32 %v2021, %v4502
        %v4759 = vmul.f32 %v2199, %v4503
        %v4760 = vmul.f32 %v2377, %v4504
        %v4761 = vmul.f32 %v2555, %v4505
        %v4762 = vmul.f32 %v1312, %v4506
        %v4763 = vmul.f32 %v1490, %v4507
        %v4764 = vmul.f32 %v1668, %v4508
        %v4765 = vmul.f32 %v1846, %v4509
        %v4766 = vmul.f32 %v2024, %v4510
        %v4767 = vmul.f32 %v2202, %v4511
        %v4768 = vmul.f32 %v2380, %v4512
        %v4769 = vmul.f32 %v2558, %v4513
        %v4770 = vmul.f32 %v1314, %v4514
        %v4771 = vmul.f32 %v1492, %v4515
        %v4772 = vmul.f32 %v1670, %v4516
        %v4773 = vmul.f32 %v1848, %v4517
        %v4774 = vmul.f32 %v2026, %v4518
        %v4775 = vmul.f32 %v2204, %v4519
        %v4776 = vmul.f32 %v2382, %v4520
        %v4777 = vmul.f32 %v2560, %v4521
        %v4778 = vmul.f32 %v1317, %v4522
        %v4779 = vmul.f32 %v1495, %v4523
        %v4780 = vmul.f32 %v1673, %v4524
        %v4781 = vmul.f32 %v1851, %v4525
        %v4782 = vmul.f32 %v2029, %v4526
        %v4783 = vmul.f32 %v2207, %v4527
        %v4784 = vmul.f32 %v2385, %v4528
        %v4785 = vmul.f32 %v2563, %v4529
        %v4786 = vmul.f32 %v1319, %v4530
        %v4787 = vmul.f32 %v1497, %v4531
        %v4788 = vmul.f32 %v1675, %v4532
        %v4789 = vmul.f32 %v1853, %v4533
        %v4790 = vmul.f32 %v2031, %v4534
        %v4791 = vmul.f32 %v2209, %v4535
        %v4792 = vmul.f32 %v2387, %v4536
        %v4793 = vmul.f32 %v2565, %v4537
        %v4794 = vmul.f32 %v1322, %v4538
        %v4795 = vmul.f32 %v1500, %v4539
        %v4796 = vmul.f32 %v1678, %v4540
        %v4797 = vmul.f32 %v1856, %v4541
        %v4798 = vmul.f32 %v2034, %v4542
        %v4799 = vmul.f32 %v2212, %v4543
        %v4800 = vmul.f32 %v2390, %v4544
        %v4801 = vmul.f32 %v2568, %v4545
        %v4802 = vmul.f32 %v1324, %v4546
        %v4803 = vmul.f32 %v1502, %v4547
        %v4804 = vmul.f32 %v1680, %v4548
        %v4805 = vmul.f32 %v1858, %v4549
        %v4806 = vmul.f32 %v2036, %v4550
        %v4807 = vmul.f32 %v2214, %v4551
        %v4808 = vmul.f32 %v2392, %v4552
        %v4809 = vmul.f32 %v2570, %v4553
        %v4810 = vmul.f32 %v1327, %v4554
        %v4811 = vmul.f32 %v1505, %v4555
        %v4812 = vmul.f32 %v1683, %v4556
        %v4813 = vmul.f32 %v1861, %v4557
        %v4814 = vmul.f32 %v2039, %v4558
        %v4815 = vmul.f32 %v2217, %v4559
        %v4816 = vmul.f32 %v2395, %v4560
        %v4817 = vmul.f32 %v2573, %v4561
        %v4818 = vmul.f32 %v1329, %v4562
        %v4819 = vmul.f32 %v1507, %v4563
        %v4820 = vmul.f32 %v1685, %v4564
        %v4821 = vmul.f32 %v1863, %v4565
        %v4822 = vmul.f32 %v2041, %v4566
        %v4823 = vmul.f32 %v2219, %v4567
        %v4824 = vmul.f32 %v2397, %v4568
        %v4825 = vmul.f32 %v2575, %v4569
        %v4826 = vmul.f32 %v1332, %v4570
        %v4827 = vmul.f32 %v1510, %v4571
        %v4828 = vmul.f32 %v1688, %v4572
        %v4829 = vmul.f32 %v1866, %v4573
        %v4830 = vmul.f32 %v2044, %v4574
        %v4831 = vmul.f32 %v2222, %v4575
        %v4832 = vmul.f32 %v2400, %v4576
        %v4833 = vmul.f32 %v2578, %v4577
        %v4834 = vmul.f32 %v1334, %v4578
        %v4835 = vmul.f32 %v1512, %v4579
        %v4836 = vmul.f32 %v1690, %v4580
        %v4837 = vmul.f32 %v1868, %v4581
        %v4838 = vmul.f32 %v2046, %v4582
        %v4839 = vmul.f32 %v2224, %v4583
        %v4840 = vmul.f32 %v2402, %v4584
        %v4841 = vmul.f32 %v2580, %v4585
        %v4842 = vmul.f32 %v1337, %v4586
        %v4843 = vmul.f32 %v1515, %v4587
        %v4844 = vmul.f32 %v1693, %v4588
        %v4845 = vmul.f32 %v1871, %v4589
        %v4846 = vmul.f32 %v2049, %v4590
        %v4847 = vmul.f32 %v2227, %v4591
        %v4848 = vmul.f32 %v2405, %v4592
        %v4849 = vmul.f32 %v2583, %v4593
        %v4850 = vmul.f32 %v1339, %v4594
        %v4851 = vmul.f32 %v1517, %v4595
        %v4852 = vmul.f32 %v1695, %v4596
        %v4853 = vmul.f32 %v1873, %v4597
        %v4854 = vmul.f32 %v2051, %v4598
        %v4855 = vmul.f32 %v2229, %v4599
        %v4856 = vmul.f32 %v2407, %v4600
        %v4857 = vmul.f32 %v2585, %v4601
        %v4858 = vmul.f32 %v1342, %v4602
        %v4859 = vmul.f32 %v1520, %v4603
        %v4860 = vmul.f32 %v1698, %v4604
        %v4861 = vmul.f32 %v1876, %v4605
        %v4862 = vmul.f32 %v2054, %v4606
        %v4863 = vmul.f32 %v2232, %v4607
        %v4864 = vmul.f32 %v2410, %v4608
        %v4865 = vmul.f32 %v2588, %v4609
        %v4866 = vmul.f32 %v1344, %v4610
        %v4867 = vmul.f32 %v1522, %v4611
        %v4868 = vmul.f32 %v1700, %v4612
        %v4869 = vmul.f32 %v1878, %v4613
        %v4870 = vmul.f32 %v2056, %v4614
        %v4871 = vmul.f32 %v2234, %v4615
        %v4872 = vmul.f32 %v2412, %v4616
        %v4873 = vmul.f32 %v2590, %v4617
        %v4874 = vmul.f32 %v1347, %v4618
        %v4875 = vmul.f32 %v1525, %v4619
        %v4876 = vmul.f32 %v1703, %v4620
        %v4877 = vmul.f32 %v1881, %v4621
        %v4878 = vmul.f32 %v2059, %v4622
        %v4879 = vmul.f32 %v2237, %v4623
        %v4880 = vmul.f32 %v2415, %v4624
        %v4881 = vmul.f32 %v2593, %v4625
        %v4882 = vmul.f32 %v1349, %v4626
        %v4883 = vmul.f32 %v1527, %v4627
        %v4884 = vmul.f32 %v1705, %v4628
        %v4885 = vmul.f32 %v1883, %v4629
        %v4886 = vmul.f32 %v2061, %v4630
        %v4887 = vmul.f32 %v2239, %v4631
        %v4888 = vmul.f32 %v2417, %v4632
        %v4889 = vmul.f32 %v2595, %v4633
        %v4890 = vmul.f32 %v1352, %v4634
        %v4891 = vmul.f32 %v1530, %v4635
        %v4892 = vmul.f32 %v1708, %v4636
        %v4893 = vmul.f32 %v1886, %v4637
        %v4894 = vmul.f32 %v2064, %v4638
        %v4895 = vmul.f32 %v2242, %v4639
        %v4896 = vmul.f32 %v2420, %v4640
        %v4897 = vmul.f32 %v2598, %v4641
        %v4898 = vmul.f32 %v1354, %v4642
        %v4899 = vmul.f32 %v1532, %v4643
        %v4900 = vmul.f32 %v1710, %v4644
        %v4901 = vmul.f32 %v1888, %v4645
        %v4902 = vmul.f32 %v2066, %v4646
        %v4903 = vmul.f32 %v2244, %v4647
        %v4904 = vmul.f32 %v2422, %v4648
        %v4905 = vmul.f32 %v2600, %v4649
        %v4906 = vpack.c.bf16 %v4658, %v4650
        %v4907 = vpack.c.bf16 %v4659, %v4651
        %v4908 = vpack.c.bf16 %v4660, %v4652
        %v4909 = vpack.c.bf16 %v4661, %v4653
        %v4910 = vpack.c.bf16 %v4662, %v4654
        %v4911 = vpack.c.bf16 %v4663, %v4655
        %v4912 = vpack.c.bf16 %v4664, %v4656
        %v4913 = vpack.c.bf16 %v4665, %v4657
        %v4914 = vpack.c.bf16 %v4674, %v4666
        %v4915 = vpack.c.bf16 %v4675, %v4667
        %v4916 = vpack.c.bf16 %v4676, %v4668
        %v4917 = vpack.c.bf16 %v4677, %v4669
        %v4918 = vpack.c.bf16 %v4678, %v4670
        %v4919 = vpack.c.bf16 %v4679, %v4671
        %v4920 = vpack.c.bf16 %v4680, %v4672
        %v4921 = vpack.c.bf16 %v4681, %v4673
        %v4922 = vpack.c.bf16 %v4690, %v4682
        %v4923 = vpack.c.bf16 %v4691, %v4683
        %v4924 = vpack.c.bf16 %v4692, %v4684
        %v4925 = vpack.c.bf16 %v4693, %v4685
        %v4926 = vpack.c.bf16 %v4694, %v4686
        %v4927 = vpack.c.bf16 %v4695, %v4687
        %v4928 = vpack.c.bf16 %v4696, %v4688
        %v4929 = vpack.c.bf16 %v4697, %v4689
        %v4930 = vpack.c.bf16 %v4706, %v4698
        %v4931 = vpack.c.bf16 %v4707, %v4699
        %v4932 = vpack.c.bf16 %v4708, %v4700
        %v4933 = vpack.c.bf16 %v4709, %v4701
        %v4934 = vpack.c.bf16 %v4710, %v4702
        %v4935 = vpack.c.bf16 %v4711, %v4703
        %v4936 = vpack.c.bf16 %v4712, %v4704
        %v4937 = vpack.c.bf16 %v4713, %v4705
        %v4938 = vpack.c.bf16 %v4722, %v4714
        %v4939 = vpack.c.bf16 %v4723, %v4715
        %v4940 = vpack.c.bf16 %v4724, %v4716
        %v4941 = vpack.c.bf16 %v4725, %v4717
        %v4942 = vpack.c.bf16 %v4726, %v4718
        %v4943 = vpack.c.bf16 %v4727, %v4719
        %v4944 = vpack.c.bf16 %v4728, %v4720
        %v4945 = vpack.c.bf16 %v4729, %v4721
        %v4946 = vpack.c.bf16 %v4738, %v4730
        %v4947 = vpack.c.bf16 %v4739, %v4731
        %v4948 = vpack.c.bf16 %v4740, %v4732
        %v4949 = vpack.c.bf16 %v4741, %v4733
        %v4950 = vpack.c.bf16 %v4742, %v4734
        %v4951 = vpack.c.bf16 %v4743, %v4735
        %v4952 = vpack.c.bf16 %v4744, %v4736
        %v4953 = vpack.c.bf16 %v4745, %v4737
        %v4954 = vpack.c.bf16 %v4754, %v4746
        %v4955 = vpack.c.bf16 %v4755, %v4747
        %v4956 = vpack.c.bf16 %v4756, %v4748
        %v4957 = vpack.c.bf16 %v4757, %v4749
        %v4958 = vpack.c.bf16 %v4758, %v4750
        %v4959 = vpack.c.bf16 %v4759, %v4751
        %v4960 = vpack.c.bf16 %v4760, %v4752
        %v4961 = vpack.c.bf16 %v4761, %v4753
        %v4962 = vpack.c.bf16 %v4770, %v4762
        %v4963 = vpack.c.bf16 %v4771, %v4763
        %v4964 = vpack.c.bf16 %v4772, %v4764
        %v4965 = vpack.c.bf16 %v4773, %v4765
        %v4966 = vpack.c.bf16 %v4774, %v4766
        %v4967 = vpack.c.bf16 %v4775, %v4767
        %v4968 = vpack.c.bf16 %v4776, %v4768
        %v4969 = vpack.c.bf16 %v4777, %v4769
        %v4970 = vpack.c.bf16 %v4786, %v4778
        %v4971 = vpack.c.bf16 %v4787, %v4779
        %v4972 = vpack.c.bf16 %v4788, %v4780
        %v4973 = vpack.c.bf16 %v4789, %v4781
        %v4974 = vpack.c.bf16 %v4790, %v4782
        %v4975 = vpack.c.bf16 %v4791, %v4783
        %v4976 = vpack.c.bf16 %v4792, %v4784
        %v4977 = vpack.c.bf16 %v4793, %v4785
        %v4978 = vpack.c.bf16 %v4802, %v4794
        %v4979 = vpack.c.bf16 %v4803, %v4795
        %v4980 = vpack.c.bf16 %v4804, %v4796
        %v4981 = vpack.c.bf16 %v4805, %v4797
        %v4982 = vpack.c.bf16 %v4806, %v4798
        %v4983 = vpack.c.bf16 %v4807, %v4799
        %v4984 = vpack.c.bf16 %v4808, %v4800
        %v4985 = vpack.c.bf16 %v4809, %v4801
        %v4986 = vpack.c.bf16 %v4818, %v4810
        %v4987 = vpack.c.bf16 %v4819, %v4811
        %v4988 = vpack.c.bf16 %v4820, %v4812
        %v4989 = vpack.c.bf16 %v4821, %v4813
        %v4990 = vpack.c.bf16 %v4822, %v4814
        %v4991 = vpack.c.bf16 %v4823, %v4815
        %v4992 = vpack.c.bf16 %v4824, %v4816
        %v4993 = vpack.c.bf16 %v4825, %v4817
        %v4994 = vpack.c.bf16 %v4834, %v4826
        %v4995 = vpack.c.bf16 %v4835, %v4827
        %v4996 = vpack.c.bf16 %v4836, %v4828
        %v4997 = vpack.c.bf16 %v4837, %v4829
        %v4998 = vpack.c.bf16 %v4838, %v4830
        %v4999 = vpack.c.bf16 %v4839, %v4831
        %v5000 = vpack.c.bf16 %v4840, %v4832
        %v5001 = vpack.c.bf16 %v4841, %v4833
        %v5002 = vpack.c.bf16 %v4850, %v4842
        %v5003 = vpack.c.bf16 %v4851, %v4843
        %v5004 = vpack.c.bf16 %v4852, %v4844
        %v5005 = vpack.c.bf16 %v4853, %v4845
        %v5006 = vpack.c.bf16 %v4854, %v4846
        %v5007 = vpack.c.bf16 %v4855, %v4847
        %v5008 = vpack.c.bf16 %v4856, %v4848
        %v5009 = vpack.c.bf16 %v4857, %v4849
        %v5010 = vpack.c.bf16 %v4866, %v4858
        %v5011 = vpack.c.bf16 %v4867, %v4859
        %v5012 = vpack.c.bf16 %v4868, %v4860
        %v5013 = vpack.c.bf16 %v4869, %v4861
        %v5014 = vpack.c.bf16 %v4870, %v4862
        %v5015 = vpack.c.bf16 %v4871, %v4863
        %v5016 = vpack.c.bf16 %v4872, %v4864
        %v5017 = vpack.c.bf16 %v4873, %v4865
        %v5018 = vpack.c.bf16 %v4882, %v4874
        %v5019 = vpack.c.bf16 %v4883, %v4875
        %v5020 = vpack.c.bf16 %v4884, %v4876
        %v5021 = vpack.c.bf16 %v4885, %v4877
        %v5022 = vpack.c.bf16 %v4886, %v4878
        %v5023 = vpack.c.bf16 %v4887, %v4879
        %v5024 = vpack.c.bf16 %v4888, %v4880
        %v5025 = vpack.c.bf16 %v4889, %v4881
        %v5026 = vpack.c.bf16 %v4898, %v4890
        %v5027 = vpack.c.bf16 %v4899, %v4891
        %v5028 = vpack.c.bf16 %v4900, %v4892
        %v5029 = vpack.c.bf16 %v4901, %v4893
        %v5030 = vpack.c.bf16 %v4902, %v4894
        %v5031 = vpack.c.bf16 %v4903, %v4895
        %v5032 = vpack.c.bf16 %v4904, %v4896
        %v5033 = vpack.c.bf16 %v4905, %v4897
        %v5034 = vld [vmem:[#allocation8] sm:$0xff]
        %v5035 = vld [vmem:[#allocation8 + $0x8] sm:$0xff]
        %v5036 = vld [vmem:[#allocation8 + $0x10] sm:$0xff]
        %v5037 = vld [vmem:[#allocation8 + $0x18] sm:$0xff]
        %v5038 = vld [vmem:[#allocation8 + $0x20] sm:$0xff]
        %v5039 = vld [vmem:[#allocation8 + $0x28] sm:$0xff]
        %v5040 = vld [vmem:[#allocation8 + $0x30] sm:$0xff]
        %v5041 = vld [vmem:[#allocation8 + $0x38] sm:$0xff]
        %v5042 = vld [vmem:[#allocation8 + $0x40] sm:$0xff]
        %v5043 = vld [vmem:[#allocation8 + $0x48] sm:$0xff]
        %v5044 = vld [vmem:[#allocation8 + $0x50] sm:$0xff]
        %v5045 = vld [vmem:[#allocation8 + $0x58] sm:$0xff]
        %v5046 = vld [vmem:[#allocation8 + $0x60] sm:$0xff]
        %v5047 = vld [vmem:[#allocation8 + $0x68] sm:$0xff]
        %v5048 = vld [vmem:[#allocation8 + $0x70] sm:$0xff]
        %v5049 = vld [vmem:[#allocation8 + $0x78] sm:$0xff]
        %v5050 = vld [vmem:[#allocation8 + $0x80] sm:$0xff]
        %v5051 = vld [vmem:[#allocation8 + $0x88] sm:$0xff]
        %v5052 = vld [vmem:[#allocation8 + $0x90] sm:$0xff]
        %v5053 = vld [vmem:[#allocation8 + $0x98] sm:$0xff]
        %v5054 = vld [vmem:[#allocation8 + $0xa0] sm:$0xff]
        %v5055 = vld [vmem:[#allocation8 + $0xa8] sm:$0xff]
        %v5056 = vld [vmem:[#allocation8 + $0xb0] sm:$0xff]
        %v5057 = vld [vmem:[#allocation8 + $0xb8] sm:$0xff]
        %v5058 = vld [vmem:[#allocation8 + $0xc0] sm:$0xff]
        %v5059 = vld [vmem:[#allocation8 + $0xc8] sm:$0xff]
        %v5060 = vld [vmem:[#allocation8 + $0xd0] sm:$0xff]
        %v5061 = vld [vmem:[#allocation8 + $0xd8] sm:$0xff]
        %v5062 = vld [vmem:[#allocation8 + $0xe0] sm:$0xff]
        %v5063 = vld [vmem:[#allocation8 + $0xe8] sm:$0xff]
        %v5064 = vld [vmem:[#allocation8 + $0xf0] sm:$0xff]
        %v5065 = vld [vmem:[#allocation8 + $0xf8] sm:$0xff]
        %v5066 = vld [vmem:[#allocation8 + $0x100] sm:$0xff]
        %v5067 = vld [vmem:[#allocation8 + $0x108] sm:$0xff]
        %v5068 = vld [vmem:[#allocation8 + $0x110] sm:$0xff]
        %v5069 = vld [vmem:[#allocation8 + $0x118] sm:$0xff]
        %v5070 = vld [vmem:[#allocation8 + $0x120] sm:$0xff]
        %v5071 = vld [vmem:[#allocation8 + $0x128] sm:$0xff]
        %v5072 = vld [vmem:[#allocation8 + $0x130] sm:$0xff]
        %v5073 = vld [vmem:[#allocation8 + $0x138] sm:$0xff]
        %v5074 = vld [vmem:[#allocation8 + $0x140] sm:$0xff]
        %v5075 = vld [vmem:[#allocation8 + $0x148] sm:$0xff]
        %v5076 = vld [vmem:[#allocation8 + $0x150] sm:$0xff]
        %v5077 = vld [vmem:[#allocation8 + $0x158] sm:$0xff]
        %v5078 = vld [vmem:[#allocation8 + $0x160] sm:$0xff]
        %v5079 = vld [vmem:[#allocation8 + $0x168] sm:$0xff]
        %v5080 = vld [vmem:[#allocation8 + $0x170] sm:$0xff]
        %v5081 = vld [vmem:[#allocation8 + $0x178] sm:$0xff]
        %v5082 = vld [vmem:[#allocation8 + $0x180] sm:$0xff]
        %v5083 = vld [vmem:[#allocation8 + $0x188] sm:$0xff]
        %v5084 = vld [vmem:[#allocation8 + $0x190] sm:$0xff]
        %v5085 = vld [vmem:[#allocation8 + $0x198] sm:$0xff]
        %v5086 = vld [vmem:[#allocation8 + $0x1a0] sm:$0xff]
        %v5087 = vld [vmem:[#allocation8 + $0x1a8] sm:$0xff]
        %v5088 = vld [vmem:[#allocation8 + $0x1b0] sm:$0xff]
        %v5089 = vld [vmem:[#allocation8 + $0x1b8] sm:$0xff]
        %v5090 = vld [vmem:[#allocation8 + $0x1c0] sm:$0xff]
        %v5091 = vld [vmem:[#allocation8 + $0x1c8] sm:$0xff]
        %v5092 = vld [vmem:[#allocation8 + $0x1d0] sm:$0xff]
        %v5093 = vld [vmem:[#allocation8 + $0x1d8] sm:$0xff]
        %v5094 = vld [vmem:[#allocation8 + $0x1e0] sm:$0xff]
        %v5095 = vld [vmem:[#allocation8 + $0x1e8] sm:$0xff]
        %v5096 = vld [vmem:[#allocation8 + $0x1f0] sm:$0xff]
        %v5097 = vld [vmem:[#allocation8 + $0x1f8] sm:$0xff]
        %v5098 = vld [vmem:[#allocation8 + $0x200] sm:$0xff]
        %v5099 = vld [vmem:[#allocation8 + $0x208] sm:$0xff]
        %v5100 = vld [vmem:[#allocation8 + $0x210] sm:$0xff]
        %v5101 = vld [vmem:[#allocation8 + $0x218] sm:$0xff]
        %v5102 = vld [vmem:[#allocation8 + $0x220] sm:$0xff]
        %v5103 = vld [vmem:[#allocation8 + $0x228] sm:$0xff]
        %v5104 = vld [vmem:[#allocation8 + $0x230] sm:$0xff]
        %v5105 = vld [vmem:[#allocation8 + $0x238] sm:$0xff]
        %v5106 = vld [vmem:[#allocation8 + $0x240] sm:$0xff]
        %v5107 = vld [vmem:[#allocation8 + $0x248] sm:$0xff]
        %v5108 = vld [vmem:[#allocation8 + $0x250] sm:$0xff]
        %v5109 = vld [vmem:[#allocation8 + $0x258] sm:$0xff]
        %v5110 = vld [vmem:[#allocation8 + $0x260] sm:$0xff]
        %v5111 = vld [vmem:[#allocation8 + $0x268] sm:$0xff]
        %v5112 = vld [vmem:[#allocation8 + $0x270] sm:$0xff]
        %v5113 = vld [vmem:[#allocation8 + $0x278] sm:$0xff]
        %v5114 = vld [vmem:[#allocation8 + $0x280] sm:$0xff]
        %v5115 = vld [vmem:[#allocation8 + $0x288] sm:$0xff]
        %v5116 = vld [vmem:[#allocation8 + $0x290] sm:$0xff]
        %v5117 = vld [vmem:[#allocation8 + $0x298] sm:$0xff]
        %v5118 = vld [vmem:[#allocation8 + $0x2a0] sm:$0xff]
        %v5119 = vld [vmem:[#allocation8 + $0x2a8] sm:$0xff]
        %v5120 = vld [vmem:[#allocation8 + $0x2b0] sm:$0xff]
        %v5121 = vld [vmem:[#allocation8 + $0x2b8] sm:$0xff]
        %v5122 = vld [vmem:[#allocation8 + $0x2c0] sm:$0xff]
        %v5123 = vld [vmem:[#allocation8 + $0x2c8] sm:$0xff]
        %v5124 = vld [vmem:[#allocation8 + $0x2d0] sm:$0xff]
        %v5125 = vld [vmem:[#allocation8 + $0x2d8] sm:$0xff]
        %v5126 = vld [vmem:[#allocation8 + $0x2e0] sm:$0xff]
        %v5127 = vld [vmem:[#allocation8 + $0x2e8] sm:$0xff]
        %v5128 = vld [vmem:[#allocation8 + $0x2f0] sm:$0xff]
        %v5129 = vld [vmem:[#allocation8 + $0x2f8] sm:$0xff]
        %v5130 = vld [vmem:[#allocation8 + $0x300] sm:$0xff]
        %v5131 = vld [vmem:[#allocation8 + $0x308] sm:$0xff]
        %v5132 = vld [vmem:[#allocation8 + $0x310] sm:$0xff]
        %v5133 = vld [vmem:[#allocation8 + $0x318] sm:$0xff]
        %v5134 = vld [vmem:[#allocation8 + $0x320] sm:$0xff]
        %v5135 = vld [vmem:[#allocation8 + $0x328] sm:$0xff]
        %v5136 = vld [vmem:[#allocation8 + $0x330] sm:$0xff]
        %v5137 = vld [vmem:[#allocation8 + $0x338] sm:$0xff]
        %v5138 = vld [vmem:[#allocation8 + $0x340] sm:$0xff]
        %v5139 = vld [vmem:[#allocation8 + $0x348] sm:$0xff]
        %v5140 = vld [vmem:[#allocation8 + $0x350] sm:$0xff]
        %v5141 = vld [vmem:[#allocation8 + $0x358] sm:$0xff]
        %v5142 = vld [vmem:[#allocation8 + $0x360] sm:$0xff]
        %v5143 = vld [vmem:[#allocation8 + $0x368] sm:$0xff]
        %v5144 = vld [vmem:[#allocation8 + $0x370] sm:$0xff]
        %v5145 = vld [vmem:[#allocation8 + $0x378] sm:$0xff]
        %v5146 = vld [vmem:[#allocation8 + $0x380] sm:$0xff]
        %v5147 = vld [vmem:[#allocation8 + $0x388] sm:$0xff]
        %v5148 = vld [vmem:[#allocation8 + $0x390] sm:$0xff]
        %v5149 = vld [vmem:[#allocation8 + $0x398] sm:$0xff]
        %v5150 = vld [vmem:[#allocation8 + $0x3a0] sm:$0xff]
        %v5151 = vld [vmem:[#allocation8 + $0x3a8] sm:$0xff]
        %v5152 = vld [vmem:[#allocation8 + $0x3b0] sm:$0xff]
        %v5153 = vld [vmem:[#allocation8 + $0x3b8] sm:$0xff]
        %v5154 = vld [vmem:[#allocation8 + $0x3c0] sm:$0xff]
        %v5155 = vld [vmem:[#allocation8 + $0x3c8] sm:$0xff]
        %v5156 = vld [vmem:[#allocation8 + $0x3d0] sm:$0xff]
        %v5157 = vld [vmem:[#allocation8 + $0x3d8] sm:$0xff]
        %v5158 = vld [vmem:[#allocation8 + $0x3e0] sm:$0xff]
        %v5159 = vld [vmem:[#allocation8 + $0x3e8] sm:$0xff]
        %v5160 = vld [vmem:[#allocation8 + $0x3f0] sm:$0xff]
        %v5161 = vld [vmem:[#allocation8 + $0x3f8] sm:$0xff]
        %v5162 = vld [vmem:[%s4] sm:$0x3]
        %v5164 = vperm.slane %v5162, 0
        %v5165 = vperm.slane %v5162, 1
        %v5296 = vunpack.c.l.b16 %v5034
        %v5297 = vunpack.c.h.b16 %v5034
        %v5298 = vunpack.c.l.b16 %v5035
        %v5299 = vunpack.c.h.b16 %v5035
        %v5300 = vunpack.c.l.b16 %v5036
        %v5301 = vunpack.c.h.b16 %v5036
        %v5302 = vunpack.c.l.b16 %v5037
        %v5303 = vunpack.c.h.b16 %v5037
        %v5304 = vunpack.c.l.b16 %v5038
        %v5305 = vunpack.c.h.b16 %v5038
        %v5306 = vunpack.c.l.b16 %v5039
        %v5307 = vunpack.c.h.b16 %v5039
        %v5308 = vunpack.c.l.b16 %v5040
        %v5309 = vunpack.c.h.b16 %v5040
        %v5310 = vunpack.c.l.b16 %v5041
        %v5311 = vunpack.c.h.b16 %v5041
        %v5312 = vunpack.c.l.b16 %v5042
        %v5313 = vunpack.c.h.b16 %v5042
        %v5314 = vunpack.c.l.b16 %v5043
        %v5315 = vunpack.c.h.b16 %v5043
        %v5316 = vunpack.c.l.b16 %v5044
        %v5317 = vunpack.c.h.b16 %v5044
        %v5318 = vunpack.c.l.b16 %v5045
        %v5319 = vunpack.c.h.b16 %v5045
        %v5320 = vunpack.c.l.b16 %v5046
        %v5321 = vunpack.c.h.b16 %v5046
        %v5322 = vunpack.c.l.b16 %v5047
        %v5323 = vunpack.c.h.b16 %v5047
        %v5324 = vunpack.c.l.b16 %v5048
        %v5325 = vunpack.c.h.b16 %v5048
        %v5326 = vunpack.c.l.b16 %v5049
        %v5327 = vunpack.c.h.b16 %v5049
        %v5328 = vunpack.c.l.b16 %v5050
        %v5329 = vunpack.c.h.b16 %v5050
        %v5330 = vunpack.c.l.b16 %v5051
        %v5331 = vunpack.c.h.b16 %v5051
        %v5332 = vunpack.c.l.b16 %v5052
        %v5333 = vunpack.c.h.b16 %v5052
        %v5334 = vunpack.c.l.b16 %v5053
        %v5335 = vunpack.c.h.b16 %v5053
        %v5336 = vunpack.c.l.b16 %v5054
        %v5337 = vunpack.c.h.b16 %v5054
        %v5338 = vunpack.c.l.b16 %v5055
        %v5339 = vunpack.c.h.b16 %v5055
        %v5340 = vunpack.c.l.b16 %v5056
        %v5341 = vunpack.c.h.b16 %v5056
        %v5342 = vunpack.c.l.b16 %v5057
        %v5343 = vunpack.c.h.b16 %v5057
        %v5344 = vunpack.c.l.b16 %v5058
        %v5345 = vunpack.c.h.b16 %v5058
        %v5346 = vunpack.c.l.b16 %v5059
        %v5347 = vunpack.c.h.b16 %v5059
        %v5348 = vunpack.c.l.b16 %v5060
        %v5349 = vunpack.c.h.b16 %v5060
        %v5350 = vunpack.c.l.b16 %v5061
        %v5351 = vunpack.c.h.b16 %v5061
        %v5352 = vunpack.c.l.b16 %v5062
        %v5353 = vunpack.c.h.b16 %v5062
        %v5354 = vunpack.c.l.b16 %v5063
        %v5355 = vunpack.c.h.b16 %v5063
        %v5356 = vunpack.c.l.b16 %v5064
        %v5357 = vunpack.c.h.b16 %v5064
        %v5358 = vunpack.c.l.b16 %v5065
        %v5359 = vunpack.c.h.b16 %v5065
        %v5360 = vunpack.c.l.b16 %v5066
        %v5361 = vunpack.c.h.b16 %v5066
        %v5362 = vunpack.c.l.b16 %v5067
        %v5363 = vunpack.c.h.b16 %v5067
        %v5364 = vunpack.c.l.b16 %v5068
        %v5365 = vunpack.c.h.b16 %v5068
        %v5366 = vunpack.c.l.b16 %v5069
        %v5367 = vunpack.c.h.b16 %v5069
        %v5368 = vunpack.c.l.b16 %v5070
        %v5369 = vunpack.c.h.b16 %v5070
        %v5370 = vunpack.c.l.b16 %v5071
        %v5371 = vunpack.c.h.b16 %v5071
        %v5372 = vunpack.c.l.b16 %v5072
        %v5373 = vunpack.c.h.b16 %v5072
        %v5374 = vunpack.c.l.b16 %v5073
        %v5375 = vunpack.c.h.b16 %v5073
        %v5376 = vunpack.c.l.b16 %v5074
        %v5377 = vunpack.c.h.b16 %v5074
        %v5378 = vunpack.c.l.b16 %v5075
        %v5379 = vunpack.c.h.b16 %v5075
        %v5380 = vunpack.c.l.b16 %v5076
        %v5381 = vunpack.c.h.b16 %v5076
        %v5382 = vunpack.c.l.b16 %v5077
        %v5383 = vunpack.c.h.b16 %v5077
        %v5384 = vunpack.c.l.b16 %v5078
        %v5385 = vunpack.c.h.b16 %v5078
        %v5386 = vunpack.c.l.b16 %v5079
        %v5387 = vunpack.c.h.b16 %v5079
        %v5388 = vunpack.c.l.b16 %v5080
        %v5389 = vunpack.c.h.b16 %v5080
        %v5390 = vunpack.c.l.b16 %v5081
        %v5391 = vunpack.c.h.b16 %v5081
        %v5392 = vunpack.c.l.b16 %v5082
        %v5393 = vunpack.c.h.b16 %v5082
        %v5394 = vunpack.c.l.b16 %v5083
        %v5395 = vunpack.c.h.b16 %v5083
        %v5396 = vunpack.c.l.b16 %v5084
        %v5397 = vunpack.c.h.b16 %v5084
        %v5398 = vunpack.c.l.b16 %v5085
        %v5399 = vunpack.c.h.b16 %v5085
        %v5400 = vunpack.c.l.b16 %v5086
        %v5401 = vunpack.c.h.b16 %v5086
        %v5402 = vunpack.c.l.b16 %v5087
        %v5403 = vunpack.c.h.b16 %v5087
        %v5404 = vunpack.c.l.b16 %v5088
        %v5405 = vunpack.c.h.b16 %v5088
        %v5406 = vunpack.c.l.b16 %v5089
        %v5407 = vunpack.c.h.b16 %v5089
        %v5408 = vunpack.c.l.b16 %v5090
        %v5409 = vunpack.c.h.b16 %v5090
        %v5410 = vunpack.c.l.b16 %v5091
        %v5411 = vunpack.c.h.b16 %v5091
        %v5412 = vunpack.c.l.b16 %v5092
        %v5413 = vunpack.c.h.b16 %v5092
        %v5414 = vunpack.c.l.b16 %v5093
        %v5415 = vunpack.c.h.b16 %v5093
        %v5416 = vunpack.c.l.b16 %v5094
        %v5417 = vunpack.c.h.b16 %v5094
        %v5418 = vunpack.c.l.b16 %v5095
        %v5419 = vunpack.c.h.b16 %v5095
        %v5420 = vunpack.c.l.b16 %v5096
        %v5421 = vunpack.c.h.b16 %v5096
        %v5422 = vunpack.c.l.b16 %v5097
        %v5423 = vunpack.c.h.b16 %v5097
        %v5424 = vunpack.c.l.b16 %v5098
        %v5425 = vunpack.c.h.b16 %v5098
        %v5426 = vunpack.c.l.b16 %v5099
        %v5427 = vunpack.c.h.b16 %v5099
        %v5428 = vunpack.c.l.b16 %v5100
        %v5429 = vunpack.c.h.b16 %v5100
        %v5430 = vunpack.c.l.b16 %v5101
        %v5431 = vunpack.c.h.b16 %v5101
        %v5432 = vunpack.c.l.b16 %v5102
        %v5433 = vunpack.c.h.b16 %v5102
        %v5434 = vunpack.c.l.b16 %v5103
        %v5435 = vunpack.c.h.b16 %v5103
        %v5436 = vunpack.c.l.b16 %v5104
        %v5437 = vunpack.c.h.b16 %v5104
        %v5438 = vunpack.c.l.b16 %v5105
        %v5439 = vunpack.c.h.b16 %v5105
        %v5440 = vunpack.c.l.b16 %v5106
        %v5441 = vunpack.c.h.b16 %v5106
        %v5442 = vunpack.c.l.b16 %v5107
        %v5443 = vunpack.c.h.b16 %v5107
        %v5444 = vunpack.c.l.b16 %v5108
        %v5445 = vunpack.c.h.b16 %v5108
        %v5446 = vunpack.c.l.b16 %v5109
        %v5447 = vunpack.c.h.b16 %v5109
        %v5448 = vunpack.c.l.b16 %v5110
        %v5449 = vunpack.c.h.b16 %v5110
        %v5450 = vunpack.c.l.b16 %v5111
        %v5451 = vunpack.c.h.b16 %v5111
        %v5452 = vunpack.c.l.b16 %v5112
        %v5453 = vunpack.c.h.b16 %v5112
        %v5454 = vunpack.c.l.b16 %v5113
        %v5455 = vunpack.c.h.b16 %v5113
        %v5456 = vunpack.c.l.b16 %v5114
        %v5457 = vunpack.c.h.b16 %v5114
        %v5458 = vunpack.c.l.b16 %v5115
        %v5459 = vunpack.c.h.b16 %v5115
        %v5460 = vunpack.c.l.b16 %v5116
        %v5461 = vunpack.c.h.b16 %v5116
        %v5462 = vunpack.c.l.b16 %v5117
        %v5463 = vunpack.c.h.b16 %v5117
        %v5464 = vunpack.c.l.b16 %v5118
        %v5465 = vunpack.c.h.b16 %v5118
        %v5466 = vunpack.c.l.b16 %v5119
        %v5467 = vunpack.c.h.b16 %v5119
        %v5468 = vunpack.c.l.b16 %v5120
        %v5469 = vunpack.c.h.b16 %v5120
        %v5470 = vunpack.c.l.b16 %v5121
        %v5471 = vunpack.c.h.b16 %v5121
        %v5472 = vunpack.c.l.b16 %v5122
        %v5473 = vunpack.c.h.b16 %v5122
        %v5474 = vunpack.c.l.b16 %v5123
        %v5475 = vunpack.c.h.b16 %v5123
        %v5476 = vunpack.c.l.b16 %v5124
        %v5477 = vunpack.c.h.b16 %v5124
        %v5478 = vunpack.c.l.b16 %v5125
        %v5479 = vunpack.c.h.b16 %v5125
        %v5480 = vunpack.c.l.b16 %v5126
        %v5481 = vunpack.c.h.b16 %v5126
        %v5482 = vunpack.c.l.b16 %v5127
        %v5483 = vunpack.c.h.b16 %v5127
        %v5484 = vunpack.c.l.b16 %v5128
        %v5485 = vunpack.c.h.b16 %v5128
        %v5486 = vunpack.c.l.b16 %v5129
        %v5487 = vunpack.c.h.b16 %v5129
        %v5488 = vunpack.c.l.b16 %v5130
        %v5489 = vunpack.c.h.b16 %v5130
        %v5490 = vunpack.c.l.b16 %v5131
        %v5491 = vunpack.c.h.b16 %v5131
        %v5492 = vunpack.c.l.b16 %v5132
        %v5493 = vunpack.c.h.b16 %v5132
        %v5494 = vunpack.c.l.b16 %v5133
        %v5495 = vunpack.c.h.b16 %v5133
        %v5496 = vunpack.c.l.b16 %v5134
        %v5497 = vunpack.c.h.b16 %v5134
        %v5498 = vunpack.c.l.b16 %v5135
        %v5499 = vunpack.c.h.b16 %v5135
        %v5500 = vunpack.c.l.b16 %v5136
        %v5501 = vunpack.c.h.b16 %v5136
        %v5502 = vunpack.c.l.b16 %v5137
        %v5503 = vunpack.c.h.b16 %v5137
        %v5504 = vunpack.c.l.b16 %v5138
        %v5505 = vunpack.c.h.b16 %v5138
        %v5506 = vunpack.c.l.b16 %v5139
        %v5507 = vunpack.c.h.b16 %v5139
        %v5508 = vunpack.c.l.b16 %v5140
        %v5509 = vunpack.c.h.b16 %v5140
        %v5510 = vunpack.c.l.b16 %v5141
        %v5511 = vunpack.c.h.b16 %v5141
        %v5512 = vunpack.c.l.b16 %v5142
        %v5513 = vunpack.c.h.b16 %v5142
        %v5514 = vunpack.c.l.b16 %v5143
        %v5515 = vunpack.c.h.b16 %v5143
        %v5516 = vunpack.c.l.b16 %v5144
        %v5517 = vunpack.c.h.b16 %v5144
        %v5518 = vunpack.c.l.b16 %v5145
        %v5519 = vunpack.c.h.b16 %v5145
        %v5520 = vunpack.c.l.b16 %v5146
        %v5521 = vunpack.c.h.b16 %v5146
        %v5522 = vunpack.c.l.b16 %v5147
        %v5523 = vunpack.c.h.b16 %v5147
        %v5524 = vunpack.c.l.b16 %v5148
        %v5525 = vunpack.c.h.b16 %v5148
        %v5526 = vunpack.c.l.b16 %v5149
        %v5527 = vunpack.c.h.b16 %v5149
        %v5528 = vunpack.c.l.b16 %v5150
        %v5529 = vunpack.c.h.b16 %v5150
        %v5530 = vunpack.c.l.b16 %v5151
        %v5531 = vunpack.c.h.b16 %v5151
        %v5532 = vunpack.c.l.b16 %v5152
        %v5533 = vunpack.c.h.b16 %v5152
        %v5534 = vunpack.c.l.b16 %v5153
        %v5535 = vunpack.c.h.b16 %v5153
        %v5536 = vunpack.c.l.b16 %v5154
        %v5537 = vunpack.c.h.b16 %v5154
        %v5538 = vunpack.c.l.b16 %v5155
        %v5539 = vunpack.c.h.b16 %v5155
        %v5540 = vunpack.c.l.b16 %v5156
        %v5541 = vunpack.c.h.b16 %v5156
        %v5542 = vunpack.c.l.b16 %v5157
        %v5543 = vunpack.c.h.b16 %v5157
        %v5544 = vunpack.c.l.b16 %v5158
        %v5545 = vunpack.c.h.b16 %v5158
        %v5546 = vunpack.c.l.b16 %v5159
        %v5547 = vunpack.c.h.b16 %v5159
        %v5548 = vunpack.c.l.b16 %v5160
        %v5549 = vunpack.c.h.b16 %v5160
        %v5550 = vunpack.c.l.b16 %v5161
        %v5551 = vunpack.c.h.b16 %v5161
        %v5552 = vpack.c.b16 %v5298, %v5296
        %v5553 = vpack.c.b16 %v5299, %v5297
        %v5554 = vpack.c.b16 %v5302, %v5300
        %v5555 = vpack.c.b16 %v5303, %v5301
        %v5556 = vpack.c.b16 %v5306, %v5304
        %v5557 = vpack.c.b16 %v5307, %v5305
        %v5558 = vpack.c.b16 %v5310, %v5308
        %v5559 = vpack.c.b16 %v5311, %v5309
        %v5560 = vpack.c.b16 %v5314, %v5312
        %v5561 = vpack.c.b16 %v5315, %v5313
        %v5562 = vpack.c.b16 %v5318, %v5316
        %v5563 = vpack.c.b16 %v5319, %v5317
        %v5564 = vpack.c.b16 %v5322, %v5320
        %v5565 = vpack.c.b16 %v5323, %v5321
        %v5566 = vpack.c.b16 %v5326, %v5324
        %v5567 = vpack.c.b16 %v5327, %v5325
        %v5568 = vpack.c.b16 %v5330, %v5328
        %v5569 = vpack.c.b16 %v5331, %v5329
        %v5570 = vpack.c.b16 %v5334, %v5332
        %v5571 = vpack.c.b16 %v5335, %v5333
        %v5572 = vpack.c.b16 %v5338, %v5336
        %v5573 = vpack.c.b16 %v5339, %v5337
        %v5574 = vpack.c.b16 %v5342, %v5340
        %v5575 = vpack.c.b16 %v5343, %v5341
        %v5576 = vpack.c.b16 %v5346, %v5344
        %v5577 = vpack.c.b16 %v5347, %v5345
        %v5578 = vpack.c.b16 %v5350, %v5348
        %v5579 = vpack.c.b16 %v5351, %v5349
        %v5580 = vpack.c.b16 %v5354, %v5352
        %v5581 = vpack.c.b16 %v5355, %v5353
        %v5582 = vpack.c.b16 %v5358, %v5356
        %v5583 = vpack.c.b16 %v5359, %v5357
        %v5584 = vpack.c.b16 %v5362, %v5360
        %v5585 = vpack.c.b16 %v5363, %v5361
        %v5586 = vpack.c.b16 %v5366, %v5364
        %v5587 = vpack.c.b16 %v5367, %v5365
        %v5588 = vpack.c.b16 %v5370, %v5368
        %v5589 = vpack.c.b16 %v5371, %v5369
        %v5590 = vpack.c.b16 %v5374, %v5372
        %v5591 = vpack.c.b16 %v5375, %v5373
        %v5592 = vpack.c.b16 %v5378, %v5376
        %v5593 = vpack.c.b16 %v5379, %v5377
        %v5594 = vpack.c.b16 %v5382, %v5380
        %v5595 = vpack.c.b16 %v5383, %v5381
        %v5596 = vpack.c.b16 %v5386, %v5384
        %v5597 = vpack.c.b16 %v5387, %v5385
        %v5598 = vpack.c.b16 %v5390, %v5388
        %v5599 = vpack.c.b16 %v5391, %v5389
        %v5600 = vpack.c.b16 %v5394, %v5392
        %v5601 = vpack.c.b16 %v5395, %v5393
        %v5602 = vpack.c.b16 %v5398, %v5396
        %v5603 = vpack.c.b16 %v5399, %v5397
        %v5604 = vpack.c.b16 %v5402, %v5400
        %v5605 = vpack.c.b16 %v5403, %v5401
        %v5606 = vpack.c.b16 %v5406, %v5404
        %v5607 = vpack.c.b16 %v5407, %v5405
        %v5608 = vpack.c.b16 %v5410, %v5408
        %v5609 = vpack.c.b16 %v5411, %v5409
        %v5610 = vpack.c.b16 %v5414, %v5412
        %v5611 = vpack.c.b16 %v5415, %v5413
        %v5612 = vpack.c.b16 %v5418, %v5416
        %v5613 = vpack.c.b16 %v5419, %v5417
        %v5614 = vpack.c.b16 %v5422, %v5420
        %v5615 = vpack.c.b16 %v5423, %v5421
        %v5616 = vpack.c.b16 %v5426, %v5424
        %v5617 = vpack.c.b16 %v5427, %v5425
        %v5618 = vpack.c.b16 %v5430, %v5428
        %v5619 = vpack.c.b16 %v5431, %v5429
        %v5620 = vpack.c.b16 %v5434, %v5432
        %v5621 = vpack.c.b16 %v5435, %v5433
        %v5622 = vpack.c.b16 %v5438, %v5436
        %v5623 = vpack.c.b16 %v5439, %v5437
        %v5624 = vpack.c.b16 %v5442, %v5440
        %v5625 = vpack.c.b16 %v5443, %v5441
        %v5626 = vpack.c.b16 %v5446, %v5444
        %v5627 = vpack.c.b16 %v5447, %v5445
        %v5628 = vpack.c.b16 %v5450, %v5448
        %v5629 = vpack.c.b16 %v5451, %v5449
        %v5630 = vpack.c.b16 %v5454, %v5452
        %v5631 = vpack.c.b16 %v5455, %v5453
        %v5632 = vpack.c.b16 %v5458, %v5456
        %v5633 = vpack.c.b16 %v5459, %v5457
        %v5634 = vpack.c.b16 %v5462, %v5460
        %v5635 = vpack.c.b16 %v5463, %v5461
        %v5636 = vpack.c.b16 %v5466, %v5464
        %v5637 = vpack.c.b16 %v5467, %v5465
        %v5638 = vpack.c.b16 %v5470, %v5468
        %v5639 = vpack.c.b16 %v5471, %v5469
        %v5640 = vpack.c.b16 %v5474, %v5472
        %v5641 = vpack.c.b16 %v5475, %v5473
        %v5642 = vpack.c.b16 %v5478, %v5476
        %v5643 = vpack.c.b16 %v5479, %v5477
        %v5644 = vpack.c.b16 %v5482, %v5480
        %v5645 = vpack.c.b16 %v5483, %v5481
        %v5646 = vpack.c.b16 %v5486, %v5484
        %v5647 = vpack.c.b16 %v5487, %v5485
        %v5648 = vpack.c.b16 %v5490, %v5488
        %v5649 = vpack.c.b16 %v5491, %v5489
        %v5650 = vpack.c.b16 %v5494, %v5492
        %v5651 = vpack.c.b16 %v5495, %v5493
        %v5652 = vpack.c.b16 %v5498, %v5496
        %v5653 = vpack.c.b16 %v5499, %v5497
        %v5654 = vpack.c.b16 %v5502, %v5500
        %v5655 = vpack.c.b16 %v5503, %v5501
        %v5656 = vpack.c.b16 %v5506, %v5504
        %v5657 = vpack.c.b16 %v5507, %v5505
        %v5658 = vpack.c.b16 %v5510, %v5508
        %v5659 = vpack.c.b16 %v5511, %v5509
        %v5660 = vpack.c.b16 %v5514, %v5512
        %v5661 = vpack.c.b16 %v5515, %v5513
        %v5662 = vpack.c.b16 %v5518, %v5516
        %v5663 = vpack.c.b16 %v5519, %v5517
        %v5664 = vpack.c.b16 %v5522, %v5520
        %v5665 = vpack.c.b16 %v5523, %v5521
        %v5666 = vpack.c.b16 %v5526, %v5524
        %v5667 = vpack.c.b16 %v5527, %v5525
        %v5668 = vpack.c.b16 %v5530, %v5528
        %v5669 = vpack.c.b16 %v5531, %v5529
        %v5670 = vpack.c.b16 %v5534, %v5532
        %v5671 = vpack.c.b16 %v5535, %v5533
        %v5672 = vpack.c.b16 %v5538, %v5536
        %v5673 = vpack.c.b16 %v5539, %v5537
        %v5674 = vpack.c.b16 %v5542, %v5540
        %v5675 = vpack.c.b16 %v5543, %v5541
        %v5676 = vpack.c.b16 %v5546, %v5544
        %v5677 = vpack.c.b16 %v5547, %v5545
        %v5678 = vpack.c.b16 %v5550, %v5548
        %v5679 = vpack.c.b16 %v5551, %v5549
        %5808 = vmatpush.bf16.msra.mxu0 %v5566
        %5809 = vmatpush.bf16.msra.mxu0 %v5564
        %5810 = vmatpush.bf16.msra.mxu0 %v5562
        %5811 = vmatpush.bf16.msra.mxu0 %v5560
        %5812 = vmatpush.bf16.msra.mxu0 %v5558
        %5813 = vmatpush.bf16.msra.mxu0 %v5556
        %5814 = vmatpush.bf16.msra.mxu0 %v5554
        %5815 = vmatpush.bf16.msra.mxu0 %v5552
        %5816 = vmatmul.bf16.gmra.mxu0 %v4906
        %v5817 = vpop.f32.mrf.mxu0
        %v5818 = vadd.f32 %v5164, %v5817
        %v5819 = vpop.f32.mrf.mxu0
        %v5820 = vadd.f32 %v5164, %v5819
        %5821 = vmatmul.bf16.gmra.mxu0 %v4914
        %v5822 = vpop.f32.mrf.mxu0
        %v5823 = vadd.f32 %v5164, %v5822
        %v5824 = vpop.f32.mrf.mxu0
        %v5825 = vadd.f32 %v5164, %v5824
        %5826 = vmatmul.bf16.gmra.mxu0 %v4922
        %v5827 = vpop.f32.mrf.mxu0
        %v5828 = vadd.f32 %v5164, %v5827
        %v5829 = vpop.f32.mrf.mxu0
        %v5830 = vadd.f32 %v5164, %v5829
        %5831 = vmatmul.bf16.gmra.mxu0 %v4930
        %v5832 = vpop.f32.mrf.mxu0
        %v5833 = vadd.f32 %v5164, %v5832
        %v5834 = vpop.f32.mrf.mxu0
        %v5835 = vadd.f32 %v5164, %v5834
        %5836 = vmatmul.bf16.gmra.mxu0 %v4938
        %v5837 = vpop.f32.mrf.mxu0
        %v5838 = vadd.f32 %v5164, %v5837
        %v5839 = vpop.f32.mrf.mxu0
        %v5840 = vadd.f32 %v5164, %v5839
        %5841 = vmatmul.bf16.gmra.mxu0 %v4946
        %v5842 = vpop.f32.mrf.mxu0
        %v5843 = vadd.f32 %v5164, %v5842
        %v5844 = vpop.f32.mrf.mxu0
        %v5845 = vadd.f32 %v5164, %v5844
        %5846 = vmatmul.bf16.gmra.mxu0 %v4954
        %v5847 = vpop.f32.mrf.mxu0
        %v5848 = vadd.f32 %v5164, %v5847
        %v5849 = vpop.f32.mrf.mxu0
        %v5850 = vadd.f32 %v5164, %v5849
        %5851 = vmatmul.bf16.gmra.mxu0 %v4962
        %v5852 = vpop.f32.mrf.mxu0
        %v5853 = vadd.f32 %v5164, %v5852
        %v5854 = vpop.f32.mrf.mxu0
        %v5855 = vadd.f32 %v5164, %v5854
        %5856 = vmatmul.bf16.gmra.mxu0 %v4970
        %v5857 = vpop.f32.mrf.mxu0
        %v5858 = vadd.f32 %v5164, %v5857
        %v5859 = vpop.f32.mrf.mxu0
        %v5860 = vadd.f32 %v5164, %v5859
        %5861 = vmatmul.bf16.gmra.mxu0 %v4978
        %v5862 = vpop.f32.mrf.mxu0
        %v5863 = vadd.f32 %v5164, %v5862
        %v5864 = vpop.f32.mrf.mxu0
        %v5865 = vadd.f32 %v5164, %v5864
        %5866 = vmatmul.bf16.gmra.mxu0 %v4986
        %v5867 = vpop.f32.mrf.mxu0
        %v5868 = vadd.f32 %v5164, %v5867
        %v5869 = vpop.f32.mrf.mxu0
        %v5870 = vadd.f32 %v5164, %v5869
        %5871 = vmatmul.bf16.gmra.mxu0 %v4994
        %v5872 = vpop.f32.mrf.mxu0
        %v5873 = vadd.f32 %v5164, %v5872
        %v5874 = vpop.f32.mrf.mxu0
        %v5875 = vadd.f32 %v5164, %v5874
        %5876 = vmatmul.bf16.gmra.mxu0 %v5002
        %v5877 = vpop.f32.mrf.mxu0
        %v5878 = vadd.f32 %v5164, %v5877
        %v5879 = vpop.f32.mrf.mxu0
        %v5880 = vadd.f32 %v5164, %v5879
        %5881 = vmatmul.bf16.gmra.mxu0 %v5010
        %v5882 = vpop.f32.mrf.mxu0
        %v5883 = vadd.f32 %v5164, %v5882
        %v5884 = vpop.f32.mrf.mxu0
        %v5885 = vadd.f32 %v5164, %v5884
        %5886 = vmatmul.bf16.gmra.mxu0 %v5018
        %v5887 = vpop.f32.mrf.mxu0
        %v5888 = vadd.f32 %v5164, %v5887
        %v5889 = vpop.f32.mrf.mxu0
        %v5890 = vadd.f32 %v5164, %v5889
        %5891 = vmatmul.bf16.gmra.mxu0 %v5026
        %v5892 = vpop.f32.mrf.mxu0
        %v5893 = vadd.f32 %v5164, %v5892
        %v5894 = vpop.f32.mrf.mxu0
        %v5895 = vadd.f32 %v5164, %v5894
        %5896 = vdwg.mxu0
        %5897 = vmatpush.bf16.msra.mxu0 %v5582
        %5898 = vmatpush.bf16.msra.mxu0 %v5580
        %5899 = vmatpush.bf16.msra.mxu0 %v5578
        %5900 = vmatpush.bf16.msra.mxu0 %v5576
        %5901 = vmatpush.bf16.msra.mxu0 %v5574
        %5902 = vmatpush.bf16.msra.mxu0 %v5572
        %5903 = vmatpush.bf16.msra.mxu0 %v5570
        %5904 = vmatpush.bf16.msra.mxu0 %v5568
        %5905 = vmatmul.bf16.gmra.mxu0 %v4907
        %v5906 = vpop.f32.mrf.mxu0
        %v5907 = vadd.f32 %v5818, %v5906
        %v5908 = vpop.f32.mrf.mxu0
        %v5909 = vadd.f32 %v5820, %v5908
        %5910 = vmatmul.bf16.gmra.mxu0 %v4915
        %v5911 = vpop.f32.mrf.mxu0
        %v5912 = vadd.f32 %v5823, %v5911
        %v5913 = vpop.f32.mrf.mxu0
        %v5914 = vadd.f32 %v5825, %v5913
        %5915 = vmatmul.bf16.gmra.mxu0 %v4923
        %v5916 = vpop.f32.mrf.mxu0
        %v5917 = vadd.f32 %v5828, %v5916
        %v5918 = vpop.f32.mrf.mxu0
        %v5919 = vadd.f32 %v5830, %v5918
        %5920 = vmatmul.bf16.gmra.mxu0 %v4931
        %v5921 = vpop.f32.mrf.mxu0
        %v5922 = vadd.f32 %v5833, %v5921
        %v5923 = vpop.f32.mrf.mxu0
        %v5924 = vadd.f32 %v5835, %v5923
        %5925 = vmatmul.bf16.gmra.mxu0 %v4939
        %v5926 = vpop.f32.mrf.mxu0
        %v5927 = vadd.f32 %v5838, %v5926
        %v5928 = vpop.f32.mrf.mxu0
        %v5929 = vadd.f32 %v5840, %v5928
        %5930 = vmatmul.bf16.gmra.mxu0 %v4947
        %v5931 = vpop.f32.mrf.mxu0
        %v5932 = vadd.f32 %v5843, %v5931
        %v5933 = vpop.f32.mrf.mxu0
        %v5934 = vadd.f32 %v5845, %v5933
        %5935 = vmatmul.bf16.gmra.mxu0 %v4955
        %v5936 = vpop.f32.mrf.mxu0
        %v5937 = vadd.f32 %v5848, %v5936
        %v5938 = vpop.f32.mrf.mxu0
        %v5939 = vadd.f32 %v5850, %v5938
        %5940 = vmatmul.bf16.gmra.mxu0 %v4963
        %v5941 = vpop.f32.mrf.mxu0
        %v5942 = vadd.f32 %v5853, %v5941
        %v5943 = vpop.f32.mrf.mxu0
        %v5944 = vadd.f32 %v5855, %v5943
        %5945 = vmatmul.bf16.gmra.mxu0 %v4971
        %v5946 = vpop.f32.mrf.mxu0
        %v5947 = vadd.f32 %v5858, %v5946
        %v5948 = vpop.f32.mrf.mxu0
        %v5949 = vadd.f32 %v5860, %v5948
        %5950 = vmatmul.bf16.gmra.mxu0 %v4979
        %v5951 = vpop.f32.mrf.mxu0
        %v5952 = vadd.f32 %v5863, %v5951
        %v5953 = vpop.f32.mrf.mxu0
        %v5954 = vadd.f32 %v5865, %v5953
        %5955 = vmatmul.bf16.gmra.mxu0 %v4987
        %v5956 = vpop.f32.mrf.mxu0
        %v5957 = vadd.f32 %v5868, %v5956
        %v5958 = vpop.f32.mrf.mxu0
        %v5959 = vadd.f32 %v5870, %v5958
        %5960 = vmatmul.bf16.gmra.mxu0 %v4995
        %v5961 = vpop.f32.mrf.mxu0
        %v5962 = vadd.f32 %v5873, %v5961
        %v5963 = vpop.f32.mrf.mxu0
        %v5964 = vadd.f32 %v5875, %v5963
        %5965 = vmatmul.bf16.gmra.mxu0 %v5003
        %v5966 = vpop.f32.mrf.mxu0
        %v5967 = vadd.f32 %v5878, %v5966
        %v5968 = vpop.f32.mrf.mxu0
        %v5969 = vadd.f32 %v5880, %v5968
        %5970 = vmatmul.bf16.gmra.mxu0 %v5011
        %v5971 = vpop.f32.mrf.mxu0
        %v5972 = vadd.f32 %v5883, %v5971
        %v5973 = vpop.f32.mrf.mxu0
        %v5974 = vadd.f32 %v5885, %v5973
        %5975 = vmatmul.bf16.gmra.mxu0 %v5019
        %v5976 = vpop.f32.mrf.mxu0
        %v5977 = vadd.f32 %v5888, %v5976
        %v5978 = vpop.f32.mrf.mxu0
        %v5979 = vadd.f32 %v5890, %v5978
        %5980 = vmatmul.bf16.gmra.mxu0 %v5027
        %v5981 = vpop.f32.mrf.mxu0
        %v5982 = vadd.f32 %v5893, %v5981
        %v5983 = vpop.f32.mrf.mxu0
        %v5984 = vadd.f32 %v5895, %v5983
        %5985 = vdwg.mxu0
        %5986 = vmatpush.bf16.msra.mxu0 %v5598
        %5987 = vmatpush.bf16.msra.mxu0 %v5596
        %5988 = vmatpush.bf16.msra.mxu0 %v5594
        %5989 = vmatpush.bf16.msra.mxu0 %v5592
        %5990 = vmatpush.bf16.msra.mxu0 %v5590
        %5991 = vmatpush.bf16.msra.mxu0 %v5588
        %5992 = vmatpush.bf16.msra.mxu0 %v5586
        %5993 = vmatpush.bf16.msra.mxu0 %v5584
        %5994 = vmatmul.bf16.gmra.mxu0 %v4908
        %v5995 = vpop.f32.mrf.mxu0
        %v5996 = vadd.f32 %v5907, %v5995
        %v5997 = vpop.f32.mrf.mxu0
        %v5998 = vadd.f32 %v5909, %v5997
        %5999 = vmatmul.bf16.gmra.mxu0 %v4916
        %v6000 = vpop.f32.mrf.mxu0
        %v6001 = vadd.f32 %v5912, %v6000
        %v6002 = vpop.f32.mrf.mxu0
        %v6003 = vadd.f32 %v5914, %v6002
        %6004 = vmatmul.bf16.gmra.mxu0 %v4924
        %v6005 = vpop.f32.mrf.mxu0
        %v6006 = vadd.f32 %v5917, %v6005
        %v6007 = vpop.f32.mrf.mxu0
        %v6008 = vadd.f32 %v5919, %v6007
        %6009 = vmatmul.bf16.gmra.mxu0 %v4932
        %v6010 = vpop.f32.mrf.mxu0
        %v6011 = vadd.f32 %v5922, %v6010
        %v6012 = vpop.f32.mrf.mxu0
        %v6013 = vadd.f32 %v5924, %v6012
        %6014 = vmatmul.bf16.gmra.mxu0 %v4940
        %v6015 = vpop.f32.mrf.mxu0
        %v6016 = vadd.f32 %v5927, %v6015
        %v6017 = vpop.f32.mrf.mxu0
        %v6018 = vadd.f32 %v5929, %v6017
        %6019 = vmatmul.bf16.gmra.mxu0 %v4948
        %v6020 = vpop.f32.mrf.mxu0
        %v6021 = vadd.f32 %v5932, %v6020
        %v6022 = vpop.f32.mrf.mxu0
        %v6023 = vadd.f32 %v5934, %v6022
        %6024 = vmatmul.bf16.gmra.mxu0 %v4956
        %v6025 = vpop.f32.mrf.mxu0
        %v6026 = vadd.f32 %v5937, %v6025
        %v6027 = vpop.f32.mrf.mxu0
        %v6028 = vadd.f32 %v5939, %v6027
        %6029 = vmatmul.bf16.gmra.mxu0 %v4964
        %v6030 = vpop.f32.mrf.mxu0
        %v6031 = vadd.f32 %v5942, %v6030
        %v6032 = vpop.f32.mrf.mxu0
        %v6033 = vadd.f32 %v5944, %v6032
        %6034 = vmatmul.bf16.gmra.mxu0 %v4972
        %v6035 = vpop.f32.mrf.mxu0
        %v6036 = vadd.f32 %v5947, %v6035
        %v6037 = vpop.f32.mrf.mxu0
        %v6038 = vadd.f32 %v5949, %v6037
        %6039 = vmatmul.bf16.gmra.mxu0 %v4980
        %v6040 = vpop.f32.mrf.mxu0
        %v6041 = vadd.f32 %v5952, %v6040
        %v6042 = vpop.f32.mrf.mxu0
        %v6043 = vadd.f32 %v5954, %v6042
        %6044 = vmatmul.bf16.gmra.mxu0 %v4988
        %v6045 = vpop.f32.mrf.mxu0
        %v6046 = vadd.f32 %v5957, %v6045
        %v6047 = vpop.f32.mrf.mxu0
        %v6048 = vadd.f32 %v5959, %v6047
        %6049 = vmatmul.bf16.gmra.mxu0 %v4996
        %v6050 = vpop.f32.mrf.mxu0
        %v6051 = vadd.f32 %v5962, %v6050
        %v6052 = vpop.f32.mrf.mxu0
        %v6053 = vadd.f32 %v5964, %v6052
        %6054 = vmatmul.bf16.gmra.mxu0 %v5004
        %v6055 = vpop.f32.mrf.mxu0
        %v6056 = vadd.f32 %v5967, %v6055
        %v6057 = vpop.f32.mrf.mxu0
        %v6058 = vadd.f32 %v5969, %v6057
        %6059 = vmatmul.bf16.gmra.mxu0 %v5012
        %v6060 = vpop.f32.mrf.mxu0
        %v6061 = vadd.f32 %v5972, %v6060
        %v6062 = vpop.f32.mrf.mxu0
        %v6063 = vadd.f32 %v5974, %v6062
        %6064 = vmatmul.bf16.gmra.mxu0 %v5020
        %v6065 = vpop.f32.mrf.mxu0
        %v6066 = vadd.f32 %v5977, %v6065
        %v6067 = vpop.f32.mrf.mxu0
        %v6068 = vadd.f32 %v5979, %v6067
        %6069 = vmatmul.bf16.gmra.mxu0 %v5028
        %v6070 = vpop.f32.mrf.mxu0
        %v6071 = vadd.f32 %v5982, %v6070
        %v6072 = vpop.f32.mrf.mxu0
        %v6073 = vadd.f32 %v5984, %v6072
        %6074 = vdwg.mxu0
        %6075 = vmatpush.bf16.msra.mxu0 %v5614
        %6076 = vmatpush.bf16.msra.mxu0 %v5612
        %6077 = vmatpush.bf16.msra.mxu0 %v5610
        %6078 = vmatpush.bf16.msra.mxu0 %v5608
        %6079 = vmatpush.bf16.msra.mxu0 %v5606
        %6080 = vmatpush.bf16.msra.mxu0 %v5604
        %6081 = vmatpush.bf16.msra.mxu0 %v5602
        %6082 = vmatpush.bf16.msra.mxu0 %v5600
        %6083 = vmatmul.bf16.gmra.mxu0 %v4909
        %v6084 = vpop.f32.mrf.mxu0
        %v6085 = vadd.f32 %v5996, %v6084
        %v6086 = vpop.f32.mrf.mxu0
        %v6087 = vadd.f32 %v5998, %v6086
        %6088 = vmatmul.bf16.gmra.mxu0 %v4917
        %v6089 = vpop.f32.mrf.mxu0
        %v6090 = vadd.f32 %v6001, %v6089
        %v6091 = vpop.f32.mrf.mxu0
        %v6092 = vadd.f32 %v6003, %v6091
        %6093 = vmatmul.bf16.gmra.mxu0 %v4925
        %v6094 = vpop.f32.mrf.mxu0
        %v6095 = vadd.f32 %v6006, %v6094
        %v6096 = vpop.f32.mrf.mxu0
        %v6097 = vadd.f32 %v6008, %v6096
        %6098 = vmatmul.bf16.gmra.mxu0 %v4933
        %v6099 = vpop.f32.mrf.mxu0
        %v6100 = vadd.f32 %v6011, %v6099
        %v6101 = vpop.f32.mrf.mxu0
        %v6102 = vadd.f32 %v6013, %v6101
        %6103 = vmatmul.bf16.gmra.mxu0 %v4941
        %v6104 = vpop.f32.mrf.mxu0
        %v6105 = vadd.f32 %v6016, %v6104
        %v6106 = vpop.f32.mrf.mxu0
        %v6107 = vadd.f32 %v6018, %v6106
        %6108 = vmatmul.bf16.gmra.mxu0 %v4949
        %v6109 = vpop.f32.mrf.mxu0
        %v6110 = vadd.f32 %v6021, %v6109
        %v6111 = vpop.f32.mrf.mxu0
        %v6112 = vadd.f32 %v6023, %v6111
        %6113 = vmatmul.bf16.gmra.mxu0 %v4957
        %v6114 = vpop.f32.mrf.mxu0
        %v6115 = vadd.f32 %v6026, %v6114
        %v6116 = vpop.f32.mrf.mxu0
        %v6117 = vadd.f32 %v6028, %v6116
        %6118 = vmatmul.bf16.gmra.mxu0 %v4965
        %v6119 = vpop.f32.mrf.mxu0
        %v6120 = vadd.f32 %v6031, %v6119
        %v6121 = vpop.f32.mrf.mxu0
        %v6122 = vadd.f32 %v6033, %v6121
        %6123 = vmatmul.bf16.gmra.mxu0 %v4973
        %v6124 = vpop.f32.mrf.mxu0
        %v6125 = vadd.f32 %v6036, %v6124
        %v6126 = vpop.f32.mrf.mxu0
        %v6127 = vadd.f32 %v6038, %v6126
        %6128 = vmatmul.bf16.gmra.mxu0 %v4981
        %v6129 = vpop.f32.mrf.mxu0
        %v6130 = vadd.f32 %v6041, %v6129
        %v6131 = vpop.f32.mrf.mxu0
        %v6132 = vadd.f32 %v6043, %v6131
        %6133 = vmatmul.bf16.gmra.mxu0 %v4989
        %v6134 = vpop.f32.mrf.mxu0
        %v6135 = vadd.f32 %v6046, %v6134
        %v6136 = vpop.f32.mrf.mxu0
        %v6137 = vadd.f32 %v6048, %v6136
        %6138 = vmatmul.bf16.gmra.mxu0 %v4997
        %v6139 = vpop.f32.mrf.mxu0
        %v6140 = vadd.f32 %v6051, %v6139
        %v6141 = vpop.f32.mrf.mxu0
        %v6142 = vadd.f32 %v6053, %v6141
        %6143 = vmatmul.bf16.gmra.mxu0 %v5005
        %v6144 = vpop.f32.mrf.mxu0
        %v6145 = vadd.f32 %v6056, %v6144
        %v6146 = vpop.f32.mrf.mxu0
        %v6147 = vadd.f32 %v6058, %v6146
        %6148 = vmatmul.bf16.gmra.mxu0 %v5013
        %v6149 = vpop.f32.mrf.mxu0
        %v6150 = vadd.f32 %v6061, %v6149
        %v6151 = vpop.f32.mrf.mxu0
        %v6152 = vadd.f32 %v6063, %v6151
        %6153 = vmatmul.bf16.gmra.mxu0 %v5021
        %v6154 = vpop.f32.mrf.mxu0
        %v6155 = vadd.f32 %v6066, %v6154
        %v6156 = vpop.f32.mrf.mxu0
        %v6157 = vadd.f32 %v6068, %v6156
        %6158 = vmatmul.bf16.gmra.mxu0 %v5029
        %v6159 = vpop.f32.mrf.mxu0
        %v6160 = vadd.f32 %v6071, %v6159
        %v6161 = vpop.f32.mrf.mxu0
        %v6162 = vadd.f32 %v6073, %v6161
        %6163 = vdwg.mxu0
        %6164 = vmatpush.bf16.msra.mxu0 %v5630
        %6165 = vmatpush.bf16.msra.mxu0 %v5628
        %6166 = vmatpush.bf16.msra.mxu0 %v5626
        %6167 = vmatpush.bf16.msra.mxu0 %v5624
        %6168 = vmatpush.bf16.msra.mxu0 %v5622
        %6169 = vmatpush.bf16.msra.mxu0 %v5620
        %6170 = vmatpush.bf16.msra.mxu0 %v5618
        %6171 = vmatpush.bf16.msra.mxu0 %v5616
        %6172 = vmatmul.bf16.gmra.mxu0 %v4910
        %v6173 = vpop.f32.mrf.mxu0
        %v6174 = vadd.f32 %v6085, %v6173
        %v6175 = vpop.f32.mrf.mxu0
        %v6176 = vadd.f32 %v6087, %v6175
        %6177 = vmatmul.bf16.gmra.mxu0 %v4918
        %v6178 = vpop.f32.mrf.mxu0
        %v6179 = vadd.f32 %v6090, %v6178
        %v6180 = vpop.f32.mrf.mxu0
        %v6181 = vadd.f32 %v6092, %v6180
        %6182 = vmatmul.bf16.gmra.mxu0 %v4926
        %v6183 = vpop.f32.mrf.mxu0
        %v6184 = vadd.f32 %v6095, %v6183
        %v6185 = vpop.f32.mrf.mxu0
        %v6186 = vadd.f32 %v6097, %v6185
        %6187 = vmatmul.bf16.gmra.mxu0 %v4934
        %v6188 = vpop.f32.mrf.mxu0
        %v6189 = vadd.f32 %v6100, %v6188
        %v6190 = vpop.f32.mrf.mxu0
        %v6191 = vadd.f32 %v6102, %v6190
        %6192 = vmatmul.bf16.gmra.mxu0 %v4942
        %v6193 = vpop.f32.mrf.mxu0
        %v6194 = vadd.f32 %v6105, %v6193
        %v6195 = vpop.f32.mrf.mxu0
        %v6196 = vadd.f32 %v6107, %v6195
        %6197 = vmatmul.bf16.gmra.mxu0 %v4950
        %v6198 = vpop.f32.mrf.mxu0
        %v6199 = vadd.f32 %v6110, %v6198
        %v6200 = vpop.f32.mrf.mxu0
        %v6201 = vadd.f32 %v6112, %v6200
        %6202 = vmatmul.bf16.gmra.mxu0 %v4958
        %v6203 = vpop.f32.mrf.mxu0
        %v6204 = vadd.f32 %v6115, %v6203
        %v6205 = vpop.f32.mrf.mxu0
        %v6206 = vadd.f32 %v6117, %v6205
        %6207 = vmatmul.bf16.gmra.mxu0 %v4966
        %v6208 = vpop.f32.mrf.mxu0
        %v6209 = vadd.f32 %v6120, %v6208
        %v6210 = vpop.f32.mrf.mxu0
        %v6211 = vadd.f32 %v6122, %v6210
        %6212 = vmatmul.bf16.gmra.mxu0 %v4974
        %v6213 = vpop.f32.mrf.mxu0
        %v6214 = vadd.f32 %v6125, %v6213
        %v6215 = vpop.f32.mrf.mxu0
        %v6216 = vadd.f32 %v6127, %v6215
        %6217 = vmatmul.bf16.gmra.mxu0 %v4982
        %v6218 = vpop.f32.mrf.mxu0
        %v6219 = vadd.f32 %v6130, %v6218
        %v6220 = vpop.f32.mrf.mxu0
        %v6221 = vadd.f32 %v6132, %v6220
        %6222 = vmatmul.bf16.gmra.mxu0 %v4990
        %v6223 = vpop.f32.mrf.mxu0
        %v6224 = vadd.f32 %v6135, %v6223
        %v6225 = vpop.f32.mrf.mxu0
        %v6226 = vadd.f32 %v6137, %v6225
        %6227 = vmatmul.bf16.gmra.mxu0 %v4998
        %v6228 = vpop.f32.mrf.mxu0
        %v6229 = vadd.f32 %v6140, %v6228
        %v6230 = vpop.f32.mrf.mxu0
        %v6231 = vadd.f32 %v6142, %v6230
        %6232 = vmatmul.bf16.gmra.mxu0 %v5006
        %v6233 = vpop.f32.mrf.mxu0
        %v6234 = vadd.f32 %v6145, %v6233
        %v6235 = vpop.f32.mrf.mxu0
        %v6236 = vadd.f32 %v6147, %v6235
        %6237 = vmatmul.bf16.gmra.mxu0 %v5014
        %v6238 = vpop.f32.mrf.mxu0
        %v6239 = vadd.f32 %v6150, %v6238
        %v6240 = vpop.f32.mrf.mxu0
        %v6241 = vadd.f32 %v6152, %v6240
        %6242 = vmatmul.bf16.gmra.mxu0 %v5022
        %v6243 = vpop.f32.mrf.mxu0
        %v6244 = vadd.f32 %v6155, %v6243
        %v6245 = vpop.f32.mrf.mxu0
        %v6246 = vadd.f32 %v6157, %v6245
        %6247 = vmatmul.bf16.gmra.mxu0 %v5030
        %v6248 = vpop.f32.mrf.mxu0
        %v6249 = vadd.f32 %v6160, %v6248
        %v6250 = vpop.f32.mrf.mxu0
        %v6251 = vadd.f32 %v6162, %v6250
        %6252 = vdwg.mxu0
        %6253 = vmatpush.bf16.msra.mxu0 %v5646
        %6254 = vmatpush.bf16.msra.mxu0 %v5644
        %6255 = vmatpush.bf16.msra.mxu0 %v5642
        %6256 = vmatpush.bf16.msra.mxu0 %v5640
        %6257 = vmatpush.bf16.msra.mxu0 %v5638
        %6258 = vmatpush.bf16.msra.mxu0 %v5636
        %6259 = vmatpush.bf16.msra.mxu0 %v5634
        %6260 = vmatpush.bf16.msra.mxu0 %v5632
        %6261 = vmatmul.bf16.gmra.mxu0 %v4911
        %v6262 = vpop.f32.mrf.mxu0
        %v6263 = vadd.f32 %v6174, %v6262
        %v6264 = vpop.f32.mrf.mxu0
        %v6265 = vadd.f32 %v6176, %v6264
        %6266 = vmatmul.bf16.gmra.mxu0 %v4919
        %v6267 = vpop.f32.mrf.mxu0
        %v6268 = vadd.f32 %v6179, %v6267
        %v6269 = vpop.f32.mrf.mxu0
        %v6270 = vadd.f32 %v6181, %v6269
        %6271 = vmatmul.bf16.gmra.mxu0 %v4927
        %v6272 = vpop.f32.mrf.mxu0
        %v6273 = vadd.f32 %v6184, %v6272
        %v6274 = vpop.f32.mrf.mxu0
        %v6275 = vadd.f32 %v6186, %v6274
        %6276 = vmatmul.bf16.gmra.mxu0 %v4935
        %v6277 = vpop.f32.mrf.mxu0
        %v6278 = vadd.f32 %v6189, %v6277
        %v6279 = vpop.f32.mrf.mxu0
        %v6280 = vadd.f32 %v6191, %v6279
        %6281 = vmatmul.bf16.gmra.mxu0 %v4943
        %v6282 = vpop.f32.mrf.mxu0
        %v6283 = vadd.f32 %v6194, %v6282
        %v6284 = vpop.f32.mrf.mxu0
        %v6285 = vadd.f32 %v6196, %v6284
        %6286 = vmatmul.bf16.gmra.mxu0 %v4951
        %v6287 = vpop.f32.mrf.mxu0
        %v6288 = vadd.f32 %v6199, %v6287
        %v6289 = vpop.f32.mrf.mxu0
        %v6290 = vadd.f32 %v6201, %v6289
        %6291 = vmatmul.bf16.gmra.mxu0 %v4959
        %v6292 = vpop.f32.mrf.mxu0
        %v6293 = vadd.f32 %v6204, %v6292
        %v6294 = vpop.f32.mrf.mxu0
        %v6295 = vadd.f32 %v6206, %v6294
        %6296 = vmatmul.bf16.gmra.mxu0 %v4967
        %v6297 = vpop.f32.mrf.mxu0
        %v6298 = vadd.f32 %v6209, %v6297
        %v6299 = vpop.f32.mrf.mxu0
        %v6300 = vadd.f32 %v6211, %v6299
        %6301 = vmatmul.bf16.gmra.mxu0 %v4975
        %v6302 = vpop.f32.mrf.mxu0
        %v6303 = vadd.f32 %v6214, %v6302
        %v6304 = vpop.f32.mrf.mxu0
        %v6305 = vadd.f32 %v6216, %v6304
        %6306 = vmatmul.bf16.gmra.mxu0 %v4983
        %v6307 = vpop.f32.mrf.mxu0
        %v6308 = vadd.f32 %v6219, %v6307
        %v6309 = vpop.f32.mrf.mxu0
        %v6310 = vadd.f32 %v6221, %v6309
        %6311 = vmatmul.bf16.gmra.mxu0 %v4991
        %v6312 = vpop.f32.mrf.mxu0
        %v6313 = vadd.f32 %v6224, %v6312
        %v6314 = vpop.f32.mrf.mxu0
        %v6315 = vadd.f32 %v6226, %v6314
        %6316 = vmatmul.bf16.gmra.mxu0 %v4999
        %v6317 = vpop.f32.mrf.mxu0
        %v6318 = vadd.f32 %v6229, %v6317
        %v6319 = vpop.f32.mrf.mxu0
        %v6320 = vadd.f32 %v6231, %v6319
        %6321 = vmatmul.bf16.gmra.mxu0 %v5007
        %v6322 = vpop.f32.mrf.mxu0
        %v6323 = vadd.f32 %v6234, %v6322
        %v6324 = vpop.f32.mrf.mxu0
        %v6325 = vadd.f32 %v6236, %v6324
        %6326 = vmatmul.bf16.gmra.mxu0 %v5015
        %v6327 = vpop.f32.mrf.mxu0
        %v6328 = vadd.f32 %v6239, %v6327
        %v6329 = vpop.f32.mrf.mxu0
        %v6330 = vadd.f32 %v6241, %v6329
        %6331 = vmatmul.bf16.gmra.mxu0 %v5023
        %v6332 = vpop.f32.mrf.mxu0
        %v6333 = vadd.f32 %v6244, %v6332
        %v6334 = vpop.f32.mrf.mxu0
        %v6335 = vadd.f32 %v6246, %v6334
        %6336 = vmatmul.bf16.gmra.mxu0 %v5031
        %v6337 = vpop.f32.mrf.mxu0
        %v6338 = vadd.f32 %v6249, %v6337
        %v6339 = vpop.f32.mrf.mxu0
        %v6340 = vadd.f32 %v6251, %v6339
        %6341 = vdwg.mxu0
        %6342 = vmatpush.bf16.msra.mxu0 %v5662
        %6343 = vmatpush.bf16.msra.mxu0 %v5660
        %6344 = vmatpush.bf16.msra.mxu0 %v5658
        %6345 = vmatpush.bf16.msra.mxu0 %v5656
        %6346 = vmatpush.bf16.msra.mxu0 %v5654
        %6347 = vmatpush.bf16.msra.mxu0 %v5652
        %6348 = vmatpush.bf16.msra.mxu0 %v5650
        %6349 = vmatpush.bf16.msra.mxu0 %v5648
        %6350 = vmatmul.bf16.gmra.mxu0 %v4912
        %v6351 = vpop.f32.mrf.mxu0
        %v6352 = vadd.f32 %v6263, %v6351
        %v6353 = vpop.f32.mrf.mxu0
        %v6354 = vadd.f32 %v6265, %v6353
        %6355 = vmatmul.bf16.gmra.mxu0 %v4920
        %v6356 = vpop.f32.mrf.mxu0
        %v6357 = vadd.f32 %v6268, %v6356
        %v6358 = vpop.f32.mrf.mxu0
        %v6359 = vadd.f32 %v6270, %v6358
        %6360 = vmatmul.bf16.gmra.mxu0 %v4928
        %v6361 = vpop.f32.mrf.mxu0
        %v6362 = vadd.f32 %v6273, %v6361
        %v6363 = vpop.f32.mrf.mxu0
        %v6364 = vadd.f32 %v6275, %v6363
        %6365 = vmatmul.bf16.gmra.mxu0 %v4936
        %v6366 = vpop.f32.mrf.mxu0
        %v6367 = vadd.f32 %v6278, %v6366
        %v6368 = vpop.f32.mrf.mxu0
        %v6369 = vadd.f32 %v6280, %v6368
        %6370 = vmatmul.bf16.gmra.mxu0 %v4944
        %v6371 = vpop.f32.mrf.mxu0
        %v6372 = vadd.f32 %v6283, %v6371
        %v6373 = vpop.f32.mrf.mxu0
        %v6374 = vadd.f32 %v6285, %v6373
        %6375 = vmatmul.bf16.gmra.mxu0 %v4952
        %v6376 = vpop.f32.mrf.mxu0
        %v6377 = vadd.f32 %v6288, %v6376
        %v6378 = vpop.f32.mrf.mxu0
        %v6379 = vadd.f32 %v6290, %v6378
        %6380 = vmatmul.bf16.gmra.mxu0 %v4960
        %v6381 = vpop.f32.mrf.mxu0
        %v6382 = vadd.f32 %v6293, %v6381
        %v6383 = vpop.f32.mrf.mxu0
        %v6384 = vadd.f32 %v6295, %v6383
        %6385 = vmatmul.bf16.gmra.mxu0 %v4968
        %v6386 = vpop.f32.mrf.mxu0
        %v6387 = vadd.f32 %v6298, %v6386
        %v6388 = vpop.f32.mrf.mxu0
        %v6389 = vadd.f32 %v6300, %v6388
        %6390 = vmatmul.bf16.gmra.mxu0 %v4976
        %v6391 = vpop.f32.mrf.mxu0
        %v6392 = vadd.f32 %v6303, %v6391
        %v6393 = vpop.f32.mrf.mxu0
        %v6394 = vadd.f32 %v6305, %v6393
        %6395 = vmatmul.bf16.gmra.mxu0 %v4984
        %v6396 = vpop.f32.mrf.mxu0
        %v6397 = vadd.f32 %v6308, %v6396
        %v6398 = vpop.f32.mrf.mxu0
        %v6399 = vadd.f32 %v6310, %v6398
        %6400 = vmatmul.bf16.gmra.mxu0 %v4992
        %v6401 = vpop.f32.mrf.mxu0
        %v6402 = vadd.f32 %v6313, %v6401
        %v6403 = vpop.f32.mrf.mxu0
        %v6404 = vadd.f32 %v6315, %v6403
        %6405 = vmatmul.bf16.gmra.mxu0 %v5000
        %v6406 = vpop.f32.mrf.mxu0
        %v6407 = vadd.f32 %v6318, %v6406
        %v6408 = vpop.f32.mrf.mxu0
        %v6409 = vadd.f32 %v6320, %v6408
        %6410 = vmatmul.bf16.gmra.mxu0 %v5008
        %v6411 = vpop.f32.mrf.mxu0
        %v6412 = vadd.f32 %v6323, %v6411
        %v6413 = vpop.f32.mrf.mxu0
        %v6414 = vadd.f32 %v6325, %v6413
        %6415 = vmatmul.bf16.gmra.mxu0 %v5016
        %v6416 = vpop.f32.mrf.mxu0
        %v6417 = vadd.f32 %v6328, %v6416
        %v6418 = vpop.f32.mrf.mxu0
        %v6419 = vadd.f32 %v6330, %v6418
        %6420 = vmatmul.bf16.gmra.mxu0 %v5024
        %v6421 = vpop.f32.mrf.mxu0
        %v6422 = vadd.f32 %v6333, %v6421
        %v6423 = vpop.f32.mrf.mxu0
        %v6424 = vadd.f32 %v6335, %v6423
        %6425 = vmatmul.bf16.gmra.mxu0 %v5032
        %v6426 = vpop.f32.mrf.mxu0
        %v6427 = vadd.f32 %v6338, %v6426
        %v6428 = vpop.f32.mrf.mxu0
        %v6429 = vadd.f32 %v6340, %v6428
        %6430 = vdwg.mxu0
        %6431 = vmatpush.bf16.msra.mxu0 %v5678
        %6432 = vmatpush.bf16.msra.mxu0 %v5676
        %6433 = vmatpush.bf16.msra.mxu0 %v5674
        %6434 = vmatpush.bf16.msra.mxu0 %v5672
        %6435 = vmatpush.bf16.msra.mxu0 %v5670
        %6436 = vmatpush.bf16.msra.mxu0 %v5668
        %6437 = vmatpush.bf16.msra.mxu0 %v5666
        %6438 = vmatpush.bf16.msra.mxu0 %v5664
        %6439 = vmatmul.bf16.gmra.mxu0 %v4913
        %v6440 = vpop.f32.mrf.mxu0
        %v6441 = vadd.f32 %v6352, %v6440
        %v6442 = vpop.f32.mrf.mxu0
        %v6443 = vadd.f32 %v6354, %v6442
        %6444 = vmatmul.bf16.gmra.mxu0 %v4921
        %v6445 = vpop.f32.mrf.mxu0
        %v6446 = vadd.f32 %v6357, %v6445
        %v6447 = vpop.f32.mrf.mxu0
        %v6448 = vadd.f32 %v6359, %v6447
        %6449 = vmatmul.bf16.gmra.mxu0 %v4929
        %v6450 = vpop.f32.mrf.mxu0
        %v6451 = vadd.f32 %v6362, %v6450
        %v6452 = vpop.f32.mrf.mxu0
        %v6453 = vadd.f32 %v6364, %v6452
        %6454 = vmatmul.bf16.gmra.mxu0 %v4937
        %v6455 = vpop.f32.mrf.mxu0
        %v6456 = vadd.f32 %v6367, %v6455
        %v6457 = vpop.f32.mrf.mxu0
        %v6458 = vadd.f32 %v6369, %v6457
        %6459 = vmatmul.bf16.gmra.mxu0 %v4945
        %v6460 = vpop.f32.mrf.mxu0
        %v6461 = vadd.f32 %v6372, %v6460
        %v6462 = vpop.f32.mrf.mxu0
        %v6463 = vadd.f32 %v6374, %v6462
        %6464 = vmatmul.bf16.gmra.mxu0 %v4953
        %v6465 = vpop.f32.mrf.mxu0
        %v6466 = vadd.f32 %v6377, %v6465
        %v6467 = vpop.f32.mrf.mxu0
        %v6468 = vadd.f32 %v6379, %v6467
        %6469 = vmatmul.bf16.gmra.mxu0 %v4961
        %v6470 = vpop.f32.mrf.mxu0
        %v6471 = vadd.f32 %v6382, %v6470
        %v6472 = vpop.f32.mrf.mxu0
        %v6473 = vadd.f32 %v6384, %v6472
        %6474 = vmatmul.bf16.gmra.mxu0 %v4969
        %v6475 = vpop.f32.mrf.mxu0
        %v6476 = vadd.f32 %v6387, %v6475
        %v6477 = vpop.f32.mrf.mxu0
        %v6478 = vadd.f32 %v6389, %v6477
        %6479 = vmatmul.bf16.gmra.mxu0 %v4977
        %v6480 = vpop.f32.mrf.mxu0
        %v6481 = vadd.f32 %v6392, %v6480
        %v6482 = vpop.f32.mrf.mxu0
        %v6483 = vadd.f32 %v6394, %v6482
        %6484 = vmatmul.bf16.gmra.mxu0 %v4985
        %v6485 = vpop.f32.mrf.mxu0
        %v6486 = vadd.f32 %v6397, %v6485
        %v6487 = vpop.f32.mrf.mxu0
        %v6488 = vadd.f32 %v6399, %v6487
        %6489 = vmatmul.bf16.gmra.mxu0 %v4993
        %v6490 = vpop.f32.mrf.mxu0
        %v6491 = vadd.f32 %v6402, %v6490
        %v6492 = vpop.f32.mrf.mxu0
        %v6493 = vadd.f32 %v6404, %v6492
        %6494 = vmatmul.bf16.gmra.mxu0 %v5001
        %v6495 = vpop.f32.mrf.mxu0
        %v6496 = vadd.f32 %v6407, %v6495
        %v6497 = vpop.f32.mrf.mxu0
        %v6498 = vadd.f32 %v6409, %v6497
        %6499 = vmatmul.bf16.gmra.mxu0 %v5009
        %v6500 = vpop.f32.mrf.mxu0
        %v6501 = vadd.f32 %v6412, %v6500
        %v6502 = vpop.f32.mrf.mxu0
        %v6503 = vadd.f32 %v6414, %v6502
        %6504 = vmatmul.bf16.gmra.mxu0 %v5017
        %v6505 = vpop.f32.mrf.mxu0
        %v6506 = vadd.f32 %v6417, %v6505
        %v6507 = vpop.f32.mrf.mxu0
        %v6508 = vadd.f32 %v6419, %v6507
        %6509 = vmatmul.bf16.gmra.mxu0 %v5025
        %v6510 = vpop.f32.mrf.mxu0
        %v6511 = vadd.f32 %v6422, %v6510
        %v6512 = vpop.f32.mrf.mxu0
        %v6513 = vadd.f32 %v6424, %v6512
        %6514 = vmatmul.bf16.gmra.mxu0 %v5033
        %v6515 = vpop.f32.mrf.mxu0
        %v6516 = vadd.f32 %v6427, %v6515
        %v6517 = vpop.f32.mrf.mxu0
        %v6518 = vadd.f32 %v6429, %v6517
        %6519 = vdwg.mxu0
        %6520 = vmatpush.bf16.msra.mxu0 %v5567
        %6521 = vmatpush.bf16.msra.mxu0 %v5565
        %6522 = vmatpush.bf16.msra.mxu0 %v5563
        %6523 = vmatpush.bf16.msra.mxu0 %v5561
        %6524 = vmatpush.bf16.msra.mxu0 %v5559
        %6525 = vmatpush.bf16.msra.mxu0 %v5557
        %6526 = vmatpush.bf16.msra.mxu0 %v5555
        %6527 = vmatpush.bf16.msra.mxu0 %v5553
        %6528 = vmatmul.bf16.gmra.mxu0 %v4906
        %v6529 = vpop.f32.mrf.mxu0
        %v6530 = vadd.f32 %v5165, %v6529
        %v6531 = vpop.f32.mrf.mxu0
        %v6532 = vadd.f32 %v5165, %v6531
        %6533 = vmatmul.bf16.gmra.mxu0 %v4914
        %v6534 = vpop.f32.mrf.mxu0
        %v6535 = vadd.f32 %v5165, %v6534
        %v6536 = vpop.f32.mrf.mxu0
        %v6537 = vadd.f32 %v5165, %v6536
        %6538 = vmatmul.bf16.gmra.mxu0 %v4922
        %v6539 = vpop.f32.mrf.mxu0
        %v6540 = vadd.f32 %v5165, %v6539
        %v6541 = vpop.f32.mrf.mxu0
        %v6542 = vadd.f32 %v5165, %v6541
        %6543 = vmatmul.bf16.gmra.mxu0 %v4930
        %v6544 = vpop.f32.mrf.mxu0
        %v6545 = vadd.f32 %v5165, %v6544
        %v6546 = vpop.f32.mrf.mxu0
        %v6547 = vadd.f32 %v5165, %v6546
        %6548 = vmatmul.bf16.gmra.mxu0 %v4938
        %v6549 = vpop.f32.mrf.mxu0
        %v6550 = vadd.f32 %v5165, %v6549
        %v6551 = vpop.f32.mrf.mxu0
        %v6552 = vadd.f32 %v5165, %v6551
        %6553 = vmatmul.bf16.gmra.mxu0 %v4946
        %v6554 = vpop.f32.mrf.mxu0
        %v6555 = vadd.f32 %v5165, %v6554
        %v6556 = vpop.f32.mrf.mxu0
        %v6557 = vadd.f32 %v5165, %v6556
        %6558 = vmatmul.bf16.gmra.mxu0 %v4954
        %v6559 = vpop.f32.mrf.mxu0
        %v6560 = vadd.f32 %v5165, %v6559
        %v6561 = vpop.f32.mrf.mxu0
        %v6562 = vadd.f32 %v5165, %v6561
        %6563 = vmatmul.bf16.gmra.mxu0 %v4962
        %v6564 = vpop.f32.mrf.mxu0
        %v6565 = vadd.f32 %v5165, %v6564
        %v6566 = vpop.f32.mrf.mxu0
        %v6567 = vadd.f32 %v5165, %v6566
        %6568 = vmatmul.bf16.gmra.mxu0 %v4970
        %v6569 = vpop.f32.mrf.mxu0
        %v6570 = vadd.f32 %v5165, %v6569
        %v6571 = vpop.f32.mrf.mxu0
        %v6572 = vadd.f32 %v5165, %v6571
        %6573 = vmatmul.bf16.gmra.mxu0 %v4978
        %v6574 = vpop.f32.mrf.mxu0
        %v6575 = vadd.f32 %v5165, %v6574
        %v6576 = vpop.f32.mrf.mxu0
        %v6577 = vadd.f32 %v5165, %v6576
        %6578 = vmatmul.bf16.gmra.mxu0 %v4986
        %v6579 = vpop.f32.mrf.mxu0
        %v6580 = vadd.f32 %v5165, %v6579
        %v6581 = vpop.f32.mrf.mxu0
        %v6582 = vadd.f32 %v5165, %v6581
        %6583 = vmatmul.bf16.gmra.mxu0 %v4994
        %v6584 = vpop.f32.mrf.mxu0
        %v6585 = vadd.f32 %v5165, %v6584
        %v6586 = vpop.f32.mrf.mxu0
        %v6587 = vadd.f32 %v5165, %v6586
        %6588 = vmatmul.bf16.gmra.mxu0 %v5002
        %v6589 = vpop.f32.mrf.mxu0
        %v6590 = vadd.f32 %v5165, %v6589
        %v6591 = vpop.f32.mrf.mxu0
        %v6592 = vadd.f32 %v5165, %v6591
        %6593 = vmatmul.bf16.gmra.mxu0 %v5010
        %v6594 = vpop.f32.mrf.mxu0
        %v6595 = vadd.f32 %v5165, %v6594
        %v6596 = vpop.f32.mrf.mxu0
        %v6597 = vadd.f32 %v5165, %v6596
        %6598 = vmatmul.bf16.gmra.mxu0 %v5018
        %v6599 = vpop.f32.mrf.mxu0
        %v6600 = vadd.f32 %v5165, %v6599
        %v6601 = vpop.f32.mrf.mxu0
        %v6602 = vadd.f32 %v5165, %v6601
        %6603 = vmatmul.bf16.gmra.mxu0 %v5026
        %v6604 = vpop.f32.mrf.mxu0
        %v6605 = vadd.f32 %v5165, %v6604
        %v6606 = vpop.f32.mrf.mxu0
        %v6607 = vadd.f32 %v5165, %v6606
        %6608 = vdwg.mxu0
        %6609 = vmatpush.bf16.msra.mxu0 %v5583
        %6610 = vmatpush.bf16.msra.mxu0 %v5581
        %6611 = vmatpush.bf16.msra.mxu0 %v5579
        %6612 = vmatpush.bf16.msra.mxu0 %v5577
        %6613 = vmatpush.bf16.msra.mxu0 %v5575
        %6614 = vmatpush.bf16.msra.mxu0 %v5573
        %6615 = vmatpush.bf16.msra.mxu0 %v5571
        %6616 = vmatpush.bf16.msra.mxu0 %v5569
        %6617 = vmatmul.bf16.gmra.mxu0 %v4907
        %v6618 = vpop.f32.mrf.mxu0
        %v6619 = vadd.f32 %v6530, %v6618
        %v6620 = vpop.f32.mrf.mxu0
        %v6621 = vadd.f32 %v6532, %v6620
        %6622 = vmatmul.bf16.gmra.mxu0 %v4915
        %v6623 = vpop.f32.mrf.mxu0
        %v6624 = vadd.f32 %v6535, %v6623
        %v6625 = vpop.f32.mrf.mxu0
        %v6626 = vadd.f32 %v6537, %v6625
        %6627 = vmatmul.bf16.gmra.mxu0 %v4923
        %v6628 = vpop.f32.mrf.mxu0
        %v6629 = vadd.f32 %v6540, %v6628
        %v6630 = vpop.f32.mrf.mxu0
        %v6631 = vadd.f32 %v6542, %v6630
        %6632 = vmatmul.bf16.gmra.mxu0 %v4931
        %v6633 = vpop.f32.mrf.mxu0
        %v6634 = vadd.f32 %v6545, %v6633
        %v6635 = vpop.f32.mrf.mxu0
        %v6636 = vadd.f32 %v6547, %v6635
        %6637 = vmatmul.bf16.gmra.mxu0 %v4939
        %v6638 = vpop.f32.mrf.mxu0
        %v6639 = vadd.f32 %v6550, %v6638
        %v6640 = vpop.f32.mrf.mxu0
        %v6641 = vadd.f32 %v6552, %v6640
        %6642 = vmatmul.bf16.gmra.mxu0 %v4947
        %v6643 = vpop.f32.mrf.mxu0
        %v6644 = vadd.f32 %v6555, %v6643
        %v6645 = vpop.f32.mrf.mxu0
        %v6646 = vadd.f32 %v6557, %v6645
        %6647 = vmatmul.bf16.gmra.mxu0 %v4955
        %v6648 = vpop.f32.mrf.mxu0
        %v6649 = vadd.f32 %v6560, %v6648
        %v6650 = vpop.f32.mrf.mxu0
        %v6651 = vadd.f32 %v6562, %v6650
        %6652 = vmatmul.bf16.gmra.mxu0 %v4963
        %v6653 = vpop.f32.mrf.mxu0
        %v6654 = vadd.f32 %v6565, %v6653
        %v6655 = vpop.f32.mrf.mxu0
        %v6656 = vadd.f32 %v6567, %v6655
        %6657 = vmatmul.bf16.gmra.mxu0 %v4971
        %v6658 = vpop.f32.mrf.mxu0
        %v6659 = vadd.f32 %v6570, %v6658
        %v6660 = vpop.f32.mrf.mxu0
        %v6661 = vadd.f32 %v6572, %v6660
        %6662 = vmatmul.bf16.gmra.mxu0 %v4979
        %v6663 = vpop.f32.mrf.mxu0
        %v6664 = vadd.f32 %v6575, %v6663
        %v6665 = vpop.f32.mrf.mxu0
        %v6666 = vadd.f32 %v6577, %v6665
        %6667 = vmatmul.bf16.gmra.mxu0 %v4987
        %v6668 = vpop.f32.mrf.mxu0
        %v6669 = vadd.f32 %v6580, %v6668
        %v6670 = vpop.f32.mrf.mxu0
        %v6671 = vadd.f32 %v6582, %v6670
        %6672 = vmatmul.bf16.gmra.mxu0 %v4995
        %v6673 = vpop.f32.mrf.mxu0
        %v6674 = vadd.f32 %v6585, %v6673
        %v6675 = vpop.f32.mrf.mxu0
        %v6676 = vadd.f32 %v6587, %v6675
        %6677 = vmatmul.bf16.gmra.mxu0 %v5003
        %v6678 = vpop.f32.mrf.mxu0
        %v6679 = vadd.f32 %v6590, %v6678
        %v6680 = vpop.f32.mrf.mxu0
        %v6681 = vadd.f32 %v6592, %v6680
        %6682 = vmatmul.bf16.gmra.mxu0 %v5011
        %v6683 = vpop.f32.mrf.mxu0
        %v6684 = vadd.f32 %v6595, %v6683
        %v6685 = vpop.f32.mrf.mxu0
        %v6686 = vadd.f32 %v6597, %v6685
        %6687 = vmatmul.bf16.gmra.mxu0 %v5019
        %v6688 = vpop.f32.mrf.mxu0
        %v6689 = vadd.f32 %v6600, %v6688
        %v6690 = vpop.f32.mrf.mxu0
        %v6691 = vadd.f32 %v6602, %v6690
        %6692 = vmatmul.bf16.gmra.mxu0 %v5027
        %v6693 = vpop.f32.mrf.mxu0
        %v6694 = vadd.f32 %v6605, %v6693
        %v6695 = vpop.f32.mrf.mxu0
        %v6696 = vadd.f32 %v6607, %v6695
        %6697 = vdwg.mxu0
        %6698 = vmatpush.bf16.msra.mxu0 %v5599
        %6699 = vmatpush.bf16.msra.mxu0 %v5597
        %6700 = vmatpush.bf16.msra.mxu0 %v5595
        %6701 = vmatpush.bf16.msra.mxu0 %v5593
        %6702 = vmatpush.bf16.msra.mxu0 %v5591
        %6703 = vmatpush.bf16.msra.mxu0 %v5589
        %6704 = vmatpush.bf16.msra.mxu0 %v5587
        %6705 = vmatpush.bf16.msra.mxu0 %v5585
        %6706 = vmatmul.bf16.gmra.mxu0 %v4908
        %v6707 = vpop.f32.mrf.mxu0
        %v6708 = vadd.f32 %v6619, %v6707
        %v6709 = vpop.f32.mrf.mxu0
        %v6710 = vadd.f32 %v6621, %v6709
        %6711 = vmatmul.bf16.gmra.mxu0 %v4916
        %v6712 = vpop.f32.mrf.mxu0
        %v6713 = vadd.f32 %v6624, %v6712
        %v6714 = vpop.f32.mrf.mxu0
        %v6715 = vadd.f32 %v6626, %v6714
        %6716 = vmatmul.bf16.gmra.mxu0 %v4924
        %v6717 = vpop.f32.mrf.mxu0
        %v6718 = vadd.f32 %v6629, %v6717
        %v6719 = vpop.f32.mrf.mxu0
        %v6720 = vadd.f32 %v6631, %v6719
        %6721 = vmatmul.bf16.gmra.mxu0 %v4932
        %v6722 = vpop.f32.mrf.mxu0
        %v6723 = vadd.f32 %v6634, %v6722
        %v6724 = vpop.f32.mrf.mxu0
        %v6725 = vadd.f32 %v6636, %v6724
        %6726 = vmatmul.bf16.gmra.mxu0 %v4940
        %v6727 = vpop.f32.mrf.mxu0
        %v6728 = vadd.f32 %v6639, %v6727
        %v6729 = vpop.f32.mrf.mxu0
        %v6730 = vadd.f32 %v6641, %v6729
        %6731 = vmatmul.bf16.gmra.mxu0 %v4948
        %v6732 = vpop.f32.mrf.mxu0
        %v6733 = vadd.f32 %v6644, %v6732
        %v6734 = vpop.f32.mrf.mxu0
        %v6735 = vadd.f32 %v6646, %v6734
        %6736 = vmatmul.bf16.gmra.mxu0 %v4956
        %v6737 = vpop.f32.mrf.mxu0
        %v6738 = vadd.f32 %v6649, %v6737
        %v6739 = vpop.f32.mrf.mxu0
        %v6740 = vadd.f32 %v6651, %v6739
        %6741 = vmatmul.bf16.gmra.mxu0 %v4964
        %v6742 = vpop.f32.mrf.mxu0
        %v6743 = vadd.f32 %v6654, %v6742
        %v6744 = vpop.f32.mrf.mxu0
        %v6745 = vadd.f32 %v6656, %v6744
        %6746 = vmatmul.bf16.gmra.mxu0 %v4972
        %v6747 = vpop.f32.mrf.mxu0
        %v6748 = vadd.f32 %v6659, %v6747
        %v6749 = vpop.f32.mrf.mxu0
        %v6750 = vadd.f32 %v6661, %v6749
        %6751 = vmatmul.bf16.gmra.mxu0 %v4980
        %v6752 = vpop.f32.mrf.mxu0
        %v6753 = vadd.f32 %v6664, %v6752
        %v6754 = vpop.f32.mrf.mxu0
        %v6755 = vadd.f32 %v6666, %v6754
        %6756 = vmatmul.bf16.gmra.mxu0 %v4988
        %v6757 = vpop.f32.mrf.mxu0
        %v6758 = vadd.f32 %v6669, %v6757
        %v6759 = vpop.f32.mrf.mxu0
        %v6760 = vadd.f32 %v6671, %v6759
        %6761 = vmatmul.bf16.gmra.mxu0 %v4996
        %v6762 = vpop.f32.mrf.mxu0
        %v6763 = vadd.f32 %v6674, %v6762
        %v6764 = vpop.f32.mrf.mxu0
        %v6765 = vadd.f32 %v6676, %v6764
        %6766 = vmatmul.bf16.gmra.mxu0 %v5004
        %v6767 = vpop.f32.mrf.mxu0
        %v6768 = vadd.f32 %v6679, %v6767
        %v6769 = vpop.f32.mrf.mxu0
        %v6770 = vadd.f32 %v6681, %v6769
        %6771 = vmatmul.bf16.gmra.mxu0 %v5012
        %v6772 = vpop.f32.mrf.mxu0
        %v6773 = vadd.f32 %v6684, %v6772
        %v6774 = vpop.f32.mrf.mxu0
        %v6775 = vadd.f32 %v6686, %v6774
        %6776 = vmatmul.bf16.gmra.mxu0 %v5020
        %v6777 = vpop.f32.mrf.mxu0
        %v6778 = vadd.f32 %v6689, %v6777
        %v6779 = vpop.f32.mrf.mxu0
        %v6780 = vadd.f32 %v6691, %v6779
        %6781 = vmatmul.bf16.gmra.mxu0 %v5028
        %v6782 = vpop.f32.mrf.mxu0
        %v6783 = vadd.f32 %v6694, %v6782
        %v6784 = vpop.f32.mrf.mxu0
        %v6785 = vadd.f32 %v6696, %v6784
        %6786 = vdwg.mxu0
        %6787 = vmatpush.bf16.msra.mxu0 %v5615
        %6788 = vmatpush.bf16.msra.mxu0 %v5613
        %6789 = vmatpush.bf16.msra.mxu0 %v5611
        %6790 = vmatpush.bf16.msra.mxu0 %v5609
        %6791 = vmatpush.bf16.msra.mxu0 %v5607
        %6792 = vmatpush.bf16.msra.mxu0 %v5605
        %6793 = vmatpush.bf16.msra.mxu0 %v5603
        %6794 = vmatpush.bf16.msra.mxu0 %v5601
        %6795 = vmatmul.bf16.gmra.mxu0 %v4909
        %v6796 = vpop.f32.mrf.mxu0
        %v6797 = vadd.f32 %v6708, %v6796
        %v6798 = vpop.f32.mrf.mxu0
        %v6799 = vadd.f32 %v6710, %v6798
        %6800 = vmatmul.bf16.gmra.mxu0 %v4917
        %v6801 = vpop.f32.mrf.mxu0
        %v6802 = vadd.f32 %v6713, %v6801
        %v6803 = vpop.f32.mrf.mxu0
        %v6804 = vadd.f32 %v6715, %v6803
        %6805 = vmatmul.bf16.gmra.mxu0 %v4925
        %v6806 = vpop.f32.mrf.mxu0
        %v6807 = vadd.f32 %v6718, %v6806
        %v6808 = vpop.f32.mrf.mxu0
        %v6809 = vadd.f32 %v6720, %v6808
        %6810 = vmatmul.bf16.gmra.mxu0 %v4933
        %v6811 = vpop.f32.mrf.mxu0
        %v6812 = vadd.f32 %v6723, %v6811
        %v6813 = vpop.f32.mrf.mxu0
        %v6814 = vadd.f32 %v6725, %v6813
        %6815 = vmatmul.bf16.gmra.mxu0 %v4941
        %v6816 = vpop.f32.mrf.mxu0
        %v6817 = vadd.f32 %v6728, %v6816
        %v6818 = vpop.f32.mrf.mxu0
        %v6819 = vadd.f32 %v6730, %v6818
        %6820 = vmatmul.bf16.gmra.mxu0 %v4949
        %v6821 = vpop.f32.mrf.mxu0
        %v6822 = vadd.f32 %v6733, %v6821
        %v6823 = vpop.f32.mrf.mxu0
        %v6824 = vadd.f32 %v6735, %v6823
        %6825 = vmatmul.bf16.gmra.mxu0 %v4957
        %v6826 = vpop.f32.mrf.mxu0
        %v6827 = vadd.f32 %v6738, %v6826
        %v6828 = vpop.f32.mrf.mxu0
        %v6829 = vadd.f32 %v6740, %v6828
        %6830 = vmatmul.bf16.gmra.mxu0 %v4965
        %v6831 = vpop.f32.mrf.mxu0
        %v6832 = vadd.f32 %v6743, %v6831
        %v6833 = vpop.f32.mrf.mxu0
        %v6834 = vadd.f32 %v6745, %v6833
        %6835 = vmatmul.bf16.gmra.mxu0 %v4973
        %v6836 = vpop.f32.mrf.mxu0
        %v6837 = vadd.f32 %v6748, %v6836
        %v6838 = vpop.f32.mrf.mxu0
        %v6839 = vadd.f32 %v6750, %v6838
        %6840 = vmatmul.bf16.gmra.mxu0 %v4981
        %v6841 = vpop.f32.mrf.mxu0
        %v6842 = vadd.f32 %v6753, %v6841
        %v6843 = vpop.f32.mrf.mxu0
        %v6844 = vadd.f32 %v6755, %v6843
        %6845 = vmatmul.bf16.gmra.mxu0 %v4989
        %v6846 = vpop.f32.mrf.mxu0
        %v6847 = vadd.f32 %v6758, %v6846
        %v6848 = vpop.f32.mrf.mxu0
        %v6849 = vadd.f32 %v6760, %v6848
        %6850 = vmatmul.bf16.gmra.mxu0 %v4997
        %v6851 = vpop.f32.mrf.mxu0
        %v6852 = vadd.f32 %v6763, %v6851
        %v6853 = vpop.f32.mrf.mxu0
        %v6854 = vadd.f32 %v6765, %v6853
        %6855 = vmatmul.bf16.gmra.mxu0 %v5005
        %v6856 = vpop.f32.mrf.mxu0
        %v6857 = vadd.f32 %v6768, %v6856
        %v6858 = vpop.f32.mrf.mxu0
        %v6859 = vadd.f32 %v6770, %v6858
        %6860 = vmatmul.bf16.gmra.mxu0 %v5013
        %v6861 = vpop.f32.mrf.mxu0
        %v6862 = vadd.f32 %v6773, %v6861
        %v6863 = vpop.f32.mrf.mxu0
        %v6864 = vadd.f32 %v6775, %v6863
        %6865 = vmatmul.bf16.gmra.mxu0 %v5021
        %v6866 = vpop.f32.mrf.mxu0
        %v6867 = vadd.f32 %v6778, %v6866
        %v6868 = vpop.f32.mrf.mxu0
        %v6869 = vadd.f32 %v6780, %v6868
        %6870 = vmatmul.bf16.gmra.mxu0 %v5029
        %v6871 = vpop.f32.mrf.mxu0
        %v6872 = vadd.f32 %v6783, %v6871
        %v6873 = vpop.f32.mrf.mxu0
        %v6874 = vadd.f32 %v6785, %v6873
        %6875 = vdwg.mxu0
        %6876 = vmatpush.bf16.msra.mxu0 %v5631
        %6877 = vmatpush.bf16.msra.mxu0 %v5629
        %6878 = vmatpush.bf16.msra.mxu0 %v5627
        %6879 = vmatpush.bf16.msra.mxu0 %v5625
        %6880 = vmatpush.bf16.msra.mxu0 %v5623
        %6881 = vmatpush.bf16.msra.mxu0 %v5621
        %6882 = vmatpush.bf16.msra.mxu0 %v5619
        %6883 = vmatpush.bf16.msra.mxu0 %v5617
        %6884 = vmatmul.bf16.gmra.mxu0 %v4910
        %v6885 = vpop.f32.mrf.mxu0
        %v6886 = vadd.f32 %v6797, %v6885
        %v6887 = vpop.f32.mrf.mxu0
        %v6888 = vadd.f32 %v6799, %v6887
        %6889 = vmatmul.bf16.gmra.mxu0 %v4918
        %v6890 = vpop.f32.mrf.mxu0
        %v6891 = vadd.f32 %v6802, %v6890
        %v6892 = vpop.f32.mrf.mxu0
        %v6893 = vadd.f32 %v6804, %v6892
        %6894 = vmatmul.bf16.gmra.mxu0 %v4926
        %v6895 = vpop.f32.mrf.mxu0
        %v6896 = vadd.f32 %v6807, %v6895
        %v6897 = vpop.f32.mrf.mxu0
        %v6898 = vadd.f32 %v6809, %v6897
        %6899 = vmatmul.bf16.gmra.mxu0 %v4934
        %v6900 = vpop.f32.mrf.mxu0
        %v6901 = vadd.f32 %v6812, %v6900
        %v6902 = vpop.f32.mrf.mxu0
        %v6903 = vadd.f32 %v6814, %v6902
        %6904 = vmatmul.bf16.gmra.mxu0 %v4942
        %v6905 = vpop.f32.mrf.mxu0
        %v6906 = vadd.f32 %v6817, %v6905
        %v6907 = vpop.f32.mrf.mxu0
        %v6908 = vadd.f32 %v6819, %v6907
        %6909 = vmatmul.bf16.gmra.mxu0 %v4950
        %v6910 = vpop.f32.mrf.mxu0
        %v6911 = vadd.f32 %v6822, %v6910
        %v6912 = vpop.f32.mrf.mxu0
        %v6913 = vadd.f32 %v6824, %v6912
        %6914 = vmatmul.bf16.gmra.mxu0 %v4958
        %v6915 = vpop.f32.mrf.mxu0
        %v6916 = vadd.f32 %v6827, %v6915
        %v6917 = vpop.f32.mrf.mxu0
        %v6918 = vadd.f32 %v6829, %v6917
        %6919 = vmatmul.bf16.gmra.mxu0 %v4966
        %v6920 = vpop.f32.mrf.mxu0
        %v6921 = vadd.f32 %v6832, %v6920
        %v6922 = vpop.f32.mrf.mxu0
        %v6923 = vadd.f32 %v6834, %v6922
        %6924 = vmatmul.bf16.gmra.mxu0 %v4974
        %v6925 = vpop.f32.mrf.mxu0
        %v6926 = vadd.f32 %v6837, %v6925
        %v6927 = vpop.f32.mrf.mxu0
        %v6928 = vadd.f32 %v6839, %v6927
        %6929 = vmatmul.bf16.gmra.mxu0 %v4982
        %v6930 = vpop.f32.mrf.mxu0
        %v6931 = vadd.f32 %v6842, %v6930
        %v6932 = vpop.f32.mrf.mxu0
        %v6933 = vadd.f32 %v6844, %v6932
        %6934 = vmatmul.bf16.gmra.mxu0 %v4990
        %v6935 = vpop.f32.mrf.mxu0
        %v6936 = vadd.f32 %v6847, %v6935
        %v6937 = vpop.f32.mrf.mxu0
        %v6938 = vadd.f32 %v6849, %v6937
        %6939 = vmatmul.bf16.gmra.mxu0 %v4998
        %v6940 = vpop.f32.mrf.mxu0
        %v6941 = vadd.f32 %v6852, %v6940
        %v6942 = vpop.f32.mrf.mxu0
        %v6943 = vadd.f32 %v6854, %v6942
        %6944 = vmatmul.bf16.gmra.mxu0 %v5006
        %v6945 = vpop.f32.mrf.mxu0
        %v6946 = vadd.f32 %v6857, %v6945
        %v6947 = vpop.f32.mrf.mxu0
        %v6948 = vadd.f32 %v6859, %v6947
        %6949 = vmatmul.bf16.gmra.mxu0 %v5014
        %v6950 = vpop.f32.mrf.mxu0
        %v6951 = vadd.f32 %v6862, %v6950
        %v6952 = vpop.f32.mrf.mxu0
        %v6953 = vadd.f32 %v6864, %v6952
        %6954 = vmatmul.bf16.gmra.mxu0 %v5022
        %v6955 = vpop.f32.mrf.mxu0
        %v6956 = vadd.f32 %v6867, %v6955
        %v6957 = vpop.f32.mrf.mxu0
        %v6958 = vadd.f32 %v6869, %v6957
        %6959 = vmatmul.bf16.gmra.mxu0 %v5030
        %v6960 = vpop.f32.mrf.mxu0
        %v6961 = vadd.f32 %v6872, %v6960
        %v6962 = vpop.f32.mrf.mxu0
        %v6963 = vadd.f32 %v6874, %v6962
        %6964 = vdwg.mxu0
        %6965 = vmatpush.bf16.msra.mxu0 %v5647
        %6966 = vmatpush.bf16.msra.mxu0 %v5645
        %6967 = vmatpush.bf16.msra.mxu0 %v5643
        %6968 = vmatpush.bf16.msra.mxu0 %v5641
        %6969 = vmatpush.bf16.msra.mxu0 %v5639
        %6970 = vmatpush.bf16.msra.mxu0 %v5637
        %6971 = vmatpush.bf16.msra.mxu0 %v5635
        %6972 = vmatpush.bf16.msra.mxu0 %v5633
        %6973 = vmatmul.bf16.gmra.mxu0 %v4911
        %v6974 = vpop.f32.mrf.mxu0
        %v6975 = vadd.f32 %v6886, %v6974
        %v6976 = vpop.f32.mrf.mxu0
        %v6977 = vadd.f32 %v6888, %v6976
        %6978 = vmatmul.bf16.gmra.mxu0 %v4919
        %v6979 = vpop.f32.mrf.mxu0
        %v6980 = vadd.f32 %v6891, %v6979
        %v6981 = vpop.f32.mrf.mxu0
        %v6982 = vadd.f32 %v6893, %v6981
        %6983 = vmatmul.bf16.gmra.mxu0 %v4927
        %v6984 = vpop.f32.mrf.mxu0
        %v6985 = vadd.f32 %v6896, %v6984
        %v6986 = vpop.f32.mrf.mxu0
        %v6987 = vadd.f32 %v6898, %v6986
        %6988 = vmatmul.bf16.gmra.mxu0 %v4935
        %v6989 = vpop.f32.mrf.mxu0
        %v6990 = vadd.f32 %v6901, %v6989
        %v6991 = vpop.f32.mrf.mxu0
        %v6992 = vadd.f32 %v6903, %v6991
        %6993 = vmatmul.bf16.gmra.mxu0 %v4943
        %v6994 = vpop.f32.mrf.mxu0
        %v6995 = vadd.f32 %v6906, %v6994
        %v6996 = vpop.f32.mrf.mxu0
        %v6997 = vadd.f32 %v6908, %v6996
        %6998 = vmatmul.bf16.gmra.mxu0 %v4951
        %v6999 = vpop.f32.mrf.mxu0
        %v7000 = vadd.f32 %v6911, %v6999
        %v7001 = vpop.f32.mrf.mxu0
        %v7002 = vadd.f32 %v6913, %v7001
        %7003 = vmatmul.bf16.gmra.mxu0 %v4959
        %v7004 = vpop.f32.mrf.mxu0
        %v7005 = vadd.f32 %v6916, %v7004
        %v7006 = vpop.f32.mrf.mxu0
        %v7007 = vadd.f32 %v6918, %v7006
        %7008 = vmatmul.bf16.gmra.mxu0 %v4967
        %v7009 = vpop.f32.mrf.mxu0
        %v7010 = vadd.f32 %v6921, %v7009
        %v7011 = vpop.f32.mrf.mxu0
        %v7012 = vadd.f32 %v6923, %v7011
        %7013 = vmatmul.bf16.gmra.mxu0 %v4975
        %v7014 = vpop.f32.mrf.mxu0
        %v7015 = vadd.f32 %v6926, %v7014
        %v7016 = vpop.f32.mrf.mxu0
        %v7017 = vadd.f32 %v6928, %v7016
        %7018 = vmatmul.bf16.gmra.mxu0 %v4983
        %v7019 = vpop.f32.mrf.mxu0
        %v7020 = vadd.f32 %v6931, %v7019
        %v7021 = vpop.f32.mrf.mxu0
        %v7022 = vadd.f32 %v6933, %v7021
        %7023 = vmatmul.bf16.gmra.mxu0 %v4991
        %v7024 = vpop.f32.mrf.mxu0
        %v7025 = vadd.f32 %v6936, %v7024
        %v7026 = vpop.f32.mrf.mxu0
        %v7027 = vadd.f32 %v6938, %v7026
        %7028 = vmatmul.bf16.gmra.mxu0 %v4999
        %v7029 = vpop.f32.mrf.mxu0
        %v7030 = vadd.f32 %v6941, %v7029
        %v7031 = vpop.f32.mrf.mxu0
        %v7032 = vadd.f32 %v6943, %v7031
        %7033 = vmatmul.bf16.gmra.mxu0 %v5007
        %v7034 = vpop.f32.mrf.mxu0
        %v7035 = vadd.f32 %v6946, %v7034
        %v7036 = vpop.f32.mrf.mxu0
        %v7037 = vadd.f32 %v6948, %v7036
        %7038 = vmatmul.bf16.gmra.mxu0 %v5015
        %v7039 = vpop.f32.mrf.mxu0
        %v7040 = vadd.f32 %v6951, %v7039
        %v7041 = vpop.f32.mrf.mxu0
        %v7042 = vadd.f32 %v6953, %v7041
        %7043 = vmatmul.bf16.gmra.mxu0 %v5023
        %v7044 = vpop.f32.mrf.mxu0
        %v7045 = vadd.f32 %v6956, %v7044
        %v7046 = vpop.f32.mrf.mxu0
        %v7047 = vadd.f32 %v6958, %v7046
        %7048 = vmatmul.bf16.gmra.mxu0 %v5031
        %v7049 = vpop.f32.mrf.mxu0
        %v7050 = vadd.f32 %v6961, %v7049
        %v7051 = vpop.f32.mrf.mxu0
        %v7052 = vadd.f32 %v6963, %v7051
        %7053 = vdwg.mxu0
        %7054 = vmatpush.bf16.msra.mxu0 %v5663
        %7055 = vmatpush.bf16.msra.mxu0 %v5661
        %7056 = vmatpush.bf16.msra.mxu0 %v5659
        %7057 = vmatpush.bf16.msra.mxu0 %v5657
        %7058 = vmatpush.bf16.msra.mxu0 %v5655
        %7059 = vmatpush.bf16.msra.mxu0 %v5653
        %7060 = vmatpush.bf16.msra.mxu0 %v5651
        %7061 = vmatpush.bf16.msra.mxu0 %v5649
        %7062 = vmatmul.bf16.gmra.mxu0 %v4912
        %v7063 = vpop.f32.mrf.mxu0
        %v7064 = vadd.f32 %v6975, %v7063
        %v7065 = vpop.f32.mrf.mxu0
        %v7066 = vadd.f32 %v6977, %v7065
        %7067 = vmatmul.bf16.gmra.mxu0 %v4920
        %v7068 = vpop.f32.mrf.mxu0
        %v7069 = vadd.f32 %v6980, %v7068
        %v7070 = vpop.f32.mrf.mxu0
        %v7071 = vadd.f32 %v6982, %v7070
        %7072 = vmatmul.bf16.gmra.mxu0 %v4928
        %v7073 = vpop.f32.mrf.mxu0
        %v7074 = vadd.f32 %v6985, %v7073
        %v7075 = vpop.f32.mrf.mxu0
        %v7076 = vadd.f32 %v6987, %v7075
        %7077 = vmatmul.bf16.gmra.mxu0 %v4936
        %v7078 = vpop.f32.mrf.mxu0
        %v7079 = vadd.f32 %v6990, %v7078
        %v7080 = vpop.f32.mrf.mxu0
        %v7081 = vadd.f32 %v6992, %v7080
        %7082 = vmatmul.bf16.gmra.mxu0 %v4944
        %v7083 = vpop.f32.mrf.mxu0
        %v7084 = vadd.f32 %v6995, %v7083
        %v7085 = vpop.f32.mrf.mxu0
        %v7086 = vadd.f32 %v6997, %v7085
        %7087 = vmatmul.bf16.gmra.mxu0 %v4952
        %v7088 = vpop.f32.mrf.mxu0
        %v7089 = vadd.f32 %v7000, %v7088
        %v7090 = vpop.f32.mrf.mxu0
        %v7091 = vadd.f32 %v7002, %v7090
        %7092 = vmatmul.bf16.gmra.mxu0 %v4960
        %v7093 = vpop.f32.mrf.mxu0
        %v7094 = vadd.f32 %v7005, %v7093
        %v7095 = vpop.f32.mrf.mxu0
        %v7096 = vadd.f32 %v7007, %v7095
        %7097 = vmatmul.bf16.gmra.mxu0 %v4968
        %v7098 = vpop.f32.mrf.mxu0
        %v7099 = vadd.f32 %v7010, %v7098
        %v7100 = vpop.f32.mrf.mxu0
        %v7101 = vadd.f32 %v7012, %v7100
        %7102 = vmatmul.bf16.gmra.mxu0 %v4976
        %v7103 = vpop.f32.mrf.mxu0
        %v7104 = vadd.f32 %v7015, %v7103
        %v7105 = vpop.f32.mrf.mxu0
        %v7106 = vadd.f32 %v7017, %v7105
        %7107 = vmatmul.bf16.gmra.mxu0 %v4984
        %v7108 = vpop.f32.mrf.mxu0
        %v7109 = vadd.f32 %v7020, %v7108
        %v7110 = vpop.f32.mrf.mxu0
        %v7111 = vadd.f32 %v7022, %v7110
        %7112 = vmatmul.bf16.gmra.mxu0 %v4992
        %v7113 = vpop.f32.mrf.mxu0
        %v7114 = vadd.f32 %v7025, %v7113
        %v7115 = vpop.f32.mrf.mxu0
        %v7116 = vadd.f32 %v7027, %v7115
        %7117 = vmatmul.bf16.gmra.mxu0 %v5000
        %v7118 = vpop.f32.mrf.mxu0
        %v7119 = vadd.f32 %v7030, %v7118
        %v7120 = vpop.f32.mrf.mxu0
        %v7121 = vadd.f32 %v7032, %v7120
        %7122 = vmatmul.bf16.gmra.mxu0 %v5008
        %v7123 = vpop.f32.mrf.mxu0
        %v7124 = vadd.f32 %v7035, %v7123
        %v7125 = vpop.f32.mrf.mxu0
        %v7126 = vadd.f32 %v7037, %v7125
        %7127 = vmatmul.bf16.gmra.mxu0 %v5016
        %v7128 = vpop.f32.mrf.mxu0
        %v7129 = vadd.f32 %v7040, %v7128
        %v7130 = vpop.f32.mrf.mxu0
        %v7131 = vadd.f32 %v7042, %v7130
        %7132 = vmatmul.bf16.gmra.mxu0 %v5024
        %v7133 = vpop.f32.mrf.mxu0
        %v7134 = vadd.f32 %v7045, %v7133
        %v7135 = vpop.f32.mrf.mxu0
        %v7136 = vadd.f32 %v7047, %v7135
        %7137 = vmatmul.bf16.gmra.mxu0 %v5032
        %v7138 = vpop.f32.mrf.mxu0
        %v7139 = vadd.f32 %v7050, %v7138
        %v7140 = vpop.f32.mrf.mxu0
        %v7141 = vadd.f32 %v7052, %v7140
        %7142 = vdwg.mxu0
        %7143 = vmatpush.bf16.msra.mxu0 %v5679
        %7144 = vmatpush.bf16.msra.mxu0 %v5677
        %7145 = vmatpush.bf16.msra.mxu0 %v5675
        %7146 = vmatpush.bf16.msra.mxu0 %v5673
        %7147 = vmatpush.bf16.msra.mxu0 %v5671
        %7148 = vmatpush.bf16.msra.mxu0 %v5669
        %7149 = vmatpush.bf16.msra.mxu0 %v5667
        %7150 = vmatpush.bf16.msra.mxu0 %v5665
        %7151 = vmatmul.bf16.gmra.mxu0 %v4913
        %v7152 = vpop.f32.mrf.mxu0
        %v7153 = vadd.f32 %v7064, %v7152
        %v7154 = vpop.f32.mrf.mxu0
        %v7155 = vadd.f32 %v7066, %v7154
        %7156 = vmatmul.bf16.gmra.mxu0 %v4921
        %v7157 = vpop.f32.mrf.mxu0
        %v7158 = vadd.f32 %v7069, %v7157
        %v7159 = vpop.f32.mrf.mxu0
        %v7160 = vadd.f32 %v7071, %v7159
        %7161 = vmatmul.bf16.gmra.mxu0 %v4929
        %v7162 = vpop.f32.mrf.mxu0
        %v7163 = vadd.f32 %v7074, %v7162
        %v7164 = vpop.f32.mrf.mxu0
        %v7165 = vadd.f32 %v7076, %v7164
        %7166 = vmatmul.bf16.gmra.mxu0 %v4937
        %v7167 = vpop.f32.mrf.mxu0
        %v7168 = vadd.f32 %v7079, %v7167
        %v7169 = vpop.f32.mrf.mxu0
        %v7170 = vadd.f32 %v7081, %v7169
        %7171 = vmatmul.bf16.gmra.mxu0 %v4945
        %v7172 = vpop.f32.mrf.mxu0
        %v7173 = vadd.f32 %v7084, %v7172
        %v7174 = vpop.f32.mrf.mxu0
        %v7175 = vadd.f32 %v7086, %v7174
        %7176 = vmatmul.bf16.gmra.mxu0 %v4953
        %v7177 = vpop.f32.mrf.mxu0
        %v7178 = vadd.f32 %v7089, %v7177
        %v7179 = vpop.f32.mrf.mxu0
        %v7180 = vadd.f32 %v7091, %v7179
        %7181 = vmatmul.bf16.gmra.mxu0 %v4961
        %v7182 = vpop.f32.mrf.mxu0
        %v7183 = vadd.f32 %v7094, %v7182
        %v7184 = vpop.f32.mrf.mxu0
        %v7185 = vadd.f32 %v7096, %v7184
        %7186 = vmatmul.bf16.gmra.mxu0 %v4969
        %v7187 = vpop.f32.mrf.mxu0
        %v7188 = vadd.f32 %v7099, %v7187
        %v7189 = vpop.f32.mrf.mxu0
        %v7190 = vadd.f32 %v7101, %v7189
        %7191 = vmatmul.bf16.gmra.mxu0 %v4977
        %v7192 = vpop.f32.mrf.mxu0
        %v7193 = vadd.f32 %v7104, %v7192
        %v7194 = vpop.f32.mrf.mxu0
        %v7195 = vadd.f32 %v7106, %v7194
        %7196 = vmatmul.bf16.gmra.mxu0 %v4985
        %v7197 = vpop.f32.mrf.mxu0
        %v7198 = vadd.f32 %v7109, %v7197
        %v7199 = vpop.f32.mrf.mxu0
        %v7200 = vadd.f32 %v7111, %v7199
        %7201 = vmatmul.bf16.gmra.mxu0 %v4993
        %v7202 = vpop.f32.mrf.mxu0
        %v7203 = vadd.f32 %v7114, %v7202
        %v7204 = vpop.f32.mrf.mxu0
        %v7205 = vadd.f32 %v7116, %v7204
        %7206 = vmatmul.bf16.gmra.mxu0 %v5001
        %v7207 = vpop.f32.mrf.mxu0
        %v7208 = vadd.f32 %v7119, %v7207
        %v7209 = vpop.f32.mrf.mxu0
        %v7210 = vadd.f32 %v7121, %v7209
        %7211 = vmatmul.bf16.gmra.mxu0 %v5009
        %v7212 = vpop.f32.mrf.mxu0
        %v7213 = vadd.f32 %v7124, %v7212
        %v7214 = vpop.f32.mrf.mxu0
        %v7215 = vadd.f32 %v7126, %v7214
        %7216 = vmatmul.bf16.gmra.mxu0 %v5017
        %v7217 = vpop.f32.mrf.mxu0
        %v7218 = vadd.f32 %v7129, %v7217
        %v7219 = vpop.f32.mrf.mxu0
        %v7220 = vadd.f32 %v7131, %v7219
        %7221 = vmatmul.bf16.gmra.mxu0 %v5025
        %v7222 = vpop.f32.mrf.mxu0
        %v7223 = vadd.f32 %v7134, %v7222
        %v7224 = vpop.f32.mrf.mxu0
        %v7225 = vadd.f32 %v7136, %v7224
        %7226 = vmatmul.bf16.gmra.mxu0 %v5033
        %v7227 = vpop.f32.mrf.mxu0
        %v7228 = vadd.f32 %v7139, %v7227
        %v7229 = vpop.f32.mrf.mxu0
        %v7230 = vadd.f32 %v7141, %v7229
        %7231 = vdwg.mxu0
        %7232 = vst [vmem:[%s293] sm:$0xff] %v6441
        %7233 = vst [vmem:[%s293 + $0x8] sm:$0xff] %v7153
        %7234 = vst [vmem:[%s293 + $0x10] sm:$0xff] %v6443
        %7235 = vst [vmem:[%s293 + $0x18] sm:$0xff] %v7155
        %7236 = vst [vmem:[%s293 + $0x20] sm:$0xff] %v6446
        %7237 = vst [vmem:[%s293 + $0x28] sm:$0xff] %v7158
        %7238 = vst [vmem:[%s293 + $0x30] sm:$0xff] %v6448
        %7239 = vst [vmem:[%s293 + $0x38] sm:$0xff] %v7160
        %7240 = vst [vmem:[%s293 + $0x40] sm:$0xff] %v6451
        %7241 = vst [vmem:[%s293 + $0x48] sm:$0xff] %v7163
        %7242 = vst [vmem:[%s293 + $0x50] sm:$0xff] %v6453
        %7243 = vst [vmem:[%s293 + $0x58] sm:$0xff] %v7165
        %7244 = vst [vmem:[%s293 + $0x60] sm:$0xff] %v6456
        %7245 = vst [vmem:[%s293 + $0x68] sm:$0xff] %v7168
        %7246 = vst [vmem:[%s293 + $0x70] sm:$0xff] %v6458
        %7247 = vst [vmem:[%s293 + $0x78] sm:$0xff] %v7170
        %7248 = vst [vmem:[%s293 + $0x80] sm:$0xff] %v6461
        %7249 = vst [vmem:[%s293 + $0x88] sm:$0xff] %v7173
        %7250 = vst [vmem:[%s293 + $0x90] sm:$0xff] %v6463
        %7251 = vst [vmem:[%s293 + $0x98] sm:$0xff] %v7175
        %7252 = vst [vmem:[%s293 + $0xa0] sm:$0xff] %v6466
        %7253 = vst [vmem:[%s293 + $0xa8] sm:$0xff] %v7178
        %7254 = vst [vmem:[%s293 + $0xb0] sm:$0xff] %v6468
        %7255 = vst [vmem:[%s293 + $0xb8] sm:$0xff] %v7180
        %7256 = vst [vmem:[%s293 + $0xc0] sm:$0xff] %v6471
        %7257 = vst [vmem:[%s293 + $0xc8] sm:$0xff] %v7183
        %7258 = vst [vmem:[%s293 + $0xd0] sm:$0xff] %v6473
        %7259 = vst [vmem:[%s293 + $0xd8] sm:$0xff] %v7185
        %7260 = vst [vmem:[%s293 + $0xe0] sm:$0xff] %v6476
        %7261 = vst [vmem:[%s293 + $0xe8] sm:$0xff] %v7188
        %7262 = vst [vmem:[%s293 + $0xf0] sm:$0xff] %v6478
        %7263 = vst [vmem:[%s293 + $0xf8] sm:$0xff] %v7190
        %7264 = vst [vmem:[%s293 + $0x100] sm:$0xff] %v6481
        %7265 = vst [vmem:[%s293 + $0x108] sm:$0xff] %v7193
        %7266 = vst [vmem:[%s293 + $0x110] sm:$0xff] %v6483
        %7267 = vst [vmem:[%s293 + $0x118] sm:$0xff] %v7195
        %7268 = vst [vmem:[%s293 + $0x120] sm:$0xff] %v6486
        %7269 = vst [vmem:[%s293 + $0x128] sm:$0xff] %v7198
        %7270 = vst [vmem:[%s293 + $0x130] sm:$0xff] %v6488
        %7271 = vst [vmem:[%s293 + $0x138] sm:$0xff] %v7200
        %7272 = vst [vmem:[%s293 + $0x140] sm:$0xff] %v6491
        %7273 = vst [vmem:[%s293 + $0x148] sm:$0xff] %v7203
        %7274 = vst [vmem:[%s293 + $0x150] sm:$0xff] %v6493
        %7275 = vst [vmem:[%s293 + $0x158] sm:$0xff] %v7205
        %7276 = vst [vmem:[%s293 + $0x160] sm:$0xff] %v6496
        %7277 = vst [vmem:[%s293 + $0x168] sm:$0xff] %v7208
        %7278 = vst [vmem:[%s293 + $0x170] sm:$0xff] %v6498
        %7279 = vst [vmem:[%s293 + $0x178] sm:$0xff] %v7210
        %7280 = vst [vmem:[%s293 + $0x180] sm:$0xff] %v6501
        %7281 = vst [vmem:[%s293 + $0x188] sm:$0xff] %v7213
        %7282 = vst [vmem:[%s293 + $0x190] sm:$0xff] %v6503
        %7283 = vst [vmem:[%s293 + $0x198] sm:$0xff] %v7215
        %7284 = vst [vmem:[%s293 + $0x1a0] sm:$0xff] %v6506
        %7285 = vst [vmem:[%s293 + $0x1a8] sm:$0xff] %v7218
        %7286 = vst [vmem:[%s293 + $0x1b0] sm:$0xff] %v6508
        %7287 = vst [vmem:[%s293 + $0x1b8] sm:$0xff] %v7220
        %7288 = vst [vmem:[%s293 + $0x1c0] sm:$0xff] %v6511
        %7289 = vst [vmem:[%s293 + $0x1c8] sm:$0xff] %v7223
        %7290 = vst [vmem:[%s293 + $0x1d0] sm:$0xff] %v6513
        %7291 = vst [vmem:[%s293 + $0x1d8] sm:$0xff] %v7225
        %7292 = vst [vmem:[%s293 + $0x1e0] sm:$0xff] %v6516
        %7293 = vst [vmem:[%s293 + $0x1e8] sm:$0xff] %v7228
        %7294 = vst [vmem:[%s293 + $0x1f0] sm:$0xff] %v6518
        %7295 = vst [vmem:[%s293 + $0x1f8] sm:$0xff] %v7230
        %s7296 = sand.u32 %s142, 1
        %s7297 = scalar_lea.sflag [#allocation4], %s7296
        %s7298 = sand.u32 %s142, 1
        %s7299 = smul.addr %s7298, 512
        %s7300 = scalar_lea.vmem [#allocation10], %s7299
        // Predicated region
        $region57: #{tpu_custom_call.1} parent=39 // pred_check
          %p7301 = pneg %p152
        $region58: #{tpu_custom_call.1} parent=39 // pred_check_branch
          %7303 = sbr.rel (%p7301) target = $region60
        $region59: #{tpu_custom_call.1} parent=39 // pred_region
          %s7304 = smul.u32 32, %s24
          %7306 = vsyncadd %s7297, 0
          %s7307 = smul.addr %s7304, 2
          %s7308 = smul.addr %s7307, 8
          %s7309 = scalar_lea.hbm %s5, %s7308
          %s7310 = sshll.u32 %s7300, 4
          %s7311 = int_to_ptr.vmem [resolvable:$true] %s7310
          %s7312 = sshll.u32 %s7309, 4
          %s7313 = int_to_ptr.hbm [resolvable:$true] %s7312
          %7318 = dma.vmem_to_hbm [thread:$0]  %s7311, 8192, %s7313, %s7297, 256, 256, 16
        $region60: #{tpu_custom_call.1} parent=39 // pred_fallthru
          _
      $region40: #{tpu_custom_call.1} parent=5 // pred_fallthru
        _
      %p7319 = scmp.le.s32.totalorder 2, %s19
      // Predicated region
      $region61: #{tpu_custom_call.1} parent=5 // pred_check
        %p7320 = pneg %p7319
      $region62: #{tpu_custom_call.1} parent=5 // pred_check_branch
        %7322 = sbr.rel (%p7320) target = $region64
      $region63: #{tpu_custom_call.1} parent=5 // pred_region
        %s7323 = ssub.s32 %s19, 2
        // Predicated region
        $region65: #{tpu_custom_call.1} parent=63 // pred_check
          %p7324 = pneg %p158
        $region66: #{tpu_custom_call.1} parent=63 // pred_check_branch
          %7326 = sbr.rel (%p7324) target = $region68
        $region67: #{tpu_custom_call.1} parent=63 // pred_region
          %s7327 = sand.u32 %s143, 1
          %s7328 = scalar_lea.sflag [#allocation4], %s7327
          %s7329 = sand.u32 %s143, 1
          %s7330 = smul.addr %s7329, 512
          %s7331 = scalar_lea.vmem [#allocation10], %s7330
          %7333 = dma.done %s7328, 8192
        $region68: #{tpu_custom_call.1} parent=63 // pred_fallthru
          _
      $region64: #{tpu_custom_call.1} parent=5 // pred_fallthru
        _
    $region6: #{tpu_custom_call.1} parent=1 // loop_footer
      %s23 = sadd.s32 1, %s19
    $region7: #{tpu_custom_call.1} parent=1 // loop_footer_branch
      %18 = sbr.rel target = $region3
    $region8: #{tpu_custom_call.1} parent=1 // loop_exit
      _
    %7334 = vsyncpa [#allocation3], 1
    %s7335 = scalar_lea.sflag [#allocation3], 1
    %7336 = vsyncpa %s7335, 1
    %7337 = vsyncpa [#allocation6], 1
    %7338 = vsyncpa [#allocation9], 1
    %7339 = vsyncpa [#allocation4], 1
    %s7340 = scalar_lea.sflag [#allocation4], 1
    %7341 = vsyncpa %s7340, 1

</llo_original>
